<compile_context>
chip_gen: v6e
topology: v6e:2x2x1
jax: 0.10.0
libtpu: 0.0.40
codegen_flags: <defaults>
</compile_context>

<pallas_src>
import functools
import math

import jax
import jax.numpy as jnp
from jax.experimental import pallas as pl
from jax.experimental.pallas import tpu as pltpu

VMEM_LIMIT = 32 * 1024 * 1024   # explicit scoped-VMEM budget (safe on v5e/v6e/v7x)
TM_MAX = 512                    # row-tile cap for the flat 1x1 GEMM path


def _round_up(x, m):
    return (x + m - 1) // m * m


# ============================================================================
# Pallas kernel 1: fused NHWC conv with a kernel-row tap grid axis.
#   grid = (N, Ho, KH); per step: one padded input row (per column phase),
#   KW MXU dots vs. a VMEM-resident weight, f32 VMEM accumulation, fused
#   shift / residual / ReLU|PReLU epilogue + (bf16|f32) store on the last tap.
# ============================================================================
def _conv_tap_kernel(*refs, n_phase, kw, wo, act, has_alpha, has_res):
    phase_refs = refs[:n_phase]
    idx = n_phase
    w_ref = refs[idx]; idx += 1          # (KH*KW, Cp, Op)  resident bf16
    t_ref = refs[idx]; idx += 1          # (1, Op) f32 shift
    al_ref = None
    if has_alpha:
        al_ref = refs[idx]; idx += 1     # (1, Op) f32 PReLU alpha
    r_ref = None
    if has_res:
        r_ref = refs[idx]; idx += 1      # (Wo, Op) bf16 residual
    o_ref = refs[idx]; idx += 1          # (Wo, Op) output
    acc_ref = refs[idx]                  # (Wo, Op) f32 scratch

    ki = pl.program_id(2)

    @pl.when(ki == 0)
    def _init():
        acc_ref[...] = jnp.zeros_like(acc_ref)

    part = None
    for kj in range(kw):
        a = phase_refs[kj % n_phase][pl.ds(kj // n_phase, wo), :]   # (Wo, Cp)
        w = w_ref[ki * kw + kj]                                     # (Cp, Op)
        d = jnp.dot(a, w, preferred_element_type=jnp.float32)
        part = d if part is None else part + d
    acc_ref[...] += part

    @pl.when(ki == pl.num_programs(2) - 1)
    def _finalize():
        y = acc_ref[...] + t_ref[...]
        if has_res:
            y = y + r_ref[...].astype(jnp.float32)
        if act == "relu":
            y = jnp.maximum(y, 0.0)
        elif act == "prelu":
            y = jnp.where(y > 0.0, y, al_ref[...] * y)
        o_ref[...] = y.astype(o_ref.dtype)


def conv2d_fused(x, w_oihw, *, stride=1, padding=1, scale=None, shift=None,
                 act="linear", alpha=None, residual=None,
                 out_dtype=jnp.bfloat16, pad_out=False):
    """Fused NHWC conv: act((x * W) * bn_scale + shift [+ residual]).

    x: NHWC (any float dtype).  w_oihw: (O, I, KH, KW) PyTorch-layout weight.
    `scale` (BatchNorm) is folded into the weights in f32 before the bf16 cast.
    Output dtype `out_dtype`; if pad_out and O < 128, output lanes are padded
    to 128 inside the kernel and sliced off here (lane-dense stores).
    """
    N, H, W, C = x.shape
    O, I, KH, KW = w_oihw.shape
    assert I == C
    S = stride
    Ho = (H + 2 * padding - KH) // S + 1
    Wo = (W + 2 * padding - KW) // S + 1

    # --- weight prep: fold BN scale (f32), pad channels, cast bf16 ----------
    w = w_oihw.astype(jnp.float32)
    if scale is not None:
        w = w * scale.astype(jnp.float32)[:, None, None, None]
    Cp = _round_up(C, 8)                      # sublane-friendly contraction dim
    wm = jnp.transpose(w, (2, 3, 1, 0))       # (KH, KW, C, O)
    if Cp != C:
        wm = jnp.pad(wm, ((0, 0), (0, 0), (0, Cp - C), (0, 0)))
    wm = wm.reshape(KH * KW, Cp, O)

    shift = (jnp.zeros((O,), jnp.float32) if shift is None
             else shift.astype(jnp.float32))

    Op = O
    if pad_out and O < 128:
        Op = 128
        wm = jnp.pad(wm, ((0, 0), (0, 0), (0, Op - O)))
        shift = jnp.pad(shift, (0, Op - O))
        if alpha is not None:
            alpha = jnp.pad(alpha.astype(jnp.float32), (0, Op - O))
    if residual is not None:
        assert Op == O, "residual is never combined with lane padding here"

    # --- input prep: bf16, spatial + channel pad, column-phase split --------
    xb = jnp.pad(x.astype(jnp.bfloat16),
                 ((0, 0), (padding, padding), (padding, padding), (0, Cp - C)))
    phases = [xb[:, :, p::S, :] for p in range(S)] if S > 1 else [xb]
    for kj in range(KW):                      # defensive width check
        assert kj // S + Wo <= phases[kj % S].shape[2]

    inputs = list(phases) + [wm.astype(jnp.bfloat16), shift.reshape(1, Op)]
    in_specs = []
    for ph in phases:
        wpp = ph.shape[2]
        in_specs.append(pl.BlockSpec(
            (None, None, wpp, Cp), lambda n, i, ki, S=S: (n, i * S + ki, 0, 0)))
    in_specs.append(pl.BlockSpec((KH * KW, Cp, Op), lambda n, i, ki: (0, 0, 0)))
    in_specs.append(pl.BlockSpec((1, Op), lambda n, i, ki: (0, 0)))

    has_alpha = act == "prelu"
    if has_alpha:
        inputs.append(alpha.reshape(1, Op).astype(jnp.float32))
        in_specs.append(pl.BlockSpec((1, Op), lambda n, i, ki: (0, 0)))
    has_res = residual is not None
    if has_res:
        inputs.append(residual.astype(jnp.bfloat16))
        in_specs.append(pl.BlockSpec((None, None, Wo, Op),
                                     lambda n, i, ki: (n, i, 0, 0)))

    out = pl.pallas_call(
        functools.partial(_conv_tap_kernel, n_phase=len(phases), kw=KW, wo=Wo,
                          act=act, has_alpha=has_alpha, has_res=has_res),
        out_shape=jax.ShapeDtypeStruct((N, Ho, Wo, Op), out_dtype),
        grid=(N, Ho, KH),
        in_specs=in_specs,
        out_specs=pl.BlockSpec((None, None, Wo, Op),
                               lambda n, i, ki: (n, i, 0, 0)),
        scratch_shapes=[pltpu.VMEM((Wo, Op), jnp.float32)],
        compiler_params=pltpu.CompilerParams(
            dimension_semantics=("parallel", "parallel", "arbitrary"),
            vmem_limit_bytes=VMEM_LIMIT),
    )(*inputs)
    if Op != O:
        out = out[..., :O]
    return out


# ============================================================================
# Pallas kernel 2: flat GEMM + bias for the 1x1 heads (no im2col duplication;
# O padded to 128 lanes for unmasked stores, sliced in glue).
# ============================================================================
def _gemm_bias_kernel(a_ref, w_ref, t_ref, o_ref):
    y = jnp.dot(a_ref[...], w_ref[...], preferred_element_type=jnp.float32)
    o_ref[...] = (y + t_ref[...]).astype(o_ref.dtype)


def conv1x1(x, w_oihw, bias, out_dtype=jnp.float32):
    N, H, W, C = x.shape
    O = w_oihw.shape[0]
    M = N * H * W
    A = x.reshape(M, C).astype(jnp.bfloat16)
    Wm = jnp.transpose(w_oihw[:, :, 0, 0], (1, 0)).astype(jnp.float32)
    t = bias.astype(jnp.float32)

    Op = O
    if O < 128:                     # lane-dense stores
        Op = 128
        Wm = jnp.pad(Wm, ((0, 0), (0, Op - O)))
        t = jnp.pad(t, (0, Op - O))

    tm = min(TM_MAX, _round_up(M, 16))        # bf16 sublane packing
    out = pl.pallas_call(
        _gemm_bias_kernel,
        out_shape=jax.ShapeDtypeStruct((M, Op), out_dtype),
        grid=(pl.cdiv(M, tm),),
        in_specs=[pl.BlockSpec((tm, C), lambda i: (i, 0)),
                  pl.BlockSpec((C, Op), lambda i: (0, 0)),
                  pl.BlockSpec((1, Op), lambda i: (0, 0))],
        out_specs=pl.BlockSpec((tm, Op), lambda i: (i, 0)),
        compiler_params=pltpu.CompilerParams(
            dimension_semantics=("parallel",),
            vmem_limit_bytes=VMEM_LIMIT),
    )(A, Wm.astype(jnp.bfloat16), t.reshape(1, Op))
    if Op != O:
        out = out[:, :O]
    return out.reshape(N, H, W, O)


# ============================================================================
# tiny / lane-sparse ops kept in plain jnp (XLA fuses them into neighbours)
# ============================================================================
def maxpool3x3_s2_p1(x):
    """MaxPool2d(kernel=3, stride=2, padding=1), NHWC — running max."""
    N, H, W, C = x.shape
    Ho = (H + 2 - 3) // 2 + 1
    Wo = (W + 2 - 3) // 2 + 1
    xp = jnp.pad(x, ((0, 0), (1, 1), (1, 1), (0, 0)),
                 constant_values=-jnp.inf)
    out = None
    for i in range(3):
        for j in range(3):
            v = xp[:, i:i + (Ho - 1) * 2 + 1:2, j:j + (Wo - 1) * 2 + 1:2, :]
            out = v if out is None else jnp.maximum(out, v)
    return out


def _lin_idx_w(out_size, in_size, scale):
    pos = (jnp.arange(out_size, dtype=jnp.float32) + 0.5) / scale - 0.5
    pos = jnp.maximum(pos, 0.0)
    i0 = jnp.minimum(jnp.floor(pos).astype(jnp.int32), in_size - 1)
    i1 = jnp.minimum(i0 + 1, in_size - 1)
    w = pos - i0.astype(jnp.float32)
    return i0, i1, w


def bilinear_upsample(x, scale):
    """Matches F.interpolate(mode='bilinear', align_corners=False)."""
    N, H, W, C = x.shape
    Ho, Wo = int(H * scale), int(W * scale)
    h0, h1, wh = _lin_idx_w(Ho, H, float(scale))
    w0, w1, ww = _lin_idx_w(Wo, W, float(scale))
    top = (x[:, h0, :, :] * (1.0 - wh)[None, :, None, None]
           + x[:, h1, :, :] * wh[None, :, None, None])
    out = (top[:, :, w0, :] * (1.0 - ww)[None, None, :, None]
           + top[:, :, w1, :] * ww[None, None, :, None])
    return out


# ============================================================================
# composite layers
# ============================================================================
def bn_scale_shift(bn, eps=1e-5):
    gamma, beta, mean, var = bn
    s = gamma / jnp.sqrt(var + eps)
    return s, beta - mean * s


def basic_block(x, p):
    """ResNet BasicBlock, stride 1 (identity shortcut).  x is bf16 NHWC."""
    s1, t1 = bn_scale_shift(p["bn1"])
    out = conv2d_fused(x, p["conv1_w"], stride=1, padding=1,
                       scale=s1, shift=t1, act="relu")
    s2, t2 = bn_scale_shift(p["bn2"])
    # residual add + ReLU fused into the second conv's epilogue
    return conv2d_fused(out, p["conv2_w"], stride=1, padding=1,
                        scale=s2, shift=t2, act="relu", residual=x)


def layer2_block0(x, p, pdown):
    """BasicBlock(64->128, stride 2) with 1x1 downsample.  The strided conv1
    and the 1x1 downsample (same strided input) are merged into ONE fused conv
    with 256 output channels: the 1x1 weight becomes the centre tap of a 3x3
    weight; per-channel PReLU alpha 0 / 1 gives ReLU / identity epilogues."""
    s1, t1 = bn_scale_shift(p["bn1"])
    sd, td = bn_scale_shift(pdown["bn"])
    O = p["conv1_w"].shape[0]                 # 128
    wd3 = jnp.zeros((O, x.shape[-1], 3, 3), jnp.float32)
    wd3 = wd3.at[:, :, 1, 1].set(pdown["w"][:, :, 0, 0])
    w_merged = jnp.concatenate([p["conv1_w"].astype(jnp.float32), wd3], axis=0)
    scale = jnp.concatenate([s1, sd])
    shift = jnp.concatenate([t1, td])
    alpha = jnp.concatenate([jnp.zeros((O,), jnp.float32),
                             jnp.ones((O,), jnp.float32)])
    y = conv2d_fused(x, w_merged, stride=2, padding=1, scale=scale,
                     shift=shift, act="prelu", alpha=alpha)     # (N,Ho,Wo,256)
    out, identity = y[..., :O], y[..., O:]
    s2, t2 = bn_scale_shift(p["bn2"])
    return conv2d_fused(out, p["conv2_w"], stride=1, padding=1,
                        scale=s2, shift=t2, act="relu", residual=identity)


def conv_transpose2d(x, w_iokk, bias, alpha):
    """ConvTranspose2d(k=4, s=2, p=1) + PReLU via the 4-phase sub-pixel
    decomposition: ONE fused 3x3 stride-1 conv with 4*O output channels
    (bias + PReLU in the epilogue) followed by a pixel shuffle."""
    N, H, W, C = x.shape
    Cin, O, KH, KW = w_iokk.shape
    assert Cin == C and KH == 4 and KW == 4
    row_taps = {0: [(0, 3), (1, 1)], 1: [(1, 2), (2, 0)]}

    def phase_weight(a, b):
        pw = jnp.zeros((O, C, 3, 3), jnp.float32)
        for (r, ky) in row_taps[a]:
            for (s_, kx) in row_taps[b]:
                pw = pw.at[:, :, r, s_].set(jnp.transpose(w_iokk[:, :, ky, kx]))
        return pw

    w_conv = jnp.concatenate([phase_weight(a, b) for a in (0, 1)
                              for b in (0, 1)], axis=0)         # (4*O, C, 3, 3)
    bias4 = jnp.tile(bias, 4)
    alpha4 = jnp.tile(alpha, 4)
    y = conv2d_fused(x, w_conv, stride=1, padding=1, shift=bias4,
                     act="prelu", alpha=alpha4, out_dtype=jnp.float32,
                     pad_out=True)                               # (N, H, W, 4*O)
    # pixel shuffle: channel block p = a*2 + b goes to output (2m+a, 2n+b)
    y = y.reshape(N, H, W, 2, 2, O)
    y = jnp.transpose(y, (0, 1, 3, 2, 4, 5)).reshape(N, 2 * H, 2 * W, O)
    return y


# ============================================================================
# network assembly (Head encoder)
# ============================================================================
MEAN = jnp.array([0.485, 0.456, 0.406], jnp.float32)
STD = jnp.array([0.229, 0.224, 0.225], jnp.float32)


def head_forward(x_nhwc, params):
    # MeanShift (normalize) — tiny elementwise, kept in glue (XLA fuses it).
    x = x_nhwc * (1.0 / STD) + (-MEAN / STD)
    # cnn0: conv7x7 s2 p3 + BN + ReLU (BN scale folded into the weights)
    s, t = bn_scale_shift(params["bn1"])
    f0 = conv2d_fused(x, params["conv1_w"], stride=2, padding=3,
                      scale=s, shift=t, act="relu")              # bf16, 64ch
    # cnn1: maxpool + layer1 (2 BasicBlocks, 64->64)
    f1 = maxpool3x3_s2_p1(f0)
    f1 = basic_block(f1, params["l1b0"])
    f1 = basic_block(f1, params["l1b1"])
    # cnn2: layer2 (merged strided block + BasicBlock 128->128)
    f2 = layer2_block0(f1, params["l2b0"], params["l2b0_down"])
    f2 = basic_block(f2, params["l2b1"])
    # 1x1 output heads (flat GEMMs, output lanes padded to 128 inside)
    o0 = conv1x1(f0, params["out0_w"], params["out0_b"])
    o1 = conv1x1(f1, params["out1_w"], params["out1_b"])
    o2 = conv1x1(f2, params["out2_w"], params["out2_b"])
    summed = o0 + bilinear_upsample(o1, 2) + bilinear_upsample(o2, 4)
    # upsample: ConvTranspose2d(c, c//2, 4, 2, 1) + PReLU(c//2)
    return conv_transpose2d(summed, params["up_w"], params["up_b"],
                            params["up_alpha"])                  # (N,H,W,c//2)


# ============================================================================
# deterministic parameter init (synthetic; mirrors module __init__ shapes)
# ============================================================================
def init_params(key, c):
    keys = iter(jax.random.split(key, 64))

    def convw(o, i, k):
        fan_in = i * k * k
        return jax.random.normal(next(keys), (o, i, k, k),
                                 jnp.float32) * math.sqrt(2.0 / fan_in)

    def bn(ch):
        return (1.0 + 0.1 * jax.random.normal(next(keys), (ch,), jnp.float32),
                0.1 * jax.random.normal(next(keys), (ch,), jnp.float32),
                0.1 * jax.random.normal(next(keys), (ch,), jnp.float32),
                0.5 + 0.5 * jax.random.uniform(next(keys), (ch,), jnp.float32))

    def block(cin, cout):
        return dict(conv1_w=convw(cout, cin, 3), bn1=bn(cout),
                    conv2_w=convw(cout, cout, 3), bn2=bn(cout))

    def bias(ch):
        return 0.1 * jax.random.normal(next(keys), (ch,), jnp.float32)

    return dict(
        conv1_w=convw(64, 3, 7), bn1=bn(64),
        l1b0=block(64, 64), l1b1=block(64, 64),
        l2b0=block(64, 128),
        l2b0_down=dict(w=convw(128, 64, 1), bn=bn(128)),
        l2b1=block(128, 128),
        out0_w=convw(c, 64, 1), out0_b=bias(c),
        out1_w=convw(c, 64, 1), out1_b=bias(c),
        out2_w=convw(c, 128, 1), out2_b=bias(c),
        up_w=jax.random.normal(next(keys), (c, c // 2, 4, 4),
                               jnp.float32) * math.sqrt(1.0 / (c * 16)),
        up_b=bias(c // 2),
        up_alpha=jnp.full((c // 2,), 0.25, jnp.float32),
    )


if __name__ == "__main__":
    c = 16
    key = jax.random.PRNGKey(0)
    k_x, k_p = jax.random.split(key)
    # PyTorch-style NCHW input, small shapes
    x_nchw = jax.random.uniform(k_x, (2, 3, 32, 32), jnp.float32)
    x_nhwc = jnp.transpose(x_nchw, (0, 2, 3, 1))   # NHWC inside the kernels
    params = init_params(k_p, c)

    fwd = jax.jit(head_forward)
    out = fwd(x_nhwc, params)
    out = jax.block_until_ready(out)

    assert out.shape == (2, 32, 32, c // 2), out.shape
    assert bool(jnp.all(jnp.isfinite(out)))
    print("KERNEL_OK")
</pallas_src>

<mosaic_0001>
module attributes {stable_mosaic.version = 11 : i64} {
  func.func @_conv_tap_kernel(%arg0: i32, %arg1: i32, %arg2: i32, %arg3: memref<1x1x19x8xbf16, #tpu.memory_space<vmem>>, %arg4: memref<1x1x19x8xbf16, #tpu.memory_space<vmem>>, %arg5: memref<49x8x64xbf16, #tpu.memory_space<vmem>>, %arg6: memref<1x64xf32, #tpu.memory_space<vmem>>, %arg7: memref<1x1x16x64xbf16, #tpu.memory_space<vmem>>, %arg8: memref<16x64xf32, #tpu.memory_space<vmem>>) attributes {dimension_semantics = [#tpu.dimension_semantics<parallel>, #tpu.dimension_semantics<parallel>, #tpu.dimension_semantics<arbitrary>], iteration_bounds = array<i64: 2, 16, 7>, scalar_prefetch = 0 : i64, scratch_operands = 1 : i64, tpu.core_type = #tpu.core_type<tc>, window_params = [{transform_indices = @transform_0, window_bounds = array<i64: 1, 1, 19, 8>}, {transform_indices = @transform_1, window_bounds = array<i64: 1, 1, 19, 8>}, {pipeline_mode = #tpu.pipeline_mode<synchronous>, transform_indices = @transform_2, window_bounds = array<i64: 49, 8, 64>}, {pipeline_mode = #tpu.pipeline_mode<synchronous>, transform_indices = @transform_3, window_bounds = array<i64: 1, 64>}, {transform_indices = @transform_4, window_bounds = array<i64: 1, 1, 16, 64>}]} {
    %c0_i32 = arith.constant 0 : i32
    %0 = arith.cmpi eq, %arg2, %c0_i32 : i32
    %1 = arith.extui %0 : i1 to i32
    %c0_i32_0 = arith.constant 0 : i32
    %2 = arith.cmpi ne, %1, %c0_i32_0 : i32
    scf.if %2 {
      %cst_58 = arith.constant 0.000000e+00 : f32
      %71 = vector.broadcast %cst_58 : f32 to vector<16x64xf32>
      %c0_59 = arith.constant 0 : index
      %c0_60 = arith.constant 0 : index
      %72 = vector.load %arg8[%c0_59, %c0_60] : memref<16x64xf32, #tpu.memory_space<vmem>>, vector<16x64xf32>
      tpu.vector_store %arg8[%c0_59, %c0_60], %71 {strides = array<i32>} : memref<16x64xf32, #tpu.memory_space<vmem>>, vector<16x64xf32>,
    } else {
    }
    %c0 = arith.constant 0 : index
    %c0_1 = arith.constant 0 : index
    %c0_2 = arith.constant 0 : index
    %c0_3 = arith.constant 0 : index
    %3 = vector.load %arg3[%c0, %c0_1, %c0_2, %c0_3] : memref<1x1x19x8xbf16, #tpu.memory_space<vmem>>, vector<1x1x16x8xbf16>
    %4 = vector.shape_cast %3 : vector<1x1x16x8xbf16> to vector<16x8xbf16>
    %c7_i32 = arith.constant 7 : i32
    %5 = arith.muli %arg2, %c7_i32 : i32
    %c0_i32_4 = arith.constant 0 : i32
    %6 = arith.addi %5, %c0_i32_4 : i32
    %7 = arith.index_cast %6 : i32 to index
    %c0_5 = arith.constant 0 : index
    %c0_6 = arith.constant 0 : index
    %8 = vector.load %arg5[%7, %c0_5, %c0_6] : memref<49x8x64xbf16, #tpu.memory_space<vmem>>, vector<1x8x64xbf16>
    %9 = vector.shape_cast %8 : vector<1x8x64xbf16> to vector<8x64xbf16>
    %cst = arith.constant dense<0.000000e+00> : vector<16x64xf32>
    %10 = tpu.matmul %4, %9, %cst {dimension_numbers = #tpu.dot_dimension_numbers<[1], [0], [0], [1], [0, 0, 1, 1], [], []>} : vector<16x8xbf16>, vector<8x64xbf16>, vector<16x64xf32> -> vector<16x64xf32>
    %c0_7 = arith.constant 0 : index
    %c0_8 = arith.constant 0 : index
    %c0_9 = arith.constant 0 : index
    %c0_10 = arith.constant 0 : index
    %11 = vector.load %arg4[%c0_7, %c0_8, %c0_9, %c0_10] : memref<1x1x19x8xbf16, #tpu.memory_space<vmem>>, vector<1x1x16x8xbf16>
    %12 = vector.shape_cast %11 : vector<1x1x16x8xbf16> to vector<16x8xbf16>
    %c7_i32_11 = arith.constant 7 : i32
    %13 = arith.muli %arg2, %c7_i32_11 : i32
    %c1_i32 = arith.constant 1 : i32
    %14 = arith.addi %13, %c1_i32 : i32
    %15 = arith.index_cast %14 : i32 to index
    %c0_12 = arith.constant 0 : index
    %c0_13 = arith.constant 0 : index
    %16 = vector.load %arg5[%15, %c0_12, %c0_13] : memref<49x8x64xbf16, #tpu.memory_space<vmem>>, vector<1x8x64xbf16>
    %17 = vector.shape_cast %16 : vector<1x8x64xbf16> to vector<8x64xbf16>
    %cst_14 = arith.constant dense<0.000000e+00> : vector<16x64xf32>
    %18 = tpu.matmul %12, %17, %cst_14 {dimension_numbers = #tpu.dot_dimension_numbers<[1], [0], [0], [1], [0, 0, 1, 1], [], []>} : vector<16x8xbf16>, vector<8x64xbf16>, vector<16x64xf32> -> vector<16x64xf32>
    %19 = arith.addf %10, %18 : vector<16x64xf32>
    %c0_15 = arith.constant 0 : index
    %c0_16 = arith.constant 0 : index
    %c1 = arith.constant 1 : index
    %c0_17 = arith.constant 0 : index
    %20 = vector.load %arg3[%c0_15, %c0_16, %c1, %c0_17] : memref<1x1x19x8xbf16, #tpu.memory_space<vmem>>, vector<1x1x16x8xbf16>
    %21 = vector.shape_cast %20 : vector<1x1x16x8xbf16> to vector<16x8xbf16>
    %c7_i32_18 = arith.constant 7 : i32
    %22 = arith.muli %arg2, %c7_i32_18 : i32
    %c2_i32 = arith.constant 2 : i32
    %23 = arith.addi %22, %c2_i32 : i32
    %24 = arith.index_cast %23 : i32 to index
    %c0_19 = arith.constant 0 : index
    %c0_20 = arith.constant 0 : index
    %25 = vector.load %arg5[%24, %c0_19, %c0_20] : memref<49x8x64xbf16, #tpu.memory_space<vmem>>, vector<1x8x64xbf16>
    %26 = vector.shape_cast %25 : vector<1x8x64xbf16> to vector<8x64xbf16>
    %cst_21 = arith.constant dense<0.000000e+00> : vector<16x64xf32>
    %27 = tpu.matmul %21, %26, %cst_21 {dimension_numbers = #tpu.dot_dimension_numbers<[1], [0], [0], [1], [0, 0, 1, 1], [], []>} : vector<16x8xbf16>, vector<8x64xbf16>, vector<16x64xf32> -> vector<16x64xf32>
    %28 = arith.addf %19, %27 : vector<16x64xf32>
    %c0_22 = arith.constant 0 : index
    %c0_23 = arith.constant 0 : index
    %c1_24 = arith.constant 1 : index
    %c0_25 = arith.constant 0 : index
    %29 = vector.load %arg4[%c0_22, %c0_23, %c1_24, %c0_25] : memref<1x1x19x8xbf16, #tpu.memory_space<vmem>>, vector<1x1x16x8xbf16>
    %30 = vector.shape_cast %29 : vector<1x1x16x8xbf16> to vector<16x8xbf16>
    %c7_i32_26 = arith.constant 7 : i32
    %31 = arith.muli %arg2, %c7_i32_26 : i32
    %c3_i32 = arith.constant 3 : i32
    %32 = arith.addi %31, %c3_i32 : i32
    %33 = arith.index_cast %32 : i32 to index
    %c0_27 = arith.constant 0 : index
    %c0_28 = arith.constant 0 : index
    %34 = vector.load %arg5[%33, %c0_27, %c0_28] : memref<49x8x64xbf16, #tpu.memory_space<vmem>>, vector<1x8x64xbf16>
    %35 = vector.shape_cast %34 : vector<1x8x64xbf16> to vector<8x64xbf16>
    %cst_29 = arith.constant dense<0.000000e+00> : vector<16x64xf32>
    %36 = tpu.matmul %30, %35, %cst_29 {dimension_numbers = #tpu.dot_dimension_numbers<[1], [0], [0], [1], [0, 0, 1, 1], [], []>} : vector<16x8xbf16>, vector<8x64xbf16>, vector<16x64xf32> -> vector<16x64xf32>
    %37 = arith.addf %28, %36 : vector<16x64xf32>
    %c0_30 = arith.constant 0 : index
    %c0_31 = arith.constant 0 : index
    %c2 = arith.constant 2 : index
    %c0_32 = arith.constant 0 : index
    %38 = vector.load %arg3[%c0_30, %c0_31, %c2, %c0_32] : memref<1x1x19x8xbf16, #tpu.memory_space<vmem>>, vector<1x1x16x8xbf16>
    %39 = vector.shape_cast %38 : vector<1x1x16x8xbf16> to vector<16x8xbf16>
    %c7_i32_33 = arith.constant 7 : i32
    %40 = arith.muli %arg2, %c7_i32_33 : i32
    %c4_i32 = arith.constant 4 : i32
    %41 = arith.addi %40, %c4_i32 : i32
    %42 = arith.index_cast %41 : i32 to index
    %c0_34 = arith.constant 0 : index
    %c0_35 = arith.constant 0 : index
    %43 = vector.load %arg5[%42, %c0_34, %c0_35] : memref<49x8x64xbf16, #tpu.memory_space<vmem>>, vector<1x8x64xbf16>
    %44 = vector.shape_cast %43 : vector<1x8x64xbf16> to vector<8x64xbf16>
    %cst_36 = arith.constant dense<0.000000e+00> : vector<16x64xf32>
    %45 = tpu.matmul %39, %44, %cst_36 {dimension_numbers = #tpu.dot_dimension_numbers<[1], [0], [0], [1], [0, 0, 1, 1], [], []>} : vector<16x8xbf16>, vector<8x64xbf16>, vector<16x64xf32> -> vector<16x64xf32>
    %46 = arith.addf %37, %45 : vector<16x64xf32>
    %c0_37 = arith.constant 0 : index
    %c0_38 = arith.constant 0 : index
    %c2_39 = arith.constant 2 : index
    %c0_40 = arith.constant 0 : index
    %47 = vector.load %arg4[%c0_37, %c0_38, %c2_39, %c0_40] : memref<1x1x19x8xbf16, #tpu.memory_space<vmem>>, vector<1x1x16x8xbf16>
    %48 = vector.shape_cast %47 : vector<1x1x16x8xbf16> to vector<16x8xbf16>
    %c7_i32_41 = arith.constant 7 : i32
    %49 = arith.muli %arg2, %c7_i32_41 : i32
    %c5_i32 = arith.constant 5 : i32
    %50 = arith.addi %49, %c5_i32 : i32
    %51 = arith.index_cast %50 : i32 to index
    %c0_42 = arith.constant 0 : index
    %c0_43 = arith.constant 0 : index
    %52 = vector.load %arg5[%51, %c0_42, %c0_43] : memref<49x8x64xbf16, #tpu.memory_space<vmem>>, vector<1x8x64xbf16>
    %53 = vector.shape_cast %52 : vector<1x8x64xbf16> to vector<8x64xbf16>
    %cst_44 = arith.constant dense<0.000000e+00> : vector<16x64xf32>
    %54 = tpu.matmul %48, %53, %cst_44 {dimension_numbers = #tpu.dot_dimension_numbers<[1], [0], [0], [1], [0, 0, 1, 1], [], []>} : vector<16x8xbf16>, vector<8x64xbf16>, vector<16x64xf32> -> vector<16x64xf32>
    %55 = arith.addf %46, %54 : vector<16x64xf32>
    %c0_45 = arith.constant 0 : index
    %c0_46 = arith.constant 0 : index
    %c3 = arith.constant 3 : index
    %c0_47 = arith.constant 0 : index
    %56 = vector.load %arg3[%c0_45, %c0_46, %c3, %c0_47] : memref<1x1x19x8xbf16, #tpu.memory_space<vmem>>, vector<1x1x16x8xbf16>
    %57 = vector.shape_cast %56 : vector<1x1x16x8xbf16> to vector<16x8xbf16>
    %c7_i32_48 = arith.constant 7 : i32
    %58 = arith.muli %arg2, %c7_i32_48 : i32
    %c6_i32 = arith.constant 6 : i32
    %59 = arith.addi %58, %c6_i32 : i32
    %60 = arith.index_cast %59 : i32 to index
    %c0_49 = arith.constant 0 : index
    %c0_50 = arith.constant 0 : index
    %61 = vector.load %arg5[%60, %c0_49, %c0_50] : memref<49x8x64xbf16, #tpu.memory_space<vmem>>, vector<1x8x64xbf16>
    %62 = vector.shape_cast %61 : vector<1x8x64xbf16> to vector<8x64xbf16>
    %cst_51 = arith.constant dense<0.000000e+00> : vector<16x64xf32>
    %63 = tpu.matmul %57, %62, %cst_51 {dimension_numbers = #tpu.dot_dimension_numbers<[1], [0], [0], [1], [0, 0, 1, 1], [], []>} : vector<16x8xbf16>, vector<8x64xbf16>, vector<16x64xf32> -> vector<16x64xf32>
    %64 = arith.addf %55, %63 : vector<16x64xf32>
    %c0_52 = arith.constant 0 : index
    %c0_53 = arith.constant 0 : index
    %65 = vector.load %arg8[%c0_52, %c0_53] : memref<16x64xf32, #tpu.memory_space<vmem>>, vector<16x64xf32>
    %66 = arith.addf %65, %64 : vector<16x64xf32>
    %c0_54 = arith.constant 0 : index
    %c0_55 = arith.constant 0 : index
    %67 = vector.load %arg8[%c0_54, %c0_55] : memref<16x64xf32, #tpu.memory_space<vmem>>, vector<16x64xf32>
    tpu.vector_store %arg8[%c0_54, %c0_55], %66 {strides = array<i32>} : memref<16x64xf32, #tpu.memory_space<vmem>>, vector<16x64xf32>,
    %c6_i32_56 = arith.constant 6 : i32
    %68 = arith.cmpi eq, %arg2, %c6_i32_56 : i32
    %69 = arith.extui %68 : i1 to i32
    %c0_i32_57 = arith.constant 0 : i32
    %70 = arith.cmpi ne, %69, %c0_i32_57 : i32
    scf.if %70 {
      %c0_58 = arith.constant 0 : index
      %c0_59 = arith.constant 0 : index
      %71 = vector.load %arg8[%c0_58, %c0_59] : memref<16x64xf32, #tpu.memory_space<vmem>>, vector<16x64xf32>
      %c0_60 = arith.constant 0 : index
      %c0_61 = arith.constant 0 : index
      %72 = vector.load %arg6[%c0_60, %c0_61] : memref<1x64xf32, #tpu.memory_space<vmem>>, vector<1x64xf32>
      %73 = vector.broadcast %72 : vector<1x64xf32> to vector<16x64xf32>
      %74 = arith.addf %71, %73 : vector<16x64xf32>
      %cst_62 = arith.constant 0.000000e+00 : f32
      %75 = vector.broadcast %cst_62 : f32 to vector<16x64xf32>
      %76 = arith.maximumf %74, %75 : vector<16x64xf32>
      %77 = arith.truncf %76 : vector<16x64xf32> to vector<16x64xbf16>
      %c0_63 = arith.constant 0 : index
      %c0_64 = arith.constant 0 : index
      %c0_65 = arith.constant 0 : index
      %c0_66 = arith.constant 0 : index
      %78 = vector.load %arg7[%c0_63, %c0_64, %c0_65, %c0_66] : memref<1x1x16x64xbf16, #tpu.memory_space<vmem>>, vector<1x1x16x64xbf16>
      %79 = vector.shape_cast %78 : vector<1x1x16x64xbf16> to vector<16x64xbf16>
      %80 = vector.shape_cast %77 : vector<16x64xbf16> to vector<1x1x16x64xbf16>
      tpu.vector_store %arg7[%c0_63, %c0_64, %c0_65, %c0_66], %80 {strides = array<i32>} : memref<1x1x16x64xbf16, #tpu.memory_space<vmem>>, vector<1x1x16x64xbf16>,
    } else {
    }
    return
  }
  func.func @transform_0(%arg0: i32, %arg1: i32, %arg2: i32) -> (i32, i32, i32, i32) {
    %c2_i32 = arith.constant 2 : i32
    %0 = arith.muli %arg1, %c2_i32 : i32
    %1 = arith.addi %0, %arg2 : i32
    %c0_i32 = arith.constant 0 : i32
    %c0_i32_0 = arith.constant 0 : i32
    %c0_i32_1 = arith.constant 0 : i32
    return %arg0, %1, %c0_i32, %c0_i32_0 : i32, i32, i32, i32
  }
  func.func @transform_1(%arg0: i32, %arg1: i32, %arg2: i32) -> (i32, i32, i32, i32) {
    %c2_i32 = arith.constant 2 : i32
    %0 = arith.muli %arg1, %c2_i32 : i32
    %1 = arith.addi %0, %arg2 : i32
    %c0_i32 = arith.constant 0 : i32
    %c0_i32_0 = arith.constant 0 : i32
    %c0_i32_1 = arith.constant 0 : i32
    return %arg0, %1, %c0_i32, %c0_i32_0 : i32, i32, i32, i32
  }
  func.func @transform_2(%arg0: i32, %arg1: i32, %arg2: i32) -> (i32, i32, i32) {
    %c0_i32 = arith.constant 0 : i32
    %c0_i32_0 = arith.constant 0 : i32
    %c0_i32_1 = arith.constant 0 : i32
    %c0_i32_2 = arith.constant 0 : i32
    return %c0_i32, %c0_i32_0, %c0_i32_1 : i32, i32, i32
  }
  func.func @transform_3(%arg0: i32, %arg1: i32, %arg2: i32) -> (i32, i32) {
    %c0_i32 = arith.constant 0 : i32
    %c0_i32_0 = arith.constant 0 : i32
    %c0_i32_1 = arith.constant 0 : i32
    return %c0_i32, %c0_i32_0 : i32, i32
  }
  func.func @transform_4(%arg0: i32, %arg1: i32, %arg2: i32) -> (i32, i32, i32, i32) {
    %c0_i32 = arith.constant 0 : i32
    %c0_i32_0 = arith.constant 0 : i32
    %c0_i32_1 = arith.constant 0 : i32
    return %arg0, %arg1, %c0_i32, %c0_i32_0 : i32, i32, i32, i32
  }
}

module attributes {stable_mosaic.version = 11 : i64} {
  func.func @_conv_tap_kernel(%arg0: i32, %arg1: i32, %arg2: i32, %arg3: memref<1x1x10x64xbf16, #tpu.memory_space<vmem>>, %arg4: memref<9x64x64xbf16, #tpu.memory_space<vmem>>, %arg5: memref<1x64xf32, #tpu.memory_space<vmem>>, %arg6: memref<1x1x8x64xbf16, #tpu.memory_space<vmem>>, %arg7: memref<1x1x8x64xbf16, #tpu.memory_space<vmem>>, %arg8: memref<8x64xf32, #tpu.memory_space<vmem>>) attributes {dimension_semantics = [#tpu.dimension_semantics<parallel>, #tpu.dimension_semantics<parallel>, #tpu.dimension_semantics<arbitrary>], iteration_bounds = array<i64: 2, 8, 3>, scalar_prefetch = 0 : i64, scratch_operands = 1 : i64, tpu.core_type = #tpu.core_type<tc>, window_params = [{transform_indices = @transform_0, window_bounds = array<i64: 1, 1, 10, 64>}, {pipeline_mode = #tpu.pipeline_mode<synchronous>, transform_indices = @transform_1, window_bounds = array<i64: 9, 64, 64>}, {pipeline_mode = #tpu.pipeline_mode<synchronous>, transform_indices = @transform_2, window_bounds = array<i64: 1, 64>}, {transform_indices = @transform_3, window_bounds = array<i64: 1, 1, 8, 64>}, {transform_indices = @transform_4, window_bounds = array<i64: 1, 1, 8, 64>}]} {
    %c0_i32 = arith.constant 0 : i32
    %0 = arith.cmpi eq, %arg2, %c0_i32 : i32
    %1 = arith.extui %0 : i1 to i32
    %c0_i32_0 = arith.constant 0 : i32
    %2 = arith.cmpi ne, %1, %c0_i32_0 : i32
    scf.if %2 {
      %cst_27 = arith.constant 0.000000e+00 : f32
      %35 = vector.broadcast %cst_27 : f32 to vector<8x64xf32>
      %c0_28 = arith.constant 0 : index
      %c0_29 = arith.constant 0 : index
      %36 = vector.load %arg8[%c0_28, %c0_29] : memref<8x64xf32, #tpu.memory_space<vmem>>, vector<8x64xf32>
      tpu.vector_store %arg8[%c0_28, %c0_29], %35 {strides = array<i32>} : memref<8x64xf32, #tpu.memory_space<vmem>>, vector<8x64xf32>,
    } else {
    }
    %c0 = arith.constant 0 : index
    %c0_1 = arith.constant 0 : index
    %c0_2 = arith.constant 0 : index
    %c0_3 = arith.constant 0 : index
    %3 = vector.load %arg3[%c0, %c0_1, %c0_2, %c0_3] : memref<1x1x10x64xbf16, #tpu.memory_space<vmem>>, vector<1x1x8x64xbf16>
    %4 = vector.shape_cast %3 : vector<1x1x8x64xbf16> to vector<8x64xbf16>
    %c3_i32 = arith.constant 3 : i32
    %5 = arith.muli %arg2, %c3_i32 : i32
    %c0_i32_4 = arith.constant 0 : i32
    %6 = arith.addi %5, %c0_i32_4 : i32
    %7 = arith.index_cast %6 : i32 to index
    %c0_5 = arith.constant 0 : index
    %c0_6 = arith.constant 0 : index
    %8 = vector.load %arg4[%7, %c0_5, %c0_6] : memref<9x64x64xbf16, #tpu.memory_space<vmem>>, vector<1x64x64xbf16>
    %9 = vector.shape_cast %8 : vector<1x64x64xbf16> to vector<64x64xbf16>
    %cst = arith.constant dense<0.000000e+00> : vector<8x64xf32>
    %10 = tpu.matmul %4, %9, %cst {dimension_numbers = #tpu.dot_dimension_numbers<[1], [0], [0], [1], [0, 0, 1, 1], [], []>} : vector<8x64xbf16>, vector<64x64xbf16>, vector<8x64xf32> -> vector<8x64xf32>
    %c0_7 = arith.constant 0 : index
    %c0_8 = arith.constant 0 : index
    %c1 = arith.constant 1 : index
    %c0_9 = arith.constant 0 : index
    %11 = vector.load %arg3[%c0_7, %c0_8, %c1, %c0_9] : memref<1x1x10x64xbf16, #tpu.memory_space<vmem>>, vector<1x1x8x64xbf16>
    %12 = vector.shape_cast %11 : vector<1x1x8x64xbf16> to vector<8x64xbf16>
    %c3_i32_10 = arith.constant 3 : i32
    %13 = arith.muli %arg2, %c3_i32_10 : i32
    %c1_i32 = arith.constant 1 : i32
    %14 = arith.addi %13, %c1_i32 : i32
    %15 = arith.index_cast %14 : i32 to index
    %c0_11 = arith.constant 0 : index
    %c0_12 = arith.constant 0 : index
    %16 = vector.load %arg4[%15, %c0_11, %c0_12] : memref<9x64x64xbf16, #tpu.memory_space<vmem>>, vector<1x64x64xbf16>
    %17 = vector.shape_cast %16 : vector<1x64x64xbf16> to vector<64x64xbf16>
    %cst_13 = arith.constant dense<0.000000e+00> : vector<8x64xf32>
    %18 = tpu.matmul %12, %17, %cst_13 {dimension_numbers = #tpu.dot_dimension_numbers<[1], [0], [0], [1], [0, 0, 1, 1], [], []>} : vector<8x64xbf16>, vector<64x64xbf16>, vector<8x64xf32> -> vector<8x64xf32>
    %19 = arith.addf %10, %18 : vector<8x64xf32>
    %c0_14 = arith.constant 0 : index
    %c0_15 = arith.constant 0 : index
    %c2 = arith.constant 2 : index
    %c0_16 = arith.constant 0 : index
    %20 = vector.load %arg3[%c0_14, %c0_15, %c2, %c0_16] : memref<1x1x10x64xbf16, #tpu.memory_space<vmem>>, vector<1x1x8x64xbf16>
    %21 = vector.shape_cast %20 : vector<1x1x8x64xbf16> to vector<8x64xbf16>
    %c3_i32_17 = arith.constant 3 : i32
    %22 = arith.muli %arg2, %c3_i32_17 : i32
    %c2_i32 = arith.constant 2 : i32
    %23 = arith.addi %22, %c2_i32 : i32
    %24 = arith.index_cast %23 : i32 to index
    %c0_18 = arith.constant 0 : index
    %c0_19 = arith.constant 0 : index
    %25 = vector.load %arg4[%24, %c0_18, %c0_19] : memref<9x64x64xbf16, #tpu.memory_space<vmem>>, vector<1x64x64xbf16>
    %26 = vector.shape_cast %25 : vector<1x64x64xbf16> to vector<64x64xbf16>
    %cst_20 = arith.constant dense<0.000000e+00> : vector<8x64xf32>
    %27 = tpu.matmul %21, %26, %cst_20 {dimension_numbers = #tpu.dot_dimension_numbers<[1], [0], [0], [1], [0, 0, 1, 1], [], []>} : vector<8x64xbf16>, vector<64x64xbf16>, vector<8x64xf32> -> vector<8x64xf32>
    %28 = arith.addf %19, %27 : vector<8x64xf32>
    %c0_21 = arith.constant 0 : index
    %c0_22 = arith.constant 0 : index
    %29 = vector.load %arg8[%c0_21, %c0_22] : memref<8x64xf32, #tpu.memory_space<vmem>>, vector<8x64xf32>
    %30 = arith.addf %29, %28 : vector<8x64xf32>
    %c0_23 = arith.constant 0 : index
    %c0_24 = arith.constant 0 : index
    %31 = vector.load %arg8[%c0_23, %c0_24] : memref<8x64xf32, #tpu.memory_space<vmem>>, vector<8x64xf32>
    tpu.vector_store %arg8[%c0_23, %c0_24], %30 {strides = array<i32>} : memref<8x64xf32, #tpu.memory_space<vmem>>, vector<8x64xf32>,
    %c2_i32_25 = arith.constant 2 : i32
    %32 = arith.cmpi eq, %arg2, %c2_i32_25 : i32
    %33 = arith.extui %32 : i1 to i32
    %c0_i32_26 = arith.constant 0 : i32
    %34 = arith.cmpi ne, %33, %c0_i32_26 : i32
    scf.if %34 {
      %c0_27 = arith.constant 0 : index
      %c0_28 = arith.constant 0 : index
      %35 = vector.load %arg8[%c0_27, %c0_28] : memref<8x64xf32, #tpu.memory_space<vmem>>, vector<8x64xf32>
      %c0_29 = arith.constant 0 : index
      %c0_30 = arith.constant 0 : index
      %36 = vector.load %arg5[%c0_29, %c0_30] : memref<1x64xf32, #tpu.memory_space<vmem>>, vector<1x64xf32>
      %37 = vector.broadcast %36 : vector<1x64xf32> to vector<8x64xf32>
      %38 = arith.addf %35, %37 : vector<8x64xf32>
      %c0_31 = arith.constant 0 : index
      %c0_32 = arith.constant 0 : index
      %c0_33 = arith.constant 0 : index
      %c0_34 = arith.constant 0 : index
      %39 = vector.load %arg6[%c0_31, %c0_32, %c0_33, %c0_34] : memref<1x1x8x64xbf16, #tpu.memory_space<vmem>>, vector<1x1x8x64xbf16>
      %40 = vector.shape_cast %39 : vector<1x1x8x64xbf16> to vector<8x64xbf16>
      %41 = arith.extf %40 : vector<8x64xbf16> to vector<8x64xf32>
      %42 = arith.addf %38, %41 : vector<8x64xf32>
      %cst_35 = arith.constant 0.000000e+00 : f32
      %43 = vector.broadcast %cst_35 : f32 to vector<8x64xf32>
      %44 = arith.maximumf %42, %43 : vector<8x64xf32>
      %45 = arith.truncf %44 : vector<8x64xf32> to vector<8x64xbf16>
      %c0_36 = arith.constant 0 : index
      %c0_37 = arith.constant 0 : index
      %c0_38 = arith.constant 0 : index
      %c0_39 = arith.constant 0 : index
      %46 = vector.load %arg7[%c0_36, %c0_37, %c0_38, %c0_39] : memref<1x1x8x64xbf16, #tpu.memory_space<vmem>>, vector<1x1x8x64xbf16>
      %47 = vector.shape_cast %46 : vector<1x1x8x64xbf16> to vector<8x64xbf16>
      %48 = vector.shape_cast %45 : vector<8x64xbf16> to vector<1x1x8x64xbf16>
      tpu.vector_store %arg7[%c0_36, %c0_37, %c0_38, %c0_39], %48 {strides = array<i32>} : memref<1x1x8x64xbf16, #tpu.memory_space<vmem>>, vector<1x1x8x64xbf16>,
    } else {
    }
    return
  }
  func.func @transform_0(%arg0: i32, %arg1: i32, %arg2: i32) -> (i32, i32, i32, i32) {
    %c1_i32 = arith.constant 1 : i32
    %0 = arith.muli %arg1, %c1_i32 : i32
    %1 = arith.addi %0, %arg2 : i32
    %c0_i32 = arith.constant 0 : i32
    %c0_i32_0 = arith.constant 0 : i32
    %c0_i32_1 = arith.constant 0 : i32
    return %arg0, %1, %c0_i32, %c0_i32_0 : i32, i32, i32, i32
  }
  func.func @transform_1(%arg0: i32, %arg1: i32, %arg2: i32) -> (i32, i32, i32) {
    %c0_i32 = arith.constant 0 : i32
    %c0_i32_0 = arith.constant 0 : i32
    %c0_i32_1 = arith.constant 0 : i32
    %c0_i32_2 = arith.constant 0 : i32
    return %c0_i32, %c0_i32_0, %c0_i32_1 : i32, i32, i32
  }
  func.func @transform_2(%arg0: i32, %arg1: i32, %arg2: i32) -> (i32, i32) {
    %c0_i32 = arith.constant 0 : i32
    %c0_i32_0 = arith.constant 0 : i32
    %c0_i32_1 = arith.constant 0 : i32
    return %c0_i32, %c0_i32_0 : i32, i32
  }
  func.func @transform_3(%arg0: i32, %arg1: i32, %arg2: i32) -> (i32, i32, i32, i32) {
    %c0_i32 = arith.constant 0 : i32
    %c0_i32_0 = arith.constant 0 : i32
    %c0_i32_1 = arith.constant 0 : i32
    return %arg0, %arg1, %c0_i32, %c0_i32_0 : i32, i32, i32, i32
  }
  func.func @transform_4(%arg0: i32, %arg1: i32, %arg2: i32) -> (i32, i32, i32, i32) {
    %c0_i32 = arith.constant 0 : i32
    %c0_i32_0 = arith.constant 0 : i32
    %c0_i32_1 = arith.constant 0 : i32
    return %arg0, %arg1, %c0_i32, %c0_i32_0 : i32, i32, i32, i32
  }
}

module attributes {stable_mosaic.version = 11 : i64} {
  func.func @_conv_tap_kernel(%arg0: i32, %arg1: i32, %arg2: i32, %arg3: memref<1x1x10x64xbf16, #tpu.memory_space<vmem>>, %arg4: memref<9x64x64xbf16, #tpu.memory_space<vmem>>, %arg5: memref<1x64xf32, #tpu.memory_space<vmem>>, %arg6: memref<1x1x8x64xbf16, #tpu.memory_space<vmem>>, %arg7: memref<8x64xf32, #tpu.memory_space<vmem>>) attributes {dimension_semantics = [#tpu.dimension_semantics<parallel>, #tpu.dimension_semantics<parallel>, #tpu.dimension_semantics<arbitrary>], iteration_bounds = array<i64: 2, 8, 3>, scalar_prefetch = 0 : i64, scratch_operands = 1 : i64, tpu.core_type = #tpu.core_type<tc>, window_params = [{transform_indices = @transform_0, window_bounds = array<i64: 1, 1, 10, 64>}, {pipeline_mode = #tpu.pipeline_mode<synchronous>, transform_indices = @transform_1, window_bounds = array<i64: 9, 64, 64>}, {pipeline_mode = #tpu.pipeline_mode<synchronous>, transform_indices = @transform_2, window_bounds = array<i64: 1, 64>}, {transform_indices = @transform_3, window_bounds = array<i64: 1, 1, 8, 64>}]} {
    %c0_i32 = arith.constant 0 : i32
    %0 = arith.cmpi eq, %arg2, %c0_i32 : i32
    %1 = arith.extui %0 : i1 to i32
    %c0_i32_0 = arith.constant 0 : i32
    %2 = arith.cmpi ne, %1, %c0_i32_0 : i32
    scf.if %2 {
      %cst_27 = arith.constant 0.000000e+00 : f32
      %35 = vector.broadcast %cst_27 : f32 to vector<8x64xf32>
      %c0_28 = arith.constant 0 : index
      %c0_29 = arith.constant 0 : index
      %36 = vector.load %arg7[%c0_28, %c0_29] : memref<8x64xf32, #tpu.memory_space<vmem>>, vector<8x64xf32>
      tpu.vector_store %arg7[%c0_28, %c0_29], %35 {strides = array<i32>} : memref<8x64xf32, #tpu.memory_space<vmem>>, vector<8x64xf32>,
    } else {
    }
    %c0 = arith.constant 0 : index
    %c0_1 = arith.constant 0 : index
    %c0_2 = arith.constant 0 : index
    %c0_3 = arith.constant 0 : index
    %3 = vector.load %arg3[%c0, %c0_1, %c0_2, %c0_3] : memref<1x1x10x64xbf16, #tpu.memory_space<vmem>>, vector<1x1x8x64xbf16>
    %4 = vector.shape_cast %3 : vector<1x1x8x64xbf16> to vector<8x64xbf16>
    %c3_i32 = arith.constant 3 : i32
    %5 = arith.muli %arg2, %c3_i32 : i32
    %c0_i32_4 = arith.constant 0 : i32
    %6 = arith.addi %5, %c0_i32_4 : i32
    %7 = arith.index_cast %6 : i32 to index
    %c0_5 = arith.constant 0 : index
    %c0_6 = arith.constant 0 : index
    %8 = vector.load %arg4[%7, %c0_5, %c0_6] : memref<9x64x64xbf16, #tpu.memory_space<vmem>>, vector<1x64x64xbf16>
    %9 = vector.shape_cast %8 : vector<1x64x64xbf16> to vector<64x64xbf16>
    %cst = arith.constant dense<0.000000e+00> : vector<8x64xf32>
    %10 = tpu.matmul %4, %9, %cst {dimension_numbers = #tpu.dot_dimension_numbers<[1], [0], [0], [1], [0, 0, 1, 1], [], []>} : vector<8x64xbf16>, vector<64x64xbf16>, vector<8x64xf32> -> vector<8x64xf32>
    %c0_7 = arith.constant 0 : index
    %c0_8 = arith.constant 0 : index
    %c1 = arith.constant 1 : index
    %c0_9 = arith.constant 0 : index
    %11 = vector.load %arg3[%c0_7, %c0_8, %c1, %c0_9] : memref<1x1x10x64xbf16, #tpu.memory_space<vmem>>, vector<1x1x8x64xbf16>
    %12 = vector.shape_cast %11 : vector<1x1x8x64xbf16> to vector<8x64xbf16>
    %c3_i32_10 = arith.constant 3 : i32
    %13 = arith.muli %arg2, %c3_i32_10 : i32
    %c1_i32 = arith.constant 1 : i32
    %14 = arith.addi %13, %c1_i32 : i32
    %15 = arith.index_cast %14 : i32 to index
    %c0_11 = arith.constant 0 : index
    %c0_12 = arith.constant 0 : index
    %16 = vector.load %arg4[%15, %c0_11, %c0_12] : memref<9x64x64xbf16, #tpu.memory_space<vmem>>, vector<1x64x64xbf16>
    %17 = vector.shape_cast %16 : vector<1x64x64xbf16> to vector<64x64xbf16>
    %cst_13 = arith.constant dense<0.000000e+00> : vector<8x64xf32>
    %18 = tpu.matmul %12, %17, %cst_13 {dimension_numbers = #tpu.dot_dimension_numbers<[1], [0], [0], [1], [0, 0, 1, 1], [], []>} : vector<8x64xbf16>, vector<64x64xbf16>, vector<8x64xf32> -> vector<8x64xf32>
    %19 = arith.addf %10, %18 : vector<8x64xf32>
    %c0_14 = arith.constant 0 : index
    %c0_15 = arith.constant 0 : index
    %c2 = arith.constant 2 : index
    %c0_16 = arith.constant 0 : index
    %20 = vector.load %arg3[%c0_14, %c0_15, %c2, %c0_16] : memref<1x1x10x64xbf16, #tpu.memory_space<vmem>>, vector<1x1x8x64xbf16>
    %21 = vector.shape_cast %20 : vector<1x1x8x64xbf16> to vector<8x64xbf16>
    %c3_i32_17 = arith.constant 3 : i32
    %22 = arith.muli %arg2, %c3_i32_17 : i32
    %c2_i32 = arith.constant 2 : i32
    %23 = arith.addi %22, %c2_i32 : i32
    %24 = arith.index_cast %23 : i32 to index
    %c0_18 = arith.constant 0 : index
    %c0_19 = arith.constant 0 : index
    %25 = vector.load %arg4[%24, %c0_18, %c0_19] : memref<9x64x64xbf16, #tpu.memory_space<vmem>>, vector<1x64x64xbf16>
    %26 = vector.shape_cast %25 : vector<1x64x64xbf16> to vector<64x64xbf16>
    %cst_20 = arith.constant dense<0.000000e+00> : vector<8x64xf32>
    %27 = tpu.matmul %21, %26, %cst_20 {dimension_numbers = #tpu.dot_dimension_numbers<[1], [0], [0], [1], [0, 0, 1, 1], [], []>} : vector<8x64xbf16>, vector<64x64xbf16>, vector<8x64xf32> -> vector<8x64xf32>
    %28 = arith.addf %19, %27 : vector<8x64xf32>
    %c0_21 = arith.constant 0 : index
    %c0_22 = arith.constant 0 : index
    %29 = vector.load %arg7[%c0_21, %c0_22] : memref<8x64xf32, #tpu.memory_space<vmem>>, vector<8x64xf32>
    %30 = arith.addf %29, %28 : vector<8x64xf32>
    %c0_23 = arith.constant 0 : index
    %c0_24 = arith.constant 0 : index
    %31 = vector.load %arg7[%c0_23, %c0_24] : memref<8x64xf32, #tpu.memory_space<vmem>>, vector<8x64xf32>
    tpu.vector_store %arg7[%c0_23, %c0_24], %30 {strides = array<i32>} : memref<8x64xf32, #tpu.memory_space<vmem>>, vector<8x64xf32>,
    %c2_i32_25 = arith.constant 2 : i32
    %32 = arith.cmpi eq, %arg2, %c2_i32_25 : i32
    %33 = arith.extui %32 : i1 to i32
    %c0_i32_26 = arith.constant 0 : i32
    %34 = arith.cmpi ne, %33, %c0_i32_26 : i32
    scf.if %34 {
      %c0_27 = arith.constant 0 : index
      %c0_28 = arith.constant 0 : index
      %35 = vector.load %arg7[%c0_27, %c0_28] : memref<8x64xf32, #tpu.memory_space<vmem>>, vector<8x64xf32>
      %c0_29 = arith.constant 0 : index
      %c0_30 = arith.constant 0 : index
      %36 = vector.load %arg5[%c0_29, %c0_30] : memref<1x64xf32, #tpu.memory_space<vmem>>, vector<1x64xf32>
      %37 = vector.broadcast %36 : vector<1x64xf32> to vector<8x64xf32>
      %38 = arith.addf %35, %37 : vector<8x64xf32>
      %cst_31 = arith.constant 0.000000e+00 : f32
      %39 = vector.broadcast %cst_31 : f32 to vector<8x64xf32>
      %40 = arith.maximumf %38, %39 : vector<8x64xf32>
      %41 = arith.truncf %40 : vector<8x64xf32> to vector<8x64xbf16>
      %c0_32 = arith.constant 0 : index
      %c0_33 = arith.constant 0 : index
      %c0_34 = arith.constant 0 : index
      %c0_35 = arith.constant 0 : index
      %42 = vector.load %arg6[%c0_32, %c0_33, %c0_34, %c0_35] : memref<1x1x8x64xbf16, #tpu.memory_space<vmem>>, vector<1x1x8x64xbf16>
      %43 = vector.shape_cast %42 : vector<1x1x8x64xbf16> to vector<8x64xbf16>
      %44 = vector.shape_cast %41 : vector<8x64xbf16> to vector<1x1x8x64xbf16>
      tpu.vector_store %arg6[%c0_32, %c0_33, %c0_34, %c0_35], %44 {strides = array<i32>} : memref<1x1x8x64xbf16, #tpu.memory_space<vmem>>, vector<1x1x8x64xbf16>,
    } else {
    }
    return
  }
  func.func @transform_0(%arg0: i32, %arg1: i32, %arg2: i32) -> (i32, i32, i32, i32) {
    %c1_i32 = arith.constant 1 : i32
    %0 = arith.muli %arg1, %c1_i32 : i32
    %1 = arith.addi %0, %arg2 : i32
    %c0_i32 = arith.constant 0 : i32
    %c0_i32_0 = arith.constant 0 : i32
    %c0_i32_1 = arith.constant 0 : i32
    return %arg0, %1, %c0_i32, %c0_i32_0 : i32, i32, i32, i32
  }
  func.func @transform_1(%arg0: i32, %arg1: i32, %arg2: i32) -> (i32, i32, i32) {
    %c0_i32 = arith.constant 0 : i32
    %c0_i32_0 = arith.constant 0 : i32
    %c0_i32_1 = arith.constant 0 : i32
    %c0_i32_2 = arith.constant 0 : i32
    return %c0_i32, %c0_i32_0, %c0_i32_1 : i32, i32, i32
  }
  func.func @transform_2(%arg0: i32, %arg1: i32, %arg2: i32) -> (i32, i32) {
    %c0_i32 = arith.constant 0 : i32
    %c0_i32_0 = arith.constant 0 : i32
    %c0_i32_1 = arith.constant 0 : i32
    return %c0_i32, %c0_i32_0 : i32, i32
  }
  func.func @transform_3(%arg0: i32, %arg1: i32, %arg2: i32) -> (i32, i32, i32, i32) {
    %c0_i32 = arith.constant 0 : i32
    %c0_i32_0 = arith.constant 0 : i32
    %c0_i32_1 = arith.constant 0 : i32
    return %arg0, %arg1, %c0_i32, %c0_i32_0 : i32, i32, i32, i32
  }
}

module attributes {stable_mosaic.version = 11 : i64} {
  func.func @_gemm_bias_kernel(%arg0: i32, %arg1: memref<128x64xbf16, #tpu.memory_space<vmem>>, %arg2: memref<64x128xbf16, #tpu.memory_space<vmem>>, %arg3: memref<1x128xf32, #tpu.memory_space<vmem>>, %arg4: memref<128x128xf32, #tpu.memory_space<vmem>>) attributes {dimension_semantics = [#tpu.dimension_semantics<parallel>], iteration_bounds = array<i64: 1>, scalar_prefetch = 0 : i64, scratch_operands = 0 : i64, tpu.core_type = #tpu.core_type<tc>, window_params = [{transform_indices = @transform_0, window_bounds = array<i64: 128, 64>}, {pipeline_mode = #tpu.pipeline_mode<synchronous>, transform_indices = @transform_1, window_bounds = array<i64: 64, 128>}, {pipeline_mode = #tpu.pipeline_mode<synchronous>, transform_indices = @transform_2, window_bounds = array<i64: 1, 128>}, {transform_indices = @transform_3, window_bounds = array<i64: 128, 128>}]} {
    %c0 = arith.constant 0 : index
    %c0_0 = arith.constant 0 : index
    %0 = vector.load %arg1[%c0, %c0_0] : memref<128x64xbf16, #tpu.memory_space<vmem>>, vector<128x64xbf16>
    %c0_1 = arith.constant 0 : index
    %c0_2 = arith.constant 0 : index
    %1 = vector.load %arg2[%c0_1, %c0_2] : memref<64x128xbf16, #tpu.memory_space<vmem>>, vector<64x128xbf16>
    %cst = arith.constant dense<0.000000e+00> : vector<128x128xf32>
    %2 = tpu.matmul %0, %1, %cst {dimension_numbers = #tpu.dot_dimension_numbers<[1], [0], [0], [1], [0, 0, 1, 1], [], []>} : vector<128x64xbf16>, vector<64x128xbf16>, vector<128x128xf32> -> vector<128x128xf32>
    %c0_3 = arith.constant 0 : index
    %c0_4 = arith.constant 0 : index
    %3 = vector.load %arg3[%c0_3, %c0_4] : memref<1x128xf32, #tpu.memory_space<vmem>>, vector<1x128xf32>
    %4 = vector.broadcast %3 : vector<1x128xf32> to vector<128x128xf32>
    %5 = arith.addf %2, %4 : vector<128x128xf32>
    %c0_5 = arith.constant 0 : index
    %c0_6 = arith.constant 0 : index
    %6 = vector.load %arg4[%c0_5, %c0_6] : memref<128x128xf32, #tpu.memory_space<vmem>>, vector<128x128xf32>
    tpu.vector_store %arg4[%c0_5, %c0_6], %5 {strides = array<i32>} : memref<128x128xf32, #tpu.memory_space<vmem>>, vector<128x128xf32>,
    return
  }
  func.func @transform_0(%arg0: i32) -> (i32, i32) {
    %c0_i32 = arith.constant 0 : i32
    %c0_i32_0 = arith.constant 0 : i32
    return %arg0, %c0_i32 : i32, i32
  }
  func.func @transform_1(%arg0: i32) -> (i32, i32) {
    %c0_i32 = arith.constant 0 : i32
    %c0_i32_0 = arith.constant 0 : i32
    %c0_i32_1 = arith.constant 0 : i32
    return %c0_i32, %c0_i32_0 : i32, i32
  }
  func.func @transform_2(%arg0: i32) -> (i32, i32) {
    %c0_i32 = arith.constant 0 : i32
    %c0_i32_0 = arith.constant 0 : i32
    %c0_i32_1 = arith.constant 0 : i32
    return %c0_i32, %c0_i32_0 : i32, i32
  }
  func.func @transform_3(%arg0: i32) -> (i32, i32) {
    %c0_i32 = arith.constant 0 : i32
    %c0_i32_0 = arith.constant 0 : i32
    return %arg0, %c0_i32 : i32, i32
  }
}

module attributes {stable_mosaic.version = 11 : i64} {
  func.func @_conv_tap_kernel(%arg0: i32, %arg1: i32, %arg2: i32, %arg3: memref<1x1x5x64xbf16, #tpu.memory_space<vmem>>, %arg4: memref<1x1x5x64xbf16, #tpu.memory_space<vmem>>, %arg5: memref<9x64x256xbf16, #tpu.memory_space<vmem>>, %arg6: memref<1x256xf32, #tpu.memory_space<vmem>>, %arg7: memref<1x256xf32, #tpu.memory_space<vmem>>, %arg8: memref<1x1x4x256xbf16, #tpu.memory_space<vmem>>, %arg9: memref<4x256xf32, #tpu.memory_space<vmem>>) attributes {dimension_semantics = [#tpu.dimension_semantics<parallel>, #tpu.dimension_semantics<parallel>, #tpu.dimension_semantics<arbitrary>], iteration_bounds = array<i64: 2, 4, 3>, scalar_prefetch = 0 : i64, scratch_operands = 1 : i64, tpu.core_type = #tpu.core_type<tc>, window_params = [{transform_indices = @transform_0, window_bounds = array<i64: 1, 1, 5, 64>}, {transform_indices = @transform_1, window_bounds = array<i64: 1, 1, 5, 64>}, {pipeline_mode = #tpu.pipeline_mode<synchronous>, transform_indices = @transform_2, window_bounds = array<i64: 9, 64, 256>}, {pipeline_mode = #tpu.pipeline_mode<synchronous>, transform_indices = @transform_3, window_bounds = array<i64: 1, 256>}, {pipeline_mode = #tpu.pipeline_mode<synchronous>, transform_indices = @transform_4, window_bounds = array<i64: 1, 256>}, {transform_indices = @transform_5, window_bounds = array<i64: 1, 1, 4, 256>}]} {
    %c0_i32 = arith.constant 0 : i32
    %0 = arith.cmpi eq, %arg2, %c0_i32 : i32
    %1 = arith.extui %0 : i1 to i32
    %c0_i32_0 = arith.constant 0 : i32
    %2 = arith.cmpi ne, %1, %c0_i32_0 : i32
    scf.if %2 {
      %cst_28 = arith.constant 0.000000e+00 : f32
      %35 = vector.broadcast %cst_28 : f32 to vector<4x256xf32>
      %c0_29 = arith.constant 0 : index
      %c0_30 = arith.constant 0 : index
      %36 = vector.load %arg9[%c0_29, %c0_30] : memref<4x256xf32, #tpu.memory_space<vmem>>, vector<4x256xf32>
      tpu.vector_store %arg9[%c0_29, %c0_30], %35 {strides = array<i32>} : memref<4x256xf32, #tpu.memory_space<vmem>>, vector<4x256xf32>,
    } else {
    }
    %c0 = arith.constant 0 : index
    %c0_1 = arith.constant 0 : index
    %c0_2 = arith.constant 0 : index
    %c0_3 = arith.constant 0 : index
    %3 = vector.load %arg3[%c0, %c0_1, %c0_2, %c0_3] : memref<1x1x5x64xbf16, #tpu.memory_space<vmem>>, vector<1x1x4x64xbf16>
    %4 = vector.shape_cast %3 : vector<1x1x4x64xbf16> to vector<4x64xbf16>
    %c3_i32 = arith.constant 3 : i32
    %5 = arith.muli %arg2, %c3_i32 : i32
    %c0_i32_4 = arith.constant 0 : i32
    %6 = arith.addi %5, %c0_i32_4 : i32
    %7 = arith.index_cast %6 : i32 to index
    %c0_5 = arith.constant 0 : index
    %c0_6 = arith.constant 0 : index
    %8 = vector.load %arg5[%7, %c0_5, %c0_6] : memref<9x64x256xbf16, #tpu.memory_space<vmem>>, vector<1x64x256xbf16>
    %9 = vector.shape_cast %8 : vector<1x64x256xbf16> to vector<64x256xbf16>
    %cst = arith.constant dense<0.000000e+00> : vector<4x256xf32>
    %10 = tpu.matmul %4, %9, %cst {dimension_numbers = #tpu.dot_dimension_numbers<[1], [0], [0], [1], [0, 0, 1, 1], [], []>} : vector<4x64xbf16>, vector<64x256xbf16>, vector<4x256xf32> -> vector<4x256xf32>
    %c0_7 = arith.constant 0 : index
    %c0_8 = arith.constant 0 : index
    %c0_9 = arith.constant 0 : index
    %c0_10 = arith.constant 0 : index
    %11 = vector.load %arg4[%c0_7, %c0_8, %c0_9, %c0_10] : memref<1x1x5x64xbf16, #tpu.memory_space<vmem>>, vector<1x1x4x64xbf16>
    %12 = vector.shape_cast %11 : vector<1x1x4x64xbf16> to vector<4x64xbf16>
    %c3_i32_11 = arith.constant 3 : i32
    %13 = arith.muli %arg2, %c3_i32_11 : i32
    %c1_i32 = arith.constant 1 : i32
    %14 = arith.addi %13, %c1_i32 : i32
    %15 = arith.index_cast %14 : i32 to index
    %c0_12 = arith.constant 0 : index
    %c0_13 = arith.constant 0 : index
    %16 = vector.load %arg5[%15, %c0_12, %c0_13] : memref<9x64x256xbf16, #tpu.memory_space<vmem>>, vector<1x64x256xbf16>
    %17 = vector.shape_cast %16 : vector<1x64x256xbf16> to vector<64x256xbf16>
    %cst_14 = arith.constant dense<0.000000e+00> : vector<4x256xf32>
    %18 = tpu.matmul %12, %17, %cst_14 {dimension_numbers = #tpu.dot_dimension_numbers<[1], [0], [0], [1], [0, 0, 1, 1], [], []>} : vector<4x64xbf16>, vector<64x256xbf16>, vector<4x256xf32> -> vector<4x256xf32>
    %19 = arith.addf %10, %18 : vector<4x256xf32>
    %c0_15 = arith.constant 0 : index
    %c0_16 = arith.constant 0 : index
    %c1 = arith.constant 1 : index
    %c0_17 = arith.constant 0 : index
    %20 = vector.load %arg3[%c0_15, %c0_16, %c1, %c0_17] : memref<1x1x5x64xbf16, #tpu.memory_space<vmem>>, vector<1x1x4x64xbf16>
    %21 = vector.shape_cast %20 : vector<1x1x4x64xbf16> to vector<4x64xbf16>
    %c3_i32_18 = arith.constant 3 : i32
    %22 = arith.muli %arg2, %c3_i32_18 : i32
    %c2_i32 = arith.constant 2 : i32
    %23 = arith.addi %22, %c2_i32 : i32
    %24 = arith.index_cast %23 : i32 to index
    %c0_19 = arith.constant 0 : index
    %c0_20 = arith.constant 0 : index
    %25 = vector.load %arg5[%24, %c0_19, %c0_20] : memref<9x64x256xbf16, #tpu.memory_space<vmem>>, vector<1x64x256xbf16>
    %26 = vector.shape_cast %25 : vector<1x64x256xbf16> to vector<64x256xbf16>
    %cst_21 = arith.constant dense<0.000000e+00> : vector<4x256xf32>
    %27 = tpu.matmul %21, %26, %cst_21 {dimension_numbers = #tpu.dot_dimension_numbers<[1], [0], [0], [1], [0, 0, 1, 1], [], []>} : vector<4x64xbf16>, vector<64x256xbf16>, vector<4x256xf32> -> vector<4x256xf32>
    %28 = arith.addf %19, %27 : vector<4x256xf32>
    %c0_22 = arith.constant 0 : index
    %c0_23 = arith.constant 0 : index
    %29 = vector.load %arg9[%c0_22, %c0_23] : memref<4x256xf32, #tpu.memory_space<vmem>>, vector<4x256xf32>
    %30 = arith.addf %29, %28 : vector<4x256xf32>
    %c0_24 = arith.constant 0 : index
    %c0_25 = arith.constant 0 : index
    %31 = vector.load %arg9[%c0_24, %c0_25] : memref<4x256xf32, #tpu.memory_space<vmem>>, vector<4x256xf32>
    tpu.vector_store %arg9[%c0_24, %c0_25], %30 {strides = array<i32>} : memref<4x256xf32, #tpu.memory_space<vmem>>, vector<4x256xf32>,
    %c2_i32_26 = arith.constant 2 : i32
    %32 = arith.cmpi eq, %arg2, %c2_i32_26 : i32
    %33 = arith.extui %32 : i1 to i32
    %c0_i32_27 = arith.constant 0 : i32
    %34 = arith.cmpi ne, %33, %c0_i32_27 : i32
    scf.if %34 {
      %c0_28 = arith.constant 0 : index
      %c0_29 = arith.constant 0 : index
      %35 = vector.load %arg9[%c0_28, %c0_29] : memref<4x256xf32, #tpu.memory_space<vmem>>, vector<4x256xf32>
      %c0_30 = arith.constant 0 : index
      %c0_31 = arith.constant 0 : index
      %36 = vector.load %arg6[%c0_30, %c0_31] : memref<1x256xf32, #tpu.memory_space<vmem>>, vector<1x256xf32>
      %37 = vector.broadcast %36 : vector<1x256xf32> to vector<4x256xf32>
      %38 = arith.addf %35, %37 : vector<4x256xf32>
      %cst_32 = arith.constant 0.000000e+00 : f32
      %39 = vector.broadcast %cst_32 : f32 to vector<4x256xf32>
      %40 = arith.cmpf ogt, %38, %39 : vector<4x256xf32>
      %c0_33 = arith.constant 0 : index
      %c0_34 = arith.constant 0 : index
      %41 = vector.load %arg7[%c0_33, %c0_34] : memref<1x256xf32, #tpu.memory_space<vmem>>, vector<1x256xf32>
      %42 = vector.broadcast %41 : vector<1x256xf32> to vector<4x256xf32>
      %43 = arith.mulf %42, %38 : vector<4x256xf32>
      %44 = arith.select %40, %38, %43 : vector<4x256xi1>, vector<4x256xf32>
      %45 = arith.truncf %44 : vector<4x256xf32> to vector<4x256xbf16>
      %c0_35 = arith.constant 0 : index
      %c0_36 = arith.constant 0 : index
      %c0_37 = arith.constant 0 : index
      %c0_38 = arith.constant 0 : index
      %46 = vector.load %arg8[%c0_35, %c0_36, %c0_37, %c0_38] : memref<1x1x4x256xbf16, #tpu.memory_space<vmem>>, vector<1x1x4x256xbf16>
      %47 = vector.shape_cast %46 : vector<1x1x4x256xbf16> to vector<4x256xbf16>
      %48 = vector.shape_cast %45 : vector<4x256xbf16> to vector<1x1x4x256xbf16>
      tpu.vector_store %arg8[%c0_35, %c0_36, %c0_37, %c0_38], %48 {strides = array<i32>} : memref<1x1x4x256xbf16, #tpu.memory_space<vmem>>, vector<1x1x4x256xbf16>,
    } else {
    }
    return
  }
  func.func @transform_0(%arg0: i32, %arg1: i32, %arg2: i32) -> (i32, i32, i32, i32) {
    %c2_i32 = arith.constant 2 : i32
    %0 = arith.muli %arg1, %c2_i32 : i32
    %1 = arith.addi %0, %arg2 : i32
    %c0_i32 = arith.constant 0 : i32
    %c0_i32_0 = arith.constant 0 : i32
    %c0_i32_1 = arith.constant 0 : i32
    return %arg0, %1, %c0_i32, %c0_i32_0 : i32, i32, i32, i32
  }
  func.func @transform_1(%arg0: i32, %arg1: i32, %arg2: i32) -> (i32, i32, i32, i32) {
    %c2_i32 = arith.constant 2 : i32
    %0 = arith.muli %arg1, %c2_i32 : i32
    %1 = arith.addi %0, %arg2 : i32
    %c0_i32 = arith.constant 0 : i32
    %c0_i32_0 = arith.constant 0 : i32
    %c0_i32_1 = arith.constant 0 : i32
    return %arg0, %1, %c0_i32, %c0_i32_0 : i32, i32, i32, i32
  }
  func.func @transform_2(%arg0: i32, %arg1: i32, %arg2: i32) -> (i32, i32, i32) {
    %c0_i32 = arith.constant 0 : i32
    %c0_i32_0 = arith.constant 0 : i32
    %c0_i32_1 = arith.constant 0 : i32
    %c0_i32_2 = arith.constant 0 : i32
    return %c0_i32, %c0_i32_0, %c0_i32_1 : i32, i32, i32
  }
  func.func @transform_3(%arg0: i32, %arg1: i32, %arg2: i32) -> (i32, i32) {
    %c0_i32 = arith.constant 0 : i32
    %c0_i32_0 = arith.constant 0 : i32
    %c0_i32_1 = arith.constant 0 : i32
    return %c0_i32, %c0_i32_0 : i32, i32
  }
  func.func @transform_4(%arg0: i32, %arg1: i32, %arg2: i32) -> (i32, i32) {
    %c0_i32 = arith.constant 0 : i32
    %c0_i32_0 = arith.constant 0 : i32
    %c0_i32_1 = arith.constant 0 : i32
    return %c0_i32, %c0_i32_0 : i32, i32
  }
  func.func @transform_5(%arg0: i32, %arg1: i32, %arg2: i32) -> (i32, i32, i32, i32) {
    %c0_i32 = arith.constant 0 : i32
    %c0_i32_0 = arith.constant 0 : i32
    %c0_i32_1 = arith.constant 0 : i32
    return %arg0, %arg1, %c0_i32, %c0_i32_0 : i32, i32, i32, i32
  }
}

module attributes {stable_mosaic.version = 11 : i64} {
  func.func @_conv_tap_kernel(%arg0: i32, %arg1: i32, %arg2: i32, %arg3: memref<1x1x6x128xbf16, #tpu.memory_space<vmem>>, %arg4: memref<9x128x128xbf16, #tpu.memory_space<vmem>>, %arg5: memref<1x128xf32, #tpu.memory_space<vmem>>, %arg6: memref<1x1x4x128xbf16, #tpu.memory_space<vmem>>, %arg7: memref<1x1x4x128xbf16, #tpu.memory_space<vmem>>, %arg8: memref<4x128xf32, #tpu.memory_space<vmem>>) attributes {dimension_semantics = [#tpu.dimension_semantics<parallel>, #tpu.dimension_semantics<parallel>, #tpu.dimension_semantics<arbitrary>], iteration_bounds = array<i64: 2, 4, 3>, scalar_prefetch = 0 : i64, scratch_operands = 1 : i64, tpu.core_type = #tpu.core_type<tc>, window_params = [{transform_indices = @transform_0, window_bounds = array<i64: 1, 1, 6, 128>}, {pipeline_mode = #tpu.pipeline_mode<synchronous>, transform_indices = @transform_1, window_bounds = array<i64: 9, 128, 128>}, {pipeline_mode = #tpu.pipeline_mode<synchronous>, transform_indices = @transform_2, window_bounds = array<i64: 1, 128>}, {transform_indices = @transform_3, window_bounds = array<i64: 1, 1, 4, 128>}, {transform_indices = @transform_4, window_bounds = array<i64: 1, 1, 4, 128>}]} {
    %c0_i32 = arith.constant 0 : i32
    %0 = arith.cmpi eq, %arg2, %c0_i32 : i32
    %1 = arith.extui %0 : i1 to i32
    %c0_i32_0 = arith.constant 0 : i32
    %2 = arith.cmpi ne, %1, %c0_i32_0 : i32
    scf.if %2 {
      %cst_27 = arith.constant 0.000000e+00 : f32
      %35 = vector.broadcast %cst_27 : f32 to vector<4x128xf32>
      %c0_28 = arith.constant 0 : index
      %c0_29 = arith.constant 0 : index
      %36 = vector.load %arg8[%c0_28, %c0_29] : memref<4x128xf32, #tpu.memory_space<vmem>>, vector<4x128xf32>
      tpu.vector_store %arg8[%c0_28, %c0_29], %35 {strides = array<i32>} : memref<4x128xf32, #tpu.memory_space<vmem>>, vector<4x128xf32>,
    } else {
    }
    %c0 = arith.constant 0 : index
    %c0_1 = arith.constant 0 : index
    %c0_2 = arith.constant 0 : index
    %c0_3 = arith.constant 0 : index
    %3 = vector.load %arg3[%c0, %c0_1, %c0_2, %c0_3] : memref<1x1x6x128xbf16, #tpu.memory_space<vmem>>, vector<1x1x4x128xbf16>
    %4 = vector.shape_cast %3 : vector<1x1x4x128xbf16> to vector<4x128xbf16>
    %c3_i32 = arith.constant 3 : i32
    %5 = arith.muli %arg2, %c3_i32 : i32
    %c0_i32_4 = arith.constant 0 : i32
    %6 = arith.addi %5, %c0_i32_4 : i32
    %7 = arith.index_cast %6 : i32 to index
    %c0_5 = arith.constant 0 : index
    %c0_6 = arith.constant 0 : index
    %8 = vector.load %arg4[%7, %c0_5, %c0_6] : memref<9x128x128xbf16, #tpu.memory_space<vmem>>, vector<1x128x128xbf16>
    %9 = vector.shape_cast %8 : vector<1x128x128xbf16> to vector<128x128xbf16>
    %cst = arith.constant dense<0.000000e+00> : vector<4x128xf32>
    %10 = tpu.matmul %4, %9, %cst {dimension_numbers = #tpu.dot_dimension_numbers<[1], [0], [0], [1], [0, 0, 1, 1], [], []>} : vector<4x128xbf16>, vector<128x128xbf16>, vector<4x128xf32> -> vector<4x128xf32>
    %c0_7 = arith.constant 0 : index
    %c0_8 = arith.constant 0 : index
    %c1 = arith.constant 1 : index
    %c0_9 = arith.constant 0 : index
    %11 = vector.load %arg3[%c0_7, %c0_8, %c1, %c0_9] : memref<1x1x6x128xbf16, #tpu.memory_space<vmem>>, vector<1x1x4x128xbf16>
    %12 = vector.shape_cast %11 : vector<1x1x4x128xbf16> to vector<4x128xbf16>
    %c3_i32_10 = arith.constant 3 : i32
    %13 = arith.muli %arg2, %c3_i32_10 : i32
    %c1_i32 = arith.constant 1 : i32
    %14 = arith.addi %13, %c1_i32 : i32
    %15 = arith.index_cast %14 : i32 to index
    %c0_11 = arith.constant 0 : index
    %c0_12 = arith.constant 0 : index
    %16 = vector.load %arg4[%15, %c0_11, %c0_12] : memref<9x128x128xbf16, #tpu.memory_space<vmem>>, vector<1x128x128xbf16>
    %17 = vector.shape_cast %16 : vector<1x128x128xbf16> to vector<128x128xbf16>
    %cst_13 = arith.constant dense<0.000000e+00> : vector<4x128xf32>
    %18 = tpu.matmul %12, %17, %cst_13 {dimension_numbers = #tpu.dot_dimension_numbers<[1], [0], [0], [1], [0, 0, 1, 1], [], []>} : vector<4x128xbf16>, vector<128x128xbf16>, vector<4x128xf32> -> vector<4x128xf32>
    %19 = arith.addf %10, %18 : vector<4x128xf32>
    %c0_14 = arith.constant 0 : index
    %c0_15 = arith.constant 0 : index
    %c2 = arith.constant 2 : index
    %c0_16 = arith.constant 0 : index
    %20 = vector.load %arg3[%c0_14, %c0_15, %c2, %c0_16] : memref<1x1x6x128xbf16, #tpu.memory_space<vmem>>, vector<1x1x4x128xbf16>
    %21 = vector.shape_cast %20 : vector<1x1x4x128xbf16> to vector<4x128xbf16>
    %c3_i32_17 = arith.constant 3 : i32
    %22 = arith.muli %arg2, %c3_i32_17 : i32
    %c2_i32 = arith.constant 2 : i32
    %23 = arith.addi %22, %c2_i32 : i32
    %24 = arith.index_cast %23 : i32 to index
    %c0_18 = arith.constant 0 : index
    %c0_19 = arith.constant 0 : index
    %25 = vector.load %arg4[%24, %c0_18, %c0_19] : memref<9x128x128xbf16, #tpu.memory_space<vmem>>, vector<1x128x128xbf16>
    %26 = vector.shape_cast %25 : vector<1x128x128xbf16> to vector<128x128xbf16>
    %cst_20 = arith.constant dense<0.000000e+00> : vector<4x128xf32>
    %27 = tpu.matmul %21, %26, %cst_20 {dimension_numbers = #tpu.dot_dimension_numbers<[1], [0], [0], [1], [0, 0, 1, 1], [], []>} : vector<4x128xbf16>, vector<128x128xbf16>, vector<4x128xf32> -> vector<4x128xf32>
    %28 = arith.addf %19, %27 : vector<4x128xf32>
    %c0_21 = arith.constant 0 : index
    %c0_22 = arith.constant 0 : index
    %29 = vector.load %arg8[%c0_21, %c0_22] : memref<4x128xf32, #tpu.memory_space<vmem>>, vector<4x128xf32>
    %30 = arith.addf %29, %28 : vector<4x128xf32>
    %c0_23 = arith.constant 0 : index
    %c0_24 = arith.constant 0 : index
    %31 = vector.load %arg8[%c0_23, %c0_24] : memref<4x128xf32, #tpu.memory_space<vmem>>, vector<4x128xf32>
    tpu.vector_store %arg8[%c0_23, %c0_24], %30 {strides = array<i32>} : memref<4x128xf32, #tpu.memory_space<vmem>>, vector<4x128xf32>,
    %c2_i32_25 = arith.constant 2 : i32
    %32 = arith.cmpi eq, %arg2, %c2_i32_25 : i32
    %33 = arith.extui %32 : i1 to i32
    %c0_i32_26 = arith.constant 0 : i32
    %34 = arith.cmpi ne, %33, %c0_i32_26 : i32
    scf.if %34 {
      %c0_27 = arith.constant 0 : index
      %c0_28 = arith.constant 0 : index
      %35 = vector.load %arg8[%c0_27, %c0_28] : memref<4x128xf32, #tpu.memory_space<vmem>>, vector<4x128xf32>
      %c0_29 = arith.constant 0 : index
      %c0_30 = arith.constant 0 : index
      %36 = vector.load %arg5[%c0_29, %c0_30] : memref<1x128xf32, #tpu.memory_space<vmem>>, vector<1x128xf32>
      %37 = vector.broadcast %36 : vector<1x128xf32> to vector<4x128xf32>
      %38 = arith.addf %35, %37 : vector<4x128xf32>
      %c0_31 = arith.constant 0 : index
      %c0_32 = arith.constant 0 : index
      %c0_33 = arith.constant 0 : index
      %c0_34 = arith.constant 0 : index
      %39 = vector.load %arg6[%c0_31, %c0_32, %c0_33, %c0_34] : memref<1x1x4x128xbf16, #tpu.memory_space<vmem>>, vector<1x1x4x128xbf16>
      %40 = vector.shape_cast %39 : vector<1x1x4x128xbf16> to vector<4x128xbf16>
      %41 = arith.extf %40 : vector<4x128xbf16> to vector<4x128xf32>
      %42 = arith.addf %38, %41 : vector<4x128xf32>
      %cst_35 = arith.constant 0.000000e+00 : f32
      %43 = vector.broadcast %cst_35 : f32 to vector<4x128xf32>
      %44 = arith.maximumf %42, %43 : vector<4x128xf32>
      %45 = arith.truncf %44 : vector<4x128xf32> to vector<4x128xbf16>
      %c0_36 = arith.constant 0 : index
      %c0_37 = arith.constant 0 : index
      %c0_38 = arith.constant 0 : index
      %c0_39 = arith.constant 0 : index
      %46 = vector.load %arg7[%c0_36, %c0_37, %c0_38, %c0_39] : memref<1x1x4x128xbf16, #tpu.memory_space<vmem>>, vector<1x1x4x128xbf16>
      %47 = vector.shape_cast %46 : vector<1x1x4x128xbf16> to vector<4x128xbf16>
      %48 = vector.shape_cast %45 : vector<4x128xbf16> to vector<1x1x4x128xbf16>
      tpu.vector_store %arg7[%c0_36, %c0_37, %c0_38, %c0_39], %48 {strides = array<i32>} : memref<1x1x4x128xbf16, #tpu.memory_space<vmem>>, vector<1x1x4x128xbf16>,
    } else {
    }
    return
  }
  func.func @transform_0(%arg0: i32, %arg1: i32, %arg2: i32) -> (i32, i32, i32, i32) {
    %c1_i32 = arith.constant 1 : i32
    %0 = arith.muli %arg1, %c1_i32 : i32
    %1 = arith.addi %0, %arg2 : i32
    %c0_i32 = arith.constant 0 : i32
    %c0_i32_0 = arith.constant 0 : i32
    %c0_i32_1 = arith.constant 0 : i32
    return %arg0, %1, %c0_i32, %c0_i32_0 : i32, i32, i32, i32
  }
  func.func @transform_1(%arg0: i32, %arg1: i32, %arg2: i32) -> (i32, i32, i32) {
    %c0_i32 = arith.constant 0 : i32
    %c0_i32_0 = arith.constant 0 : i32
    %c0_i32_1 = arith.constant 0 : i32
    %c0_i32_2 = arith.constant 0 : i32
    return %c0_i32, %c0_i32_0, %c0_i32_1 : i32, i32, i32
  }
  func.func @transform_2(%arg0: i32, %arg1: i32, %arg2: i32) -> (i32, i32) {
    %c0_i32 = arith.constant 0 : i32
    %c0_i32_0 = arith.constant 0 : i32
    %c0_i32_1 = arith.constant 0 : i32
    return %c0_i32, %c0_i32_0 : i32, i32
  }
  func.func @transform_3(%arg0: i32, %arg1: i32, %arg2: i32) -> (i32, i32, i32, i32) {
    %c0_i32 = arith.constant 0 : i32
    %c0_i32_0 = arith.constant 0 : i32
    %c0_i32_1 = arith.constant 0 : i32
    return %arg0, %arg1, %c0_i32, %c0_i32_0 : i32, i32, i32, i32
  }
  func.func @transform_4(%arg0: i32, %arg1: i32, %arg2: i32) -> (i32, i32, i32, i32) {
    %c0_i32 = arith.constant 0 : i32
    %c0_i32_0 = arith.constant 0 : i32
    %c0_i32_1 = arith.constant 0 : i32
    return %arg0, %arg1, %c0_i32, %c0_i32_0 : i32, i32, i32, i32
  }
}

module attributes {stable_mosaic.version = 11 : i64} {
  func.func @_conv_tap_kernel(%arg0: i32, %arg1: i32, %arg2: i32, %arg3: memref<1x1x6x128xbf16, #tpu.memory_space<vmem>>, %arg4: memref<9x128x128xbf16, #tpu.memory_space<vmem>>, %arg5: memref<1x128xf32, #tpu.memory_space<vmem>>, %arg6: memref<1x1x4x128xbf16, #tpu.memory_space<vmem>>, %arg7: memref<4x128xf32, #tpu.memory_space<vmem>>) attributes {dimension_semantics = [#tpu.dimension_semantics<parallel>, #tpu.dimension_semantics<parallel>, #tpu.dimension_semantics<arbitrary>], iteration_bounds = array<i64: 2, 4, 3>, scalar_prefetch = 0 : i64, scratch_operands = 1 : i64, tpu.core_type = #tpu.core_type<tc>, window_params = [{transform_indices = @transform_0, window_bounds = array<i64: 1, 1, 6, 128>}, {pipeline_mode = #tpu.pipeline_mode<synchronous>, transform_indices = @transform_1, window_bounds = array<i64: 9, 128, 128>}, {pipeline_mode = #tpu.pipeline_mode<synchronous>, transform_indices = @transform_2, window_bounds = array<i64: 1, 128>}, {transform_indices = @transform_3, window_bounds = array<i64: 1, 1, 4, 128>}]} {
    %c0_i32 = arith.constant 0 : i32
    %0 = arith.cmpi eq, %arg2, %c0_i32 : i32
    %1 = arith.extui %0 : i1 to i32
    %c0_i32_0 = arith.constant 0 : i32
    %2 = arith.cmpi ne, %1, %c0_i32_0 : i32
    scf.if %2 {
      %cst_27 = arith.constant 0.000000e+00 : f32
      %35 = vector.broadcast %cst_27 : f32 to vector<4x128xf32>
      %c0_28 = arith.constant 0 : index
      %c0_29 = arith.constant 0 : index
      %36 = vector.load %arg7[%c0_28, %c0_29] : memref<4x128xf32, #tpu.memory_space<vmem>>, vector<4x128xf32>
      tpu.vector_store %arg7[%c0_28, %c0_29], %35 {strides = array<i32>} : memref<4x128xf32, #tpu.memory_space<vmem>>, vector<4x128xf32>,
    } else {
    }
    %c0 = arith.constant 0 : index
    %c0_1 = arith.constant 0 : index
    %c0_2 = arith.constant 0 : index
    %c0_3 = arith.constant 0 : index
    %3 = vector.load %arg3[%c0, %c0_1, %c0_2, %c0_3] : memref<1x1x6x128xbf16, #tpu.memory_space<vmem>>, vector<1x1x4x128xbf16>
    %4 = vector.shape_cast %3 : vector<1x1x4x128xbf16> to vector<4x128xbf16>
    %c3_i32 = arith.constant 3 : i32
    %5 = arith.muli %arg2, %c3_i32 : i32
    %c0_i32_4 = arith.constant 0 : i32
    %6 = arith.addi %5, %c0_i32_4 : i32
    %7 = arith.index_cast %6 : i32 to index
    %c0_5 = arith.constant 0 : index
    %c0_6 = arith.constant 0 : index
    %8 = vector.load %arg4[%7, %c0_5, %c0_6] : memref<9x128x128xbf16, #tpu.memory_space<vmem>>, vector<1x128x128xbf16>
    %9 = vector.shape_cast %8 : vector<1x128x128xbf16> to vector<128x128xbf16>
    %cst = arith.constant dense<0.000000e+00> : vector<4x128xf32>
    %10 = tpu.matmul %4, %9, %cst {dimension_numbers = #tpu.dot_dimension_numbers<[1], [0], [0], [1], [0, 0, 1, 1], [], []>} : vector<4x128xbf16>, vector<128x128xbf16>, vector<4x128xf32> -> vector<4x128xf32>
    %c0_7 = arith.constant 0 : index
    %c0_8 = arith.constant 0 : index
    %c1 = arith.constant 1 : index
    %c0_9 = arith.constant 0 : index
    %11 = vector.load %arg3[%c0_7, %c0_8, %c1, %c0_9] : memref<1x1x6x128xbf16, #tpu.memory_space<vmem>>, vector<1x1x4x128xbf16>
    %12 = vector.shape_cast %11 : vector<1x1x4x128xbf16> to vector<4x128xbf16>
    %c3_i32_10 = arith.constant 3 : i32
    %13 = arith.muli %arg2, %c3_i32_10 : i32
    %c1_i32 = arith.constant 1 : i32
    %14 = arith.addi %13, %c1_i32 : i32
    %15 = arith.index_cast %14 : i32 to index
    %c0_11 = arith.constant 0 : index
    %c0_12 = arith.constant 0 : index
    %16 = vector.load %arg4[%15, %c0_11, %c0_12] : memref<9x128x128xbf16, #tpu.memory_space<vmem>>, vector<1x128x128xbf16>
    %17 = vector.shape_cast %16 : vector<1x128x128xbf16> to vector<128x128xbf16>
    %cst_13 = arith.constant dense<0.000000e+00> : vector<4x128xf32>
    %18 = tpu.matmul %12, %17, %cst_13 {dimension_numbers = #tpu.dot_dimension_numbers<[1], [0], [0], [1], [0, 0, 1, 1], [], []>} : vector<4x128xbf16>, vector<128x128xbf16>, vector<4x128xf32> -> vector<4x128xf32>
    %19 = arith.addf %10, %18 : vector<4x128xf32>
    %c0_14 = arith.constant 0 : index
    %c0_15 = arith.constant 0 : index
    %c2 = arith.constant 2 : index
    %c0_16 = arith.constant 0 : index
    %20 = vector.load %arg3[%c0_14, %c0_15, %c2, %c0_16] : memref<1x1x6x128xbf16, #tpu.memory_space<vmem>>, vector<1x1x4x128xbf16>
    %21 = vector.shape_cast %20 : vector<1x1x4x128xbf16> to vector<4x128xbf16>
    %c3_i32_17 = arith.constant 3 : i32
    %22 = arith.muli %arg2, %c3_i32_17 : i32
    %c2_i32 = arith.constant 2 : i32
    %23 = arith.addi %22, %c2_i32 : i32
    %24 = arith.index_cast %23 : i32 to index
    %c0_18 = arith.constant 0 : index
    %c0_19 = arith.constant 0 : index
    %25 = vector.load %arg4[%24, %c0_18, %c0_19] : memref<9x128x128xbf16, #tpu.memory_space<vmem>>, vector<1x128x128xbf16>
    %26 = vector.shape_cast %25 : vector<1x128x128xbf16> to vector<128x128xbf16>
    %cst_20 = arith.constant dense<0.000000e+00> : vector<4x128xf32>
    %27 = tpu.matmul %21, %26, %cst_20 {dimension_numbers = #tpu.dot_dimension_numbers<[1], [0], [0], [1], [0, 0, 1, 1], [], []>} : vector<4x128xbf16>, vector<128x128xbf16>, vector<4x128xf32> -> vector<4x128xf32>
    %28 = arith.addf %19, %27 : vector<4x128xf32>
    %c0_21 = arith.constant 0 : index
    %c0_22 = arith.constant 0 : index
    %29 = vector.load %arg7[%c0_21, %c0_22] : memref<4x128xf32, #tpu.memory_space<vmem>>, vector<4x128xf32>
    %30 = arith.addf %29, %28 : vector<4x128xf32>
    %c0_23 = arith.constant 0 : index
    %c0_24 = arith.constant 0 : index
    %31 = vector.load %arg7[%c0_23, %c0_24] : memref<4x128xf32, #tpu.memory_space<vmem>>, vector<4x128xf32>
    tpu.vector_store %arg7[%c0_23, %c0_24], %30 {strides = array<i32>} : memref<4x128xf32, #tpu.memory_space<vmem>>, vector<4x128xf32>,
    %c2_i32_25 = arith.constant 2 : i32
    %32 = arith.cmpi eq, %arg2, %c2_i32_25 : i32
    %33 = arith.extui %32 : i1 to i32
    %c0_i32_26 = arith.constant 0 : i32
    %34 = arith.cmpi ne, %33, %c0_i32_26 : i32
    scf.if %34 {
      %c0_27 = arith.constant 0 : index
      %c0_28 = arith.constant 0 : index
      %35 = vector.load %arg7[%c0_27, %c0_28] : memref<4x128xf32, #tpu.memory_space<vmem>>, vector<4x128xf32>
      %c0_29 = arith.constant 0 : index
      %c0_30 = arith.constant 0 : index
      %36 = vector.load %arg5[%c0_29, %c0_30] : memref<1x128xf32, #tpu.memory_space<vmem>>, vector<1x128xf32>
      %37 = vector.broadcast %36 : vector<1x128xf32> to vector<4x128xf32>
      %38 = arith.addf %35, %37 : vector<4x128xf32>
      %cst_31 = arith.constant 0.000000e+00 : f32
      %39 = vector.broadcast %cst_31 : f32 to vector<4x128xf32>
      %40 = arith.maximumf %38, %39 : vector<4x128xf32>
      %41 = arith.truncf %40 : vector<4x128xf32> to vector<4x128xbf16>
      %c0_32 = arith.constant 0 : index
      %c0_33 = arith.constant 0 : index
      %c0_34 = arith.constant 0 : index
      %c0_35 = arith.constant 0 : index
      %42 = vector.load %arg6[%c0_32, %c0_33, %c0_34, %c0_35] : memref<1x1x4x128xbf16, #tpu.memory_space<vmem>>, vector<1x1x4x128xbf16>
      %43 = vector.shape_cast %42 : vector<1x1x4x128xbf16> to vector<4x128xbf16>
      %44 = vector.shape_cast %41 : vector<4x128xbf16> to vector<1x1x4x128xbf16>
      tpu.vector_store %arg6[%c0_32, %c0_33, %c0_34, %c0_35], %44 {strides = array<i32>} : memref<1x1x4x128xbf16, #tpu.memory_space<vmem>>, vector<1x1x4x128xbf16>,
    } else {
    }
    return
  }
  func.func @transform_0(%arg0: i32, %arg1: i32, %arg2: i32) -> (i32, i32, i32, i32) {
    %c1_i32 = arith.constant 1 : i32
    %0 = arith.muli %arg1, %c1_i32 : i32
    %1 = arith.addi %0, %arg2 : i32
    %c0_i32 = arith.constant 0 : i32
    %c0_i32_0 = arith.constant 0 : i32
    %c0_i32_1 = arith.constant 0 : i32
    return %arg0, %1, %c0_i32, %c0_i32_0 : i32, i32, i32, i32
  }
  func.func @transform_1(%arg0: i32, %arg1: i32, %arg2: i32) -> (i32, i32, i32) {
    %c0_i32 = arith.constant 0 : i32
    %c0_i32_0 = arith.constant 0 : i32
    %c0_i32_1 = arith.constant 0 : i32
    %c0_i32_2 = arith.constant 0 : i32
    return %c0_i32, %c0_i32_0, %c0_i32_1 : i32, i32, i32
  }
  func.func @transform_2(%arg0: i32, %arg1: i32, %arg2: i32) -> (i32, i32) {
    %c0_i32 = arith.constant 0 : i32
    %c0_i32_0 = arith.constant 0 : i32
    %c0_i32_1 = arith.constant 0 : i32
    return %c0_i32, %c0_i32_0 : i32, i32
  }
  func.func @transform_3(%arg0: i32, %arg1: i32, %arg2: i32) -> (i32, i32, i32, i32) {
    %c0_i32 = arith.constant 0 : i32
    %c0_i32_0 = arith.constant 0 : i32
    %c0_i32_1 = arith.constant 0 : i32
    return %arg0, %arg1, %c0_i32, %c0_i32_0 : i32, i32, i32, i32
  }
}

module attributes {stable_mosaic.version = 11 : i64} {
  func.func @_gemm_bias_kernel(%arg0: i32, %arg1: memref<32x128xbf16, #tpu.memory_space<vmem>>, %arg2: memref<128x128xbf16, #tpu.memory_space<vmem>>, %arg3: memref<1x128xf32, #tpu.memory_space<vmem>>, %arg4: memref<32x128xf32, #tpu.memory_space<vmem>>) attributes {dimension_semantics = [#tpu.dimension_semantics<parallel>], iteration_bounds = array<i64: 1>, scalar_prefetch = 0 : i64, scratch_operands = 0 : i64, tpu.core_type = #tpu.core_type<tc>, window_params = [{transform_indices = @transform_0, window_bounds = array<i64: 32, 128>}, {pipeline_mode = #tpu.pipeline_mode<synchronous>, transform_indices = @transform_1, window_bounds = array<i64: 128, 128>}, {pipeline_mode = #tpu.pipeline_mode<synchronous>, transform_indices = @transform_2, window_bounds = array<i64: 1, 128>}, {transform_indices = @transform_3, window_bounds = array<i64: 32, 128>}]} {
    %c0 = arith.constant 0 : index
    %c0_0 = arith.constant 0 : index
    %0 = vector.load %arg1[%c0, %c0_0] : memref<32x128xbf16, #tpu.memory_space<vmem>>, vector<32x128xbf16>
    %c0_1 = arith.constant 0 : index
    %c0_2 = arith.constant 0 : index
    %1 = vector.load %arg2[%c0_1, %c0_2] : memref<128x128xbf16, #tpu.memory_space<vmem>>, vector<128x128xbf16>
    %cst = arith.constant dense<0.000000e+00> : vector<32x128xf32>
    %2 = tpu.matmul %0, %1, %cst {dimension_numbers = #tpu.dot_dimension_numbers<[1], [0], [0], [1], [0, 0, 1, 1], [], []>} : vector<32x128xbf16>, vector<128x128xbf16>, vector<32x128xf32> -> vector<32x128xf32>
    %c0_3 = arith.constant 0 : index
    %c0_4 = arith.constant 0 : index
    %3 = vector.load %arg3[%c0_3, %c0_4] : memref<1x128xf32, #tpu.memory_space<vmem>>, vector<1x128xf32>
    %4 = vector.broadcast %3 : vector<1x128xf32> to vector<32x128xf32>
    %5 = arith.addf %2, %4 : vector<32x128xf32>
    %c0_5 = arith.constant 0 : index
    %c0_6 = arith.constant 0 : index
    %6 = vector.load %arg4[%c0_5, %c0_6] : memref<32x128xf32, #tpu.memory_space<vmem>>, vector<32x128xf32>
    tpu.vector_store %arg4[%c0_5, %c0_6], %5 {strides = array<i32>} : memref<32x128xf32, #tpu.memory_space<vmem>>, vector<32x128xf32>,
    return
  }
  func.func @transform_0(%arg0: i32) -> (i32, i32) {
    %c0_i32 = arith.constant 0 : i32
    %c0_i32_0 = arith.constant 0 : i32
    return %arg0, %c0_i32 : i32, i32
  }
  func.func @transform_1(%arg0: i32) -> (i32, i32) {
    %c0_i32 = arith.constant 0 : i32
    %c0_i32_0 = arith.constant 0 : i32
    %c0_i32_1 = arith.constant 0 : i32
    return %c0_i32, %c0_i32_0 : i32, i32
  }
  func.func @transform_2(%arg0: i32) -> (i32, i32) {
    %c0_i32 = arith.constant 0 : i32
    %c0_i32_0 = arith.constant 0 : i32
    %c0_i32_1 = arith.constant 0 : i32
    return %c0_i32, %c0_i32_0 : i32, i32
  }
  func.func @transform_3(%arg0: i32) -> (i32, i32) {
    %c0_i32 = arith.constant 0 : i32
    %c0_i32_0 = arith.constant 0 : i32
    return %arg0, %c0_i32 : i32, i32
  }
}

module attributes {stable_mosaic.version = 11 : i64} {
  func.func @_gemm_bias_kernel(%arg0: i32, %arg1: memref<512x64xbf16, #tpu.memory_space<vmem>>, %arg2: memref<64x128xbf16, #tpu.memory_space<vmem>>, %arg3: memref<1x128xf32, #tpu.memory_space<vmem>>, %arg4: memref<512x128xf32, #tpu.memory_space<vmem>>) attributes {dimension_semantics = [#tpu.dimension_semantics<parallel>], iteration_bounds = array<i64: 1>, scalar_prefetch = 0 : i64, scratch_operands = 0 : i64, tpu.core_type = #tpu.core_type<tc>, window_params = [{transform_indices = @transform_0, window_bounds = array<i64: 512, 64>}, {pipeline_mode = #tpu.pipeline_mode<synchronous>, transform_indices = @transform_1, window_bounds = array<i64: 64, 128>}, {pipeline_mode = #tpu.pipeline_mode<synchronous>, transform_indices = @transform_2, window_bounds = array<i64: 1, 128>}, {transform_indices = @transform_3, window_bounds = array<i64: 512, 128>}]} {
    %c0 = arith.constant 0 : index
    %c0_0 = arith.constant 0 : index
    %0 = vector.load %arg1[%c0, %c0_0] : memref<512x64xbf16, #tpu.memory_space<vmem>>, vector<512x64xbf16>
    %c0_1 = arith.constant 0 : index
    %c0_2 = arith.constant 0 : index
    %1 = vector.load %arg2[%c0_1, %c0_2] : memref<64x128xbf16, #tpu.memory_space<vmem>>, vector<64x128xbf16>
    %cst = arith.constant dense<0.000000e+00> : vector<512x128xf32>
    %2 = tpu.matmul %0, %1, %cst {dimension_numbers = #tpu.dot_dimension_numbers<[1], [0], [0], [1], [0, 0, 1, 1], [], []>} : vector<512x64xbf16>, vector<64x128xbf16>, vector<512x128xf32> -> vector<512x128xf32>
    %c0_3 = arith.constant 0 : index
    %c0_4 = arith.constant 0 : index
    %3 = vector.load %arg3[%c0_3, %c0_4] : memref<1x128xf32, #tpu.memory_space<vmem>>, vector<1x128xf32>
    %4 = vector.broadcast %3 : vector<1x128xf32> to vector<512x128xf32>
    %5 = arith.addf %2, %4 : vector<512x128xf32>
    %c0_5 = arith.constant 0 : index
    %c0_6 = arith.constant 0 : index
    %6 = vector.load %arg4[%c0_5, %c0_6] : memref<512x128xf32, #tpu.memory_space<vmem>>, vector<512x128xf32>
    tpu.vector_store %arg4[%c0_5, %c0_6], %5 {strides = array<i32>} : memref<512x128xf32, #tpu.memory_space<vmem>>, vector<512x128xf32>,
    return
  }
  func.func @transform_0(%arg0: i32) -> (i32, i32) {
    %c0_i32 = arith.constant 0 : i32
    %c0_i32_0 = arith.constant 0 : i32
    return %arg0, %c0_i32 : i32, i32
  }
  func.func @transform_1(%arg0: i32) -> (i32, i32) {
    %c0_i32 = arith.constant 0 : i32
    %c0_i32_0 = arith.constant 0 : i32
    %c0_i32_1 = arith.constant 0 : i32
    return %c0_i32, %c0_i32_0 : i32, i32
  }
  func.func @transform_2(%arg0: i32) -> (i32, i32) {
    %c0_i32 = arith.constant 0 : i32
    %c0_i32_0 = arith.constant 0 : i32
    %c0_i32_1 = arith.constant 0 : i32
    return %c0_i32, %c0_i32_0 : i32, i32
  }
  func.func @transform_3(%arg0: i32) -> (i32, i32) {
    %c0_i32 = arith.constant 0 : i32
    %c0_i32_0 = arith.constant 0 : i32
    return %arg0, %c0_i32 : i32, i32
  }
}

module attributes {stable_mosaic.version = 11 : i64} {
  func.func @_conv_tap_kernel(%arg0: i32, %arg1: i32, %arg2: i32, %arg3: memref<1x1x18x16xbf16, #tpu.memory_space<vmem>>, %arg4: memref<9x16x128xbf16, #tpu.memory_space<vmem>>, %arg5: memref<1x128xf32, #tpu.memory_space<vmem>>, %arg6: memref<1x128xf32, #tpu.memory_space<vmem>>, %arg7: memref<1x1x16x128xf32, #tpu.memory_space<vmem>>, %arg8: memref<16x128xf32, #tpu.memory_space<vmem>>) attributes {dimension_semantics = [#tpu.dimension_semantics<parallel>, #tpu.dimension_semantics<parallel>, #tpu.dimension_semantics<arbitrary>], iteration_bounds = array<i64: 2, 16, 3>, scalar_prefetch = 0 : i64, scratch_operands = 1 : i64, tpu.core_type = #tpu.core_type<tc>, window_params = [{transform_indices = @transform_0, window_bounds = array<i64: 1, 1, 18, 16>}, {pipeline_mode = #tpu.pipeline_mode<synchronous>, transform_indices = @transform_1, window_bounds = array<i64: 9, 16, 128>}, {pipeline_mode = #tpu.pipeline_mode<synchronous>, transform_indices = @transform_2, window_bounds = array<i64: 1, 128>}, {pipeline_mode = #tpu.pipeline_mode<synchronous>, transform_indices = @transform_3, window_bounds = array<i64: 1, 128>}, {transform_indices = @transform_4, window_bounds = array<i64: 1, 1, 16, 128>}]} {
    %c0_i32 = arith.constant 0 : i32
    %0 = arith.cmpi eq, %arg2, %c0_i32 : i32
    %1 = arith.extui %0 : i1 to i32
    %c0_i32_0 = arith.constant 0 : i32
    %2 = arith.cmpi ne, %1, %c0_i32_0 : i32
    scf.if %2 {
      %cst_27 = arith.constant 0.000000e+00 : f32
      %35 = vector.broadcast %cst_27 : f32 to vector<16x128xf32>
      %c0_28 = arith.constant 0 : index
      %c0_29 = arith.constant 0 : index
      %36 = vector.load %arg8[%c0_28, %c0_29] : memref<16x128xf32, #tpu.memory_space<vmem>>, vector<16x128xf32>
      tpu.vector_store %arg8[%c0_28, %c0_29], %35 {strides = array<i32>} : memref<16x128xf32, #tpu.memory_space<vmem>>, vector<16x128xf32>,
    } else {
    }
    %c0 = arith.constant 0 : index
    %c0_1 = arith.constant 0 : index
    %c0_2 = arith.constant 0 : index
    %c0_3 = arith.constant 0 : index
    %3 = vector.load %arg3[%c0, %c0_1, %c0_2, %c0_3] : memref<1x1x18x16xbf16, #tpu.memory_space<vmem>>, vector<1x1x16x16xbf16>
    %4 = vector.shape_cast %3 : vector<1x1x16x16xbf16> to vector<16x16xbf16>
    %c3_i32 = arith.constant 3 : i32
    %5 = arith.muli %arg2, %c3_i32 : i32
    %c0_i32_4 = arith.constant 0 : i32
    %6 = arith.addi %5, %c0_i32_4 : i32
    %7 = arith.index_cast %6 : i32 to index
    %c0_5 = arith.constant 0 : index
    %c0_6 = arith.constant 0 : index
    %8 = vector.load %arg4[%7, %c0_5, %c0_6] : memref<9x16x128xbf16, #tpu.memory_space<vmem>>, vector<1x16x128xbf16>
    %9 = vector.shape_cast %8 : vector<1x16x128xbf16> to vector<16x128xbf16>
    %cst = arith.constant dense<0.000000e+00> : vector<16x128xf32>
    %10 = tpu.matmul %4, %9, %cst {dimension_numbers = #tpu.dot_dimension_numbers<[1], [0], [0], [1], [0, 0, 1, 1], [], []>} : vector<16x16xbf16>, vector<16x128xbf16>, vector<16x128xf32> -> vector<16x128xf32>
    %c0_7 = arith.constant 0 : index
    %c0_8 = arith.constant 0 : index
    %c1 = arith.constant 1 : index
    %c0_9 = arith.constant 0 : index
    %11 = vector.load %arg3[%c0_7, %c0_8, %c1, %c0_9] : memref<1x1x18x16xbf16, #tpu.memory_space<vmem>>, vector<1x1x16x16xbf16>
    %12 = vector.shape_cast %11 : vector<1x1x16x16xbf16> to vector<16x16xbf16>
    %c3_i32_10 = arith.constant 3 : i32
    %13 = arith.muli %arg2, %c3_i32_10 : i32
    %c1_i32 = arith.constant 1 : i32
    %14 = arith.addi %13, %c1_i32 : i32
    %15 = arith.index_cast %14 : i32 to index
    %c0_11 = arith.constant 0 : index
    %c0_12 = arith.constant 0 : index
    %16 = vector.load %arg4[%15, %c0_11, %c0_12] : memref<9x16x128xbf16, #tpu.memory_space<vmem>>, vector<1x16x128xbf16>
    %17 = vector.shape_cast %16 : vector<1x16x128xbf16> to vector<16x128xbf16>
    %cst_13 = arith.constant dense<0.000000e+00> : vector<16x128xf32>
    %18 = tpu.matmul %12, %17, %cst_13 {dimension_numbers = #tpu.dot_dimension_numbers<[1], [0], [0], [1], [0, 0, 1, 1], [], []>} : vector<16x16xbf16>, vector<16x128xbf16>, vector<16x128xf32> -> vector<16x128xf32>
    %19 = arith.addf %10, %18 : vector<16x128xf32>
    %c0_14 = arith.constant 0 : index
    %c0_15 = arith.constant 0 : index
    %c2 = arith.constant 2 : index
    %c0_16 = arith.constant 0 : index
    %20 = vector.load %arg3[%c0_14, %c0_15, %c2, %c0_16] : memref<1x1x18x16xbf16, #tpu.memory_space<vmem>>, vector<1x1x16x16xbf16>
    %21 = vector.shape_cast %20 : vector<1x1x16x16xbf16> to vector<16x16xbf16>
    %c3_i32_17 = arith.constant 3 : i32
    %22 = arith.muli %arg2, %c3_i32_17 : i32
    %c2_i32 = arith.constant 2 : i32
    %23 = arith.addi %22, %c2_i32 : i32
    %24 = arith.index_cast %23 : i32 to index
    %c0_18 = arith.constant 0 : index
    %c0_19 = arith.constant 0 : index
    %25 = vector.load %arg4[%24, %c0_18, %c0_19] : memref<9x16x128xbf16, #tpu.memory_space<vmem>>, vector<1x16x128xbf16>
    %26 = vector.shape_cast %25 : vector<1x16x128xbf16> to vector<16x128xbf16>
    %cst_20 = arith.constant dense<0.000000e+00> : vector<16x128xf32>
    %27 = tpu.matmul %21, %26, %cst_20 {dimension_numbers = #tpu.dot_dimension_numbers<[1], [0], [0], [1], [0, 0, 1, 1], [], []>} : vector<16x16xbf16>, vector<16x128xbf16>, vector<16x128xf32> -> vector<16x128xf32>
    %28 = arith.addf %19, %27 : vector<16x128xf32>
    %c0_21 = arith.constant 0 : index
    %c0_22 = arith.constant 0 : index
    %29 = vector.load %arg8[%c0_21, %c0_22] : memref<16x128xf32, #tpu.memory_space<vmem>>, vector<16x128xf32>
    %30 = arith.addf %29, %28 : vector<16x128xf32>
    %c0_23 = arith.constant 0 : index
    %c0_24 = arith.constant 0 : index
    %31 = vector.load %arg8[%c0_23, %c0_24] : memref<16x128xf32, #tpu.memory_space<vmem>>, vector<16x128xf32>
    tpu.vector_store %arg8[%c0_23, %c0_24], %30 {strides = array<i32>} : memref<16x128xf32, #tpu.memory_space<vmem>>, vector<16x128xf32>,
    %c2_i32_25 = arith.constant 2 : i32
    %32 = arith.cmpi eq, %arg2, %c2_i32_25 : i32
    %33 = arith.extui %32 : i1 to i32
    %c0_i32_26 = arith.constant 0 : i32
    %34 = arith.cmpi ne, %33, %c0_i32_26 : i32
    scf.if %34 {
      %c0_27 = arith.constant 0 : index
      %c0_28 = arith.constant 0 : index
      %35 = vector.load %arg8[%c0_27, %c0_28] : memref<16x128xf32, #tpu.memory_space<vmem>>, vector<16x128xf32>
      %c0_29 = arith.constant 0 : index
      %c0_30 = arith.constant 0 : index
      %36 = vector.load %arg5[%c0_29, %c0_30] : memref<1x128xf32, #tpu.memory_space<vmem>>, vector<1x128xf32>
      %37 = vector.broadcast %36 : vector<1x128xf32> to vector<16x128xf32>
      %38 = arith.addf %35, %37 : vector<16x128xf32>
      %cst_31 = arith.constant 0.000000e+00 : f32
      %39 = vector.broadcast %cst_31 : f32 to vector<16x128xf32>
      %40 = arith.cmpf ogt, %38, %39 : vector<16x128xf32>
      %c0_32 = arith.constant 0 : index
      %c0_33 = arith.constant 0 : index
      %41 = vector.load %arg6[%c0_32, %c0_33] : memref<1x128xf32, #tpu.memory_space<vmem>>, vector<1x128xf32>
      %42 = vector.broadcast %41 : vector<1x128xf32> to vector<16x128xf32>
      %43 = arith.mulf %42, %38 : vector<16x128xf32>
      %44 = arith.select %40, %38, %43 : vector<16x128xi1>, vector<16x128xf32>
      %c0_34 = arith.constant 0 : index
      %c0_35 = arith.constant 0 : index
      %c0_36 = arith.constant 0 : index
      %c0_37 = arith.constant 0 : index
      %45 = vector.load %arg7[%c0_34, %c0_35, %c0_36, %c0_37] : memref<1x1x16x128xf32, #tpu.memory_space<vmem>>, vector<1x1x16x128xf32>
      %46 = vector.shape_cast %45 : vector<1x1x16x128xf32> to vector<16x128xf32>
      %47 = vector.shape_cast %44 : vector<16x128xf32> to vector<1x1x16x128xf32>
      tpu.vector_store %arg7[%c0_34, %c0_35, %c0_36, %c0_37], %47 {strides = array<i32>} : memref<1x1x16x128xf32, #tpu.memory_space<vmem>>, vector<1x1x16x128xf32>,
    } else {
    }
    return
  }
  func.func @transform_0(%arg0: i32, %arg1: i32, %arg2: i32) -> (i32, i32, i32, i32) {
    %c1_i32 = arith.constant 1 : i32
    %0 = arith.muli %arg1, %c1_i32 : i32
    %1 = arith.addi %0, %arg2 : i32
    %c0_i32 = arith.constant 0 : i32
    %c0_i32_0 = arith.constant 0 : i32
    %c0_i32_1 = arith.constant 0 : i32
    return %arg0, %1, %c0_i32, %c0_i32_0 : i32, i32, i32, i32
  }
  func.func @transform_1(%arg0: i32, %arg1: i32, %arg2: i32) -> (i32, i32, i32) {
    %c0_i32 = arith.constant 0 : i32
    %c0_i32_0 = arith.constant 0 : i32
    %c0_i32_1 = arith.constant 0 : i32
    %c0_i32_2 = arith.constant 0 : i32
    return %c0_i32, %c0_i32_0, %c0_i32_1 : i32, i32, i32
  }
  func.func @transform_2(%arg0: i32, %arg1: i32, %arg2: i32) -> (i32, i32) {
    %c0_i32 = arith.constant 0 : i32
    %c0_i32_0 = arith.constant 0 : i32
    %c0_i32_1 = arith.constant 0 : i32
    return %c0_i32, %c0_i32_0 : i32, i32
  }
  func.func @transform_3(%arg0: i32, %arg1: i32, %arg2: i32) -> (i32, i32) {
    %c0_i32 = arith.constant 0 : i32
    %c0_i32_0 = arith.constant 0 : i32
    %c0_i32_1 = arith.constant 0 : i32
    return %c0_i32, %c0_i32_0 : i32, i32
  }
  func.func @transform_4(%arg0: i32, %arg1: i32, %arg2: i32) -> (i32, i32, i32, i32) {
    %c0_i32 = arith.constant 0 : i32
    %c0_i32_0 = arith.constant 0 : i32
    %c0_i32_1 = arith.constant 0 : i32
    return %arg0, %arg1, %c0_i32, %c0_i32_0 : i32, i32, i32, i32
  }
}

</mosaic_0001>

<llo_original>
// kernel: head_forward.13
$region0: #{head_forward.13}
  #allocation0 [shape = 'u32[]', space=smem, size = 0x4, offset = 0x4, fixed_abs, tag = 'smem constant byte address 0x4 - core index']
  #allocation1 [shape = 'u32[144,128]{1,0:T(1,128)}', space=vmem, size = 0x12000, scoped, tag = 'internal scratch']
  #allocation2 [shape = 'f32[16,64]{1,0:T(8,128)}', space=vmem, size = 0x2000, scoped, tag = 'scratch operand']
  %s0 = inlined_call_operand.vmem [shape: bf16[2,38,19,8], index: 0, kind: input, shape index: {}]
  %s1 = inlined_call_operand.vmem [shape: bf16[2,38,19,8], index: 1, kind: input, shape index: {}]
  %s2 = inlined_call_operand.vmem [shape: bf16[49,8,64], index: 2, kind: input, shape index: {}]
  %s3 = inlined_call_operand.vmem [shape: f32[1,64], index: 3, kind: input, shape index: {}]
  %s4 = inlined_call_operand.vmem [shape: bf16[2,16,16,64], index: 4, kind: output, shape index: {}]
  %s5 = sld [smem:[#allocation0]]
  $region57: #{head_forward.13} parent=0
    _
  %s7 = ssub.s32 1, %s5
  %s8 = scalar_select 0, %s7, %s5
  loop: start=0, step=1, limit=226
  $region2: #{head_forward.13} parent=0 // loop_pre_header
    _
  $region3: #{head_forward.13} parent=0 // loop_header
    %s10 = sphi 0, %s14
    %p11 = scmp.ge.s32.totalorder %s10, 226
    %s17 = sphi 0, %s36
    %s18 = sphi 0, %s32
    %s19 = sphi 0, %s28
    %s20 = sphi 0, %s17
    %s21 = sphi 0, %s18
    %s22 = sphi 0, %s19
    %s23 = sphi 0, %s20
    %s24 = sphi 0, %s21
    %s25 = sphi 0, %s22
    %s45 = sphi 0, %s47
    %s48 = sphi 0, %s45
    %s49 = sphi 0, %s48
    %s65 = sphi 0, %s49
    %s77 = sphi 0, %s79
    %s80 = sphi 0, %s77
    %s81 = sphi 0, %s80
    %s97 = sphi 0, %s81
    %s101 = sphi 0, %s101
    %s103 = sphi 0, %s101
    %s104 = sphi 0, %s103
    %s118 = sphi 0, %s104
    %s122 = sphi 0, %s122
    %s124 = sphi 0, %s122
    %s125 = sphi 0, %s124
    %s139 = sphi 0, %s125
    %s147 = sphi 0, %s149
    %s150 = sphi 0, %s147
    %s151 = sphi 0, %s150
    %s167 = sphi 0, %s151
  $region4: #{head_forward.13} parent=0 // loop_header_branch
    %13 = sbr.rel (%p11) target = $region8
  $region5: #{head_forward.13} parent=0 // loop_body
    %s15 = ssub.s32 %s10, 1
    %s16 = ssub.s32 %s10, 2
    %s26 = sadd.s32 1, %s19
    %p27 = scmp.ge.s32.totalorder %s26, 7
    %s28 = scalar_select %p27, 0, %s26
    %s29 = sadd.s32 1, %s18
    %s30 = scalar_select %p27, %s29, %s18
    %p31 = scmp.ge.s32.totalorder %s30, 16
    %s32 = scalar_select %p31, 0, %s30
    %s33 = sadd.s32 1, %s17
    %s34 = scalar_select %p31, %s33, %s17
    %p35 = scmp.ge.s32.totalorder %s34, 2
    %s36 = scalar_select %p35, 0, %s34
    %s37 = smul.u32 %s18, 2
    %s38 = sadd.s32 %s37, %s19
    %s39 = smul.u32 %s32, 2
    %s40 = sadd.s32 %s39, %s28
    %s41 = ssub.s32 %s17, %s36
    %s42 = ssub.s32 %s38, %s40
    %s43 = sor.u32 %s41, %s42
    %p44 = scmp.eq.s32.totalorder %s43, 0
    %s46 = sadd.s32 %s45, 1
    %s47 = scalar_select %p44, %s45, %s46
    %p50 = pneg %p44
    %p51 = scmp.eq.s32.totalorder %s10, 223
    %p52 = por %p50, %p51
    %p53 = scmp.ne.s32.totalorder %s45, %s48
    %p54 = scmp.eq.s32.totalorder %s10, 0
    %p55 = por %p53, %p54
    %p56 = scmp.ne.s32.totalorder %s45, %s48
    %p57 = scmp.eq.s32.totalorder %s15, 223
    %p58 = por %p56, %p57
    %p59 = scmp.ne.s32.totalorder %s48, %s49
    %p60 = scmp.eq.s32.totalorder %s15, 0
    %p61 = por %p59, %p60
    %p62 = scmp.ne.s32.totalorder %s48, %s49
    %p63 = scmp.eq.s32.totalorder %s16, 223
    %p64 = por %p62, %p63
    %p66 = scmp.ne.s32.totalorder %s49, %s65
    %p67 = scmp.eq.s32.totalorder %s16, 0
    %p68 = por %p66, %p67
    %s69 = smul.u32 %s18, 2
    %s70 = sadd.s32 %s69, %s19
    %s71 = smul.u32 %s32, 2
    %s72 = sadd.s32 %s71, %s28
    %s73 = ssub.s32 %s17, %s36
    %s74 = ssub.s32 %s70, %s72
    %s75 = sor.u32 %s73, %s74
    %p76 = scmp.eq.s32.totalorder %s75, 0
    %s78 = sadd.s32 %s77, 1
    %s79 = scalar_select %p76, %s77, %s78
    %p82 = pneg %p76
    %p83 = scmp.eq.s32.totalorder %s10, 223
    %p84 = por %p82, %p83
    %p85 = scmp.ne.s32.totalorder %s77, %s80
    %p86 = scmp.eq.s32.totalorder %s10, 0
    %p87 = por %p85, %p86
    %p88 = scmp.ne.s32.totalorder %s77, %s80
    %p89 = scmp.eq.s32.totalorder %s15, 223
    %p90 = por %p88, %p89
    %p91 = scmp.ne.s32.totalorder %s80, %s81
    %p92 = scmp.eq.s32.totalorder %s15, 0
    %p93 = por %p91, %p92
    %p94 = scmp.ne.s32.totalorder %s80, %s81
    %p95 = scmp.eq.s32.totalorder %s16, 223
    %p96 = por %p94, %p95
    %p98 = scmp.ne.s32.totalorder %s81, %s97
    %p99 = scmp.eq.s32.totalorder %s16, 0
    %p100 = por %p98, %p99
    %s102 = sadd.s32 %s101, 1
    %p105 = scmp.eq.s32.totalorder %s10, 223
    %p106 = scmp.ne.s32.totalorder %s101, %s103
    %p107 = scmp.eq.s32.totalorder %s10, 0
    %p108 = por %p106, %p107
    %p109 = scmp.ne.s32.totalorder %s101, %s103
    %p110 = scmp.eq.s32.totalorder %s15, 223
    %p111 = por %p109, %p110
    %p112 = scmp.ne.s32.totalorder %s103, %s104
    %p113 = scmp.eq.s32.totalorder %s15, 0
    %p114 = por %p112, %p113
    %p115 = scmp.ne.s32.totalorder %s103, %s104
    %p116 = scmp.eq.s32.totalorder %s16, 223
    %p117 = por %p115, %p116
    %p119 = scmp.ne.s32.totalorder %s104, %s118
    %p120 = scmp.eq.s32.totalorder %s16, 0
    %p121 = por %p119, %p120
    %s123 = sadd.s32 %s122, 1
    %p126 = scmp.eq.s32.totalorder %s10, 223
    %p127 = scmp.ne.s32.totalorder %s122, %s124
    %p128 = scmp.eq.s32.totalorder %s10, 0
    %p129 = por %p127, %p128
    %p130 = scmp.ne.s32.totalorder %s122, %s124
    %p131 = scmp.eq.s32.totalorder %s15, 223
    %p132 = por %p130, %p131
    %p133 = scmp.ne.s32.totalorder %s124, %s125
    %p134 = scmp.eq.s32.totalorder %s15, 0
    %p135 = por %p133, %p134
    %p136 = scmp.ne.s32.totalorder %s124, %s125
    %p137 = scmp.eq.s32.totalorder %s16, 223
    %p138 = por %p136, %p137
    %p140 = scmp.ne.s32.totalorder %s125, %s139
    %p141 = scmp.eq.s32.totalorder %s16, 0
    %p142 = por %p140, %p141
    %s143 = ssub.s32 %s17, %s36
    %s144 = ssub.s32 %s18, %s32
    %s145 = sor.u32 %s143, %s144
    %p146 = scmp.eq.s32.totalorder %s145, 0
    %s148 = sadd.s32 %s147, 1
    %s149 = scalar_select %p146, %s147, %s148
    %p152 = pneg %p146
    %p153 = scmp.eq.s32.totalorder %s10, 223
    %p154 = por %p152, %p153
    %p155 = scmp.ne.s32.totalorder %s147, %s150
    %p156 = scmp.eq.s32.totalorder %s10, 0
    %p157 = por %p155, %p156
    %p158 = scmp.ne.s32.totalorder %s147, %s150
    %p159 = scmp.eq.s32.totalorder %s15, 223
    %p160 = por %p158, %p159
    %p161 = scmp.ne.s32.totalorder %s150, %s151
    %p162 = scmp.eq.s32.totalorder %s15, 0
    %p163 = por %p161, %p162
    %p164 = scmp.ne.s32.totalorder %s150, %s151
    %p165 = scmp.eq.s32.totalorder %s16, 223
    %p166 = por %p164, %p165
    %p168 = scmp.ne.s32.totalorder %s151, %s167
    %p169 = scmp.eq.s32.totalorder %s16, 0
    %p170 = por %p168, %p169
    %p171 = scmp.le.s32.totalorder 1, %s10
    %p172 = scmp.lt.s32.totalorder %s10, 225
    %p173 = pnand %p171, %p172
    %p174 = pneg %p173
    // Predicated region
    $region9: #{head_forward.13} parent=5 // pred_check
      _
    $region10: #{head_forward.13} parent=5 // pred_check_branch
      %176 = sbr.rel (%p173) target = $region12
    $region11: #{head_forward.13} parent=5 // pred_region
      %s177 = ssub.s32 %s10, 1
      // Predicated region
      $region13: #{head_forward.13} parent=11 // pred_check
        %p178 = pneg %p114
      $region14: #{head_forward.13} parent=11 // pred_check_branch
        %180 = sbr.rel (%p178) target = $region16
      $region15: #{head_forward.13} parent=11 // pred_region
        _
      $region16: #{head_forward.13} parent=11 // pred_fallthru
        _
      // Predicated region
      $region17: #{head_forward.13} parent=11 // pred_check
        %p181 = pneg %p135
      $region18: #{head_forward.13} parent=11 // pred_check_branch
        %183 = sbr.rel (%p181) target = $region20
      $region19: #{head_forward.13} parent=11 // pred_region
        _
      $region20: #{head_forward.13} parent=11 // pred_fallthru
        _
    $region12: #{head_forward.13} parent=5 // pred_fallthru
      _
    %p184 = scmp.lt.s32.totalorder %s10, 224
    // Predicated region
    $region21: #{head_forward.13} parent=5 // pred_check
      %p185 = pneg %p184
    $region22: #{head_forward.13} parent=5 // pred_check_branch
      %187 = sbr.rel (%p185) target = $region24
    $region23: #{head_forward.13} parent=5 // pred_region
      // Predicated region
      $region25: #{head_forward.13} parent=23 // pred_check
        %p188 = pneg %p55
      $region26: #{head_forward.13} parent=23 // pred_check_branch
        %190 = sbr.rel (%p188) target = $region28
      $region27: #{head_forward.13} parent=23 // pred_region
        %s191 = smul.u32 %s18, 2
        %s192 = sadd.s32 %s191, %s19
        %p193 = scmp.lt.s32.totalorder %s17, 1
        %s194 = scalar_select %p193, %s17, 1
        %p195 = scmp.lt.s32.totalorder %s192, 37
        %s196 = scalar_select %p195, %s192, 37
        %s197 = smul.addr %s196, 3
        %s198 = smul.addr %s194, 114
        %s199 = sadd.s32 %s197, %s198
        %s200 = smul.addr %s199, 4
        %s201 = scalar_lea.vmem %s0, %s200
        %s202 = smul.u32 %s18, 2
        %s203 = sadd.s32 %s202, %s19
      $region28: #{head_forward.13} parent=23 // pred_fallthru
        _
      // Predicated region
      $region29: #{head_forward.13} parent=23 // pred_check
        %p204 = pneg %p87
      $region30: #{head_forward.13} parent=23 // pred_check_branch
        %206 = sbr.rel (%p204) target = $region32
      $region31: #{head_forward.13} parent=23 // pred_region
        %s207 = smul.u32 %s18, 2
        %s208 = sadd.s32 %s207, %s19
        %p209 = scmp.lt.s32.totalorder %s17, 1
        %s210 = scalar_select %p209, %s17, 1
        %p211 = scmp.lt.s32.totalorder %s208, 37
        %s212 = scalar_select %p211, %s208, 37
        %s213 = smul.addr %s212, 3
        %s214 = smul.addr %s210, 114
        %s215 = sadd.s32 %s213, %s214
        %s216 = smul.addr %s215, 4
        %s217 = scalar_lea.vmem %s1, %s216
        %s218 = smul.u32 %s18, 2
        %s219 = sadd.s32 %s218, %s19
      $region32: #{head_forward.13} parent=23 // pred_fallthru
        _
    $region24: #{head_forward.13} parent=5 // pred_fallthru
      _
    %p220 = scmp.le.s32.totalorder 1, %s10
    %p221 = scmp.lt.s32.totalorder %s10, 225
    %p222 = pnand %p220, %p221
    %p223 = pneg %p222
    // Predicated region
    $region33: #{head_forward.13} parent=5 // pred_check
      _
    $region34: #{head_forward.13} parent=5 // pred_check_branch
      %225 = sbr.rel (%p222) target = $region36
    $region35: #{head_forward.13} parent=5 // pred_region
      %s226 = ssub.s32 %s10, 1
      %s227 = smul.u32 %s21, 2
      %s228 = sadd.s32 %s227, %s22
      %p229 = scmp.lt.s32.totalorder %s20, 1
      %s230 = scalar_select %p229, %s20, 1
      %p231 = scmp.lt.s32.totalorder %s228, 37
      %s232 = scalar_select %p231, %s228, 37
      %s233 = smul.addr %s232, 3
      %s234 = smul.addr %s230, 114
      %s235 = sadd.s32 %s233, %s234
      %s236 = smul.addr %s235, 4
      %s237 = scalar_lea.vmem %s0, %s236
      %p238 = pneg %p61
      %p239 = pneg %p58
      %s240 = smul.u32 %s21, 2
      %s241 = sadd.s32 %s240, %s22
      %p242 = scmp.lt.s32.totalorder %s20, 1
      %s243 = scalar_select %p242, %s20, 1
      %p244 = scmp.lt.s32.totalorder %s241, 37
      %s245 = scalar_select %p244, %s241, 37
      %s246 = smul.addr %s245, 3
      %s247 = smul.addr %s243, 114
      %s248 = sadd.s32 %s246, %s247
      %s249 = smul.addr %s248, 4
      %s250 = scalar_lea.vmem %s1, %s249
      %p251 = pneg %p93
      %p252 = pneg %p90
      %p253 = pneg %p114
      %p254 = pneg %p111
      %p255 = pneg %p135
      %p256 = pneg %p132
      %p257 = pneg %p163
      %p258 = pneg %p160
      %p259 = scmp.lt.s32.totalorder %s20, 1
      %s260 = scalar_select %p259, %s20, 1
      %p261 = scmp.lt.s32.totalorder %s21, 15
      %s262 = scalar_select %p261, %s21, 15
      %s263 = smul.addr %s262, 2
      %s264 = smul.addr %s260, 32
      %s265 = sadd.s32 %s263, %s264
      %s266 = smul.addr %s265, 4
      %s267 = scalar_lea.vmem %s4, %s266
      %s268 = smul.u32 %s21, 2
      %s269 = sadd.s32 %s268, %s22
      %p270 = scmp.lt.s32.totalorder %s20, 1
      %s271 = scalar_select %p270, %s20, 1
      %p272 = scmp.lt.s32.totalorder %s269, 37
      %s273 = scalar_select %p272, %s269, 37
      %s274 = smul.addr %s273, 3
      %s275 = smul.addr %s271, 114
      %s276 = sadd.s32 %s274, %s275
      %s277 = smul.addr %s276, 4
      %s278 = scalar_lea.vmem %s0, %s277
      %s279 = smul.u32 %s21, 2
      %s280 = sadd.s32 %s279, %s22
      %s281 = smul.u32 %s21, 2
      %s282 = sadd.s32 %s281, %s22
      %p283 = scmp.lt.s32.totalorder %s20, 1
      %s284 = scalar_select %p283, %s20, 1
      %p285 = scmp.lt.s32.totalorder %s282, 37
      %s286 = scalar_select %p285, %s282, 37
      %s287 = smul.addr %s286, 3
      %s288 = smul.addr %s284, 114
      %s289 = sadd.s32 %s287, %s288
      %s290 = smul.addr %s289, 4
      %s291 = scalar_lea.vmem %s1, %s290
      %s292 = smul.u32 %s21, 2
      %s293 = sadd.s32 %s292, %s22
      %p294 = scmp.lt.s32.totalorder %s20, 1
      %s295 = scalar_select %p294, %s20, 1
      %p296 = scmp.lt.s32.totalorder %s21, 15
      %s297 = scalar_select %p296, %s21, 15
      %s298 = smul.addr %s297, 2
      %s299 = smul.addr %s295, 32
      %s300 = sadd.s32 %s298, %s299
      %s301 = smul.addr %s300, 4
      %s302 = scalar_lea.vmem %s4, %s301
      %p304 = scmp.eq.s32.totalorder %s22, 0
      // Predicated region
      $region37: #{head_forward.13} parent=35 // pred_check
        %p305 = pneg %p304
      $region38: #{head_forward.13} parent=35 // pred_check_branch
        %307 = sbr.rel (%p305) target = $region40
      $region39: #{head_forward.13} parent=35 // pred_region
        %vm308 = vcmask 523264
        %309 = vst.msk [vmem:[#allocation2] sm:$0xff] %vm308, 0.0
        %310 = vst.msk [vmem:[#allocation2 + $0x8] sm:$0xff] %vm308, 0.0
      $region40: #{head_forward.13} parent=35 // pred_fallthru
        _
      %v311 = vld [vmem:[%s278] sm:$0xf]
      %v312 = vld [vmem:[%s278 + $0x4] sm:$0xf]
      %s313 = smul.u32 %s22, 7
      %s314 = smul.addr %s313, 4
      %s315 = scalar_lea.vmem %s2, %s314
      %v316 = vld [vmem:[%s315] sm:$0xf]
      %v317 = vld [vmem:[%s291] sm:$0xf]
      %v318 = vld [vmem:[%s291 + $0x4] sm:$0xf]
      %s319 = sadd.s32 %s313, 1
      %s320 = smul.addr %s319, 4
      %s321 = scalar_lea.vmem %s2, %s320
      %v322 = vld [vmem:[%s321] sm:$0xf]
      %v325 = vunpack.c.l.b16 %v317
      %v326 = vunpack.c.l.b16 %v318
      %v327 = vpack.c.b16 %v326, %v325
      %vm328 = vcmask 64512
      %v330 = vsel %vm328, %v327, 0
      %vm332 = vcmask 1043456
      %v334 = vsel %vm332, %v322, 0
      %336 = vmatprep.subr.bf16.mxu0 0
      %337 = vmatpush1.bf16.msra.mxu0 0
      %338 = vmatprep.subr.bf16.mxu0 0
      %339 = vmatpush1.bf16.msra.mxu0 0
      %340 = vmatprep.subr.bf16.mxu0 0
      %341 = vmatpush1.bf16.msra.mxu0 0
      %342 = vmatprep.subr.bf16.mxu0 0
      %343 = vmatpush1.bf16.msra.mxu0 0
      %344 = vmatprep.subr.bf16.mxu0 0
      %345 = vmatpush1.bf16.msra.mxu0 0
      %346 = vmatprep.subr.bf16.mxu0 0
      %347 = vmatpush1.bf16.msra.mxu0 0
      %348 = vmatprep.subr.bf16.mxu0 0
      %349 = vmatpush1.bf16.msra.mxu0 0
      %350 = vmatprep.subr.bf16.mxu0 0
      %351 = vmatpush1.bf16.msra.mxu0 %v334
      %352 = vmatprep.subr.bf16.mxu0 0
      %353 = vmatpush2.bf16.msra.mxu0 0
      %354 = vmatprep.subr.bf16.mxu0 0
      %355 = vmatpush2.bf16.msra.mxu0 0
      %356 = vmatprep.subr.bf16.mxu0 0
      %357 = vmatpush2.bf16.msra.mxu0 0
      %358 = vmatprep.subr.bf16.mxu0 0
      %359 = vmatpush2.bf16.msra.mxu0 0
      %360 = vmatprep.subr.bf16.mxu0 0
      %361 = vmatpush2.bf16.msra.mxu0 0
      %362 = vmatprep.subr.bf16.mxu0 0
      %363 = vmatpush2.bf16.msra.mxu0 0
      %364 = vmatprep.subr.bf16.mxu0 0
      %365 = vmatpush2.bf16.msra.mxu0 0
      %366 = vmatprep.subr.bf16.mxu0 0
      %367 = vmatpush2.bf16.msra.mxu0 0
      %368 = vmatprep.mubr.bf16.mxu0 0
      %369 = vmatmul.mubr.bf16.gmra.mxu0 %v330
      %v370 = vpop.f32.mrf.mxu0
      %v371 = vadd.f32 0.0, %v370
      %v372 = vpop.f32.mrf.mxu0
      %v373 = vpop.f32.mrf.mxu0
      %v374 = vadd.f32 0.0, %v373
      %v375 = vpop.f32.mrf.mxu0
      %376 = vdwg.mxu0
      %v379 = vunpack.c.l.b16 %v311
      %v380 = vunpack.c.l.b16 %v312
      %v381 = vpack.c.b16 %v380, %v379
      %v383 = vsel %vm328, %v381, 0
      %v386 = vsel %vm332, %v316, 0
      %388 = vmatprep.subr.bf16.mxu0 0
      %389 = vmatpush1.bf16.msra.mxu0 0
      %390 = vmatprep.subr.bf16.mxu0 0
      %391 = vmatpush1.bf16.msra.mxu0 0
      %392 = vmatprep.subr.bf16.mxu0 0
      %393 = vmatpush1.bf16.msra.mxu0 0
      %394 = vmatprep.subr.bf16.mxu0 0
      %395 = vmatpush1.bf16.msra.mxu0 0
      %396 = vmatprep.subr.bf16.mxu0 0
      %397 = vmatpush1.bf16.msra.mxu0 0
      %398 = vmatprep.subr.bf16.mxu0 0
      %399 = vmatpush1.bf16.msra.mxu0 0
      %400 = vmatprep.subr.bf16.mxu0 0
      %401 = vmatpush1.bf16.msra.mxu0 0
      %402 = vmatprep.subr.bf16.mxu0 0
      %403 = vmatpush1.bf16.msra.mxu0 %v386
      %404 = vmatprep.subr.bf16.mxu0 0
      %405 = vmatpush2.bf16.msra.mxu0 0
      %406 = vmatprep.subr.bf16.mxu0 0
      %407 = vmatpush2.bf16.msra.mxu0 0
      %408 = vmatprep.subr.bf16.mxu0 0
      %409 = vmatpush2.bf16.msra.mxu0 0
      %410 = vmatprep.subr.bf16.mxu0 0
      %411 = vmatpush2.bf16.msra.mxu0 0
      %412 = vmatprep.subr.bf16.mxu0 0
      %413 = vmatpush2.bf16.msra.mxu0 0
      %414 = vmatprep.subr.bf16.mxu0 0
      %415 = vmatpush2.bf16.msra.mxu0 0
      %416 = vmatprep.subr.bf16.mxu0 0
      %417 = vmatpush2.bf16.msra.mxu0 0
      %418 = vmatprep.subr.bf16.mxu0 0
      %419 = vmatpush2.bf16.msra.mxu0 0
      %420 = vmatprep.mubr.bf16.mxu0 0
      %421 = vmatmul.mubr.bf16.gmra.mxu0 %v383
      %v422 = vpop.f32.mrf.mxu0
      %v423 = vadd.f32 %v371, %v422
      %v424 = vpop.f32.mrf.mxu0
      %v425 = vpop.f32.mrf.mxu0
      %v426 = vadd.f32 %v374, %v425
      %v427 = vpop.f32.mrf.mxu0
      %428 = vdwg.mxu0
      %v429 = vld [vmem:[%s278] sm:$0xf]
      %v430 = vld [vmem:[%s278 + $0x4] sm:$0xf]
      %v431 = vld [vmem:[%s278 + $0x8] sm:$0x1]
      %s432 = sadd.s32 %s313, 2
      %s433 = smul.addr %s432, 4
      %s434 = scalar_lea.vmem %s2, %s433
      %v435 = vld [vmem:[%s434] sm:$0xf]
      %v439 = vunpack.c.l.b16 %v429
      %v440 = vunpack.c.l.b16 %v430
      %v441 = vunpack.c.l.b16 %v431
      %v442 = vpack.c.b16 %v440, %v439
      %v443 = vpack.c.b16 %v441, %v441
      %vm444 = vsmask.f32 7424
      %v446 = vshrl.u32 %v442, 16
      %v448 = vshll.u32 %v442, 16
      %v450 = vrot.slane %v448, 1
      %v451 = vor.u32 %v446, %v450
      %v453 = vshll.u32 %v443, 16
      %v455 = vrot.slane %v453, 1
      %v456 = vsel %vm444, %v451, %v455
      %v458 = vsel %vm328, %v456, 0
      %v461 = vsel %vm332, %v435, 0
      %463 = vmatprep.subr.bf16.mxu0 0
      %464 = vmatpush1.bf16.msra.mxu0 0
      %465 = vmatprep.subr.bf16.mxu0 0
      %466 = vmatpush1.bf16.msra.mxu0 0
      %467 = vmatprep.subr.bf16.mxu0 0
      %468 = vmatpush1.bf16.msra.mxu0 0
      %469 = vmatprep.subr.bf16.mxu0 0
      %470 = vmatpush1.bf16.msra.mxu0 0
      %471 = vmatprep.subr.bf16.mxu0 0
      %472 = vmatpush1.bf16.msra.mxu0 0
      %473 = vmatprep.subr.bf16.mxu0 0
      %474 = vmatpush1.bf16.msra.mxu0 0
      %475 = vmatprep.subr.bf16.mxu0 0
      %476 = vmatpush1.bf16.msra.mxu0 0
      %477 = vmatprep.subr.bf16.mxu0 0
      %478 = vmatpush1.bf16.msra.mxu0 %v461
      %479 = vmatprep.subr.bf16.mxu0 0
      %480 = vmatpush2.bf16.msra.mxu0 0
      %481 = vmatprep.subr.bf16.mxu0 0
      %482 = vmatpush2.bf16.msra.mxu0 0
      %483 = vmatprep.subr.bf16.mxu0 0
      %484 = vmatpush2.bf16.msra.mxu0 0
      %485 = vmatprep.subr.bf16.mxu0 0
      %486 = vmatpush2.bf16.msra.mxu0 0
      %487 = vmatprep.subr.bf16.mxu0 0
      %488 = vmatpush2.bf16.msra.mxu0 0
      %489 = vmatprep.subr.bf16.mxu0 0
      %490 = vmatpush2.bf16.msra.mxu0 0
      %491 = vmatprep.subr.bf16.mxu0 0
      %492 = vmatpush2.bf16.msra.mxu0 0
      %493 = vmatprep.subr.bf16.mxu0 0
      %494 = vmatpush2.bf16.msra.mxu0 0
      %495 = vmatprep.mubr.bf16.mxu0 0
      %496 = vmatmul.mubr.bf16.gmra.mxu0 %v458
      %v497 = vpop.f32.mrf.mxu0
      %v498 = vadd.f32 0.0, %v497
      %v499 = vpop.f32.mrf.mxu0
      %v500 = vpop.f32.mrf.mxu0
      %v501 = vadd.f32 0.0, %v500
      %v502 = vpop.f32.mrf.mxu0
      %503 = vdwg.mxu0
      %v504 = vadd.f32 %v423, %v498
      %v505 = vadd.f32 %v426, %v501
      %v506 = vld [vmem:[%s291] sm:$0xf]
      %v507 = vld [vmem:[%s291 + $0x4] sm:$0xf]
      %v508 = vld [vmem:[%s291 + $0x8] sm:$0x1]
      %s509 = sadd.s32 %s313, 3
      %s510 = smul.addr %s509, 4
      %s511 = scalar_lea.vmem %s2, %s510
      %v512 = vld [vmem:[%s511] sm:$0xf]
      %v516 = vunpack.c.l.b16 %v506
      %v517 = vunpack.c.l.b16 %v507
      %v518 = vunpack.c.l.b16 %v508
      %v519 = vpack.c.b16 %v517, %v516
      %v520 = vpack.c.b16 %v518, %v518
      %v522 = vshrl.u32 %v519, 16
      %v524 = vshll.u32 %v519, 16
      %v526 = vrot.slane %v524, 1
      %v527 = vor.u32 %v522, %v526
      %v529 = vshll.u32 %v520, 16
      %v531 = vrot.slane %v529, 1
      %v532 = vsel %vm444, %v527, %v531
      %v534 = vsel %vm328, %v532, 0
      %v537 = vsel %vm332, %v512, 0
      %539 = vmatprep.subr.bf16.mxu0 0
      %540 = vmatpush1.bf16.msra.mxu0 0
      %541 = vmatprep.subr.bf16.mxu0 0
      %542 = vmatpush1.bf16.msra.mxu0 0
      %543 = vmatprep.subr.bf16.mxu0 0
      %544 = vmatpush1.bf16.msra.mxu0 0
      %545 = vmatprep.subr.bf16.mxu0 0
      %546 = vmatpush1.bf16.msra.mxu0 0
      %547 = vmatprep.subr.bf16.mxu0 0
      %548 = vmatpush1.bf16.msra.mxu0 0
      %549 = vmatprep.subr.bf16.mxu0 0
      %550 = vmatpush1.bf16.msra.mxu0 0
      %551 = vmatprep.subr.bf16.mxu0 0
      %552 = vmatpush1.bf16.msra.mxu0 0
      %553 = vmatprep.subr.bf16.mxu0 0
      %554 = vmatpush1.bf16.msra.mxu0 %v537
      %555 = vmatprep.subr.bf16.mxu0 0
      %556 = vmatpush2.bf16.msra.mxu0 0
      %557 = vmatprep.subr.bf16.mxu0 0
      %558 = vmatpush2.bf16.msra.mxu0 0
      %559 = vmatprep.subr.bf16.mxu0 0
      %560 = vmatpush2.bf16.msra.mxu0 0
      %561 = vmatprep.subr.bf16.mxu0 0
      %562 = vmatpush2.bf16.msra.mxu0 0
      %563 = vmatprep.subr.bf16.mxu0 0
      %564 = vmatpush2.bf16.msra.mxu0 0
      %565 = vmatprep.subr.bf16.mxu0 0
      %566 = vmatpush2.bf16.msra.mxu0 0
      %567 = vmatprep.subr.bf16.mxu0 0
      %568 = vmatpush2.bf16.msra.mxu0 0
      %569 = vmatprep.subr.bf16.mxu0 0
      %570 = vmatpush2.bf16.msra.mxu0 0
      %571 = vmatprep.mubr.bf16.mxu0 0
      %572 = vmatmul.mubr.bf16.gmra.mxu0 %v534
      %v573 = vpop.f32.mrf.mxu0
      %v574 = vadd.f32 0.0, %v573
      %v575 = vpop.f32.mrf.mxu0
      %v576 = vpop.f32.mrf.mxu0
      %v577 = vadd.f32 0.0, %v576
      %v578 = vpop.f32.mrf.mxu0
      %579 = vdwg.mxu0
      %v580 = vadd.f32 %v504, %v574
      %v581 = vadd.f32 %v505, %v577
      %v582 = vld [vmem:[%s278] sm:$0xe]
      %s583 = sadd.s32 %s313, 4
      %s584 = smul.addr %s583, 4
      %s585 = scalar_lea.vmem %s2, %s584
      %v586 = vld [vmem:[%s585] sm:$0xf]
      %v588 = vunpack.c.l.b16 %v582
      %v589 = vpack.c.b16 %v440, %v588
      %vm590 = vcmask 1046528
      %v591 = vrot.slane %v589, 1
      %v592 = vrot.slane %v443, 1
      %v593 = vsel %vm590, %v591, %v592
      %v595 = vsel %vm328, %v593, 0
      %v598 = vsel %vm332, %v586, 0
      %600 = vmatprep.subr.bf16.mxu0 0
      %601 = vmatpush1.bf16.msra.mxu0 0
      %602 = vmatprep.subr.bf16.mxu0 0
      %603 = vmatpush1.bf16.msra.mxu0 0
      %604 = vmatprep.subr.bf16.mxu0 0
      %605 = vmatpush1.bf16.msra.mxu0 0
      %606 = vmatprep.subr.bf16.mxu0 0
      %607 = vmatpush1.bf16.msra.mxu0 0
      %608 = vmatprep.subr.bf16.mxu0 0
      %609 = vmatpush1.bf16.msra.mxu0 0
      %610 = vmatprep.subr.bf16.mxu0 0
      %611 = vmatpush1.bf16.msra.mxu0 0
      %612 = vmatprep.subr.bf16.mxu0 0
      %613 = vmatpush1.bf16.msra.mxu0 0
      %614 = vmatprep.subr.bf16.mxu0 0
      %615 = vmatpush1.bf16.msra.mxu0 %v598
      %616 = vmatprep.subr.bf16.mxu0 0
      %617 = vmatpush2.bf16.msra.mxu0 0
      %618 = vmatprep.subr.bf16.mxu0 0
      %619 = vmatpush2.bf16.msra.mxu0 0
      %620 = vmatprep.subr.bf16.mxu0 0
      %621 = vmatpush2.bf16.msra.mxu0 0
      %622 = vmatprep.subr.bf16.mxu0 0
      %623 = vmatpush2.bf16.msra.mxu0 0
      %624 = vmatprep.subr.bf16.mxu0 0
      %625 = vmatpush2.bf16.msra.mxu0 0
      %626 = vmatprep.subr.bf16.mxu0 0
      %627 = vmatpush2.bf16.msra.mxu0 0
      %628 = vmatprep.subr.bf16.mxu0 0
      %629 = vmatpush2.bf16.msra.mxu0 0
      %630 = vmatprep.subr.bf16.mxu0 0
      %631 = vmatpush2.bf16.msra.mxu0 0
      %632 = vmatprep.mubr.bf16.mxu0 0
      %633 = vmatmul.mubr.bf16.gmra.mxu0 %v595
      %v634 = vpop.f32.mrf.mxu0
      %v635 = vadd.f32 0.0, %v634
      %v636 = vpop.f32.mrf.mxu0
      %v637 = vpop.f32.mrf.mxu0
      %v638 = vadd.f32 0.0, %v637
      %v639 = vpop.f32.mrf.mxu0
      %640 = vdwg.mxu0
      %v641 = vadd.f32 %v580, %v635
      %v642 = vadd.f32 %v581, %v638
      %v643 = vld [vmem:[%s291] sm:$0xe]
      %s644 = sadd.s32 %s313, 5
      %s645 = smul.addr %s644, 4
      %s646 = scalar_lea.vmem %s2, %s645
      %v647 = vld [vmem:[%s646] sm:$0xf]
      %v649 = vunpack.c.l.b16 %v643
      %v650 = vpack.c.b16 %v517, %v649
      %v651 = vrot.slane %v650, 1
      %v652 = vrot.slane %v520, 1
      %v653 = vsel %vm590, %v651, %v652
      %v655 = vsel %vm328, %v653, 0
      %v658 = vsel %vm332, %v647, 0
      %660 = vmatprep.subr.bf16.mxu0 0
      %661 = vmatpush1.bf16.msra.mxu0 0
      %662 = vmatprep.subr.bf16.mxu0 0
      %663 = vmatpush1.bf16.msra.mxu0 0
      %664 = vmatprep.subr.bf16.mxu0 0
      %665 = vmatpush1.bf16.msra.mxu0 0
      %666 = vmatprep.subr.bf16.mxu0 0
      %667 = vmatpush1.bf16.msra.mxu0 0
      %668 = vmatprep.subr.bf16.mxu0 0
      %669 = vmatpush1.bf16.msra.mxu0 0
      %670 = vmatprep.subr.bf16.mxu0 0
      %671 = vmatpush1.bf16.msra.mxu0 0
      %672 = vmatprep.subr.bf16.mxu0 0
      %673 = vmatpush1.bf16.msra.mxu0 0
      %674 = vmatprep.subr.bf16.mxu0 0
      %675 = vmatpush1.bf16.msra.mxu0 %v658
      %676 = vmatprep.subr.bf16.mxu0 0
      %677 = vmatpush2.bf16.msra.mxu0 0
      %678 = vmatprep.subr.bf16.mxu0 0
      %679 = vmatpush2.bf16.msra.mxu0 0
      %680 = vmatprep.subr.bf16.mxu0 0
      %681 = vmatpush2.bf16.msra.mxu0 0
      %682 = vmatprep.subr.bf16.mxu0 0
      %683 = vmatpush2.bf16.msra.mxu0 0
      %684 = vmatprep.subr.bf16.mxu0 0
      %685 = vmatpush2.bf16.msra.mxu0 0
      %686 = vmatprep.subr.bf16.mxu0 0
      %687 = vmatpush2.bf16.msra.mxu0 0
      %688 = vmatprep.subr.bf16.mxu0 0
      %689 = vmatpush2.bf16.msra.mxu0 0
      %690 = vmatprep.subr.bf16.mxu0 0
      %691 = vmatpush2.bf16.msra.mxu0 0
      %692 = vmatprep.mubr.bf16.mxu0 0
      %693 = vmatmul.mubr.bf16.gmra.mxu0 %v655
      %v694 = vpop.f32.mrf.mxu0
      %v695 = vadd.f32 0.0, %v694
      %v696 = vpop.f32.mrf.mxu0
      %v697 = vpop.f32.mrf.mxu0
      %v698 = vadd.f32 0.0, %v697
      %v699 = vpop.f32.mrf.mxu0
      %700 = vdwg.mxu0
      %v701 = vadd.f32 %v641, %v695
      %v702 = vadd.f32 %v642, %v698
      %v703 = vld [vmem:[%s278 + $0x8] sm:$0x3]
      %s704 = sadd.s32 %s313, 6
      %s705 = smul.addr %s704, 4
      %s706 = scalar_lea.vmem %s2, %s705
      %v707 = vld [vmem:[%s706] sm:$0xf]
      %v709 = vunpack.c.l.b16 %v703
      %v710 = vpack.c.b16 %v709, %v709
      %vm711 = vsmask.f32 6400
      %v713 = vshrl.u32 %v589, 16
      %v715 = vrot.slane %v713, 1
      %v716 = vshll.u32 %v589, 16
      %v718 = vrot.slane %v716, 2
      %v719 = vor.u32 %v715, %v718
      %v721 = vshrl.u32 %v710, 16
      %v723 = vrot.slane %v721, 1
      %v724 = vshll.u32 %v710, 16
      %v726 = vrot.slane %v724, 2
      %v727 = vor.u32 %v723, %v726
      %v728 = vsel %vm711, %v719, %v727
      %v730 = vsel %vm328, %v728, 0
      %v733 = vsel %vm332, %v707, 0
      %735 = vmatprep.subr.bf16.mxu0 0
      %736 = vmatpush1.bf16.msra.mxu0 0
      %737 = vmatprep.subr.bf16.mxu0 0
      %738 = vmatpush1.bf16.msra.mxu0 0
      %739 = vmatprep.subr.bf16.mxu0 0
      %740 = vmatpush1.bf16.msra.mxu0 0
      %741 = vmatprep.subr.bf16.mxu0 0
      %742 = vmatpush1.bf16.msra.mxu0 0
      %743 = vmatprep.subr.bf16.mxu0 0
      %744 = vmatpush1.bf16.msra.mxu0 0
      %745 = vmatprep.subr.bf16.mxu0 0
      %746 = vmatpush1.bf16.msra.mxu0 0
      %747 = vmatprep.subr.bf16.mxu0 0
      %748 = vmatpush1.bf16.msra.mxu0 0
      %749 = vmatprep.subr.bf16.mxu0 0
      %750 = vmatpush1.bf16.msra.mxu0 %v733
      %751 = vmatprep.subr.bf16.mxu0 0
      %752 = vmatpush2.bf16.msra.mxu0 0
      %753 = vmatprep.subr.bf16.mxu0 0
      %754 = vmatpush2.bf16.msra.mxu0 0
      %755 = vmatprep.subr.bf16.mxu0 0
      %756 = vmatpush2.bf16.msra.mxu0 0
      %757 = vmatprep.subr.bf16.mxu0 0
      %758 = vmatpush2.bf16.msra.mxu0 0
      %759 = vmatprep.subr.bf16.mxu0 0
      %760 = vmatpush2.bf16.msra.mxu0 0
      %761 = vmatprep.subr.bf16.mxu0 0
      %762 = vmatpush2.bf16.msra.mxu0 0
      %763 = vmatprep.subr.bf16.mxu0 0
      %764 = vmatpush2.bf16.msra.mxu0 0
      %765 = vmatprep.subr.bf16.mxu0 0
      %766 = vmatpush2.bf16.msra.mxu0 0
      %767 = vmatprep.mubr.bf16.mxu0 0
      %768 = vmatmul.mubr.bf16.gmra.mxu0 %v730
      %v769 = vpop.f32.mrf.mxu0
      %v770 = vadd.f32 0.0, %v769
      %v771 = vpop.f32.mrf.mxu0
      %v772 = vpop.f32.mrf.mxu0
      %v773 = vadd.f32 0.0, %v772
      %v774 = vpop.f32.mrf.mxu0
      %775 = vdwg.mxu0
      %v776 = vadd.f32 %v701, %v770
      %v777 = vadd.f32 %v702, %v773
      %v778 = vld [vmem:[#allocation2] sm:$0xff]
      %v779 = vld [vmem:[#allocation2 + $0x8] sm:$0xff]
      %v780 = vadd.f32 %v778, %v776
      %v781 = vadd.f32 %v779, %v777
      %vm782 = vcmask 523264
      %783 = vst.msk [vmem:[#allocation2] sm:$0xff] %vm782, %v780
      %784 = vst.msk [vmem:[#allocation2 + $0x8] sm:$0xff] %vm782, %v781
      %p785 = scmp.eq.s32.totalorder %s22, 6
      // Predicated region
      $region41: #{head_forward.13} parent=35 // pred_check
        %p786 = pneg %p785
      $region42: #{head_forward.13} parent=35 // pred_check_branch
        %788 = sbr.rel (%p786) target = $region44
      $region43: #{head_forward.13} parent=35 // pred_region
        %v789 = vld [vmem:[#allocation2] sm:$0xff]
        %v790 = vld [vmem:[#allocation2 + $0x8] sm:$0xff]
        %v791 = vld [vmem:[%s3] sm:$0x1]
        %v793 = vlaneseq
        %v794 = vshrl.u32 %v793, 7
        %v795 = vsub.s32 0, %v794
        %v796 = vrot.slane %v791, %v795
        %v798 = vadd.f32 %v789, %v796
        %v799 = vadd.f32 %v790, %v796
        %v800 = vmax.f32 %v798, 0.0
        %v801 = vmax.f32 %v799, 0.0
        %v802 = vpack.c.bf16 %v801, %v800
        %v804 = vunpack.c.l.b16 %v802
        %v805 = vunpack.c.h.b16 %v802
        %v806 = vpack.c.b16 %v804, %v804
        %v807 = vpack.c.b16 %v805, %v805
        %vm810 = vcmask 519168
        %811 = vst.msk [vmem:[%s302] sm:$0xf] %vm810, %v806
        %812 = vst.msk [vmem:[%s302 + $0x4] sm:$0xf] %vm810, %v807
      $region44: #{head_forward.13} parent=35 // pred_fallthru
        _
      %p813 = scmp.lt.s32.totalorder %s20, 1
      %s814 = scalar_select %p813, %s20, 1
      %p815 = scmp.lt.s32.totalorder %s21, 15
      %s816 = scalar_select %p815, %s21, 15
      %s817 = smul.addr %s816, 2
      %s818 = smul.addr %s814, 32
      %s819 = sadd.s32 %s817, %s818
      %s820 = smul.addr %s819, 4
      %s821 = scalar_lea.vmem %s4, %s820
      // Predicated region
      $region45: #{head_forward.13} parent=35 // pred_check
        %p822 = pneg %p160
      $region46: #{head_forward.13} parent=35 // pred_check_branch
        %824 = sbr.rel (%p822) target = $region48
      $region47: #{head_forward.13} parent=35 // pred_region
        _
      $region48: #{head_forward.13} parent=35 // pred_fallthru
        _
    $region36: #{head_forward.13} parent=5 // pred_fallthru
      _
    %p825 = scmp.le.s32.totalorder 2, %s10
    // Predicated region
    $region49: #{head_forward.13} parent=5 // pred_check
      %p826 = pneg %p825
    $region50: #{head_forward.13} parent=5 // pred_check_branch
      %828 = sbr.rel (%p826) target = $region52
    $region51: #{head_forward.13} parent=5 // pred_region
      %s829 = ssub.s32 %s10, 2
      // Predicated region
      $region53: #{head_forward.13} parent=51 // pred_check
        %p830 = pneg %p166
      $region54: #{head_forward.13} parent=51 // pred_check_branch
        %832 = sbr.rel (%p830) target = $region56
      $region55: #{head_forward.13} parent=51 // pred_region
        %p833 = scmp.lt.s32.totalorder %s23, 1
        %s834 = scalar_select %p833, %s23, 1
        %p835 = scmp.lt.s32.totalorder %s24, 15
        %s836 = scalar_select %p835, %s24, 15
        %s837 = smul.addr %s836, 2
        %s838 = smul.addr %s834, 32
        %s839 = sadd.s32 %s837, %s838
        %s840 = smul.addr %s839, 4
        %s841 = scalar_lea.vmem %s4, %s840
      $region56: #{head_forward.13} parent=51 // pred_fallthru
        _
    $region52: #{head_forward.13} parent=5 // pred_fallthru
      _
  $region6: #{head_forward.13} parent=0 // loop_footer
    %s14 = sadd.s32 1, %s10
  $region7: #{head_forward.13} parent=0 // loop_footer_branch
    %9 = sbr.rel target = $region3
  $region8: #{head_forward.13} parent=0 // loop_exit
    _

// kernel: head_forward.15
$region0: #{head_forward.15}
  #allocation0 [shape = 'u32[]', space=smem, size = 0x4, offset = 0x4, fixed_abs, tag = 'smem constant byte address 0x4 - core index']
  #allocation1 [shape = 'u32[144,128]{1,0:T(1,128)}', space=vmem, size = 0x12000, scoped, tag = 'internal scratch']
  #allocation2 [shape = 'f32[8,64]{1,0:T(8,128)}', space=vmem, size = 0x1000, scoped, tag = 'scratch operand']
  %s0 = inlined_call_operand.vmem [shape: bf16[2,10,10,64], index: 0, kind: input, shape index: {}]
  %s1 = inlined_call_operand.vmem [shape: bf16[9,64,64], index: 1, kind: input, shape index: {}]
  %s2 = inlined_call_operand.vmem [shape: f32[1,64], index: 2, kind: input, shape index: {}]
  %s3 = inlined_call_operand.vmem [shape: bf16[2,8,8,64], index: 3, kind: input, shape index: {}]
  %s4 = inlined_call_operand.vmem [shape: bf16[2,8,8,64], index: 4, kind: output, shape index: {}]
  %s5 = sld [smem:[#allocation0]]
  $region57: #{head_forward.15} parent=0
    _
  %s7 = ssub.s32 1, %s5
  %s8 = scalar_select 0, %s7, %s5
  loop: start=0, step=1, limit=50
  $region2: #{head_forward.15} parent=0 // loop_pre_header
    _
  $region3: #{head_forward.15} parent=0 // loop_header
    %s10 = sphi 0, %s14
    %p11 = scmp.ge.s32.totalorder %s10, 50
    %s17 = sphi 0, %s36
    %s18 = sphi 0, %s32
    %s19 = sphi 0, %s28
    %s20 = sphi 0, %s17
    %s21 = sphi 0, %s18
    %s22 = sphi 0, %s19
    %s23 = sphi 0, %s20
    %s24 = sphi 0, %s21
    %s25 = sphi 0, %s22
    %s43 = sphi 0, %s45
    %s46 = sphi 0, %s43
    %s47 = sphi 0, %s46
    %s63 = sphi 0, %s47
    %s67 = sphi 0, %s67
    %s69 = sphi 0, %s67
    %s70 = sphi 0, %s69
    %s84 = sphi 0, %s70
    %s88 = sphi 0, %s88
    %s90 = sphi 0, %s88
    %s91 = sphi 0, %s90
    %s105 = sphi 0, %s91
    %s113 = sphi 0, %s115
    %s116 = sphi 0, %s113
    %s117 = sphi 0, %s116
    %s133 = sphi 0, %s117
    %s141 = sphi 0, %s143
    %s144 = sphi 0, %s141
    %s145 = sphi 0, %s144
    %s161 = sphi 0, %s145
  $region4: #{head_forward.15} parent=0 // loop_header_branch
    %13 = sbr.rel (%p11) target = $region8
  $region5: #{head_forward.15} parent=0 // loop_body
    %s15 = ssub.s32 %s10, 1
    %s16 = ssub.s32 %s10, 2
    %s26 = sadd.s32 1, %s19
    %p27 = scmp.ge.s32.totalorder %s26, 3
    %s28 = scalar_select %p27, 0, %s26
    %s29 = sadd.s32 1, %s18
    %s30 = scalar_select %p27, %s29, %s18
    %p31 = scmp.ge.s32.totalorder %s30, 8
    %s32 = scalar_select %p31, 0, %s30
    %s33 = sadd.s32 1, %s17
    %s34 = scalar_select %p31, %s33, %s17
    %p35 = scmp.ge.s32.totalorder %s34, 2
    %s36 = scalar_select %p35, 0, %s34
    %s37 = sadd.s32 %s18, %s19
    %s38 = sadd.s32 %s32, %s28
    %s39 = ssub.s32 %s17, %s36
    %s40 = ssub.s32 %s37, %s38
    %s41 = sor.u32 %s39, %s40
    %p42 = scmp.eq.s32.totalorder %s41, 0
    %s44 = sadd.s32 %s43, 1
    %s45 = scalar_select %p42, %s43, %s44
    %p48 = pneg %p42
    %p49 = scmp.eq.s32.totalorder %s10, 47
    %p50 = por %p48, %p49
    %p51 = scmp.ne.s32.totalorder %s43, %s46
    %p52 = scmp.eq.s32.totalorder %s10, 0
    %p53 = por %p51, %p52
    %p54 = scmp.ne.s32.totalorder %s43, %s46
    %p55 = scmp.eq.s32.totalorder %s15, 47
    %p56 = por %p54, %p55
    %p57 = scmp.ne.s32.totalorder %s46, %s47
    %p58 = scmp.eq.s32.totalorder %s15, 0
    %p59 = por %p57, %p58
    %p60 = scmp.ne.s32.totalorder %s46, %s47
    %p61 = scmp.eq.s32.totalorder %s16, 47
    %p62 = por %p60, %p61
    %p64 = scmp.ne.s32.totalorder %s47, %s63
    %p65 = scmp.eq.s32.totalorder %s16, 0
    %p66 = por %p64, %p65
    %s68 = sadd.s32 %s67, 1
    %p71 = scmp.eq.s32.totalorder %s10, 47
    %p72 = scmp.ne.s32.totalorder %s67, %s69
    %p73 = scmp.eq.s32.totalorder %s10, 0
    %p74 = por %p72, %p73
    %p75 = scmp.ne.s32.totalorder %s67, %s69
    %p76 = scmp.eq.s32.totalorder %s15, 47
    %p77 = por %p75, %p76
    %p78 = scmp.ne.s32.totalorder %s69, %s70
    %p79 = scmp.eq.s32.totalorder %s15, 0
    %p80 = por %p78, %p79
    %p81 = scmp.ne.s32.totalorder %s69, %s70
    %p82 = scmp.eq.s32.totalorder %s16, 47
    %p83 = por %p81, %p82
    %p85 = scmp.ne.s32.totalorder %s70, %s84
    %p86 = scmp.eq.s32.totalorder %s16, 0
    %p87 = por %p85, %p86
    %s89 = sadd.s32 %s88, 1
    %p92 = scmp.eq.s32.totalorder %s10, 47
    %p93 = scmp.ne.s32.totalorder %s88, %s90
    %p94 = scmp.eq.s32.totalorder %s10, 0
    %p95 = por %p93, %p94
    %p96 = scmp.ne.s32.totalorder %s88, %s90
    %p97 = scmp.eq.s32.totalorder %s15, 47
    %p98 = por %p96, %p97
    %p99 = scmp.ne.s32.totalorder %s90, %s91
    %p100 = scmp.eq.s32.totalorder %s15, 0
    %p101 = por %p99, %p100
    %p102 = scmp.ne.s32.totalorder %s90, %s91
    %p103 = scmp.eq.s32.totalorder %s16, 47
    %p104 = por %p102, %p103
    %p106 = scmp.ne.s32.totalorder %s91, %s105
    %p107 = scmp.eq.s32.totalorder %s16, 0
    %p108 = por %p106, %p107
    %s109 = ssub.s32 %s17, %s36
    %s110 = ssub.s32 %s18, %s32
    %s111 = sor.u32 %s109, %s110
    %p112 = scmp.eq.s32.totalorder %s111, 0
    %s114 = sadd.s32 %s113, 1
    %s115 = scalar_select %p112, %s113, %s114
    %p118 = pneg %p112
    %p119 = scmp.eq.s32.totalorder %s10, 47
    %p120 = por %p118, %p119
    %p121 = scmp.ne.s32.totalorder %s113, %s116
    %p122 = scmp.eq.s32.totalorder %s10, 0
    %p123 = por %p121, %p122
    %p124 = scmp.ne.s32.totalorder %s113, %s116
    %p125 = scmp.eq.s32.totalorder %s15, 47
    %p126 = por %p124, %p125
    %p127 = scmp.ne.s32.totalorder %s116, %s117
    %p128 = scmp.eq.s32.totalorder %s15, 0
    %p129 = por %p127, %p128
    %p130 = scmp.ne.s32.totalorder %s116, %s117
    %p131 = scmp.eq.s32.totalorder %s16, 47
    %p132 = por %p130, %p131
    %p134 = scmp.ne.s32.totalorder %s117, %s133
    %p135 = scmp.eq.s32.totalorder %s16, 0
    %p136 = por %p134, %p135
    %s137 = ssub.s32 %s17, %s36
    %s138 = ssub.s32 %s18, %s32
    %s139 = sor.u32 %s137, %s138
    %p140 = scmp.eq.s32.totalorder %s139, 0
    %s142 = sadd.s32 %s141, 1
    %s143 = scalar_select %p140, %s141, %s142
    %p146 = pneg %p140
    %p147 = scmp.eq.s32.totalorder %s10, 47
    %p148 = por %p146, %p147
    %p149 = scmp.ne.s32.totalorder %s141, %s144
    %p150 = scmp.eq.s32.totalorder %s10, 0
    %p151 = por %p149, %p150
    %p152 = scmp.ne.s32.totalorder %s141, %s144
    %p153 = scmp.eq.s32.totalorder %s15, 47
    %p154 = por %p152, %p153
    %p155 = scmp.ne.s32.totalorder %s144, %s145
    %p156 = scmp.eq.s32.totalorder %s15, 0
    %p157 = por %p155, %p156
    %p158 = scmp.ne.s32.totalorder %s144, %s145
    %p159 = scmp.eq.s32.totalorder %s16, 47
    %p160 = por %p158, %p159
    %p162 = scmp.ne.s32.totalorder %s145, %s161
    %p163 = scmp.eq.s32.totalorder %s16, 0
    %p164 = por %p162, %p163
    %p165 = scmp.le.s32.totalorder 1, %s10
    %p166 = scmp.lt.s32.totalorder %s10, 49
    %p167 = pnand %p165, %p166
    %p168 = pneg %p167
    // Predicated region
    $region9: #{head_forward.15} parent=5 // pred_check
      _
    $region10: #{head_forward.15} parent=5 // pred_check_branch
      %170 = sbr.rel (%p167) target = $region12
    $region11: #{head_forward.15} parent=5 // pred_region
      %s171 = ssub.s32 %s10, 1
      // Predicated region
      $region13: #{head_forward.15} parent=11 // pred_check
        %p172 = pneg %p80
      $region14: #{head_forward.15} parent=11 // pred_check_branch
        %174 = sbr.rel (%p172) target = $region16
      $region15: #{head_forward.15} parent=11 // pred_region
        _
      $region16: #{head_forward.15} parent=11 // pred_fallthru
        _
      // Predicated region
      $region17: #{head_forward.15} parent=11 // pred_check
        %p175 = pneg %p101
      $region18: #{head_forward.15} parent=11 // pred_check_branch
        %177 = sbr.rel (%p175) target = $region20
      $region19: #{head_forward.15} parent=11 // pred_region
        _
      $region20: #{head_forward.15} parent=11 // pred_fallthru
        _
    $region12: #{head_forward.15} parent=5 // pred_fallthru
      _
    %p178 = scmp.lt.s32.totalorder %s10, 48
    // Predicated region
    $region21: #{head_forward.15} parent=5 // pred_check
      %p179 = pneg %p178
    $region22: #{head_forward.15} parent=5 // pred_check_branch
      %181 = sbr.rel (%p179) target = $region24
    $region23: #{head_forward.15} parent=5 // pred_region
      // Predicated region
      $region25: #{head_forward.15} parent=23 // pred_check
        %p182 = pneg %p53
      $region26: #{head_forward.15} parent=23 // pred_check_branch
        %184 = sbr.rel (%p182) target = $region28
      $region27: #{head_forward.15} parent=23 // pred_region
        %s185 = sadd.s32 %s18, %s19
        %p186 = scmp.lt.s32.totalorder %s17, 1
        %s187 = scalar_select %p186, %s17, 1
        %p188 = scmp.lt.s32.totalorder %s185, 9
        %s189 = scalar_select %p188, %s185, 9
        %s190 = smul.addr %s189, 2
        %s191 = smul.addr %s187, 20
        %s192 = sadd.s32 %s190, %s191
        %s193 = smul.addr %s192, 4
        %s194 = scalar_lea.vmem %s0, %s193
        %s195 = sadd.s32 %s18, %s19
      $region28: #{head_forward.15} parent=23 // pred_fallthru
        _
      // Predicated region
      $region29: #{head_forward.15} parent=23 // pred_check
        %p196 = pneg %p123
      $region30: #{head_forward.15} parent=23 // pred_check_branch
        %198 = sbr.rel (%p196) target = $region32
      $region31: #{head_forward.15} parent=23 // pred_region
        %p199 = scmp.lt.s32.totalorder %s17, 1
        %s200 = scalar_select %p199, %s17, 1
        %p201 = scmp.lt.s32.totalorder %s18, 7
        %s202 = scalar_select %p201, %s18, 7
        %s203 = smul.addr %s200, 8
        %s204 = sadd.s32 %s202, %s203
        %s205 = smul.addr %s204, 4
        %s206 = scalar_lea.vmem %s3, %s205
      $region32: #{head_forward.15} parent=23 // pred_fallthru
        _
    $region24: #{head_forward.15} parent=5 // pred_fallthru
      _
    %p207 = scmp.le.s32.totalorder 1, %s10
    %p208 = scmp.lt.s32.totalorder %s10, 49
    %p209 = pnand %p207, %p208
    %p210 = pneg %p209
    // Predicated region
    $region33: #{head_forward.15} parent=5 // pred_check
      _
    $region34: #{head_forward.15} parent=5 // pred_check_branch
      %212 = sbr.rel (%p209) target = $region36
    $region35: #{head_forward.15} parent=5 // pred_region
      %s213 = ssub.s32 %s10, 1
      %s214 = sadd.s32 %s21, %s22
      %p215 = scmp.lt.s32.totalorder %s20, 1
      %s216 = scalar_select %p215, %s20, 1
      %p217 = scmp.lt.s32.totalorder %s214, 9
      %s218 = scalar_select %p217, %s214, 9
      %s219 = smul.addr %s218, 2
      %s220 = smul.addr %s216, 20
      %s221 = sadd.s32 %s219, %s220
      %s222 = smul.addr %s221, 4
      %s223 = scalar_lea.vmem %s0, %s222
      %p224 = pneg %p59
      %p225 = pneg %p56
      %p226 = pneg %p80
      %p227 = pneg %p77
      %p228 = pneg %p101
      %p229 = pneg %p98
      %p230 = scmp.lt.s32.totalorder %s20, 1
      %s231 = scalar_select %p230, %s20, 1
      %p232 = scmp.lt.s32.totalorder %s21, 7
      %s233 = scalar_select %p232, %s21, 7
      %s234 = smul.addr %s231, 8
      %s235 = sadd.s32 %s233, %s234
      %s236 = smul.addr %s235, 4
      %s237 = scalar_lea.vmem %s3, %s236
      %p238 = pneg %p129
      %p239 = pneg %p126
      %p240 = pneg %p157
      %p241 = pneg %p154
      %p242 = scmp.lt.s32.totalorder %s20, 1
      %s243 = scalar_select %p242, %s20, 1
      %p244 = scmp.lt.s32.totalorder %s21, 7
      %s245 = scalar_select %p244, %s21, 7
      %s246 = smul.addr %s243, 8
      %s247 = sadd.s32 %s245, %s246
      %s248 = smul.addr %s247, 4
      %s249 = scalar_lea.vmem %s4, %s248
      %s250 = sadd.s32 %s21, %s22
      %p251 = scmp.lt.s32.totalorder %s20, 1
      %s252 = scalar_select %p251, %s20, 1
      %p253 = scmp.lt.s32.totalorder %s250, 9
      %s254 = scalar_select %p253, %s250, 9
      %s255 = smul.addr %s254, 2
      %s256 = smul.addr %s252, 20
      %s257 = sadd.s32 %s255, %s256
      %s258 = smul.addr %s257, 4
      %s259 = scalar_lea.vmem %s0, %s258
      %s260 = sadd.s32 %s21, %s22
      %p261 = scmp.lt.s32.totalorder %s20, 1
      %s262 = scalar_select %p261, %s20, 1
      %p263 = scmp.lt.s32.totalorder %s21, 7
      %s264 = scalar_select %p263, %s21, 7
      %s265 = smul.addr %s262, 8
      %s266 = sadd.s32 %s264, %s265
      %s267 = smul.addr %s266, 4
      %s268 = scalar_lea.vmem %s3, %s267
      %p269 = scmp.lt.s32.totalorder %s20, 1
      %s270 = scalar_select %p269, %s20, 1
      %p271 = scmp.lt.s32.totalorder %s21, 7
      %s272 = scalar_select %p271, %s21, 7
      %s273 = smul.addr %s270, 8
      %s274 = sadd.s32 %s272, %s273
      %s275 = smul.addr %s274, 4
      %s276 = scalar_lea.vmem %s4, %s275
      %p278 = scmp.eq.s32.totalorder %s22, 0
      // Predicated region
      $region37: #{head_forward.15} parent=35 // pred_check
        %p279 = pneg %p278
      $region38: #{head_forward.15} parent=35 // pred_check_branch
        %281 = sbr.rel (%p279) target = $region40
      $region39: #{head_forward.15} parent=35 // pred_region
        %vm282 = vcmask 523264
        %283 = vst.msk [vmem:[#allocation2] sm:$0xff] %vm282, 0.0
      $region40: #{head_forward.15} parent=35 // pred_fallthru
        _
      %v284 = vld [vmem:[%s259] sm:$0xf]
      %s285 = smul.u32 %s22, 3
      %s286 = smul.u32 %s285, 8
      %s287 = smul.addr %s286, 4
      %s288 = scalar_lea.vmem %s1, %s287
      %v289 = vld [vmem:[%s288] sm:$0xf]
      %v290 = vld [vmem:[%s288 + $0x4] sm:$0xf]
      %v291 = vld [vmem:[%s288 + $0x8] sm:$0xf]
      %v292 = vld [vmem:[%s288 + $0xc] sm:$0xf]
      %v293 = vld [vmem:[%s288 + $0x10] sm:$0xf]
      %v294 = vld [vmem:[%s288 + $0x14] sm:$0xf]
      %v295 = vld [vmem:[%s288 + $0x18] sm:$0xf]
      %v296 = vld [vmem:[%s288 + $0x1c] sm:$0xf]
      %v297 = vld [vmem:[%s259 + $0x4] sm:$0x1]
      %s298 = sadd.s32 %s285, 1
      %s299 = smul.u32 %s298, 8
      %s300 = smul.addr %s299, 4
      %s301 = scalar_lea.vmem %s1, %s300
      %v302 = vld [vmem:[%s301] sm:$0xf]
      %v303 = vld [vmem:[%s301 + $0x4] sm:$0xf]
      %v304 = vld [vmem:[%s301 + $0x8] sm:$0xf]
      %v305 = vld [vmem:[%s301 + $0xc] sm:$0xf]
      %v306 = vld [vmem:[%s301 + $0x10] sm:$0xf]
      %v307 = vld [vmem:[%s301 + $0x14] sm:$0xf]
      %v308 = vld [vmem:[%s301 + $0x18] sm:$0xf]
      %v309 = vld [vmem:[%s301 + $0x1c] sm:$0xf]
      %v312 = vunpack.c.l.b16 %v284
      %v313 = vunpack.c.l.b16 %v297
      %v314 = vpack.c.b16 %v313, %v312
      %v316 = vshrl.u32 %v314, 16
      %v318 = vshll.u32 %v314, 16
      %v320 = vrot.slane %v318, 1
      %v321 = vor.u32 %v316, %v320
      %v330 = vunpack.c.l.b16 %v302
      %v331 = vunpack.c.l.b16 %v303
      %v332 = vunpack.c.l.b16 %v304
      %v333 = vunpack.c.l.b16 %v305
      %v334 = vunpack.c.l.b16 %v306
      %v335 = vunpack.c.l.b16 %v307
      %v336 = vunpack.c.l.b16 %v308
      %v337 = vunpack.c.l.b16 %v309
      %v338 = vpack.c.b16 %v331, %v330
      %v339 = vpack.c.b16 %v333, %v332
      %v340 = vpack.c.b16 %v335, %v334
      %v341 = vpack.c.b16 %v337, %v336
      %vm346 = vcmask 523264
      %v348 = vsel %vm346, %v321, 0
      %350 = vmatprep.subr.bf16.mxu0 0
      %351 = vmatpush1.bf16.msra.mxu0 0
      %352 = vmatprep.subr.bf16.mxu0 0
      %353 = vmatpush1.bf16.msra.mxu0 0
      %354 = vmatprep.subr.bf16.mxu0 0
      %355 = vmatpush1.bf16.msra.mxu0 0
      %356 = vmatprep.subr.bf16.mxu0 0
      %357 = vmatpush1.bf16.msra.mxu0 0
      %358 = vmatprep.subr.bf16.mxu0 0
      %359 = vmatpush1.bf16.msra.mxu0 %v341
      %360 = vmatprep.subr.bf16.mxu0 0
      %361 = vmatpush1.bf16.msra.mxu0 %v340
      %362 = vmatprep.subr.bf16.mxu0 0
      %363 = vmatpush1.bf16.msra.mxu0 %v339
      %364 = vmatprep.subr.bf16.mxu0 0
      %365 = vmatpush1.bf16.msra.mxu0 %v338
      %366 = vmatprep.subr.bf16.mxu0 0
      %367 = vmatpush2.bf16.msra.mxu0 0
      %368 = vmatprep.subr.bf16.mxu0 0
      %369 = vmatpush2.bf16.msra.mxu0 0
      %370 = vmatprep.subr.bf16.mxu0 0
      %371 = vmatpush2.bf16.msra.mxu0 0
      %372 = vmatprep.subr.bf16.mxu0 0
      %373 = vmatpush2.bf16.msra.mxu0 0
      %374 = vmatprep.subr.bf16.mxu0 0
      %375 = vmatpush2.bf16.msra.mxu0 0
      %376 = vmatprep.subr.bf16.mxu0 0
      %377 = vmatpush2.bf16.msra.mxu0 0
      %378 = vmatprep.subr.bf16.mxu0 0
      %379 = vmatpush2.bf16.msra.mxu0 0
      %380 = vmatprep.subr.bf16.mxu0 0
      %381 = vmatpush2.bf16.msra.mxu0 0
      %382 = vmatprep.mubr.bf16.mxu0 0
      %383 = vmatmul.mubr.bf16.gmra.mxu0 %v348
      %v384 = vpop.f32.mrf.mxu0
      %v385 = vadd.f32 0.0, %v384
      %v386 = vpop.f32.mrf.mxu0
      %v387 = vpop.f32.mrf.mxu0
      %v388 = vpop.f32.mrf.mxu0
      %389 = vdwg.mxu0
      %v398 = vunpack.c.l.b16 %v289
      %v399 = vunpack.c.l.b16 %v290
      %v400 = vunpack.c.l.b16 %v291
      %v401 = vunpack.c.l.b16 %v292
      %v402 = vunpack.c.l.b16 %v293
      %v403 = vunpack.c.l.b16 %v294
      %v404 = vunpack.c.l.b16 %v295
      %v405 = vunpack.c.l.b16 %v296
      %v406 = vpack.c.b16 %v399, %v398
      %v407 = vpack.c.b16 %v401, %v400
      %v408 = vpack.c.b16 %v403, %v402
      %v409 = vpack.c.b16 %v405, %v404
      %v415 = vsel %vm346, %v284, 0
      %417 = vmatprep.subr.bf16.mxu0 0
      %418 = vmatpush1.bf16.msra.mxu0 0
      %419 = vmatprep.subr.bf16.mxu0 0
      %420 = vmatpush1.bf16.msra.mxu0 0
      %421 = vmatprep.subr.bf16.mxu0 0
      %422 = vmatpush1.bf16.msra.mxu0 0
      %423 = vmatprep.subr.bf16.mxu0 0
      %424 = vmatpush1.bf16.msra.mxu0 0
      %425 = vmatprep.subr.bf16.mxu0 0
      %426 = vmatpush1.bf16.msra.mxu0 %v409
      %427 = vmatprep.subr.bf16.mxu0 0
      %428 = vmatpush1.bf16.msra.mxu0 %v408
      %429 = vmatprep.subr.bf16.mxu0 0
      %430 = vmatpush1.bf16.msra.mxu0 %v407
      %431 = vmatprep.subr.bf16.mxu0 0
      %432 = vmatpush1.bf16.msra.mxu0 %v406
      %433 = vmatprep.subr.bf16.mxu0 0
      %434 = vmatpush2.bf16.msra.mxu0 0
      %435 = vmatprep.subr.bf16.mxu0 0
      %436 = vmatpush2.bf16.msra.mxu0 0
      %437 = vmatprep.subr.bf16.mxu0 0
      %438 = vmatpush2.bf16.msra.mxu0 0
      %439 = vmatprep.subr.bf16.mxu0 0
      %440 = vmatpush2.bf16.msra.mxu0 0
      %441 = vmatprep.subr.bf16.mxu0 0
      %442 = vmatpush2.bf16.msra.mxu0 0
      %443 = vmatprep.subr.bf16.mxu0 0
      %444 = vmatpush2.bf16.msra.mxu0 0
      %445 = vmatprep.subr.bf16.mxu0 0
      %446 = vmatpush2.bf16.msra.mxu0 0
      %447 = vmatprep.subr.bf16.mxu0 0
      %448 = vmatpush2.bf16.msra.mxu0 0
      %449 = vmatprep.mubr.bf16.mxu0 0
      %450 = vmatmul.mubr.bf16.gmra.mxu0 %v415
      %v451 = vpop.f32.mrf.mxu0
      %v452 = vadd.f32 %v385, %v451
      %v453 = vpop.f32.mrf.mxu0
      %v454 = vpop.f32.mrf.mxu0
      %v455 = vpop.f32.mrf.mxu0
      %456 = vdwg.mxu0
      %v457 = vld [vmem:[%s259] sm:$0xe]
      %s458 = sadd.s32 %s285, 2
      %s459 = smul.u32 %s458, 8
      %s460 = smul.addr %s459, 4
      %s461 = scalar_lea.vmem %s1, %s460
      %v462 = vld [vmem:[%s461] sm:$0xf]
      %v463 = vld [vmem:[%s461 + $0x4] sm:$0xf]
      %v464 = vld [vmem:[%s461 + $0x8] sm:$0xf]
      %v465 = vld [vmem:[%s461 + $0xc] sm:$0xf]
      %v466 = vld [vmem:[%s461 + $0x10] sm:$0xf]
      %v467 = vld [vmem:[%s461 + $0x14] sm:$0xf]
      %v468 = vld [vmem:[%s461 + $0x18] sm:$0xf]
      %v469 = vld [vmem:[%s461 + $0x1c] sm:$0xf]
      %v471 = vunpack.c.l.b16 %v457
      %v472 = vpack.c.b16 %v313, %v471
      %v473 = vrot.slane %v472, 1
      %v482 = vunpack.c.l.b16 %v462
      %v483 = vunpack.c.l.b16 %v463
      %v484 = vunpack.c.l.b16 %v464
      %v485 = vunpack.c.l.b16 %v465
      %v486 = vunpack.c.l.b16 %v466
      %v487 = vunpack.c.l.b16 %v467
      %v488 = vunpack.c.l.b16 %v468
      %v489 = vunpack.c.l.b16 %v469
      %v490 = vpack.c.b16 %v483, %v482
      %v491 = vpack.c.b16 %v485, %v484
      %v492 = vpack.c.b16 %v487, %v486
      %v493 = vpack.c.b16 %v489, %v488
      %v499 = vsel %vm346, %v473, 0
      %501 = vmatprep.subr.bf16.mxu0 0
      %502 = vmatpush1.bf16.msra.mxu0 0
      %503 = vmatprep.subr.bf16.mxu0 0
      %504 = vmatpush1.bf16.msra.mxu0 0
      %505 = vmatprep.subr.bf16.mxu0 0
      %506 = vmatpush1.bf16.msra.mxu0 0
      %507 = vmatprep.subr.bf16.mxu0 0
      %508 = vmatpush1.bf16.msra.mxu0 0
      %509 = vmatprep.subr.bf16.mxu0 0
      %510 = vmatpush1.bf16.msra.mxu0 %v493
      %511 = vmatprep.subr.bf16.mxu0 0
      %512 = vmatpush1.bf16.msra.mxu0 %v492
      %513 = vmatprep.subr.bf16.mxu0 0
      %514 = vmatpush1.bf16.msra.mxu0 %v491
      %515 = vmatprep.subr.bf16.mxu0 0
      %516 = vmatpush1.bf16.msra.mxu0 %v490
      %517 = vmatprep.subr.bf16.mxu0 0
      %518 = vmatpush2.bf16.msra.mxu0 0
      %519 = vmatprep.subr.bf16.mxu0 0
      %520 = vmatpush2.bf16.msra.mxu0 0
      %521 = vmatprep.subr.bf16.mxu0 0
      %522 = vmatpush2.bf16.msra.mxu0 0
      %523 = vmatprep.subr.bf16.mxu0 0
      %524 = vmatpush2.bf16.msra.mxu0 0
      %525 = vmatprep.subr.bf16.mxu0 0
      %526 = vmatpush2.bf16.msra.mxu0 0
      %527 = vmatprep.subr.bf16.mxu0 0
      %528 = vmatpush2.bf16.msra.mxu0 0
      %529 = vmatprep.subr.bf16.mxu0 0
      %530 = vmatpush2.bf16.msra.mxu0 0
      %531 = vmatprep.subr.bf16.mxu0 0
      %532 = vmatpush2.bf16.msra.mxu0 0
      %533 = vmatprep.mubr.bf16.mxu0 0
      %534 = vmatmul.mubr.bf16.gmra.mxu0 %v499
      %v535 = vpop.f32.mrf.mxu0
      %v536 = vadd.f32 0.0, %v535
      %v537 = vpop.f32.mrf.mxu0
      %v538 = vpop.f32.mrf.mxu0
      %v539 = vpop.f32.mrf.mxu0
      %540 = vdwg.mxu0
      %v541 = vadd.f32 %v452, %v536
      %v542 = vld [vmem:[#allocation2] sm:$0xff]
      %v543 = vadd.f32 %v542, %v541
      %544 = vst.msk [vmem:[#allocation2] sm:$0xff] %vm346, %v543
      %p545 = scmp.eq.s32.totalorder %s22, 2
      // Predicated region
      $region41: #{head_forward.15} parent=35 // pred_check
        %p546 = pneg %p545
      $region42: #{head_forward.15} parent=35 // pred_check_branch
        %548 = sbr.rel (%p546) target = $region44
      $region43: #{head_forward.15} parent=35 // pred_region
        %v549 = vld [vmem:[#allocation2] sm:$0xff]
        %v550 = vld [vmem:[%s2] sm:$0x1]
        %v552 = vlaneseq
        %v553 = vshrl.u32 %v552, 7
        %v554 = vsub.s32 0, %v553
        %v555 = vrot.slane %v550, %v554
        %v557 = vadd.f32 %v549, %v555
        %v558 = vld [vmem:[%s268] sm:$0xf]
        %v559 = vunpack.c.l.bf16 %v558
        %v560 = vadd.f32 %v557, %v559
        %v561 = vmax.f32 %v560, 0.0
        %v562 = vpack.c.bf16 %v561, %v561
        %vm563 = vcmask 519168
        %564 = vst.msk [vmem:[%s276] sm:$0xf] %vm563, %v562
      $region44: #{head_forward.15} parent=35 // pred_fallthru
        _
      %p565 = scmp.lt.s32.totalorder %s20, 1
      %s566 = scalar_select %p565, %s20, 1
      %p567 = scmp.lt.s32.totalorder %s21, 7
      %s568 = scalar_select %p567, %s21, 7
      %s569 = smul.addr %s566, 8
      %s570 = sadd.s32 %s568, %s569
      %s571 = smul.addr %s570, 4
      %s572 = scalar_lea.vmem %s4, %s571
      // Predicated region
      $region45: #{head_forward.15} parent=35 // pred_check
        %p573 = pneg %p154
      $region46: #{head_forward.15} parent=35 // pred_check_branch
        %575 = sbr.rel (%p573) target = $region48
      $region47: #{head_forward.15} parent=35 // pred_region
        _
      $region48: #{head_forward.15} parent=35 // pred_fallthru
        _
    $region36: #{head_forward.15} parent=5 // pred_fallthru
      _
    %p576 = scmp.le.s32.totalorder 2, %s10
    // Predicated region
    $region49: #{head_forward.15} parent=5 // pred_check
      %p577 = pneg %p576
    $region50: #{head_forward.15} parent=5 // pred_check_branch
      %579 = sbr.rel (%p577) target = $region52
    $region51: #{head_forward.15} parent=5 // pred_region
      %s580 = ssub.s32 %s10, 2
      // Predicated region
      $region53: #{head_forward.15} parent=51 // pred_check
        %p581 = pneg %p160
      $region54: #{head_forward.15} parent=51 // pred_check_branch
        %583 = sbr.rel (%p581) target = $region56
      $region55: #{head_forward.15} parent=51 // pred_region
        %p584 = scmp.lt.s32.totalorder %s23, 1
        %s585 = scalar_select %p584, %s23, 1
        %p586 = scmp.lt.s32.totalorder %s24, 7
        %s587 = scalar_select %p586, %s24, 7
        %s588 = smul.addr %s585, 8
        %s589 = sadd.s32 %s587, %s588
        %s590 = smul.addr %s589, 4
        %s591 = scalar_lea.vmem %s4, %s590
      $region56: #{head_forward.15} parent=51 // pred_fallthru
        _
    $region52: #{head_forward.15} parent=5 // pred_fallthru
      _
  $region6: #{head_forward.15} parent=0 // loop_footer
    %s14 = sadd.s32 1, %s10
  $region7: #{head_forward.15} parent=0 // loop_footer_branch
    %9 = sbr.rel target = $region3
  $region8: #{head_forward.15} parent=0 // loop_exit
    _

// kernel: head_forward.23
$region0: #{head_forward.23}
  #allocation0 [shape = 'u32[]', space=smem, size = 0x4, offset = 0x4, fixed_abs, tag = 'smem constant byte address 0x4 - core index']
  #allocation1 [shape = 'u32[144,128]{1,0:T(1,128)}', space=vmem, size = 0x12000, scoped, tag = 'internal scratch']
  %s0 = inlined_call_operand.vmem [shape: bf16[128,64], index: 0, kind: input, shape index: {}]
  %s1 = inlined_call_operand.vmem [shape: bf16[64,128], index: 1, kind: input, shape index: {}]
  %s2 = inlined_call_operand.vmem [shape: f32[1,128], index: 2, kind: input, shape index: {}]
  %s3 = inlined_call_operand.vmem [shape: f32[128,128], index: 3, kind: output, shape index: {}]
  %s4 = sld [smem:[#allocation0]]
  $region22: #{head_forward.23} parent=0
    _
  %s6 = ssub.s32 1, %s4
  %s7 = scalar_select 0, %s6, %s4
  // Predicated region
  $region2: #{head_forward.23} parent=0 // pred_check
    _
  $region3: #{head_forward.23} parent=0 // pred_check_branch
    %9 = sbr.rel (0) target = $region5
  $region4: #{head_forward.23} parent=0 // pred_region
    _
  $region5: #{head_forward.23} parent=0 // pred_fallthru
    _
  // Predicated region
  $region6: #{head_forward.23} parent=0 // pred_check
    _
  $region7: #{head_forward.23} parent=0 // pred_check_branch
    %11 = sbr.rel (0) target = $region9
  $region8: #{head_forward.23} parent=0 // pred_region
    _
  $region9: #{head_forward.23} parent=0 // pred_fallthru
    _
  // Predicated region
  $region10: #{head_forward.23} parent=0 // pred_check
    _
  $region11: #{head_forward.23} parent=0 // pred_check_branch
    %13 = sbr.rel (0) target = $region13
  $region12: #{head_forward.23} parent=0 // pred_region
    _
  $region13: #{head_forward.23} parent=0 // pred_fallthru
    _
  %v15 = vld [vmem:[%s0] sm:$0xf]
  %v16 = vld [vmem:[%s0 + $0x4] sm:$0xf]
  %v17 = vld [vmem:[%s0 + $0x8] sm:$0xf]
  %v18 = vld [vmem:[%s0 + $0xc] sm:$0xf]
  %v19 = vld [vmem:[%s0 + $0x10] sm:$0xf]
  %v20 = vld [vmem:[%s0 + $0x14] sm:$0xf]
  %v21 = vld [vmem:[%s0 + $0x18] sm:$0xf]
  %v22 = vld [vmem:[%s0 + $0x1c] sm:$0xf]
  %v23 = vld [vmem:[%s0 + $0x20] sm:$0xf]
  %v24 = vld [vmem:[%s0 + $0x24] sm:$0xf]
  %v25 = vld [vmem:[%s0 + $0x28] sm:$0xf]
  %v26 = vld [vmem:[%s0 + $0x2c] sm:$0xf]
  %v27 = vld [vmem:[%s0 + $0x30] sm:$0xf]
  %v28 = vld [vmem:[%s0 + $0x34] sm:$0xf]
  %v29 = vld [vmem:[%s0 + $0x38] sm:$0xf]
  %v30 = vld [vmem:[%s0 + $0x3c] sm:$0xf]
  %v31 = vld [vmem:[%s1] sm:$0xf]
  %v32 = vld [vmem:[%s1 + $0x4] sm:$0xf]
  %v33 = vld [vmem:[%s1 + $0x8] sm:$0xf]
  %v34 = vld [vmem:[%s1 + $0xc] sm:$0xf]
  %v35 = vld [vmem:[%s1 + $0x10] sm:$0xf]
  %v36 = vld [vmem:[%s1 + $0x14] sm:$0xf]
  %v37 = vld [vmem:[%s1 + $0x18] sm:$0xf]
  %v38 = vld [vmem:[%s1 + $0x1c] sm:$0xf]
  %v39 = vld [vmem:[%s2] sm:$0x1]
  %v41 = vlaneseq
  %v42 = vshrl.u32 %v41, 7
  %v43 = vsub.s32 0, %v42
  %v44 = vrot.slane %v39, %v43
  %v62 = vunpack.c.l.b16 %v15
  %v63 = vunpack.c.l.b16 %v16
  %v64 = vunpack.c.l.b16 %v17
  %v65 = vunpack.c.l.b16 %v18
  %v66 = vunpack.c.l.b16 %v19
  %v67 = vunpack.c.l.b16 %v20
  %v68 = vunpack.c.l.b16 %v21
  %v69 = vunpack.c.l.b16 %v22
  %v70 = vunpack.c.l.b16 %v23
  %v71 = vunpack.c.l.b16 %v24
  %v72 = vunpack.c.l.b16 %v25
  %v73 = vunpack.c.l.b16 %v26
  %v74 = vunpack.c.l.b16 %v27
  %v75 = vunpack.c.l.b16 %v28
  %v76 = vunpack.c.l.b16 %v29
  %v77 = vunpack.c.l.b16 %v30
  %v78 = vpack.c.b16 %v63, %v62
  %v79 = vpack.c.b16 %v65, %v64
  %v80 = vpack.c.b16 %v67, %v66
  %v81 = vpack.c.b16 %v69, %v68
  %v82 = vpack.c.b16 %v71, %v70
  %v83 = vpack.c.b16 %v73, %v72
  %v84 = vpack.c.b16 %v75, %v74
  %v85 = vpack.c.b16 %v77, %v76
  %v94 = vunpack.c.l.b16 %v31
  %v95 = vunpack.c.l.b16 %v32
  %v96 = vunpack.c.l.b16 %v33
  %v97 = vunpack.c.l.b16 %v34
  %v98 = vunpack.c.l.b16 %v35
  %v99 = vunpack.c.l.b16 %v36
  %v100 = vunpack.c.l.b16 %v37
  %v101 = vunpack.c.l.b16 %v38
  %v102 = vpack.c.b16 %v95, %v94
  %v103 = vpack.c.b16 %v97, %v96
  %v104 = vpack.c.b16 %v99, %v98
  %v105 = vpack.c.b16 %v101, %v100
  %vm110 = vcmask 523264
  %v112 = vsel %vm110, %v78, 0
  %v115 = vsel %vm110, %v79, 0
  %v118 = vsel %vm110, %v80, 0
  %v121 = vsel %vm110, %v81, 0
  %v124 = vsel %vm110, %v82, 0
  %v127 = vsel %vm110, %v83, 0
  %v130 = vsel %vm110, %v84, 0
  %v133 = vsel %vm110, %v85, 0
  %135 = vmatprep.subr.bf16.mxu0 0
  %136 = vmatpush1.bf16.msra.mxu0 0
  %137 = vmatprep.subr.bf16.mxu0 0
  %138 = vmatpush1.bf16.msra.mxu0 0
  %139 = vmatprep.subr.bf16.mxu0 0
  %140 = vmatpush1.bf16.msra.mxu0 0
  %141 = vmatprep.subr.bf16.mxu0 0
  %142 = vmatpush1.bf16.msra.mxu0 0
  %143 = vmatprep.subr.bf16.mxu0 0
  %144 = vmatpush1.bf16.msra.mxu0 %v105
  %145 = vmatprep.subr.bf16.mxu0 0
  %146 = vmatpush1.bf16.msra.mxu0 %v104
  %147 = vmatprep.subr.bf16.mxu0 0
  %148 = vmatpush1.bf16.msra.mxu0 %v103
  %149 = vmatprep.subr.bf16.mxu0 0
  %150 = vmatpush1.bf16.msra.mxu0 %v102
  %151 = vmatprep.subr.bf16.mxu0 0
  %152 = vmatpush2.bf16.msra.mxu0 0
  %153 = vmatprep.subr.bf16.mxu0 0
  %154 = vmatpush2.bf16.msra.mxu0 0
  %155 = vmatprep.subr.bf16.mxu0 0
  %156 = vmatpush2.bf16.msra.mxu0 0
  %157 = vmatprep.subr.bf16.mxu0 0
  %158 = vmatpush2.bf16.msra.mxu0 0
  %159 = vmatprep.subr.bf16.mxu0 0
  %160 = vmatpush2.bf16.msra.mxu0 0
  %161 = vmatprep.subr.bf16.mxu0 0
  %162 = vmatpush2.bf16.msra.mxu0 0
  %163 = vmatprep.subr.bf16.mxu0 0
  %164 = vmatpush2.bf16.msra.mxu0 0
  %165 = vmatprep.subr.bf16.mxu0 0
  %166 = vmatpush2.bf16.msra.mxu0 0
  %167 = vmatprep.mubr.bf16.mxu0 0
  %168 = vmatmul.mubr.bf16.gmra.mxu0 %v112
  %v169 = vpop.f32.mrf.mxu0
  %v170 = vadd.f32 %v44, %v169
  %v171 = vpop.f32.mrf.mxu0
  %v172 = vpop.f32.mrf.mxu0
  %v173 = vadd.f32 %v44, %v172
  %v174 = vpop.f32.mrf.mxu0
  %175 = vmatprep.mubr.bf16.mxu0 0
  %176 = vmatmul.mubr.bf16.gmra.mxu0 %v115
  %v177 = vpop.f32.mrf.mxu0
  %v178 = vadd.f32 %v44, %v177
  %v179 = vpop.f32.mrf.mxu0
  %v180 = vpop.f32.mrf.mxu0
  %v181 = vadd.f32 %v44, %v180
  %v182 = vpop.f32.mrf.mxu0
  %183 = vmatprep.mubr.bf16.mxu0 0
  %184 = vmatmul.mubr.bf16.gmra.mxu0 %v118
  %v185 = vpop.f32.mrf.mxu0
  %v186 = vadd.f32 %v44, %v185
  %v187 = vpop.f32.mrf.mxu0
  %v188 = vpop.f32.mrf.mxu0
  %v189 = vadd.f32 %v44, %v188
  %v190 = vpop.f32.mrf.mxu0
  %191 = vmatprep.mubr.bf16.mxu0 0
  %192 = vmatmul.mubr.bf16.gmra.mxu0 %v121
  %v193 = vpop.f32.mrf.mxu0
  %v194 = vadd.f32 %v44, %v193
  %v195 = vpop.f32.mrf.mxu0
  %v196 = vpop.f32.mrf.mxu0
  %v197 = vadd.f32 %v44, %v196
  %v198 = vpop.f32.mrf.mxu0
  %199 = vmatprep.mubr.bf16.mxu0 0
  %200 = vmatmul.mubr.bf16.gmra.mxu0 %v124
  %v201 = vpop.f32.mrf.mxu0
  %v202 = vadd.f32 %v44, %v201
  %v203 = vpop.f32.mrf.mxu0
  %v204 = vpop.f32.mrf.mxu0
  %v205 = vadd.f32 %v44, %v204
  %v206 = vpop.f32.mrf.mxu0
  %207 = vmatprep.mubr.bf16.mxu0 0
  %208 = vmatmul.mubr.bf16.gmra.mxu0 %v127
  %v209 = vpop.f32.mrf.mxu0
  %v210 = vadd.f32 %v44, %v209
  %v211 = vpop.f32.mrf.mxu0
  %v212 = vpop.f32.mrf.mxu0
  %v213 = vadd.f32 %v44, %v212
  %v214 = vpop.f32.mrf.mxu0
  %215 = vmatprep.mubr.bf16.mxu0 0
  %216 = vmatmul.mubr.bf16.gmra.mxu0 %v130
  %v217 = vpop.f32.mrf.mxu0
  %v218 = vadd.f32 %v44, %v217
  %v219 = vpop.f32.mrf.mxu0
  %v220 = vpop.f32.mrf.mxu0
  %v221 = vadd.f32 %v44, %v220
  %v222 = vpop.f32.mrf.mxu0
  %223 = vmatprep.mubr.bf16.mxu0 0
  %224 = vmatmul.mubr.bf16.gmra.mxu0 %v133
  %v225 = vpop.f32.mrf.mxu0
  %v226 = vadd.f32 %v44, %v225
  %v227 = vpop.f32.mrf.mxu0
  %v228 = vpop.f32.mrf.mxu0
  %v229 = vadd.f32 %v44, %v228
  %v230 = vpop.f32.mrf.mxu0
  %231 = vdwg.mxu0
  %232 = vst [vmem:[%s3] sm:$0xff] %v170
  %233 = vst [vmem:[%s3 + $0x8] sm:$0xff] %v173
  %234 = vst [vmem:[%s3 + $0x10] sm:$0xff] %v178
  %235 = vst [vmem:[%s3 + $0x18] sm:$0xff] %v181
  %236 = vst [vmem:[%s3 + $0x20] sm:$0xff] %v186
  %237 = vst [vmem:[%s3 + $0x28] sm:$0xff] %v189
  %238 = vst [vmem:[%s3 + $0x30] sm:$0xff] %v194
  %239 = vst [vmem:[%s3 + $0x38] sm:$0xff] %v197
  %240 = vst [vmem:[%s3 + $0x40] sm:$0xff] %v202
  %241 = vst [vmem:[%s3 + $0x48] sm:$0xff] %v205
  %242 = vst [vmem:[%s3 + $0x50] sm:$0xff] %v210
  %243 = vst [vmem:[%s3 + $0x58] sm:$0xff] %v213
  %244 = vst [vmem:[%s3 + $0x60] sm:$0xff] %v218
  %245 = vst [vmem:[%s3 + $0x68] sm:$0xff] %v221
  %246 = vst [vmem:[%s3 + $0x70] sm:$0xff] %v226
  %247 = vst [vmem:[%s3 + $0x78] sm:$0xff] %v229
  // Predicated region
  $region14: #{head_forward.23} parent=0 // pred_check
    _
  $region15: #{head_forward.23} parent=0 // pred_check_branch
    %249 = sbr.rel (0) target = $region17
  $region16: #{head_forward.23} parent=0 // pred_region
    _
  $region17: #{head_forward.23} parent=0 // pred_fallthru
    _
  // Predicated region
  $region18: #{head_forward.23} parent=0 // pred_check
    _
  $region19: #{head_forward.23} parent=0 // pred_check_branch
    %251 = sbr.rel (0) target = $region21
  $region20: #{head_forward.23} parent=0 // pred_region
    _
  $region21: #{head_forward.23} parent=0 // pred_fallthru
    _

// kernel: head_forward.14
$region0: #{head_forward.14}
  #allocation0 [shape = 'u32[]', space=smem, size = 0x4, offset = 0x4, fixed_abs, tag = 'smem constant byte address 0x4 - core index']
  #allocation1 [shape = 'u32[144,128]{1,0:T(1,128)}', space=vmem, size = 0x12000, scoped, tag = 'internal scratch']
  #allocation2 [shape = 'f32[8,64]{1,0:T(8,128)}', space=vmem, size = 0x1000, scoped, tag = 'scratch operand']
  %s0 = inlined_call_operand.vmem [shape: bf16[2,10,10,64], index: 0, kind: input, shape index: {}]
  %s1 = inlined_call_operand.vmem [shape: bf16[9,64,64], index: 1, kind: input, shape index: {}]
  %s2 = inlined_call_operand.vmem [shape: f32[1,64], index: 2, kind: input, shape index: {}]
  %s3 = inlined_call_operand.vmem [shape: bf16[2,8,8,64], index: 3, kind: output, shape index: {}]
  %s4 = sld [smem:[#allocation0]]
  $region53: #{head_forward.14} parent=0
    _
  %s6 = ssub.s32 1, %s4
  %s7 = scalar_select 0, %s6, %s4
  loop: start=0, step=1, limit=50
  $region2: #{head_forward.14} parent=0 // loop_pre_header
    _
  $region3: #{head_forward.14} parent=0 // loop_header
    %s9 = sphi 0, %s13
    %p10 = scmp.ge.s32.totalorder %s9, 50
    %s16 = sphi 0, %s35
    %s17 = sphi 0, %s31
    %s18 = sphi 0, %s27
    %s19 = sphi 0, %s16
    %s20 = sphi 0, %s17
    %s21 = sphi 0, %s18
    %s22 = sphi 0, %s19
    %s23 = sphi 0, %s20
    %s24 = sphi 0, %s21
    %s42 = sphi 0, %s44
    %s45 = sphi 0, %s42
    %s46 = sphi 0, %s45
    %s62 = sphi 0, %s46
    %s66 = sphi 0, %s66
    %s68 = sphi 0, %s66
    %s69 = sphi 0, %s68
    %s83 = sphi 0, %s69
    %s87 = sphi 0, %s87
    %s89 = sphi 0, %s87
    %s90 = sphi 0, %s89
    %s104 = sphi 0, %s90
    %s112 = sphi 0, %s114
    %s115 = sphi 0, %s112
    %s116 = sphi 0, %s115
    %s132 = sphi 0, %s116
  $region4: #{head_forward.14} parent=0 // loop_header_branch
    %12 = sbr.rel (%p10) target = $region8
  $region5: #{head_forward.14} parent=0 // loop_body
    %s14 = ssub.s32 %s9, 1
    %s15 = ssub.s32 %s9, 2
    %s25 = sadd.s32 1, %s18
    %p26 = scmp.ge.s32.totalorder %s25, 3
    %s27 = scalar_select %p26, 0, %s25
    %s28 = sadd.s32 1, %s17
    %s29 = scalar_select %p26, %s28, %s17
    %p30 = scmp.ge.s32.totalorder %s29, 8
    %s31 = scalar_select %p30, 0, %s29
    %s32 = sadd.s32 1, %s16
    %s33 = scalar_select %p30, %s32, %s16
    %p34 = scmp.ge.s32.totalorder %s33, 2
    %s35 = scalar_select %p34, 0, %s33
    %s36 = sadd.s32 %s17, %s18
    %s37 = sadd.s32 %s31, %s27
    %s38 = ssub.s32 %s16, %s35
    %s39 = ssub.s32 %s36, %s37
    %s40 = sor.u32 %s38, %s39
    %p41 = scmp.eq.s32.totalorder %s40, 0
    %s43 = sadd.s32 %s42, 1
    %s44 = scalar_select %p41, %s42, %s43
    %p47 = pneg %p41
    %p48 = scmp.eq.s32.totalorder %s9, 47
    %p49 = por %p47, %p48
    %p50 = scmp.ne.s32.totalorder %s42, %s45
    %p51 = scmp.eq.s32.totalorder %s9, 0
    %p52 = por %p50, %p51
    %p53 = scmp.ne.s32.totalorder %s42, %s45
    %p54 = scmp.eq.s32.totalorder %s14, 47
    %p55 = por %p53, %p54
    %p56 = scmp.ne.s32.totalorder %s45, %s46
    %p57 = scmp.eq.s32.totalorder %s14, 0
    %p58 = por %p56, %p57
    %p59 = scmp.ne.s32.totalorder %s45, %s46
    %p60 = scmp.eq.s32.totalorder %s15, 47
    %p61 = por %p59, %p60
    %p63 = scmp.ne.s32.totalorder %s46, %s62
    %p64 = scmp.eq.s32.totalorder %s15, 0
    %p65 = por %p63, %p64
    %s67 = sadd.s32 %s66, 1
    %p70 = scmp.eq.s32.totalorder %s9, 47
    %p71 = scmp.ne.s32.totalorder %s66, %s68
    %p72 = scmp.eq.s32.totalorder %s9, 0
    %p73 = por %p71, %p72
    %p74 = scmp.ne.s32.totalorder %s66, %s68
    %p75 = scmp.eq.s32.totalorder %s14, 47
    %p76 = por %p74, %p75
    %p77 = scmp.ne.s32.totalorder %s68, %s69
    %p78 = scmp.eq.s32.totalorder %s14, 0
    %p79 = por %p77, %p78
    %p80 = scmp.ne.s32.totalorder %s68, %s69
    %p81 = scmp.eq.s32.totalorder %s15, 47
    %p82 = por %p80, %p81
    %p84 = scmp.ne.s32.totalorder %s69, %s83
    %p85 = scmp.eq.s32.totalorder %s15, 0
    %p86 = por %p84, %p85
    %s88 = sadd.s32 %s87, 1
    %p91 = scmp.eq.s32.totalorder %s9, 47
    %p92 = scmp.ne.s32.totalorder %s87, %s89
    %p93 = scmp.eq.s32.totalorder %s9, 0
    %p94 = por %p92, %p93
    %p95 = scmp.ne.s32.totalorder %s87, %s89
    %p96 = scmp.eq.s32.totalorder %s14, 47
    %p97 = por %p95, %p96
    %p98 = scmp.ne.s32.totalorder %s89, %s90
    %p99 = scmp.eq.s32.totalorder %s14, 0
    %p100 = por %p98, %p99
    %p101 = scmp.ne.s32.totalorder %s89, %s90
    %p102 = scmp.eq.s32.totalorder %s15, 47
    %p103 = por %p101, %p102
    %p105 = scmp.ne.s32.totalorder %s90, %s104
    %p106 = scmp.eq.s32.totalorder %s15, 0
    %p107 = por %p105, %p106
    %s108 = ssub.s32 %s16, %s35
    %s109 = ssub.s32 %s17, %s31
    %s110 = sor.u32 %s108, %s109
    %p111 = scmp.eq.s32.totalorder %s110, 0
    %s113 = sadd.s32 %s112, 1
    %s114 = scalar_select %p111, %s112, %s113
    %p117 = pneg %p111
    %p118 = scmp.eq.s32.totalorder %s9, 47
    %p119 = por %p117, %p118
    %p120 = scmp.ne.s32.totalorder %s112, %s115
    %p121 = scmp.eq.s32.totalorder %s9, 0
    %p122 = por %p120, %p121
    %p123 = scmp.ne.s32.totalorder %s112, %s115
    %p124 = scmp.eq.s32.totalorder %s14, 47
    %p125 = por %p123, %p124
    %p126 = scmp.ne.s32.totalorder %s115, %s116
    %p127 = scmp.eq.s32.totalorder %s14, 0
    %p128 = por %p126, %p127
    %p129 = scmp.ne.s32.totalorder %s115, %s116
    %p130 = scmp.eq.s32.totalorder %s15, 47
    %p131 = por %p129, %p130
    %p133 = scmp.ne.s32.totalorder %s116, %s132
    %p134 = scmp.eq.s32.totalorder %s15, 0
    %p135 = por %p133, %p134
    %p136 = scmp.le.s32.totalorder 1, %s9
    %p137 = scmp.lt.s32.totalorder %s9, 49
    %p138 = pnand %p136, %p137
    %p139 = pneg %p138
    // Predicated region
    $region9: #{head_forward.14} parent=5 // pred_check
      _
    $region10: #{head_forward.14} parent=5 // pred_check_branch
      %141 = sbr.rel (%p138) target = $region12
    $region11: #{head_forward.14} parent=5 // pred_region
      %s142 = ssub.s32 %s9, 1
      // Predicated region
      $region13: #{head_forward.14} parent=11 // pred_check
        %p143 = pneg %p79
      $region14: #{head_forward.14} parent=11 // pred_check_branch
        %145 = sbr.rel (%p143) target = $region16
      $region15: #{head_forward.14} parent=11 // pred_region
        _
      $region16: #{head_forward.14} parent=11 // pred_fallthru
        _
      // Predicated region
      $region17: #{head_forward.14} parent=11 // pred_check
        %p146 = pneg %p100
      $region18: #{head_forward.14} parent=11 // pred_check_branch
        %148 = sbr.rel (%p146) target = $region20
      $region19: #{head_forward.14} parent=11 // pred_region
        _
      $region20: #{head_forward.14} parent=11 // pred_fallthru
        _
    $region12: #{head_forward.14} parent=5 // pred_fallthru
      _
    %p149 = scmp.lt.s32.totalorder %s9, 48
    // Predicated region
    $region21: #{head_forward.14} parent=5 // pred_check
      %p150 = pneg %p149
    $region22: #{head_forward.14} parent=5 // pred_check_branch
      %152 = sbr.rel (%p150) target = $region24
    $region23: #{head_forward.14} parent=5 // pred_region
      // Predicated region
      $region25: #{head_forward.14} parent=23 // pred_check
        %p153 = pneg %p52
      $region26: #{head_forward.14} parent=23 // pred_check_branch
        %155 = sbr.rel (%p153) target = $region28
      $region27: #{head_forward.14} parent=23 // pred_region
        %s156 = sadd.s32 %s17, %s18
        %p157 = scmp.lt.s32.totalorder %s16, 1
        %s158 = scalar_select %p157, %s16, 1
        %p159 = scmp.lt.s32.totalorder %s156, 9
        %s160 = scalar_select %p159, %s156, 9
        %s161 = smul.addr %s160, 2
        %s162 = smul.addr %s158, 20
        %s163 = sadd.s32 %s161, %s162
        %s164 = smul.addr %s163, 4
        %s165 = scalar_lea.vmem %s0, %s164
        %s166 = sadd.s32 %s17, %s18
      $region28: #{head_forward.14} parent=23 // pred_fallthru
        _
    $region24: #{head_forward.14} parent=5 // pred_fallthru
      _
    %p167 = scmp.le.s32.totalorder 1, %s9
    %p168 = scmp.lt.s32.totalorder %s9, 49
    %p169 = pnand %p167, %p168
    %p170 = pneg %p169
    // Predicated region
    $region29: #{head_forward.14} parent=5 // pred_check
      _
    $region30: #{head_forward.14} parent=5 // pred_check_branch
      %172 = sbr.rel (%p169) target = $region32
    $region31: #{head_forward.14} parent=5 // pred_region
      %s173 = ssub.s32 %s9, 1
      %s174 = sadd.s32 %s20, %s21
      %p175 = scmp.lt.s32.totalorder %s19, 1
      %s176 = scalar_select %p175, %s19, 1
      %p177 = scmp.lt.s32.totalorder %s174, 9
      %s178 = scalar_select %p177, %s174, 9
      %s179 = smul.addr %s178, 2
      %s180 = smul.addr %s176, 20
      %s181 = sadd.s32 %s179, %s180
      %s182 = smul.addr %s181, 4
      %s183 = scalar_lea.vmem %s0, %s182
      %p184 = pneg %p58
      %p185 = pneg %p55
      %p186 = pneg %p79
      %p187 = pneg %p76
      %p188 = pneg %p100
      %p189 = pneg %p97
      %p190 = pneg %p128
      %p191 = pneg %p125
      %p192 = scmp.lt.s32.totalorder %s19, 1
      %s193 = scalar_select %p192, %s19, 1
      %p194 = scmp.lt.s32.totalorder %s20, 7
      %s195 = scalar_select %p194, %s20, 7
      %s196 = smul.addr %s193, 8
      %s197 = sadd.s32 %s195, %s196
      %s198 = smul.addr %s197, 4
      %s199 = scalar_lea.vmem %s3, %s198
      %s200 = sadd.s32 %s20, %s21
      %p201 = scmp.lt.s32.totalorder %s19, 1
      %s202 = scalar_select %p201, %s19, 1
      %p203 = scmp.lt.s32.totalorder %s200, 9
      %s204 = scalar_select %p203, %s200, 9
      %s205 = smul.addr %s204, 2
      %s206 = smul.addr %s202, 20
      %s207 = sadd.s32 %s205, %s206
      %s208 = smul.addr %s207, 4
      %s209 = scalar_lea.vmem %s0, %s208
      %s210 = sadd.s32 %s20, %s21
      %p211 = scmp.lt.s32.totalorder %s19, 1
      %s212 = scalar_select %p211, %s19, 1
      %p213 = scmp.lt.s32.totalorder %s20, 7
      %s214 = scalar_select %p213, %s20, 7
      %s215 = smul.addr %s212, 8
      %s216 = sadd.s32 %s214, %s215
      %s217 = smul.addr %s216, 4
      %s218 = scalar_lea.vmem %s3, %s217
      %p220 = scmp.eq.s32.totalorder %s21, 0
      // Predicated region
      $region33: #{head_forward.14} parent=31 // pred_check
        %p221 = pneg %p220
      $region34: #{head_forward.14} parent=31 // pred_check_branch
        %223 = sbr.rel (%p221) target = $region36
      $region35: #{head_forward.14} parent=31 // pred_region
        %vm224 = vcmask 523264
        %225 = vst.msk [vmem:[#allocation2] sm:$0xff] %vm224, 0.0
      $region36: #{head_forward.14} parent=31 // pred_fallthru
        _
      %v226 = vld [vmem:[%s209] sm:$0xf]
      %s227 = smul.u32 %s21, 3
      %s228 = smul.u32 %s227, 8
      %s229 = smul.addr %s228, 4
      %s230 = scalar_lea.vmem %s1, %s229
      %v231 = vld [vmem:[%s230] sm:$0xf]
      %v232 = vld [vmem:[%s230 + $0x4] sm:$0xf]
      %v233 = vld [vmem:[%s230 + $0x8] sm:$0xf]
      %v234 = vld [vmem:[%s230 + $0xc] sm:$0xf]
      %v235 = vld [vmem:[%s230 + $0x10] sm:$0xf]
      %v236 = vld [vmem:[%s230 + $0x14] sm:$0xf]
      %v237 = vld [vmem:[%s230 + $0x18] sm:$0xf]
      %v238 = vld [vmem:[%s230 + $0x1c] sm:$0xf]
      %v239 = vld [vmem:[%s209 + $0x4] sm:$0x1]
      %s240 = sadd.s32 %s227, 1
      %s241 = smul.u32 %s240, 8
      %s242 = smul.addr %s241, 4
      %s243 = scalar_lea.vmem %s1, %s242
      %v244 = vld [vmem:[%s243] sm:$0xf]
      %v245 = vld [vmem:[%s243 + $0x4] sm:$0xf]
      %v246 = vld [vmem:[%s243 + $0x8] sm:$0xf]
      %v247 = vld [vmem:[%s243 + $0xc] sm:$0xf]
      %v248 = vld [vmem:[%s243 + $0x10] sm:$0xf]
      %v249 = vld [vmem:[%s243 + $0x14] sm:$0xf]
      %v250 = vld [vmem:[%s243 + $0x18] sm:$0xf]
      %v251 = vld [vmem:[%s243 + $0x1c] sm:$0xf]
      %v254 = vunpack.c.l.b16 %v226
      %v255 = vunpack.c.l.b16 %v239
      %v256 = vpack.c.b16 %v255, %v254
      %v258 = vshrl.u32 %v256, 16
      %v260 = vshll.u32 %v256, 16
      %v262 = vrot.slane %v260, 1
      %v263 = vor.u32 %v258, %v262
      %v272 = vunpack.c.l.b16 %v244
      %v273 = vunpack.c.l.b16 %v245
      %v274 = vunpack.c.l.b16 %v246
      %v275 = vunpack.c.l.b16 %v247
      %v276 = vunpack.c.l.b16 %v248
      %v277 = vunpack.c.l.b16 %v249
      %v278 = vunpack.c.l.b16 %v250
      %v279 = vunpack.c.l.b16 %v251
      %v280 = vpack.c.b16 %v273, %v272
      %v281 = vpack.c.b16 %v275, %v274
      %v282 = vpack.c.b16 %v277, %v276
      %v283 = vpack.c.b16 %v279, %v278
      %vm288 = vcmask 523264
      %v290 = vsel %vm288, %v263, 0
      %292 = vmatprep.subr.bf16.mxu0 0
      %293 = vmatpush1.bf16.msra.mxu0 0
      %294 = vmatprep.subr.bf16.mxu0 0
      %295 = vmatpush1.bf16.msra.mxu0 0
      %296 = vmatprep.subr.bf16.mxu0 0
      %297 = vmatpush1.bf16.msra.mxu0 0
      %298 = vmatprep.subr.bf16.mxu0 0
      %299 = vmatpush1.bf16.msra.mxu0 0
      %300 = vmatprep.subr.bf16.mxu0 0
      %301 = vmatpush1.bf16.msra.mxu0 %v283
      %302 = vmatprep.subr.bf16.mxu0 0
      %303 = vmatpush1.bf16.msra.mxu0 %v282
      %304 = vmatprep.subr.bf16.mxu0 0
      %305 = vmatpush1.bf16.msra.mxu0 %v281
      %306 = vmatprep.subr.bf16.mxu0 0
      %307 = vmatpush1.bf16.msra.mxu0 %v280
      %308 = vmatprep.subr.bf16.mxu0 0
      %309 = vmatpush2.bf16.msra.mxu0 0
      %310 = vmatprep.subr.bf16.mxu0 0
      %311 = vmatpush2.bf16.msra.mxu0 0
      %312 = vmatprep.subr.bf16.mxu0 0
      %313 = vmatpush2.bf16.msra.mxu0 0
      %314 = vmatprep.subr.bf16.mxu0 0
      %315 = vmatpush2.bf16.msra.mxu0 0
      %316 = vmatprep.subr.bf16.mxu0 0
      %317 = vmatpush2.bf16.msra.mxu0 0
      %318 = vmatprep.subr.bf16.mxu0 0
      %319 = vmatpush2.bf16.msra.mxu0 0
      %320 = vmatprep.subr.bf16.mxu0 0
      %321 = vmatpush2.bf16.msra.mxu0 0
      %322 = vmatprep.subr.bf16.mxu0 0
      %323 = vmatpush2.bf16.msra.mxu0 0
      %324 = vmatprep.mubr.bf16.mxu0 0
      %325 = vmatmul.mubr.bf16.gmra.mxu0 %v290
      %v326 = vpop.f32.mrf.mxu0
      %v327 = vadd.f32 0.0, %v326
      %v328 = vpop.f32.mrf.mxu0
      %v329 = vpop.f32.mrf.mxu0
      %v330 = vpop.f32.mrf.mxu0
      %331 = vdwg.mxu0
      %v340 = vunpack.c.l.b16 %v231
      %v341 = vunpack.c.l.b16 %v232
      %v342 = vunpack.c.l.b16 %v233
      %v343 = vunpack.c.l.b16 %v234
      %v344 = vunpack.c.l.b16 %v235
      %v345 = vunpack.c.l.b16 %v236
      %v346 = vunpack.c.l.b16 %v237
      %v347 = vunpack.c.l.b16 %v238
      %v348 = vpack.c.b16 %v341, %v340
      %v349 = vpack.c.b16 %v343, %v342
      %v350 = vpack.c.b16 %v345, %v344
      %v351 = vpack.c.b16 %v347, %v346
      %v357 = vsel %vm288, %v226, 0
      %359 = vmatprep.subr.bf16.mxu0 0
      %360 = vmatpush1.bf16.msra.mxu0 0
      %361 = vmatprep.subr.bf16.mxu0 0
      %362 = vmatpush1.bf16.msra.mxu0 0
      %363 = vmatprep.subr.bf16.mxu0 0
      %364 = vmatpush1.bf16.msra.mxu0 0
      %365 = vmatprep.subr.bf16.mxu0 0
      %366 = vmatpush1.bf16.msra.mxu0 0
      %367 = vmatprep.subr.bf16.mxu0 0
      %368 = vmatpush1.bf16.msra.mxu0 %v351
      %369 = vmatprep.subr.bf16.mxu0 0
      %370 = vmatpush1.bf16.msra.mxu0 %v350
      %371 = vmatprep.subr.bf16.mxu0 0
      %372 = vmatpush1.bf16.msra.mxu0 %v349
      %373 = vmatprep.subr.bf16.mxu0 0
      %374 = vmatpush1.bf16.msra.mxu0 %v348
      %375 = vmatprep.subr.bf16.mxu0 0
      %376 = vmatpush2.bf16.msra.mxu0 0
      %377 = vmatprep.subr.bf16.mxu0 0
      %378 = vmatpush2.bf16.msra.mxu0 0
      %379 = vmatprep.subr.bf16.mxu0 0
      %380 = vmatpush2.bf16.msra.mxu0 0
      %381 = vmatprep.subr.bf16.mxu0 0
      %382 = vmatpush2.bf16.msra.mxu0 0
      %383 = vmatprep.subr.bf16.mxu0 0
      %384 = vmatpush2.bf16.msra.mxu0 0
      %385 = vmatprep.subr.bf16.mxu0 0
      %386 = vmatpush2.bf16.msra.mxu0 0
      %387 = vmatprep.subr.bf16.mxu0 0
      %388 = vmatpush2.bf16.msra.mxu0 0
      %389 = vmatprep.subr.bf16.mxu0 0
      %390 = vmatpush2.bf16.msra.mxu0 0
      %391 = vmatprep.mubr.bf16.mxu0 0
      %392 = vmatmul.mubr.bf16.gmra.mxu0 %v357
      %v393 = vpop.f32.mrf.mxu0
      %v394 = vadd.f32 %v327, %v393
      %v395 = vpop.f32.mrf.mxu0
      %v396 = vpop.f32.mrf.mxu0
      %v397 = vpop.f32.mrf.mxu0
      %398 = vdwg.mxu0
      %v399 = vld [vmem:[%s209] sm:$0xe]
      %s400 = sadd.s32 %s227, 2
      %s401 = smul.u32 %s400, 8
      %s402 = smul.addr %s401, 4
      %s403 = scalar_lea.vmem %s1, %s402
      %v404 = vld [vmem:[%s403] sm:$0xf]
      %v405 = vld [vmem:[%s403 + $0x4] sm:$0xf]
      %v406 = vld [vmem:[%s403 + $0x8] sm:$0xf]
      %v407 = vld [vmem:[%s403 + $0xc] sm:$0xf]
      %v408 = vld [vmem:[%s403 + $0x10] sm:$0xf]
      %v409 = vld [vmem:[%s403 + $0x14] sm:$0xf]
      %v410 = vld [vmem:[%s403 + $0x18] sm:$0xf]
      %v411 = vld [vmem:[%s403 + $0x1c] sm:$0xf]
      %v413 = vunpack.c.l.b16 %v399
      %v414 = vpack.c.b16 %v255, %v413
      %v415 = vrot.slane %v414, 1
      %v424 = vunpack.c.l.b16 %v404
      %v425 = vunpack.c.l.b16 %v405
      %v426 = vunpack.c.l.b16 %v406
      %v427 = vunpack.c.l.b16 %v407
      %v428 = vunpack.c.l.b16 %v408
      %v429 = vunpack.c.l.b16 %v409
      %v430 = vunpack.c.l.b16 %v410
      %v431 = vunpack.c.l.b16 %v411
      %v432 = vpack.c.b16 %v425, %v424
      %v433 = vpack.c.b16 %v427, %v426
      %v434 = vpack.c.b16 %v429, %v428
      %v435 = vpack.c.b16 %v431, %v430
      %v441 = vsel %vm288, %v415, 0
      %443 = vmatprep.subr.bf16.mxu0 0
      %444 = vmatpush1.bf16.msra.mxu0 0
      %445 = vmatprep.subr.bf16.mxu0 0
      %446 = vmatpush1.bf16.msra.mxu0 0
      %447 = vmatprep.subr.bf16.mxu0 0
      %448 = vmatpush1.bf16.msra.mxu0 0
      %449 = vmatprep.subr.bf16.mxu0 0
      %450 = vmatpush1.bf16.msra.mxu0 0
      %451 = vmatprep.subr.bf16.mxu0 0
      %452 = vmatpush1.bf16.msra.mxu0 %v435
      %453 = vmatprep.subr.bf16.mxu0 0
      %454 = vmatpush1.bf16.msra.mxu0 %v434
      %455 = vmatprep.subr.bf16.mxu0 0
      %456 = vmatpush1.bf16.msra.mxu0 %v433
      %457 = vmatprep.subr.bf16.mxu0 0
      %458 = vmatpush1.bf16.msra.mxu0 %v432
      %459 = vmatprep.subr.bf16.mxu0 0
      %460 = vmatpush2.bf16.msra.mxu0 0
      %461 = vmatprep.subr.bf16.mxu0 0
      %462 = vmatpush2.bf16.msra.mxu0 0
      %463 = vmatprep.subr.bf16.mxu0 0
      %464 = vmatpush2.bf16.msra.mxu0 0
      %465 = vmatprep.subr.bf16.mxu0 0
      %466 = vmatpush2.bf16.msra.mxu0 0
      %467 = vmatprep.subr.bf16.mxu0 0
      %468 = vmatpush2.bf16.msra.mxu0 0
      %469 = vmatprep.subr.bf16.mxu0 0
      %470 = vmatpush2.bf16.msra.mxu0 0
      %471 = vmatprep.subr.bf16.mxu0 0
      %472 = vmatpush2.bf16.msra.mxu0 0
      %473 = vmatprep.subr.bf16.mxu0 0
      %474 = vmatpush2.bf16.msra.mxu0 0
      %475 = vmatprep.mubr.bf16.mxu0 0
      %476 = vmatmul.mubr.bf16.gmra.mxu0 %v441
      %v477 = vpop.f32.mrf.mxu0
      %v478 = vadd.f32 0.0, %v477
      %v479 = vpop.f32.mrf.mxu0
      %v480 = vpop.f32.mrf.mxu0
      %v481 = vpop.f32.mrf.mxu0
      %482 = vdwg.mxu0
      %v483 = vadd.f32 %v394, %v478
      %v484 = vld [vmem:[#allocation2] sm:$0xff]
      %v485 = vadd.f32 %v484, %v483
      %486 = vst.msk [vmem:[#allocation2] sm:$0xff] %vm288, %v485
      %p487 = scmp.eq.s32.totalorder %s21, 2
      // Predicated region
      $region37: #{head_forward.14} parent=31 // pred_check
        %p488 = pneg %p487
      $region38: #{head_forward.14} parent=31 // pred_check_branch
        %490 = sbr.rel (%p488) target = $region40
      $region39: #{head_forward.14} parent=31 // pred_region
        %v491 = vld [vmem:[#allocation2] sm:$0xff]
        %v492 = vld [vmem:[%s2] sm:$0x1]
        %v494 = vlaneseq
        %v495 = vshrl.u32 %v494, 7
        %v496 = vsub.s32 0, %v495
        %v497 = vrot.slane %v492, %v496
        %v499 = vadd.f32 %v491, %v497
        %v500 = vmax.f32 %v499, 0.0
        %v501 = vpack.c.bf16 %v500, %v500
        %vm502 = vcmask 519168
        %503 = vst.msk [vmem:[%s218] sm:$0xf] %vm502, %v501
      $region40: #{head_forward.14} parent=31 // pred_fallthru
        _
      %p504 = scmp.lt.s32.totalorder %s19, 1
      %s505 = scalar_select %p504, %s19, 1
      %p506 = scmp.lt.s32.totalorder %s20, 7
      %s507 = scalar_select %p506, %s20, 7
      %s508 = smul.addr %s505, 8
      %s509 = sadd.s32 %s507, %s508
      %s510 = smul.addr %s509, 4
      %s511 = scalar_lea.vmem %s3, %s510
      // Predicated region
      $region41: #{head_forward.14} parent=31 // pred_check
        %p512 = pneg %p125
      $region42: #{head_forward.14} parent=31 // pred_check_branch
        %514 = sbr.rel (%p512) target = $region44
      $region43: #{head_forward.14} parent=31 // pred_region
        _
      $region44: #{head_forward.14} parent=31 // pred_fallthru
        _
    $region32: #{head_forward.14} parent=5 // pred_fallthru
      _
    %p515 = scmp.le.s32.totalorder 2, %s9
    // Predicated region
    $region45: #{head_forward.14} parent=5 // pred_check
      %p516 = pneg %p515
    $region46: #{head_forward.14} parent=5 // pred_check_branch
      %518 = sbr.rel (%p516) target = $region48
    $region47: #{head_forward.14} parent=5 // pred_region
      %s519 = ssub.s32 %s9, 2
      // Predicated region
      $region49: #{head_forward.14} parent=47 // pred_check
        %p520 = pneg %p131
      $region50: #{head_forward.14} parent=47 // pred_check_branch
        %522 = sbr.rel (%p520) target = $region52
      $region51: #{head_forward.14} parent=47 // pred_region
        %p523 = scmp.lt.s32.totalorder %s22, 1
        %s524 = scalar_select %p523, %s22, 1
        %p525 = scmp.lt.s32.totalorder %s23, 7
        %s526 = scalar_select %p525, %s23, 7
        %s527 = smul.addr %s524, 8
        %s528 = sadd.s32 %s526, %s527
        %s529 = smul.addr %s528, 4
        %s530 = scalar_lea.vmem %s3, %s529
      $region52: #{head_forward.14} parent=47 // pred_fallthru
        _
    $region48: #{head_forward.14} parent=5 // pred_fallthru
      _
  $region6: #{head_forward.14} parent=0 // loop_footer
    %s13 = sadd.s32 1, %s9
  $region7: #{head_forward.14} parent=0 // loop_footer_branch
    %8 = sbr.rel target = $region3
  $region8: #{head_forward.14} parent=0 // loop_exit
    _

// kernel: head_forward.18
$region0: #{head_forward.18}
  #allocation0 [shape = 'u32[]', space=smem, size = 0x4, offset = 0x4, fixed_abs, tag = 'smem constant byte address 0x4 - core index']
  #allocation1 [shape = 'u32[144,128]{1,0:T(1,128)}', space=vmem, size = 0x12000, scoped, tag = 'internal scratch']
  #allocation2 [shape = 'f32[4,256]{1,0:T(4,128)}', space=vmem, size = 0x1000, scoped, tag = 'scratch operand']
  %s0 = inlined_call_operand.vmem [shape: bf16[2,10,5,64], index: 0, kind: input, shape index: {}]
  %s1 = inlined_call_operand.vmem [shape: bf16[2,10,5,64], index: 1, kind: input, shape index: {}]
  %s2 = inlined_call_operand.vmem [shape: bf16[9,64,256], index: 2, kind: input, shape index: {}]
  %s3 = inlined_call_operand.vmem [shape: f32[1,256], index: 3, kind: input, shape index: {}]
  %s4 = inlined_call_operand.vmem [shape: f32[1,256], index: 4, kind: input, shape index: {}]
  %s5 = inlined_call_operand.vmem [shape: bf16[2,4,4,256], index: 5, kind: output, shape index: {}]
  %s6 = sld [smem:[#allocation0]]
  $region61: #{head_forward.18} parent=0
    _
  %s8 = ssub.s32 1, %s6
  %s9 = scalar_select 0, %s8, %s6
  loop: start=0, step=1, limit=26
  $region2: #{head_forward.18} parent=0 // loop_pre_header
    _
  $region3: #{head_forward.18} parent=0 // loop_header
    %s11 = sphi 0, %s15
    %p12 = scmp.ge.s32.totalorder %s11, 26
    %s18 = sphi 0, %s37
    %s19 = sphi 0, %s33
    %s20 = sphi 0, %s29
    %s21 = sphi 0, %s18
    %s22 = sphi 0, %s19
    %s23 = sphi 0, %s20
    %s24 = sphi 0, %s21
    %s25 = sphi 0, %s22
    %s26 = sphi 0, %s23
    %s46 = sphi 0, %s48
    %s49 = sphi 0, %s46
    %s50 = sphi 0, %s49
    %s66 = sphi 0, %s50
    %s78 = sphi 0, %s80
    %s81 = sphi 0, %s78
    %s82 = sphi 0, %s81
    %s98 = sphi 0, %s82
    %s102 = sphi 0, %s102
    %s104 = sphi 0, %s102
    %s105 = sphi 0, %s104
    %s119 = sphi 0, %s105
    %s123 = sphi 0, %s123
    %s125 = sphi 0, %s123
    %s126 = sphi 0, %s125
    %s140 = sphi 0, %s126
    %s144 = sphi 0, %s144
    %s146 = sphi 0, %s144
    %s147 = sphi 0, %s146
    %s161 = sphi 0, %s147
    %s169 = sphi 0, %s171
    %s172 = sphi 0, %s169
    %s173 = sphi 0, %s172
    %s189 = sphi 0, %s173
  $region4: #{head_forward.18} parent=0 // loop_header_branch
    %14 = sbr.rel (%p12) target = $region8
  $region5: #{head_forward.18} parent=0 // loop_body
    %s16 = ssub.s32 %s11, 1
    %s17 = ssub.s32 %s11, 2
    %s27 = sadd.s32 1, %s20
    %p28 = scmp.ge.s32.totalorder %s27, 3
    %s29 = scalar_select %p28, 0, %s27
    %s30 = sadd.s32 1, %s19
    %s31 = scalar_select %p28, %s30, %s19
    %p32 = scmp.ge.s32.totalorder %s31, 4
    %s33 = scalar_select %p32, 0, %s31
    %s34 = sadd.s32 1, %s18
    %s35 = scalar_select %p32, %s34, %s18
    %p36 = scmp.ge.s32.totalorder %s35, 2
    %s37 = scalar_select %p36, 0, %s35
    %s38 = smul.u32 %s19, 2
    %s39 = sadd.s32 %s38, %s20
    %s40 = smul.u32 %s33, 2
    %s41 = sadd.s32 %s40, %s29
    %s42 = ssub.s32 %s18, %s37
    %s43 = ssub.s32 %s39, %s41
    %s44 = sor.u32 %s42, %s43
    %p45 = scmp.eq.s32.totalorder %s44, 0
    %s47 = sadd.s32 %s46, 1
    %s48 = scalar_select %p45, %s46, %s47
    %p51 = pneg %p45
    %p52 = scmp.eq.s32.totalorder %s11, 23
    %p53 = por %p51, %p52
    %p54 = scmp.ne.s32.totalorder %s46, %s49
    %p55 = scmp.eq.s32.totalorder %s11, 0
    %p56 = por %p54, %p55
    %p57 = scmp.ne.s32.totalorder %s46, %s49
    %p58 = scmp.eq.s32.totalorder %s16, 23
    %p59 = por %p57, %p58
    %p60 = scmp.ne.s32.totalorder %s49, %s50
    %p61 = scmp.eq.s32.totalorder %s16, 0
    %p62 = por %p60, %p61
    %p63 = scmp.ne.s32.totalorder %s49, %s50
    %p64 = scmp.eq.s32.totalorder %s17, 23
    %p65 = por %p63, %p64
    %p67 = scmp.ne.s32.totalorder %s50, %s66
    %p68 = scmp.eq.s32.totalorder %s17, 0
    %p69 = por %p67, %p68
    %s70 = smul.u32 %s19, 2
    %s71 = sadd.s32 %s70, %s20
    %s72 = smul.u32 %s33, 2
    %s73 = sadd.s32 %s72, %s29
    %s74 = ssub.s32 %s18, %s37
    %s75 = ssub.s32 %s71, %s73
    %s76 = sor.u32 %s74, %s75
    %p77 = scmp.eq.s32.totalorder %s76, 0
    %s79 = sadd.s32 %s78, 1
    %s80 = scalar_select %p77, %s78, %s79
    %p83 = pneg %p77
    %p84 = scmp.eq.s32.totalorder %s11, 23
    %p85 = por %p83, %p84
    %p86 = scmp.ne.s32.totalorder %s78, %s81
    %p87 = scmp.eq.s32.totalorder %s11, 0
    %p88 = por %p86, %p87
    %p89 = scmp.ne.s32.totalorder %s78, %s81
    %p90 = scmp.eq.s32.totalorder %s16, 23
    %p91 = por %p89, %p90
    %p92 = scmp.ne.s32.totalorder %s81, %s82
    %p93 = scmp.eq.s32.totalorder %s16, 0
    %p94 = por %p92, %p93
    %p95 = scmp.ne.s32.totalorder %s81, %s82
    %p96 = scmp.eq.s32.totalorder %s17, 23
    %p97 = por %p95, %p96
    %p99 = scmp.ne.s32.totalorder %s82, %s98
    %p100 = scmp.eq.s32.totalorder %s17, 0
    %p101 = por %p99, %p100
    %s103 = sadd.s32 %s102, 1
    %p106 = scmp.eq.s32.totalorder %s11, 23
    %p107 = scmp.ne.s32.totalorder %s102, %s104
    %p108 = scmp.eq.s32.totalorder %s11, 0
    %p109 = por %p107, %p108
    %p110 = scmp.ne.s32.totalorder %s102, %s104
    %p111 = scmp.eq.s32.totalorder %s16, 23
    %p112 = por %p110, %p111
    %p113 = scmp.ne.s32.totalorder %s104, %s105
    %p114 = scmp.eq.s32.totalorder %s16, 0
    %p115 = por %p113, %p114
    %p116 = scmp.ne.s32.totalorder %s104, %s105
    %p117 = scmp.eq.s32.totalorder %s17, 23
    %p118 = por %p116, %p117
    %p120 = scmp.ne.s32.totalorder %s105, %s119
    %p121 = scmp.eq.s32.totalorder %s17, 0
    %p122 = por %p120, %p121
    %s124 = sadd.s32 %s123, 1
    %p127 = scmp.eq.s32.totalorder %s11, 23
    %p128 = scmp.ne.s32.totalorder %s123, %s125
    %p129 = scmp.eq.s32.totalorder %s11, 0
    %p130 = por %p128, %p129
    %p131 = scmp.ne.s32.totalorder %s123, %s125
    %p132 = scmp.eq.s32.totalorder %s16, 23
    %p133 = por %p131, %p132
    %p134 = scmp.ne.s32.totalorder %s125, %s126
    %p135 = scmp.eq.s32.totalorder %s16, 0
    %p136 = por %p134, %p135
    %p137 = scmp.ne.s32.totalorder %s125, %s126
    %p138 = scmp.eq.s32.totalorder %s17, 23
    %p139 = por %p137, %p138
    %p141 = scmp.ne.s32.totalorder %s126, %s140
    %p142 = scmp.eq.s32.totalorder %s17, 0
    %p143 = por %p141, %p142
    %s145 = sadd.s32 %s144, 1
    %p148 = scmp.eq.s32.totalorder %s11, 23
    %p149 = scmp.ne.s32.totalorder %s144, %s146
    %p150 = scmp.eq.s32.totalorder %s11, 0
    %p151 = por %p149, %p150
    %p152 = scmp.ne.s32.totalorder %s144, %s146
    %p153 = scmp.eq.s32.totalorder %s16, 23
    %p154 = por %p152, %p153
    %p155 = scmp.ne.s32.totalorder %s146, %s147
    %p156 = scmp.eq.s32.totalorder %s16, 0
    %p157 = por %p155, %p156
    %p158 = scmp.ne.s32.totalorder %s146, %s147
    %p159 = scmp.eq.s32.totalorder %s17, 23
    %p160 = por %p158, %p159
    %p162 = scmp.ne.s32.totalorder %s147, %s161
    %p163 = scmp.eq.s32.totalorder %s17, 0
    %p164 = por %p162, %p163
    %s165 = ssub.s32 %s18, %s37
    %s166 = ssub.s32 %s19, %s33
    %s167 = sor.u32 %s165, %s166
    %p168 = scmp.eq.s32.totalorder %s167, 0
    %s170 = sadd.s32 %s169, 1
    %s171 = scalar_select %p168, %s169, %s170
    %p174 = pneg %p168
    %p175 = scmp.eq.s32.totalorder %s11, 23
    %p176 = por %p174, %p175
    %p177 = scmp.ne.s32.totalorder %s169, %s172
    %p178 = scmp.eq.s32.totalorder %s11, 0
    %p179 = por %p177, %p178
    %p180 = scmp.ne.s32.totalorder %s169, %s172
    %p181 = scmp.eq.s32.totalorder %s16, 23
    %p182 = por %p180, %p181
    %p183 = scmp.ne.s32.totalorder %s172, %s173
    %p184 = scmp.eq.s32.totalorder %s16, 0
    %p185 = por %p183, %p184
    %p186 = scmp.ne.s32.totalorder %s172, %s173
    %p187 = scmp.eq.s32.totalorder %s17, 23
    %p188 = por %p186, %p187
    %p190 = scmp.ne.s32.totalorder %s173, %s189
    %p191 = scmp.eq.s32.totalorder %s17, 0
    %p192 = por %p190, %p191
    %p193 = scmp.le.s32.totalorder 1, %s11
    %p194 = scmp.lt.s32.totalorder %s11, 25
    %p195 = pnand %p193, %p194
    %p196 = pneg %p195
    // Predicated region
    $region9: #{head_forward.18} parent=5 // pred_check
      _
    $region10: #{head_forward.18} parent=5 // pred_check_branch
      %198 = sbr.rel (%p195) target = $region12
    $region11: #{head_forward.18} parent=5 // pred_region
      %s199 = ssub.s32 %s11, 1
      // Predicated region
      $region13: #{head_forward.18} parent=11 // pred_check
        %p200 = pneg %p115
      $region14: #{head_forward.18} parent=11 // pred_check_branch
        %202 = sbr.rel (%p200) target = $region16
      $region15: #{head_forward.18} parent=11 // pred_region
        _
      $region16: #{head_forward.18} parent=11 // pred_fallthru
        _
      // Predicated region
      $region17: #{head_forward.18} parent=11 // pred_check
        %p203 = pneg %p136
      $region18: #{head_forward.18} parent=11 // pred_check_branch
        %205 = sbr.rel (%p203) target = $region20
      $region19: #{head_forward.18} parent=11 // pred_region
        _
      $region20: #{head_forward.18} parent=11 // pred_fallthru
        _
      // Predicated region
      $region21: #{head_forward.18} parent=11 // pred_check
        %p206 = pneg %p157
      $region22: #{head_forward.18} parent=11 // pred_check_branch
        %208 = sbr.rel (%p206) target = $region24
      $region23: #{head_forward.18} parent=11 // pred_region
        _
      $region24: #{head_forward.18} parent=11 // pred_fallthru
        _
    $region12: #{head_forward.18} parent=5 // pred_fallthru
      _
    %p209 = scmp.lt.s32.totalorder %s11, 24
    // Predicated region
    $region25: #{head_forward.18} parent=5 // pred_check
      %p210 = pneg %p209
    $region26: #{head_forward.18} parent=5 // pred_check_branch
      %212 = sbr.rel (%p210) target = $region28
    $region27: #{head_forward.18} parent=5 // pred_region
      // Predicated region
      $region29: #{head_forward.18} parent=27 // pred_check
        %p213 = pneg %p56
      $region30: #{head_forward.18} parent=27 // pred_check_branch
        %215 = sbr.rel (%p213) target = $region32
      $region31: #{head_forward.18} parent=27 // pred_region
        %s216 = smul.u32 %s19, 2
        %s217 = sadd.s32 %s216, %s20
        %p218 = scmp.lt.s32.totalorder %s18, 1
        %s219 = scalar_select %p218, %s18, 1
        %p220 = scmp.lt.s32.totalorder %s217, 9
        %s221 = scalar_select %p220, %s217, 9
        %s222 = smul.addr %s219, 10
        %s223 = sadd.s32 %s221, %s222
        %s224 = smul.addr %s223, 4
        %s225 = scalar_lea.vmem %s0, %s224
        %s226 = smul.u32 %s19, 2
        %s227 = sadd.s32 %s226, %s20
      $region32: #{head_forward.18} parent=27 // pred_fallthru
        _
      // Predicated region
      $region33: #{head_forward.18} parent=27 // pred_check
        %p228 = pneg %p88
      $region34: #{head_forward.18} parent=27 // pred_check_branch
        %230 = sbr.rel (%p228) target = $region36
      $region35: #{head_forward.18} parent=27 // pred_region
        %s231 = smul.u32 %s19, 2
        %s232 = sadd.s32 %s231, %s20
        %p233 = scmp.lt.s32.totalorder %s18, 1
        %s234 = scalar_select %p233, %s18, 1
        %p235 = scmp.lt.s32.totalorder %s232, 9
        %s236 = scalar_select %p235, %s232, 9
        %s237 = smul.addr %s234, 10
        %s238 = sadd.s32 %s236, %s237
        %s239 = smul.addr %s238, 4
        %s240 = scalar_lea.vmem %s1, %s239
        %s241 = smul.u32 %s19, 2
        %s242 = sadd.s32 %s241, %s20
      $region36: #{head_forward.18} parent=27 // pred_fallthru
        _
    $region28: #{head_forward.18} parent=5 // pred_fallthru
      _
    %p243 = scmp.le.s32.totalorder 1, %s11
    %p244 = scmp.lt.s32.totalorder %s11, 25
    %p245 = pnand %p243, %p244
    %p246 = pneg %p245
    // Predicated region
    $region37: #{head_forward.18} parent=5 // pred_check
      _
    $region38: #{head_forward.18} parent=5 // pred_check_branch
      %248 = sbr.rel (%p245) target = $region40
    $region39: #{head_forward.18} parent=5 // pred_region
      %s249 = ssub.s32 %s11, 1
      %s250 = smul.u32 %s22, 2
      %s251 = sadd.s32 %s250, %s23
      %p252 = scmp.lt.s32.totalorder %s21, 1
      %s253 = scalar_select %p252, %s21, 1
      %p254 = scmp.lt.s32.totalorder %s251, 9
      %s255 = scalar_select %p254, %s251, 9
      %s256 = smul.addr %s253, 10
      %s257 = sadd.s32 %s255, %s256
      %s258 = smul.addr %s257, 4
      %s259 = scalar_lea.vmem %s0, %s258
      %p260 = pneg %p62
      %p261 = pneg %p59
      %s262 = smul.u32 %s22, 2
      %s263 = sadd.s32 %s262, %s23
      %p264 = scmp.lt.s32.totalorder %s21, 1
      %s265 = scalar_select %p264, %s21, 1
      %p266 = scmp.lt.s32.totalorder %s263, 9
      %s267 = scalar_select %p266, %s263, 9
      %s268 = smul.addr %s265, 10
      %s269 = sadd.s32 %s267, %s268
      %s270 = smul.addr %s269, 4
      %s271 = scalar_lea.vmem %s1, %s270
      %p272 = pneg %p94
      %p273 = pneg %p91
      %p274 = pneg %p115
      %p275 = pneg %p112
      %p276 = pneg %p136
      %p277 = pneg %p133
      %p278 = pneg %p157
      %p279 = pneg %p154
      %p280 = pneg %p185
      %p281 = pneg %p182
      %p282 = scmp.lt.s32.totalorder %s21, 1
      %s283 = scalar_select %p282, %s21, 1
      %p284 = scmp.lt.s32.totalorder %s22, 3
      %s285 = scalar_select %p284, %s22, 3
      %s286 = smul.addr %s285, 2
      %s287 = smul.addr %s283, 8
      %s288 = sadd.s32 %s286, %s287
      %s289 = smul.addr %s288, 2
      %s290 = scalar_lea.vmem %s5, %s289
      %s291 = smul.u32 %s22, 2
      %s292 = sadd.s32 %s291, %s23
      %p293 = scmp.lt.s32.totalorder %s21, 1
      %s294 = scalar_select %p293, %s21, 1
      %p295 = scmp.lt.s32.totalorder %s292, 9
      %s296 = scalar_select %p295, %s292, 9
      %s297 = smul.addr %s294, 10
      %s298 = sadd.s32 %s296, %s297
      %s299 = smul.addr %s298, 4
      %s300 = scalar_lea.vmem %s0, %s299
      %s301 = smul.u32 %s22, 2
      %s302 = sadd.s32 %s301, %s23
      %s303 = smul.u32 %s22, 2
      %s304 = sadd.s32 %s303, %s23
      %p305 = scmp.lt.s32.totalorder %s21, 1
      %s306 = scalar_select %p305, %s21, 1
      %p307 = scmp.lt.s32.totalorder %s304, 9
      %s308 = scalar_select %p307, %s304, 9
      %s309 = smul.addr %s306, 10
      %s310 = sadd.s32 %s308, %s309
      %s311 = smul.addr %s310, 4
      %s312 = scalar_lea.vmem %s1, %s311
      %s313 = smul.u32 %s22, 2
      %s314 = sadd.s32 %s313, %s23
      %p315 = scmp.lt.s32.totalorder %s21, 1
      %s316 = scalar_select %p315, %s21, 1
      %p317 = scmp.lt.s32.totalorder %s22, 3
      %s318 = scalar_select %p317, %s22, 3
      %s319 = smul.addr %s318, 2
      %s320 = smul.addr %s316, 8
      %s321 = sadd.s32 %s319, %s320
      %s322 = smul.addr %s321, 2
      %s323 = scalar_lea.vmem %s5, %s322
      %p325 = scmp.eq.s32.totalorder %s23, 0
      // Predicated region
      $region41: #{head_forward.18} parent=39 // pred_check
        %p326 = pneg %p325
      $region42: #{head_forward.18} parent=39 // pred_check_branch
        %328 = sbr.rel (%p326) target = $region44
      $region43: #{head_forward.18} parent=39 // pred_region
        %329 = vst [vmem:[#allocation2] sm:$0xff] 0.0
      $region44: #{head_forward.18} parent=39 // pred_fallthru
        _
      %v330 = vld [vmem:[%s300] sm:$0x3]
      %s331 = smul.u32 %s23, 3
      %s332 = smul.u32 %s331, 16
      %s333 = smul.addr %s332, 4
      %s334 = scalar_lea.vmem %s2, %s333
      %v335 = vld [vmem:[%s334] sm:$0xff]
      %v336 = vld [vmem:[%s334 + $0x8] sm:$0xff]
      %v337 = vld [vmem:[%s334 + $0x10] sm:$0xff]
      %v338 = vld [vmem:[%s334 + $0x18] sm:$0xff]
      %v339 = vld [vmem:[%s334 + $0x20] sm:$0xff]
      %v340 = vld [vmem:[%s334 + $0x28] sm:$0xff]
      %v341 = vld [vmem:[%s334 + $0x30] sm:$0xff]
      %v342 = vld [vmem:[%s334 + $0x38] sm:$0xff]
      %v343 = vld [vmem:[%s312] sm:$0x3]
      %s344 = sadd.s32 %s331, 1
      %s345 = smul.u32 %s344, 16
      %s346 = smul.addr %s345, 4
      %s347 = scalar_lea.vmem %s2, %s346
      %v348 = vld [vmem:[%s347] sm:$0xff]
      %v349 = vld [vmem:[%s347 + $0x8] sm:$0xff]
      %v350 = vld [vmem:[%s347 + $0x10] sm:$0xff]
      %v351 = vld [vmem:[%s347 + $0x18] sm:$0xff]
      %v352 = vld [vmem:[%s347 + $0x20] sm:$0xff]
      %v353 = vld [vmem:[%s347 + $0x28] sm:$0xff]
      %v354 = vld [vmem:[%s347 + $0x30] sm:$0xff]
      %v355 = vld [vmem:[%s347 + $0x38] sm:$0xff]
      %v364 = vunpack.c.l.b16 %v348
      %v365 = vunpack.c.h.b16 %v348
      %v366 = vunpack.c.l.b16 %v349
      %v367 = vunpack.c.h.b16 %v349
      %v368 = vunpack.c.l.b16 %v350
      %v369 = vunpack.c.h.b16 %v350
      %v370 = vunpack.c.l.b16 %v351
      %v371 = vunpack.c.h.b16 %v351
      %v372 = vunpack.c.l.b16 %v352
      %v373 = vunpack.c.h.b16 %v352
      %v374 = vunpack.c.l.b16 %v353
      %v375 = vunpack.c.h.b16 %v353
      %v376 = vunpack.c.l.b16 %v354
      %v377 = vunpack.c.h.b16 %v354
      %v378 = vunpack.c.l.b16 %v355
      %v379 = vunpack.c.h.b16 %v355
      %v380 = vpack.c.b16 %v366, %v364
      %v381 = vpack.c.b16 %v367, %v365
      %v382 = vpack.c.b16 %v370, %v368
      %v383 = vpack.c.b16 %v371, %v369
      %v384 = vpack.c.b16 %v374, %v372
      %v385 = vpack.c.b16 %v375, %v373
      %v386 = vpack.c.b16 %v378, %v376
      %v387 = vpack.c.b16 %v379, %v377
      %vm396 = vcmask 523264
      %v398 = vsel %vm396, %v343, 0
      %400 = vmatprep.subr.bf16.mxu0 0
      %401 = vmatpush1.bf16.msra.mxu0 0
      %402 = vmatprep.subr.bf16.mxu0 0
      %403 = vmatpush1.bf16.msra.mxu0 0
      %404 = vmatprep.subr.bf16.mxu0 0
      %405 = vmatpush1.bf16.msra.mxu0 0
      %406 = vmatprep.subr.bf16.mxu0 0
      %407 = vmatpush1.bf16.msra.mxu0 0
      %408 = vmatprep.subr.bf16.mxu0 %v387
      %409 = vmatpush1.bf16.msra.mxu0 %v386
      %410 = vmatprep.subr.bf16.mxu0 %v385
      %411 = vmatpush1.bf16.msra.mxu0 %v384
      %412 = vmatprep.subr.bf16.mxu0 %v383
      %413 = vmatpush1.bf16.msra.mxu0 %v382
      %414 = vmatprep.subr.bf16.mxu0 %v381
      %415 = vmatpush1.bf16.msra.mxu0 %v380
      %416 = vmatprep.subr.bf16.mxu0 0
      %417 = vmatpush2.bf16.msra.mxu0 0
      %418 = vmatprep.subr.bf16.mxu0 0
      %419 = vmatpush2.bf16.msra.mxu0 0
      %420 = vmatprep.subr.bf16.mxu0 0
      %421 = vmatpush2.bf16.msra.mxu0 0
      %422 = vmatprep.subr.bf16.mxu0 0
      %423 = vmatpush2.bf16.msra.mxu0 0
      %424 = vmatprep.subr.bf16.mxu0 0
      %425 = vmatpush2.bf16.msra.mxu0 0
      %426 = vmatprep.subr.bf16.mxu0 0
      %427 = vmatpush2.bf16.msra.mxu0 0
      %428 = vmatprep.subr.bf16.mxu0 0
      %429 = vmatpush2.bf16.msra.mxu0 0
      %430 = vmatprep.subr.bf16.mxu0 0
      %431 = vmatpush2.bf16.msra.mxu0 0
      %432 = vmatprep.mubr.bf16.mxu0 0
      %433 = vmatmul.mubr.bf16.gmra.mxu0 %v398
      %v434 = vpop.f32.mrf.mxu0
      %v435 = vadd.f32 0.0, %v434
      %v436 = vpop.f32.mrf.mxu0
      %v437 = vadd.f32 0.0, %v436
      %v438 = vpop.f32.mrf.mxu0
      %v439 = vpop.f32.mrf.mxu0
      %440 = vdwg.mxu0
      %v449 = vunpack.c.l.b16 %v335
      %v450 = vunpack.c.h.b16 %v335
      %v451 = vunpack.c.l.b16 %v336
      %v452 = vunpack.c.h.b16 %v336
      %v453 = vunpack.c.l.b16 %v337
      %v454 = vunpack.c.h.b16 %v337
      %v455 = vunpack.c.l.b16 %v338
      %v456 = vunpack.c.h.b16 %v338
      %v457 = vunpack.c.l.b16 %v339
      %v458 = vunpack.c.h.b16 %v339
      %v459 = vunpack.c.l.b16 %v340
      %v460 = vunpack.c.h.b16 %v340
      %v461 = vunpack.c.l.b16 %v341
      %v462 = vunpack.c.h.b16 %v341
      %v463 = vunpack.c.l.b16 %v342
      %v464 = vunpack.c.h.b16 %v342
      %v465 = vpack.c.b16 %v451, %v449
      %v466 = vpack.c.b16 %v452, %v450
      %v467 = vpack.c.b16 %v455, %v453
      %v468 = vpack.c.b16 %v456, %v454
      %v469 = vpack.c.b16 %v459, %v457
      %v470 = vpack.c.b16 %v460, %v458
      %v471 = vpack.c.b16 %v463, %v461
      %v472 = vpack.c.b16 %v464, %v462
      %v482 = vsel %vm396, %v330, 0
      %484 = vmatprep.subr.bf16.mxu0 0
      %485 = vmatpush1.bf16.msra.mxu0 0
      %486 = vmatprep.subr.bf16.mxu0 0
      %487 = vmatpush1.bf16.msra.mxu0 0
      %488 = vmatprep.subr.bf16.mxu0 0
      %489 = vmatpush1.bf16.msra.mxu0 0
      %490 = vmatprep.subr.bf16.mxu0 0
      %491 = vmatpush1.bf16.msra.mxu0 0
      %492 = vmatprep.subr.bf16.mxu0 %v472
      %493 = vmatpush1.bf16.msra.mxu0 %v471
      %494 = vmatprep.subr.bf16.mxu0 %v470
      %495 = vmatpush1.bf16.msra.mxu0 %v469
      %496 = vmatprep.subr.bf16.mxu0 %v468
      %497 = vmatpush1.bf16.msra.mxu0 %v467
      %498 = vmatprep.subr.bf16.mxu0 %v466
      %499 = vmatpush1.bf16.msra.mxu0 %v465
      %500 = vmatprep.subr.bf16.mxu0 0
      %501 = vmatpush2.bf16.msra.mxu0 0
      %502 = vmatprep.subr.bf16.mxu0 0
      %503 = vmatpush2.bf16.msra.mxu0 0
      %504 = vmatprep.subr.bf16.mxu0 0
      %505 = vmatpush2.bf16.msra.mxu0 0
      %506 = vmatprep.subr.bf16.mxu0 0
      %507 = vmatpush2.bf16.msra.mxu0 0
      %508 = vmatprep.subr.bf16.mxu0 0
      %509 = vmatpush2.bf16.msra.mxu0 0
      %510 = vmatprep.subr.bf16.mxu0 0
      %511 = vmatpush2.bf16.msra.mxu0 0
      %512 = vmatprep.subr.bf16.mxu0 0
      %513 = vmatpush2.bf16.msra.mxu0 0
      %514 = vmatprep.subr.bf16.mxu0 0
      %515 = vmatpush2.bf16.msra.mxu0 0
      %516 = vmatprep.mubr.bf16.mxu0 0
      %517 = vmatmul.mubr.bf16.gmra.mxu0 %v482
      %v518 = vpop.f32.mrf.mxu0
      %v519 = vadd.f32 %v435, %v518
      %v520 = vpop.f32.mrf.mxu0
      %v521 = vadd.f32 %v437, %v520
      %v522 = vpop.f32.mrf.mxu0
      %v523 = vpop.f32.mrf.mxu0
      %524 = vdwg.mxu0
      %v525 = vld [vmem:[%s300] sm:$0x7]
      %s526 = sadd.s32 %s331, 2
      %s527 = smul.u32 %s526, 16
      %s528 = smul.addr %s527, 4
      %s529 = scalar_lea.vmem %s2, %s528
      %v530 = vld [vmem:[%s529] sm:$0xff]
      %v531 = vld [vmem:[%s529 + $0x8] sm:$0xff]
      %v532 = vld [vmem:[%s529 + $0x10] sm:$0xff]
      %v533 = vld [vmem:[%s529 + $0x18] sm:$0xff]
      %v534 = vld [vmem:[%s529 + $0x20] sm:$0xff]
      %v535 = vld [vmem:[%s529 + $0x28] sm:$0xff]
      %v536 = vld [vmem:[%s529 + $0x30] sm:$0xff]
      %v537 = vld [vmem:[%s529 + $0x38] sm:$0xff]
      %v539 = vunpack.c.l.b16 %v525
      %v540 = vpack.c.b16 %v539, %v539
      %v542 = vshrl.u32 %v540, 16
      %v544 = vshll.u32 %v540, 16
      %v546 = vrot.slane %v544, 1
      %v547 = vor.u32 %v542, %v546
      %v556 = vunpack.c.l.b16 %v530
      %v557 = vunpack.c.h.b16 %v530
      %v558 = vunpack.c.l.b16 %v531
      %v559 = vunpack.c.h.b16 %v531
      %v560 = vunpack.c.l.b16 %v532
      %v561 = vunpack.c.h.b16 %v532
      %v562 = vunpack.c.l.b16 %v533
      %v563 = vunpack.c.h.b16 %v533
      %v564 = vunpack.c.l.b16 %v534
      %v565 = vunpack.c.h.b16 %v534
      %v566 = vunpack.c.l.b16 %v535
      %v567 = vunpack.c.h.b16 %v535
      %v568 = vunpack.c.l.b16 %v536
      %v569 = vunpack.c.h.b16 %v536
      %v570 = vunpack.c.l.b16 %v537
      %v571 = vunpack.c.h.b16 %v537
      %v572 = vpack.c.b16 %v558, %v556
      %v573 = vpack.c.b16 %v559, %v557
      %v574 = vpack.c.b16 %v562, %v560
      %v575 = vpack.c.b16 %v563, %v561
      %v576 = vpack.c.b16 %v566, %v564
      %v577 = vpack.c.b16 %v567, %v565
      %v578 = vpack.c.b16 %v570, %v568
      %v579 = vpack.c.b16 %v571, %v569
      %v589 = vsel %vm396, %v547, 0
      %591 = vmatprep.subr.bf16.mxu0 0
      %592 = vmatpush1.bf16.msra.mxu0 0
      %593 = vmatprep.subr.bf16.mxu0 0
      %594 = vmatpush1.bf16.msra.mxu0 0
      %595 = vmatprep.subr.bf16.mxu0 0
      %596 = vmatpush1.bf16.msra.mxu0 0
      %597 = vmatprep.subr.bf16.mxu0 0
      %598 = vmatpush1.bf16.msra.mxu0 0
      %599 = vmatprep.subr.bf16.mxu0 %v579
      %600 = vmatpush1.bf16.msra.mxu0 %v578
      %601 = vmatprep.subr.bf16.mxu0 %v577
      %602 = vmatpush1.bf16.msra.mxu0 %v576
      %603 = vmatprep.subr.bf16.mxu0 %v575
      %604 = vmatpush1.bf16.msra.mxu0 %v574
      %605 = vmatprep.subr.bf16.mxu0 %v573
      %606 = vmatpush1.bf16.msra.mxu0 %v572
      %607 = vmatprep.subr.bf16.mxu0 0
      %608 = vmatpush2.bf16.msra.mxu0 0
      %609 = vmatprep.subr.bf16.mxu0 0
      %610 = vmatpush2.bf16.msra.mxu0 0
      %611 = vmatprep.subr.bf16.mxu0 0
      %612 = vmatpush2.bf16.msra.mxu0 0
      %613 = vmatprep.subr.bf16.mxu0 0
      %614 = vmatpush2.bf16.msra.mxu0 0
      %615 = vmatprep.subr.bf16.mxu0 0
      %616 = vmatpush2.bf16.msra.mxu0 0
      %617 = vmatprep.subr.bf16.mxu0 0
      %618 = vmatpush2.bf16.msra.mxu0 0
      %619 = vmatprep.subr.bf16.mxu0 0
      %620 = vmatpush2.bf16.msra.mxu0 0
      %621 = vmatprep.subr.bf16.mxu0 0
      %622 = vmatpush2.bf16.msra.mxu0 0
      %623 = vmatprep.mubr.bf16.mxu0 0
      %624 = vmatmul.mubr.bf16.gmra.mxu0 %v589
      %v625 = vpop.f32.mrf.mxu0
      %v626 = vadd.f32 0.0, %v625
      %v627 = vpop.f32.mrf.mxu0
      %v628 = vadd.f32 0.0, %v627
      %v629 = vpop.f32.mrf.mxu0
      %v630 = vpop.f32.mrf.mxu0
      %631 = vdwg.mxu0
      %v632 = vadd.f32 %v519, %v626
      %v633 = vadd.f32 %v521, %v628
      %v634 = vld [vmem:[#allocation2] sm:$0xff]
      %v637 = vcombine.low %v632, %v633
      %v639 = vadd.f32 %v634, %v637
      %640 = vst [vmem:[#allocation2] sm:$0xff] %v639
      %p641 = scmp.eq.s32.totalorder %s23, 2
      // Predicated region
      $region45: #{head_forward.18} parent=39 // pred_check
        %p642 = pneg %p641
      $region46: #{head_forward.18} parent=39 // pred_check_branch
        %644 = sbr.rel (%p642) target = $region48
      $region47: #{head_forward.18} parent=39 // pred_region
        %v645 = vld [vmem:[#allocation2] sm:$0xff]
        %v646 = vld [vmem:[%s3] sm:$0x3]
        %v648 = vlaneseq
        %v649 = vshrl.u32 %v648, 7
        %v650 = vsub.s32 0, %v649
        %v651 = vrot.slane %v646, %v650
        %v652 = vlaneseq
        %v653 = vshrl.u32 %v652, 7
        %v654 = vsub.s32 1, %v653
        %v655 = vrot.slane %v646, %v654
        %v656 = vcombine.low %v651, %v655
        %v658 = vadd.f32 %v645, %v656
        %vm659 = vcmp.gt.f32.partialorder %v658, 0.0
        %v660 = vld [vmem:[%s4] sm:$0x3]
        %v662 = vlaneseq
        %v663 = vshrl.u32 %v662, 7
        %v664 = vsub.s32 0, %v663
        %v665 = vrot.slane %v660, %v664
        %v666 = vlaneseq
        %v667 = vshrl.u32 %v666, 7
        %v668 = vsub.s32 1, %v667
        %v669 = vrot.slane %v660, %v668
        %v673 = vcombine.high %v658, %v658
        %v675 = vmul.f32 %v665, %v658
        %v676 = vmul.f32 %v669, %v673
        %v679 = vcombine.low %v675, %v676
        %v681 = vsel %vm659, %v658, %v679
        %v683 = vcombine.high %v681, %v681
        %v685 = vpack.c.bf16 %v681, %v681
        %v686 = vpack.c.bf16 %v683, %v683
        %v689 = vcombine.low %v685, %v686
        %v691 = vunpack.c.l.s4 1983009808
        %v692 = vunpack.c.0.s8 %v691
        %v693 = vlaneseq
        %v694 = vshrl.u32 %v693, 7
        %v695 = vsub.s32 %v692, %v694
        %v696 = vrot.slane %v689, %v695
        %698 = vst [vmem:[%s323] sm:$0xf] %v696
      $region48: #{head_forward.18} parent=39 // pred_fallthru
        _
      %p699 = scmp.lt.s32.totalorder %s21, 1
      %s700 = scalar_select %p699, %s21, 1
      %p701 = scmp.lt.s32.totalorder %s22, 3
      %s702 = scalar_select %p701, %s22, 3
      %s703 = smul.addr %s702, 2
      %s704 = smul.addr %s700, 8
      %s705 = sadd.s32 %s703, %s704
      %s706 = smul.addr %s705, 2
      %s707 = scalar_lea.vmem %s5, %s706
      // Predicated region
      $region49: #{head_forward.18} parent=39 // pred_check
        %p708 = pneg %p182
      $region50: #{head_forward.18} parent=39 // pred_check_branch
        %710 = sbr.rel (%p708) target = $region52
      $region51: #{head_forward.18} parent=39 // pred_region
        _
      $region52: #{head_forward.18} parent=39 // pred_fallthru
        _
    $region40: #{head_forward.18} parent=5 // pred_fallthru
      _
    %p711 = scmp.le.s32.totalorder 2, %s11
    // Predicated region
    $region53: #{head_forward.18} parent=5 // pred_check
      %p712 = pneg %p711
    $region54: #{head_forward.18} parent=5 // pred_check_branch
      %714 = sbr.rel (%p712) target = $region56
    $region55: #{head_forward.18} parent=5 // pred_region
      %s715 = ssub.s32 %s11, 2
      // Predicated region
      $region57: #{head_forward.18} parent=55 // pred_check
        %p716 = pneg %p188
      $region58: #{head_forward.18} parent=55 // pred_check_branch
        %718 = sbr.rel (%p716) target = $region60
      $region59: #{head_forward.18} parent=55 // pred_region
        %p719 = scmp.lt.s32.totalorder %s24, 1
        %s720 = scalar_select %p719, %s24, 1
        %p721 = scmp.lt.s32.totalorder %s25, 3
        %s722 = scalar_select %p721, %s25, 3
        %s723 = smul.addr %s722, 2
        %s724 = smul.addr %s720, 8
        %s725 = sadd.s32 %s723, %s724
        %s726 = smul.addr %s725, 2
        %s727 = scalar_lea.vmem %s5, %s726
      $region60: #{head_forward.18} parent=55 // pred_fallthru
        _
    $region56: #{head_forward.18} parent=5 // pred_fallthru
      _
  $region6: #{head_forward.18} parent=0 // loop_footer
    %s15 = sadd.s32 1, %s11
  $region7: #{head_forward.18} parent=0 // loop_footer_branch
    %10 = sbr.rel target = $region3
  $region8: #{head_forward.18} parent=0 // loop_exit
    _

// kernel: head_forward.19
$region0: #{head_forward.19}
  #allocation0 [shape = 'u32[]', space=smem, size = 0x4, offset = 0x4, fixed_abs, tag = 'smem constant byte address 0x4 - core index']
  #allocation1 [shape = 'u32[144,128]{1,0:T(1,128)}', space=vmem, size = 0x12000, scoped, tag = 'internal scratch']
  #allocation2 [shape = 'f32[4,128]{1,0:T(4,128)}', space=vmem, size = 0x800, scoped, tag = 'scratch operand']
  %s0 = inlined_call_operand.vmem [shape: bf16[2,6,6,128], index: 0, kind: input, shape index: {}]
  %s1 = inlined_call_operand.vmem [shape: bf16[9,128,128], index: 1, kind: input, shape index: {}]
  %s2 = inlined_call_operand.vmem [shape: f32[1,128], index: 2, kind: input, shape index: {}]
  %s3 = inlined_call_operand.vmem [shape: bf16[2,4,4,128], index: 3, kind: input, shape index: {}]
  %s4 = inlined_call_operand.vmem [shape: bf16[2,4,4,128], index: 4, kind: output, shape index: {}]
  %s5 = sld [smem:[#allocation0]]
  $region57: #{head_forward.19} parent=0
    _
  %s7 = ssub.s32 1, %s5
  %s8 = scalar_select 0, %s7, %s5
  loop: start=0, step=1, limit=26
  $region2: #{head_forward.19} parent=0 // loop_pre_header
    _
  $region3: #{head_forward.19} parent=0 // loop_header
    %s10 = sphi 0, %s14
    %p11 = scmp.ge.s32.totalorder %s10, 26
    %s17 = sphi 0, %s36
    %s18 = sphi 0, %s32
    %s19 = sphi 0, %s28
    %s20 = sphi 0, %s17
    %s21 = sphi 0, %s18
    %s22 = sphi 0, %s19
    %s23 = sphi 0, %s20
    %s24 = sphi 0, %s21
    %s25 = sphi 0, %s22
    %s43 = sphi 0, %s45
    %s46 = sphi 0, %s43
    %s47 = sphi 0, %s46
    %s63 = sphi 0, %s47
    %s67 = sphi 0, %s67
    %s69 = sphi 0, %s67
    %s70 = sphi 0, %s69
    %s84 = sphi 0, %s70
    %s88 = sphi 0, %s88
    %s90 = sphi 0, %s88
    %s91 = sphi 0, %s90
    %s105 = sphi 0, %s91
    %s113 = sphi 0, %s115
    %s116 = sphi 0, %s113
    %s117 = sphi 0, %s116
    %s133 = sphi 0, %s117
    %s141 = sphi 0, %s143
    %s144 = sphi 0, %s141
    %s145 = sphi 0, %s144
    %s161 = sphi 0, %s145
  $region4: #{head_forward.19} parent=0 // loop_header_branch
    %13 = sbr.rel (%p11) target = $region8
  $region5: #{head_forward.19} parent=0 // loop_body
    %s15 = ssub.s32 %s10, 1
    %s16 = ssub.s32 %s10, 2
    %s26 = sadd.s32 1, %s19
    %p27 = scmp.ge.s32.totalorder %s26, 3
    %s28 = scalar_select %p27, 0, %s26
    %s29 = sadd.s32 1, %s18
    %s30 = scalar_select %p27, %s29, %s18
    %p31 = scmp.ge.s32.totalorder %s30, 4
    %s32 = scalar_select %p31, 0, %s30
    %s33 = sadd.s32 1, %s17
    %s34 = scalar_select %p31, %s33, %s17
    %p35 = scmp.ge.s32.totalorder %s34, 2
    %s36 = scalar_select %p35, 0, %s34
    %s37 = sadd.s32 %s18, %s19
    %s38 = sadd.s32 %s32, %s28
    %s39 = ssub.s32 %s17, %s36
    %s40 = ssub.s32 %s37, %s38
    %s41 = sor.u32 %s39, %s40
    %p42 = scmp.eq.s32.totalorder %s41, 0
    %s44 = sadd.s32 %s43, 1
    %s45 = scalar_select %p42, %s43, %s44
    %p48 = pneg %p42
    %p49 = scmp.eq.s32.totalorder %s10, 23
    %p50 = por %p48, %p49
    %p51 = scmp.ne.s32.totalorder %s43, %s46
    %p52 = scmp.eq.s32.totalorder %s10, 0
    %p53 = por %p51, %p52
    %p54 = scmp.ne.s32.totalorder %s43, %s46
    %p55 = scmp.eq.s32.totalorder %s15, 23
    %p56 = por %p54, %p55
    %p57 = scmp.ne.s32.totalorder %s46, %s47
    %p58 = scmp.eq.s32.totalorder %s15, 0
    %p59 = por %p57, %p58
    %p60 = scmp.ne.s32.totalorder %s46, %s47
    %p61 = scmp.eq.s32.totalorder %s16, 23
    %p62 = por %p60, %p61
    %p64 = scmp.ne.s32.totalorder %s47, %s63
    %p65 = scmp.eq.s32.totalorder %s16, 0
    %p66 = por %p64, %p65
    %s68 = sadd.s32 %s67, 1
    %p71 = scmp.eq.s32.totalorder %s10, 23
    %p72 = scmp.ne.s32.totalorder %s67, %s69
    %p73 = scmp.eq.s32.totalorder %s10, 0
    %p74 = por %p72, %p73
    %p75 = scmp.ne.s32.totalorder %s67, %s69
    %p76 = scmp.eq.s32.totalorder %s15, 23
    %p77 = por %p75, %p76
    %p78 = scmp.ne.s32.totalorder %s69, %s70
    %p79 = scmp.eq.s32.totalorder %s15, 0
    %p80 = por %p78, %p79
    %p81 = scmp.ne.s32.totalorder %s69, %s70
    %p82 = scmp.eq.s32.totalorder %s16, 23
    %p83 = por %p81, %p82
    %p85 = scmp.ne.s32.totalorder %s70, %s84
    %p86 = scmp.eq.s32.totalorder %s16, 0
    %p87 = por %p85, %p86
    %s89 = sadd.s32 %s88, 1
    %p92 = scmp.eq.s32.totalorder %s10, 23
    %p93 = scmp.ne.s32.totalorder %s88, %s90
    %p94 = scmp.eq.s32.totalorder %s10, 0
    %p95 = por %p93, %p94
    %p96 = scmp.ne.s32.totalorder %s88, %s90
    %p97 = scmp.eq.s32.totalorder %s15, 23
    %p98 = por %p96, %p97
    %p99 = scmp.ne.s32.totalorder %s90, %s91
    %p100 = scmp.eq.s32.totalorder %s15, 0
    %p101 = por %p99, %p100
    %p102 = scmp.ne.s32.totalorder %s90, %s91
    %p103 = scmp.eq.s32.totalorder %s16, 23
    %p104 = por %p102, %p103
    %p106 = scmp.ne.s32.totalorder %s91, %s105
    %p107 = scmp.eq.s32.totalorder %s16, 0
    %p108 = por %p106, %p107
    %s109 = ssub.s32 %s17, %s36
    %s110 = ssub.s32 %s18, %s32
    %s111 = sor.u32 %s109, %s110
    %p112 = scmp.eq.s32.totalorder %s111, 0
    %s114 = sadd.s32 %s113, 1
    %s115 = scalar_select %p112, %s113, %s114
    %p118 = pneg %p112
    %p119 = scmp.eq.s32.totalorder %s10, 23
    %p120 = por %p118, %p119
    %p121 = scmp.ne.s32.totalorder %s113, %s116
    %p122 = scmp.eq.s32.totalorder %s10, 0
    %p123 = por %p121, %p122
    %p124 = scmp.ne.s32.totalorder %s113, %s116
    %p125 = scmp.eq.s32.totalorder %s15, 23
    %p126 = por %p124, %p125
    %p127 = scmp.ne.s32.totalorder %s116, %s117
    %p128 = scmp.eq.s32.totalorder %s15, 0
    %p129 = por %p127, %p128
    %p130 = scmp.ne.s32.totalorder %s116, %s117
    %p131 = scmp.eq.s32.totalorder %s16, 23
    %p132 = por %p130, %p131
    %p134 = scmp.ne.s32.totalorder %s117, %s133
    %p135 = scmp.eq.s32.totalorder %s16, 0
    %p136 = por %p134, %p135
    %s137 = ssub.s32 %s17, %s36
    %s138 = ssub.s32 %s18, %s32
    %s139 = sor.u32 %s137, %s138
    %p140 = scmp.eq.s32.totalorder %s139, 0
    %s142 = sadd.s32 %s141, 1
    %s143 = scalar_select %p140, %s141, %s142
    %p146 = pneg %p140
    %p147 = scmp.eq.s32.totalorder %s10, 23
    %p148 = por %p146, %p147
    %p149 = scmp.ne.s32.totalorder %s141, %s144
    %p150 = scmp.eq.s32.totalorder %s10, 0
    %p151 = por %p149, %p150
    %p152 = scmp.ne.s32.totalorder %s141, %s144
    %p153 = scmp.eq.s32.totalorder %s15, 23
    %p154 = por %p152, %p153
    %p155 = scmp.ne.s32.totalorder %s144, %s145
    %p156 = scmp.eq.s32.totalorder %s15, 0
    %p157 = por %p155, %p156
    %p158 = scmp.ne.s32.totalorder %s144, %s145
    %p159 = scmp.eq.s32.totalorder %s16, 23
    %p160 = por %p158, %p159
    %p162 = scmp.ne.s32.totalorder %s145, %s161
    %p163 = scmp.eq.s32.totalorder %s16, 0
    %p164 = por %p162, %p163
    %p165 = scmp.le.s32.totalorder 1, %s10
    %p166 = scmp.lt.s32.totalorder %s10, 25
    %p167 = pnand %p165, %p166
    %p168 = pneg %p167
    // Predicated region
    $region9: #{head_forward.19} parent=5 // pred_check
      _
    $region10: #{head_forward.19} parent=5 // pred_check_branch
      %170 = sbr.rel (%p167) target = $region12
    $region11: #{head_forward.19} parent=5 // pred_region
      %s171 = ssub.s32 %s10, 1
      // Predicated region
      $region13: #{head_forward.19} parent=11 // pred_check
        %p172 = pneg %p80
      $region14: #{head_forward.19} parent=11 // pred_check_branch
        %174 = sbr.rel (%p172) target = $region16
      $region15: #{head_forward.19} parent=11 // pred_region
        _
      $region16: #{head_forward.19} parent=11 // pred_fallthru
        _
      // Predicated region
      $region17: #{head_forward.19} parent=11 // pred_check
        %p175 = pneg %p101
      $region18: #{head_forward.19} parent=11 // pred_check_branch
        %177 = sbr.rel (%p175) target = $region20
      $region19: #{head_forward.19} parent=11 // pred_region
        _
      $region20: #{head_forward.19} parent=11 // pred_fallthru
        _
    $region12: #{head_forward.19} parent=5 // pred_fallthru
      _
    %p178 = scmp.lt.s32.totalorder %s10, 24
    // Predicated region
    $region21: #{head_forward.19} parent=5 // pred_check
      %p179 = pneg %p178
    $region22: #{head_forward.19} parent=5 // pred_check_branch
      %181 = sbr.rel (%p179) target = $region24
    $region23: #{head_forward.19} parent=5 // pred_region
      // Predicated region
      $region25: #{head_forward.19} parent=23 // pred_check
        %p182 = pneg %p53
      $region26: #{head_forward.19} parent=23 // pred_check_branch
        %184 = sbr.rel (%p182) target = $region28
      $region27: #{head_forward.19} parent=23 // pred_region
        %s185 = sadd.s32 %s18, %s19
        %p186 = scmp.lt.s32.totalorder %s17, 1
        %s187 = scalar_select %p186, %s17, 1
        %p188 = scmp.lt.s32.totalorder %s185, 5
        %s189 = scalar_select %p188, %s185, 5
        %s190 = smul.addr %s187, 6
        %s191 = sadd.s32 %s189, %s190
        %s192 = smul.addr %s191, 4
        %s193 = scalar_lea.vmem %s0, %s192
        %s194 = sadd.s32 %s18, %s19
      $region28: #{head_forward.19} parent=23 // pred_fallthru
        _
      // Predicated region
      $region29: #{head_forward.19} parent=23 // pred_check
        %p195 = pneg %p123
      $region30: #{head_forward.19} parent=23 // pred_check_branch
        %197 = sbr.rel (%p195) target = $region32
      $region31: #{head_forward.19} parent=23 // pred_region
        %p198 = scmp.lt.s32.totalorder %s17, 1
        %s199 = scalar_select %p198, %s17, 1
        %p200 = scmp.lt.s32.totalorder %s18, 3
        %s201 = scalar_select %p200, %s18, 3
        %s202 = smul.addr %s199, 4
        %s203 = sadd.s32 %s201, %s202
        %s204 = smul.addr %s203, 2
        %s205 = scalar_lea.vmem %s3, %s204
      $region32: #{head_forward.19} parent=23 // pred_fallthru
        _
    $region24: #{head_forward.19} parent=5 // pred_fallthru
      _
    %p206 = scmp.le.s32.totalorder 1, %s10
    %p207 = scmp.lt.s32.totalorder %s10, 25
    %p208 = pnand %p206, %p207
    %p209 = pneg %p208
    // Predicated region
    $region33: #{head_forward.19} parent=5 // pred_check
      _
    $region34: #{head_forward.19} parent=5 // pred_check_branch
      %211 = sbr.rel (%p208) target = $region36
    $region35: #{head_forward.19} parent=5 // pred_region
      %s212 = ssub.s32 %s10, 1
      %s213 = sadd.s32 %s21, %s22
      %p214 = scmp.lt.s32.totalorder %s20, 1
      %s215 = scalar_select %p214, %s20, 1
      %p216 = scmp.lt.s32.totalorder %s213, 5
      %s217 = scalar_select %p216, %s213, 5
      %s218 = smul.addr %s215, 6
      %s219 = sadd.s32 %s217, %s218
      %s220 = smul.addr %s219, 4
      %s221 = scalar_lea.vmem %s0, %s220
      %p222 = pneg %p59
      %p223 = pneg %p56
      %p224 = pneg %p80
      %p225 = pneg %p77
      %p226 = pneg %p101
      %p227 = pneg %p98
      %p228 = scmp.lt.s32.totalorder %s20, 1
      %s229 = scalar_select %p228, %s20, 1
      %p230 = scmp.lt.s32.totalorder %s21, 3
      %s231 = scalar_select %p230, %s21, 3
      %s232 = smul.addr %s229, 4
      %s233 = sadd.s32 %s231, %s232
      %s234 = smul.addr %s233, 2
      %s235 = scalar_lea.vmem %s3, %s234
      %p236 = pneg %p129
      %p237 = pneg %p126
      %p238 = pneg %p157
      %p239 = pneg %p154
      %p240 = scmp.lt.s32.totalorder %s20, 1
      %s241 = scalar_select %p240, %s20, 1
      %p242 = scmp.lt.s32.totalorder %s21, 3
      %s243 = scalar_select %p242, %s21, 3
      %s244 = smul.addr %s241, 4
      %s245 = sadd.s32 %s243, %s244
      %s246 = smul.addr %s245, 2
      %s247 = scalar_lea.vmem %s4, %s246
      %s248 = sadd.s32 %s21, %s22
      %p249 = scmp.lt.s32.totalorder %s20, 1
      %s250 = scalar_select %p249, %s20, 1
      %p251 = scmp.lt.s32.totalorder %s248, 5
      %s252 = scalar_select %p251, %s248, 5
      %s253 = smul.addr %s250, 6
      %s254 = sadd.s32 %s252, %s253
      %s255 = smul.addr %s254, 4
      %s256 = scalar_lea.vmem %s0, %s255
      %s257 = sadd.s32 %s21, %s22
      %p258 = scmp.lt.s32.totalorder %s20, 1
      %s259 = scalar_select %p258, %s20, 1
      %p260 = scmp.lt.s32.totalorder %s21, 3
      %s261 = scalar_select %p260, %s21, 3
      %s262 = smul.addr %s259, 4
      %s263 = sadd.s32 %s261, %s262
      %s264 = smul.addr %s263, 2
      %s265 = scalar_lea.vmem %s3, %s264
      %p266 = scmp.lt.s32.totalorder %s20, 1
      %s267 = scalar_select %p266, %s20, 1
      %p268 = scmp.lt.s32.totalorder %s21, 3
      %s269 = scalar_select %p268, %s21, 3
      %s270 = smul.addr %s267, 4
      %s271 = sadd.s32 %s269, %s270
      %s272 = smul.addr %s271, 2
      %s273 = scalar_lea.vmem %s4, %s272
      %p275 = scmp.eq.s32.totalorder %s22, 0
      // Predicated region
      $region37: #{head_forward.19} parent=35 // pred_check
        %p276 = pneg %p275
      $region38: #{head_forward.19} parent=35 // pred_check_branch
        %278 = sbr.rel (%p276) target = $region40
      $region39: #{head_forward.19} parent=35 // pred_region
        %279 = vst [vmem:[#allocation2] sm:$0xf] 0.0
      $region40: #{head_forward.19} parent=35 // pred_fallthru
        _
      %v280 = vld [vmem:[%s256] sm:$0x3]
      %s281 = smul.u32 %s22, 3
      %s282 = smul.u32 %s281, 16
      %s283 = smul.addr %s282, 4
      %s284 = scalar_lea.vmem %s1, %s283
      %v285 = vld [vmem:[%s284] sm:$0xf]
      %v286 = vld [vmem:[%s284 + $0x4] sm:$0xf]
      %v287 = vld [vmem:[%s284 + $0x8] sm:$0xf]
      %v288 = vld [vmem:[%s284 + $0xc] sm:$0xf]
      %v289 = vld [vmem:[%s284 + $0x10] sm:$0xf]
      %v290 = vld [vmem:[%s284 + $0x14] sm:$0xf]
      %v291 = vld [vmem:[%s284 + $0x18] sm:$0xf]
      %v292 = vld [vmem:[%s284 + $0x1c] sm:$0xf]
      %v293 = vld [vmem:[%s284 + $0x20] sm:$0xf]
      %v294 = vld [vmem:[%s284 + $0x24] sm:$0xf]
      %v295 = vld [vmem:[%s284 + $0x28] sm:$0xf]
      %v296 = vld [vmem:[%s284 + $0x2c] sm:$0xf]
      %v297 = vld [vmem:[%s284 + $0x30] sm:$0xf]
      %v298 = vld [vmem:[%s284 + $0x34] sm:$0xf]
      %v299 = vld [vmem:[%s284 + $0x38] sm:$0xf]
      %v300 = vld [vmem:[%s284 + $0x3c] sm:$0xf]
      %v301 = vld [vmem:[%s256] sm:$0x7]
      %s302 = sadd.s32 %s281, 1
      %s303 = smul.u32 %s302, 16
      %s304 = smul.addr %s303, 4
      %s305 = scalar_lea.vmem %s1, %s304
      %v306 = vld [vmem:[%s305] sm:$0xf]
      %v307 = vld [vmem:[%s305 + $0x4] sm:$0xf]
      %v308 = vld [vmem:[%s305 + $0x8] sm:$0xf]
      %v309 = vld [vmem:[%s305 + $0xc] sm:$0xf]
      %v310 = vld [vmem:[%s305 + $0x10] sm:$0xf]
      %v311 = vld [vmem:[%s305 + $0x14] sm:$0xf]
      %v312 = vld [vmem:[%s305 + $0x18] sm:$0xf]
      %v313 = vld [vmem:[%s305 + $0x1c] sm:$0xf]
      %v314 = vld [vmem:[%s305 + $0x20] sm:$0xf]
      %v315 = vld [vmem:[%s305 + $0x24] sm:$0xf]
      %v316 = vld [vmem:[%s305 + $0x28] sm:$0xf]
      %v317 = vld [vmem:[%s305 + $0x2c] sm:$0xf]
      %v318 = vld [vmem:[%s305 + $0x30] sm:$0xf]
      %v319 = vld [vmem:[%s305 + $0x34] sm:$0xf]
      %v320 = vld [vmem:[%s305 + $0x38] sm:$0xf]
      %v321 = vld [vmem:[%s305 + $0x3c] sm:$0xf]
      %v323 = vunpack.c.l.b16 %v301
      %v324 = vpack.c.b16 %v323, %v323
      %v326 = vshrl.u32 %v324, 16
      %v328 = vshll.u32 %v324, 16
      %v330 = vrot.slane %v328, 1
      %v331 = vor.u32 %v326, %v330
      %v349 = vunpack.c.l.b16 %v306
      %v350 = vunpack.c.l.b16 %v307
      %v351 = vunpack.c.l.b16 %v308
      %v352 = vunpack.c.l.b16 %v309
      %v353 = vunpack.c.l.b16 %v310
      %v354 = vunpack.c.l.b16 %v311
      %v355 = vunpack.c.l.b16 %v312
      %v356 = vunpack.c.l.b16 %v313
      %v357 = vunpack.c.l.b16 %v314
      %v358 = vunpack.c.l.b16 %v315
      %v359 = vunpack.c.l.b16 %v316
      %v360 = vunpack.c.l.b16 %v317
      %v361 = vunpack.c.l.b16 %v318
      %v362 = vunpack.c.l.b16 %v319
      %v363 = vunpack.c.l.b16 %v320
      %v364 = vunpack.c.l.b16 %v321
      %v365 = vpack.c.b16 %v350, %v349
      %v366 = vpack.c.b16 %v352, %v351
      %v367 = vpack.c.b16 %v354, %v353
      %v368 = vpack.c.b16 %v356, %v355
      %v369 = vpack.c.b16 %v358, %v357
      %v370 = vpack.c.b16 %v360, %v359
      %v371 = vpack.c.b16 %v362, %v361
      %v372 = vpack.c.b16 %v364, %v363
      %381 = vmatprep.subr.bf16.mxu0 0
      %382 = vmatpush1.bf16.msra.mxu0 %v372
      %383 = vmatprep.subr.bf16.mxu0 0
      %384 = vmatpush1.bf16.msra.mxu0 %v371
      %385 = vmatprep.subr.bf16.mxu0 0
      %386 = vmatpush1.bf16.msra.mxu0 %v370
      %387 = vmatprep.subr.bf16.mxu0 0
      %388 = vmatpush1.bf16.msra.mxu0 %v369
      %389 = vmatprep.subr.bf16.mxu0 0
      %390 = vmatpush1.bf16.msra.mxu0 %v368
      %391 = vmatprep.subr.bf16.mxu0 0
      %392 = vmatpush1.bf16.msra.mxu0 %v367
      %393 = vmatprep.subr.bf16.mxu0 0
      %394 = vmatpush1.bf16.msra.mxu0 %v366
      %395 = vmatprep.subr.bf16.mxu0 0
      %396 = vmatpush1.bf16.msra.mxu0 %v365
      %397 = vmatprep.subr.bf16.mxu0 0
      %398 = vmatpush2.bf16.msra.mxu0 0
      %399 = vmatprep.subr.bf16.mxu0 0
      %400 = vmatpush2.bf16.msra.mxu0 0
      %401 = vmatprep.subr.bf16.mxu0 0
      %402 = vmatpush2.bf16.msra.mxu0 0
      %403 = vmatprep.subr.bf16.mxu0 0
      %404 = vmatpush2.bf16.msra.mxu0 0
      %405 = vmatprep.subr.bf16.mxu0 0
      %406 = vmatpush2.bf16.msra.mxu0 0
      %407 = vmatprep.subr.bf16.mxu0 0
      %408 = vmatpush2.bf16.msra.mxu0 0
      %409 = vmatprep.subr.bf16.mxu0 0
      %410 = vmatpush2.bf16.msra.mxu0 0
      %411 = vmatprep.subr.bf16.mxu0 0
      %412 = vmatpush2.bf16.msra.mxu0 0
      %413 = vmatprep.mubr.bf16.mxu0 0
      %414 = vmatmul.mubr.bf16.gmra.mxu0 %v331
      %v415 = vpop.f32.mrf.mxu0
      %v416 = vadd.f32 0.0, %v415
      %v417 = vpop.f32.mrf.mxu0
      %v418 = vpop.f32.mrf.mxu0
      %v419 = vpop.f32.mrf.mxu0
      %420 = vdwg.mxu0
      %v437 = vunpack.c.l.b16 %v285
      %v438 = vunpack.c.l.b16 %v286
      %v439 = vunpack.c.l.b16 %v287
      %v440 = vunpack.c.l.b16 %v288
      %v441 = vunpack.c.l.b16 %v289
      %v442 = vunpack.c.l.b16 %v290
      %v443 = vunpack.c.l.b16 %v291
      %v444 = vunpack.c.l.b16 %v292
      %v445 = vunpack.c.l.b16 %v293
      %v446 = vunpack.c.l.b16 %v294
      %v447 = vunpack.c.l.b16 %v295
      %v448 = vunpack.c.l.b16 %v296
      %v449 = vunpack.c.l.b16 %v297
      %v450 = vunpack.c.l.b16 %v298
      %v451 = vunpack.c.l.b16 %v299
      %v452 = vunpack.c.l.b16 %v300
      %v453 = vpack.c.b16 %v438, %v437
      %v454 = vpack.c.b16 %v440, %v439
      %v455 = vpack.c.b16 %v442, %v441
      %v456 = vpack.c.b16 %v444, %v443
      %v457 = vpack.c.b16 %v446, %v445
      %v458 = vpack.c.b16 %v448, %v447
      %v459 = vpack.c.b16 %v450, %v449
      %v460 = vpack.c.b16 %v452, %v451
      %469 = vmatprep.subr.bf16.mxu0 0
      %470 = vmatpush1.bf16.msra.mxu0 %v460
      %471 = vmatprep.subr.bf16.mxu0 0
      %472 = vmatpush1.bf16.msra.mxu0 %v459
      %473 = vmatprep.subr.bf16.mxu0 0
      %474 = vmatpush1.bf16.msra.mxu0 %v458
      %475 = vmatprep.subr.bf16.mxu0 0
      %476 = vmatpush1.bf16.msra.mxu0 %v457
      %477 = vmatprep.subr.bf16.mxu0 0
      %478 = vmatpush1.bf16.msra.mxu0 %v456
      %479 = vmatprep.subr.bf16.mxu0 0
      %480 = vmatpush1.bf16.msra.mxu0 %v455
      %481 = vmatprep.subr.bf16.mxu0 0
      %482 = vmatpush1.bf16.msra.mxu0 %v454
      %483 = vmatprep.subr.bf16.mxu0 0
      %484 = vmatpush1.bf16.msra.mxu0 %v453
      %485 = vmatprep.subr.bf16.mxu0 0
      %486 = vmatpush2.bf16.msra.mxu0 0
      %487 = vmatprep.subr.bf16.mxu0 0
      %488 = vmatpush2.bf16.msra.mxu0 0
      %489 = vmatprep.subr.bf16.mxu0 0
      %490 = vmatpush2.bf16.msra.mxu0 0
      %491 = vmatprep.subr.bf16.mxu0 0
      %492 = vmatpush2.bf16.msra.mxu0 0
      %493 = vmatprep.subr.bf16.mxu0 0
      %494 = vmatpush2.bf16.msra.mxu0 0
      %495 = vmatprep.subr.bf16.mxu0 0
      %496 = vmatpush2.bf16.msra.mxu0 0
      %497 = vmatprep.subr.bf16.mxu0 0
      %498 = vmatpush2.bf16.msra.mxu0 0
      %499 = vmatprep.subr.bf16.mxu0 0
      %500 = vmatpush2.bf16.msra.mxu0 0
      %501 = vmatprep.mubr.bf16.mxu0 0
      %502 = vmatmul.mubr.bf16.gmra.mxu0 %v280
      %v503 = vpop.f32.mrf.mxu0
      %v504 = vadd.f32 %v416, %v503
      %v505 = vpop.f32.mrf.mxu0
      %v506 = vpop.f32.mrf.mxu0
      %v507 = vpop.f32.mrf.mxu0
      %508 = vdwg.mxu0
      %v509 = vld [vmem:[%s256] sm:$0x6]
      %s510 = sadd.s32 %s281, 2
      %s511 = smul.u32 %s510, 16
      %s512 = smul.addr %s511, 4
      %s513 = scalar_lea.vmem %s1, %s512
      %v514 = vld [vmem:[%s513] sm:$0xf]
      %v515 = vld [vmem:[%s513 + $0x4] sm:$0xf]
      %v516 = vld [vmem:[%s513 + $0x8] sm:$0xf]
      %v517 = vld [vmem:[%s513 + $0xc] sm:$0xf]
      %v518 = vld [vmem:[%s513 + $0x10] sm:$0xf]
      %v519 = vld [vmem:[%s513 + $0x14] sm:$0xf]
      %v520 = vld [vmem:[%s513 + $0x18] sm:$0xf]
      %v521 = vld [vmem:[%s513 + $0x1c] sm:$0xf]
      %v522 = vld [vmem:[%s513 + $0x20] sm:$0xf]
      %v523 = vld [vmem:[%s513 + $0x24] sm:$0xf]
      %v524 = vld [vmem:[%s513 + $0x28] sm:$0xf]
      %v525 = vld [vmem:[%s513 + $0x2c] sm:$0xf]
      %v526 = vld [vmem:[%s513 + $0x30] sm:$0xf]
      %v527 = vld [vmem:[%s513 + $0x34] sm:$0xf]
      %v528 = vld [vmem:[%s513 + $0x38] sm:$0xf]
      %v529 = vld [vmem:[%s513 + $0x3c] sm:$0xf]
      %v531 = vunpack.c.l.b16 %v509
      %v532 = vpack.c.b16 %v531, %v531
      %v533 = vrot.slane %v532, 1
      %v551 = vunpack.c.l.b16 %v514
      %v552 = vunpack.c.l.b16 %v515
      %v553 = vunpack.c.l.b16 %v516
      %v554 = vunpack.c.l.b16 %v517
      %v555 = vunpack.c.l.b16 %v518
      %v556 = vunpack.c.l.b16 %v519
      %v557 = vunpack.c.l.b16 %v520
      %v558 = vunpack.c.l.b16 %v521
      %v559 = vunpack.c.l.b16 %v522
      %v560 = vunpack.c.l.b16 %v523
      %v561 = vunpack.c.l.b16 %v524
      %v562 = vunpack.c.l.b16 %v525
      %v563 = vunpack.c.l.b16 %v526
      %v564 = vunpack.c.l.b16 %v527
      %v565 = vunpack.c.l.b16 %v528
      %v566 = vunpack.c.l.b16 %v529
      %v567 = vpack.c.b16 %v552, %v551
      %v568 = vpack.c.b16 %v554, %v553
      %v569 = vpack.c.b16 %v556, %v555
      %v570 = vpack.c.b16 %v558, %v557
      %v571 = vpack.c.b16 %v560, %v559
      %v572 = vpack.c.b16 %v562, %v561
      %v573 = vpack.c.b16 %v564, %v563
      %v574 = vpack.c.b16 %v566, %v565
      %583 = vmatprep.subr.bf16.mxu0 0
      %584 = vmatpush1.bf16.msra.mxu0 %v574
      %585 = vmatprep.subr.bf16.mxu0 0
      %586 = vmatpush1.bf16.msra.mxu0 %v573
      %587 = vmatprep.subr.bf16.mxu0 0
      %588 = vmatpush1.bf16.msra.mxu0 %v572
      %589 = vmatprep.subr.bf16.mxu0 0
      %590 = vmatpush1.bf16.msra.mxu0 %v571
      %591 = vmatprep.subr.bf16.mxu0 0
      %592 = vmatpush1.bf16.msra.mxu0 %v570
      %593 = vmatprep.subr.bf16.mxu0 0
      %594 = vmatpush1.bf16.msra.mxu0 %v569
      %595 = vmatprep.subr.bf16.mxu0 0
      %596 = vmatpush1.bf16.msra.mxu0 %v568
      %597 = vmatprep.subr.bf16.mxu0 0
      %598 = vmatpush1.bf16.msra.mxu0 %v567
      %599 = vmatprep.subr.bf16.mxu0 0
      %600 = vmatpush2.bf16.msra.mxu0 0
      %601 = vmatprep.subr.bf16.mxu0 0
      %602 = vmatpush2.bf16.msra.mxu0 0
      %603 = vmatprep.subr.bf16.mxu0 0
      %604 = vmatpush2.bf16.msra.mxu0 0
      %605 = vmatprep.subr.bf16.mxu0 0
      %606 = vmatpush2.bf16.msra.mxu0 0
      %607 = vmatprep.subr.bf16.mxu0 0
      %608 = vmatpush2.bf16.msra.mxu0 0
      %609 = vmatprep.subr.bf16.mxu0 0
      %610 = vmatpush2.bf16.msra.mxu0 0
      %611 = vmatprep.subr.bf16.mxu0 0
      %612 = vmatpush2.bf16.msra.mxu0 0
      %613 = vmatprep.subr.bf16.mxu0 0
      %614 = vmatpush2.bf16.msra.mxu0 0
      %615 = vmatprep.mubr.bf16.mxu0 0
      %616 = vmatmul.mubr.bf16.gmra.mxu0 %v533
      %v617 = vpop.f32.mrf.mxu0
      %v618 = vadd.f32 0.0, %v617
      %v619 = vpop.f32.mrf.mxu0
      %v620 = vpop.f32.mrf.mxu0
      %v621 = vpop.f32.mrf.mxu0
      %622 = vdwg.mxu0
      %v623 = vadd.f32 %v504, %v618
      %v624 = vld [vmem:[#allocation2] sm:$0xf]
      %v625 = vadd.f32 %v624, %v623
      %626 = vst [vmem:[#allocation2] sm:$0xf] %v625
      %p627 = scmp.eq.s32.totalorder %s22, 2
      // Predicated region
      $region41: #{head_forward.19} parent=35 // pred_check
        %p628 = pneg %p627
      $region42: #{head_forward.19} parent=35 // pred_check_branch
        %630 = sbr.rel (%p628) target = $region44
      $region43: #{head_forward.19} parent=35 // pred_region
        %v631 = vld [vmem:[#allocation2] sm:$0xf]
        %v632 = vld [vmem:[%s2] sm:$0x1]
        %v634 = vlaneseq
        %v635 = vshrl.u32 %v634, 7
        %v636 = vsub.s32 0, %v635
        %v637 = vrot.slane %v632, %v636
        %v639 = vadd.f32 %v631, %v637
        %v640 = vld [vmem:[%s265] sm:$0x3]
        %v641 = vunpack.c.l.bf16 %v640
        %v642 = vadd.f32 %v639, %v641
        %v643 = vmax.f32 %v642, 0.0
        %v644 = vpack.c.bf16 %v643, %v643
        %645 = vst [vmem:[%s273] sm:$0x3] %v644
      $region44: #{head_forward.19} parent=35 // pred_fallthru
        _
      %p646 = scmp.lt.s32.totalorder %s20, 1
      %s647 = scalar_select %p646, %s20, 1
      %p648 = scmp.lt.s32.totalorder %s21, 3
      %s649 = scalar_select %p648, %s21, 3
      %s650 = smul.addr %s647, 4
      %s651 = sadd.s32 %s649, %s650
      %s652 = smul.addr %s651, 2
      %s653 = scalar_lea.vmem %s4, %s652
      // Predicated region
      $region45: #{head_forward.19} parent=35 // pred_check
        %p654 = pneg %p154
      $region46: #{head_forward.19} parent=35 // pred_check_branch
        %656 = sbr.rel (%p654) target = $region48
      $region47: #{head_forward.19} parent=35 // pred_region
        _
      $region48: #{head_forward.19} parent=35 // pred_fallthru
        _
    $region36: #{head_forward.19} parent=5 // pred_fallthru
      _
    %p657 = scmp.le.s32.totalorder 2, %s10
    // Predicated region
    $region49: #{head_forward.19} parent=5 // pred_check
      %p658 = pneg %p657
    $region50: #{head_forward.19} parent=5 // pred_check_branch
      %660 = sbr.rel (%p658) target = $region52
    $region51: #{head_forward.19} parent=5 // pred_region
      %s661 = ssub.s32 %s10, 2
      // Predicated region
      $region53: #{head_forward.19} parent=51 // pred_check
        %p662 = pneg %p160
      $region54: #{head_forward.19} parent=51 // pred_check_branch
        %664 = sbr.rel (%p662) target = $region56
      $region55: #{head_forward.19} parent=51 // pred_region
        %p665 = scmp.lt.s32.totalorder %s23, 1
        %s666 = scalar_select %p665, %s23, 1
        %p667 = scmp.lt.s32.totalorder %s24, 3
        %s668 = scalar_select %p667, %s24, 3
        %s669 = smul.addr %s666, 4
        %s670 = sadd.s32 %s668, %s669
        %s671 = smul.addr %s670, 2
        %s672 = scalar_lea.vmem %s4, %s671
      $region56: #{head_forward.19} parent=51 // pred_fallthru
        _
    $region52: #{head_forward.19} parent=5 // pred_fallthru
      _
  $region6: #{head_forward.19} parent=0 // loop_footer
    %s14 = sadd.s32 1, %s10
  $region7: #{head_forward.19} parent=0 // loop_footer_branch
    %9 = sbr.rel target = $region3
  $region8: #{head_forward.19} parent=0 // loop_exit
    _

// kernel: head_forward.20
$region0: #{head_forward.20}
  #allocation0 [shape = 'u32[]', space=smem, size = 0x4, offset = 0x4, fixed_abs, tag = 'smem constant byte address 0x4 - core index']
  #allocation1 [shape = 'u32[144,128]{1,0:T(1,128)}', space=vmem, size = 0x12000, scoped, tag = 'internal scratch']
  #allocation2 [shape = 'f32[4,128]{1,0:T(4,128)}', space=vmem, size = 0x800, scoped, tag = 'scratch operand']
  %s0 = inlined_call_operand.vmem [shape: bf16[2,6,6,128], index: 0, kind: input, shape index: {}]
  %s1 = inlined_call_operand.vmem [shape: bf16[9,128,128], index: 1, kind: input, shape index: {}]
  %s2 = inlined_call_operand.vmem [shape: f32[1,128], index: 2, kind: input, shape index: {}]
  %s3 = inlined_call_operand.vmem [shape: bf16[2,4,4,128], index: 3, kind: output, shape index: {}]
  %s4 = sld [smem:[#allocation0]]
  $region53: #{head_forward.20} parent=0
    _
  %s6 = ssub.s32 1, %s4
  %s7 = scalar_select 0, %s6, %s4
  loop: start=0, step=1, limit=26
  $region2: #{head_forward.20} parent=0 // loop_pre_header
    _
  $region3: #{head_forward.20} parent=0 // loop_header
    %s9 = sphi 0, %s13
    %p10 = scmp.ge.s32.totalorder %s9, 26
    %s16 = sphi 0, %s35
    %s17 = sphi 0, %s31
    %s18 = sphi 0, %s27
    %s19 = sphi 0, %s16
    %s20 = sphi 0, %s17
    %s21 = sphi 0, %s18
    %s22 = sphi 0, %s19
    %s23 = sphi 0, %s20
    %s24 = sphi 0, %s21
    %s42 = sphi 0, %s44
    %s45 = sphi 0, %s42
    %s46 = sphi 0, %s45
    %s62 = sphi 0, %s46
    %s66 = sphi 0, %s66
    %s68 = sphi 0, %s66
    %s69 = sphi 0, %s68
    %s83 = sphi 0, %s69
    %s87 = sphi 0, %s87
    %s89 = sphi 0, %s87
    %s90 = sphi 0, %s89
    %s104 = sphi 0, %s90
    %s112 = sphi 0, %s114
    %s115 = sphi 0, %s112
    %s116 = sphi 0, %s115
    %s132 = sphi 0, %s116
  $region4: #{head_forward.20} parent=0 // loop_header_branch
    %12 = sbr.rel (%p10) target = $region8
  $region5: #{head_forward.20} parent=0 // loop_body
    %s14 = ssub.s32 %s9, 1
    %s15 = ssub.s32 %s9, 2
    %s25 = sadd.s32 1, %s18
    %p26 = scmp.ge.s32.totalorder %s25, 3
    %s27 = scalar_select %p26, 0, %s25
    %s28 = sadd.s32 1, %s17
    %s29 = scalar_select %p26, %s28, %s17
    %p30 = scmp.ge.s32.totalorder %s29, 4
    %s31 = scalar_select %p30, 0, %s29
    %s32 = sadd.s32 1, %s16
    %s33 = scalar_select %p30, %s32, %s16
    %p34 = scmp.ge.s32.totalorder %s33, 2
    %s35 = scalar_select %p34, 0, %s33
    %s36 = sadd.s32 %s17, %s18
    %s37 = sadd.s32 %s31, %s27
    %s38 = ssub.s32 %s16, %s35
    %s39 = ssub.s32 %s36, %s37
    %s40 = sor.u32 %s38, %s39
    %p41 = scmp.eq.s32.totalorder %s40, 0
    %s43 = sadd.s32 %s42, 1
    %s44 = scalar_select %p41, %s42, %s43
    %p47 = pneg %p41
    %p48 = scmp.eq.s32.totalorder %s9, 23
    %p49 = por %p47, %p48
    %p50 = scmp.ne.s32.totalorder %s42, %s45
    %p51 = scmp.eq.s32.totalorder %s9, 0
    %p52 = por %p50, %p51
    %p53 = scmp.ne.s32.totalorder %s42, %s45
    %p54 = scmp.eq.s32.totalorder %s14, 23
    %p55 = por %p53, %p54
    %p56 = scmp.ne.s32.totalorder %s45, %s46
    %p57 = scmp.eq.s32.totalorder %s14, 0
    %p58 = por %p56, %p57
    %p59 = scmp.ne.s32.totalorder %s45, %s46
    %p60 = scmp.eq.s32.totalorder %s15, 23
    %p61 = por %p59, %p60
    %p63 = scmp.ne.s32.totalorder %s46, %s62
    %p64 = scmp.eq.s32.totalorder %s15, 0
    %p65 = por %p63, %p64
    %s67 = sadd.s32 %s66, 1
    %p70 = scmp.eq.s32.totalorder %s9, 23
    %p71 = scmp.ne.s32.totalorder %s66, %s68
    %p72 = scmp.eq.s32.totalorder %s9, 0
    %p73 = por %p71, %p72
    %p74 = scmp.ne.s32.totalorder %s66, %s68
    %p75 = scmp.eq.s32.totalorder %s14, 23
    %p76 = por %p74, %p75
    %p77 = scmp.ne.s32.totalorder %s68, %s69
    %p78 = scmp.eq.s32.totalorder %s14, 0
    %p79 = por %p77, %p78
    %p80 = scmp.ne.s32.totalorder %s68, %s69
    %p81 = scmp.eq.s32.totalorder %s15, 23
    %p82 = por %p80, %p81
    %p84 = scmp.ne.s32.totalorder %s69, %s83
    %p85 = scmp.eq.s32.totalorder %s15, 0
    %p86 = por %p84, %p85
    %s88 = sadd.s32 %s87, 1
    %p91 = scmp.eq.s32.totalorder %s9, 23
    %p92 = scmp.ne.s32.totalorder %s87, %s89
    %p93 = scmp.eq.s32.totalorder %s9, 0
    %p94 = por %p92, %p93
    %p95 = scmp.ne.s32.totalorder %s87, %s89
    %p96 = scmp.eq.s32.totalorder %s14, 23
    %p97 = por %p95, %p96
    %p98 = scmp.ne.s32.totalorder %s89, %s90
    %p99 = scmp.eq.s32.totalorder %s14, 0
    %p100 = por %p98, %p99
    %p101 = scmp.ne.s32.totalorder %s89, %s90
    %p102 = scmp.eq.s32.totalorder %s15, 23
    %p103 = por %p101, %p102
    %p105 = scmp.ne.s32.totalorder %s90, %s104
    %p106 = scmp.eq.s32.totalorder %s15, 0
    %p107 = por %p105, %p106
    %s108 = ssub.s32 %s16, %s35
    %s109 = ssub.s32 %s17, %s31
    %s110 = sor.u32 %s108, %s109
    %p111 = scmp.eq.s32.totalorder %s110, 0
    %s113 = sadd.s32 %s112, 1
    %s114 = scalar_select %p111, %s112, %s113
    %p117 = pneg %p111
    %p118 = scmp.eq.s32.totalorder %s9, 23
    %p119 = por %p117, %p118
    %p120 = scmp.ne.s32.totalorder %s112, %s115
    %p121 = scmp.eq.s32.totalorder %s9, 0
    %p122 = por %p120, %p121
    %p123 = scmp.ne.s32.totalorder %s112, %s115
    %p124 = scmp.eq.s32.totalorder %s14, 23
    %p125 = por %p123, %p124
    %p126 = scmp.ne.s32.totalorder %s115, %s116
    %p127 = scmp.eq.s32.totalorder %s14, 0
    %p128 = por %p126, %p127
    %p129 = scmp.ne.s32.totalorder %s115, %s116
    %p130 = scmp.eq.s32.totalorder %s15, 23
    %p131 = por %p129, %p130
    %p133 = scmp.ne.s32.totalorder %s116, %s132
    %p134 = scmp.eq.s32.totalorder %s15, 0
    %p135 = por %p133, %p134
    %p136 = scmp.le.s32.totalorder 1, %s9
    %p137 = scmp.lt.s32.totalorder %s9, 25
    %p138 = pnand %p136, %p137
    %p139 = pneg %p138
    // Predicated region
    $region9: #{head_forward.20} parent=5 // pred_check
      _
    $region10: #{head_forward.20} parent=5 // pred_check_branch
      %141 = sbr.rel (%p138) target = $region12
    $region11: #{head_forward.20} parent=5 // pred_region
      %s142 = ssub.s32 %s9, 1
      // Predicated region
      $region13: #{head_forward.20} parent=11 // pred_check
        %p143 = pneg %p79
      $region14: #{head_forward.20} parent=11 // pred_check_branch
        %145 = sbr.rel (%p143) target = $region16
      $region15: #{head_forward.20} parent=11 // pred_region
        _
      $region16: #{head_forward.20} parent=11 // pred_fallthru
        _
      // Predicated region
      $region17: #{head_forward.20} parent=11 // pred_check
        %p146 = pneg %p100
      $region18: #{head_forward.20} parent=11 // pred_check_branch
        %148 = sbr.rel (%p146) target = $region20
      $region19: #{head_forward.20} parent=11 // pred_region
        _
      $region20: #{head_forward.20} parent=11 // pred_fallthru
        _
    $region12: #{head_forward.20} parent=5 // pred_fallthru
      _
    %p149 = scmp.lt.s32.totalorder %s9, 24
    // Predicated region
    $region21: #{head_forward.20} parent=5 // pred_check
      %p150 = pneg %p149
    $region22: #{head_forward.20} parent=5 // pred_check_branch
      %152 = sbr.rel (%p150) target = $region24
    $region23: #{head_forward.20} parent=5 // pred_region
      // Predicated region
      $region25: #{head_forward.20} parent=23 // pred_check
        %p153 = pneg %p52
      $region26: #{head_forward.20} parent=23 // pred_check_branch
        %155 = sbr.rel (%p153) target = $region28
      $region27: #{head_forward.20} parent=23 // pred_region
        %s156 = sadd.s32 %s17, %s18
        %p157 = scmp.lt.s32.totalorder %s16, 1
        %s158 = scalar_select %p157, %s16, 1
        %p159 = scmp.lt.s32.totalorder %s156, 5
        %s160 = scalar_select %p159, %s156, 5
        %s161 = smul.addr %s158, 6
        %s162 = sadd.s32 %s160, %s161
        %s163 = smul.addr %s162, 4
        %s164 = scalar_lea.vmem %s0, %s163
        %s165 = sadd.s32 %s17, %s18
      $region28: #{head_forward.20} parent=23 // pred_fallthru
        _
    $region24: #{head_forward.20} parent=5 // pred_fallthru
      _
    %p166 = scmp.le.s32.totalorder 1, %s9
    %p167 = scmp.lt.s32.totalorder %s9, 25
    %p168 = pnand %p166, %p167
    %p169 = pneg %p168
    // Predicated region
    $region29: #{head_forward.20} parent=5 // pred_check
      _
    $region30: #{head_forward.20} parent=5 // pred_check_branch
      %171 = sbr.rel (%p168) target = $region32
    $region31: #{head_forward.20} parent=5 // pred_region
      %s172 = ssub.s32 %s9, 1
      %s173 = sadd.s32 %s20, %s21
      %p174 = scmp.lt.s32.totalorder %s19, 1
      %s175 = scalar_select %p174, %s19, 1
      %p176 = scmp.lt.s32.totalorder %s173, 5
      %s177 = scalar_select %p176, %s173, 5
      %s178 = smul.addr %s175, 6
      %s179 = sadd.s32 %s177, %s178
      %s180 = smul.addr %s179, 4
      %s181 = scalar_lea.vmem %s0, %s180
      %p182 = pneg %p58
      %p183 = pneg %p55
      %p184 = pneg %p79
      %p185 = pneg %p76
      %p186 = pneg %p100
      %p187 = pneg %p97
      %p188 = pneg %p128
      %p189 = pneg %p125
      %p190 = scmp.lt.s32.totalorder %s19, 1
      %s191 = scalar_select %p190, %s19, 1
      %p192 = scmp.lt.s32.totalorder %s20, 3
      %s193 = scalar_select %p192, %s20, 3
      %s194 = smul.addr %s191, 4
      %s195 = sadd.s32 %s193, %s194
      %s196 = smul.addr %s195, 2
      %s197 = scalar_lea.vmem %s3, %s196
      %s198 = sadd.s32 %s20, %s21
      %p199 = scmp.lt.s32.totalorder %s19, 1
      %s200 = scalar_select %p199, %s19, 1
      %p201 = scmp.lt.s32.totalorder %s198, 5
      %s202 = scalar_select %p201, %s198, 5
      %s203 = smul.addr %s200, 6
      %s204 = sadd.s32 %s202, %s203
      %s205 = smul.addr %s204, 4
      %s206 = scalar_lea.vmem %s0, %s205
      %s207 = sadd.s32 %s20, %s21
      %p208 = scmp.lt.s32.totalorder %s19, 1
      %s209 = scalar_select %p208, %s19, 1
      %p210 = scmp.lt.s32.totalorder %s20, 3
      %s211 = scalar_select %p210, %s20, 3
      %s212 = smul.addr %s209, 4
      %s213 = sadd.s32 %s211, %s212
      %s214 = smul.addr %s213, 2
      %s215 = scalar_lea.vmem %s3, %s214
      %p217 = scmp.eq.s32.totalorder %s21, 0
      // Predicated region
      $region33: #{head_forward.20} parent=31 // pred_check
        %p218 = pneg %p217
      $region34: #{head_forward.20} parent=31 // pred_check_branch
        %220 = sbr.rel (%p218) target = $region36
      $region35: #{head_forward.20} parent=31 // pred_region
        %221 = vst [vmem:[#allocation2] sm:$0xf] 0.0
      $region36: #{head_forward.20} parent=31 // pred_fallthru
        _
      %v222 = vld [vmem:[%s206] sm:$0x3]
      %s223 = smul.u32 %s21, 3
      %s224 = smul.u32 %s223, 16
      %s225 = smul.addr %s224, 4
      %s226 = scalar_lea.vmem %s1, %s225
      %v227 = vld [vmem:[%s226] sm:$0xf]
      %v228 = vld [vmem:[%s226 + $0x4] sm:$0xf]
      %v229 = vld [vmem:[%s226 + $0x8] sm:$0xf]
      %v230 = vld [vmem:[%s226 + $0xc] sm:$0xf]
      %v231 = vld [vmem:[%s226 + $0x10] sm:$0xf]
      %v232 = vld [vmem:[%s226 + $0x14] sm:$0xf]
      %v233 = vld [vmem:[%s226 + $0x18] sm:$0xf]
      %v234 = vld [vmem:[%s226 + $0x1c] sm:$0xf]
      %v235 = vld [vmem:[%s226 + $0x20] sm:$0xf]
      %v236 = vld [vmem:[%s226 + $0x24] sm:$0xf]
      %v237 = vld [vmem:[%s226 + $0x28] sm:$0xf]
      %v238 = vld [vmem:[%s226 + $0x2c] sm:$0xf]
      %v239 = vld [vmem:[%s226 + $0x30] sm:$0xf]
      %v240 = vld [vmem:[%s226 + $0x34] sm:$0xf]
      %v241 = vld [vmem:[%s226 + $0x38] sm:$0xf]
      %v242 = vld [vmem:[%s226 + $0x3c] sm:$0xf]
      %v243 = vld [vmem:[%s206] sm:$0x7]
      %s244 = sadd.s32 %s223, 1
      %s245 = smul.u32 %s244, 16
      %s246 = smul.addr %s245, 4
      %s247 = scalar_lea.vmem %s1, %s246
      %v248 = vld [vmem:[%s247] sm:$0xf]
      %v249 = vld [vmem:[%s247 + $0x4] sm:$0xf]
      %v250 = vld [vmem:[%s247 + $0x8] sm:$0xf]
      %v251 = vld [vmem:[%s247 + $0xc] sm:$0xf]
      %v252 = vld [vmem:[%s247 + $0x10] sm:$0xf]
      %v253 = vld [vmem:[%s247 + $0x14] sm:$0xf]
      %v254 = vld [vmem:[%s247 + $0x18] sm:$0xf]
      %v255 = vld [vmem:[%s247 + $0x1c] sm:$0xf]
      %v256 = vld [vmem:[%s247 + $0x20] sm:$0xf]
      %v257 = vld [vmem:[%s247 + $0x24] sm:$0xf]
      %v258 = vld [vmem:[%s247 + $0x28] sm:$0xf]
      %v259 = vld [vmem:[%s247 + $0x2c] sm:$0xf]
      %v260 = vld [vmem:[%s247 + $0x30] sm:$0xf]
      %v261 = vld [vmem:[%s247 + $0x34] sm:$0xf]
      %v262 = vld [vmem:[%s247 + $0x38] sm:$0xf]
      %v263 = vld [vmem:[%s247 + $0x3c] sm:$0xf]
      %v265 = vunpack.c.l.b16 %v243
      %v266 = vpack.c.b16 %v265, %v265
      %v268 = vshrl.u32 %v266, 16
      %v270 = vshll.u32 %v266, 16
      %v272 = vrot.slane %v270, 1
      %v273 = vor.u32 %v268, %v272
      %v291 = vunpack.c.l.b16 %v248
      %v292 = vunpack.c.l.b16 %v249
      %v293 = vunpack.c.l.b16 %v250
      %v294 = vunpack.c.l.b16 %v251
      %v295 = vunpack.c.l.b16 %v252
      %v296 = vunpack.c.l.b16 %v253
      %v297 = vunpack.c.l.b16 %v254
      %v298 = vunpack.c.l.b16 %v255
      %v299 = vunpack.c.l.b16 %v256
      %v300 = vunpack.c.l.b16 %v257
      %v301 = vunpack.c.l.b16 %v258
      %v302 = vunpack.c.l.b16 %v259
      %v303 = vunpack.c.l.b16 %v260
      %v304 = vunpack.c.l.b16 %v261
      %v305 = vunpack.c.l.b16 %v262
      %v306 = vunpack.c.l.b16 %v263
      %v307 = vpack.c.b16 %v292, %v291
      %v308 = vpack.c.b16 %v294, %v293
      %v309 = vpack.c.b16 %v296, %v295
      %v310 = vpack.c.b16 %v298, %v297
      %v311 = vpack.c.b16 %v300, %v299
      %v312 = vpack.c.b16 %v302, %v301
      %v313 = vpack.c.b16 %v304, %v303
      %v314 = vpack.c.b16 %v306, %v305
      %323 = vmatprep.subr.bf16.mxu0 0
      %324 = vmatpush1.bf16.msra.mxu0 %v314
      %325 = vmatprep.subr.bf16.mxu0 0
      %326 = vmatpush1.bf16.msra.mxu0 %v313
      %327 = vmatprep.subr.bf16.mxu0 0
      %328 = vmatpush1.bf16.msra.mxu0 %v312
      %329 = vmatprep.subr.bf16.mxu0 0
      %330 = vmatpush1.bf16.msra.mxu0 %v311
      %331 = vmatprep.subr.bf16.mxu0 0
      %332 = vmatpush1.bf16.msra.mxu0 %v310
      %333 = vmatprep.subr.bf16.mxu0 0
      %334 = vmatpush1.bf16.msra.mxu0 %v309
      %335 = vmatprep.subr.bf16.mxu0 0
      %336 = vmatpush1.bf16.msra.mxu0 %v308
      %337 = vmatprep.subr.bf16.mxu0 0
      %338 = vmatpush1.bf16.msra.mxu0 %v307
      %339 = vmatprep.subr.bf16.mxu0 0
      %340 = vmatpush2.bf16.msra.mxu0 0
      %341 = vmatprep.subr.bf16.mxu0 0
      %342 = vmatpush2.bf16.msra.mxu0 0
      %343 = vmatprep.subr.bf16.mxu0 0
      %344 = vmatpush2.bf16.msra.mxu0 0
      %345 = vmatprep.subr.bf16.mxu0 0
      %346 = vmatpush2.bf16.msra.mxu0 0
      %347 = vmatprep.subr.bf16.mxu0 0
      %348 = vmatpush2.bf16.msra.mxu0 0
      %349 = vmatprep.subr.bf16.mxu0 0
      %350 = vmatpush2.bf16.msra.mxu0 0
      %351 = vmatprep.subr.bf16.mxu0 0
      %352 = vmatpush2.bf16.msra.mxu0 0
      %353 = vmatprep.subr.bf16.mxu0 0
      %354 = vmatpush2.bf16.msra.mxu0 0
      %355 = vmatprep.mubr.bf16.mxu0 0
      %356 = vmatmul.mubr.bf16.gmra.mxu0 %v273
      %v357 = vpop.f32.mrf.mxu0
      %v358 = vadd.f32 0.0, %v357
      %v359 = vpop.f32.mrf.mxu0
      %v360 = vpop.f32.mrf.mxu0
      %v361 = vpop.f32.mrf.mxu0
      %362 = vdwg.mxu0
      %v379 = vunpack.c.l.b16 %v227
      %v380 = vunpack.c.l.b16 %v228
      %v381 = vunpack.c.l.b16 %v229
      %v382 = vunpack.c.l.b16 %v230
      %v383 = vunpack.c.l.b16 %v231
      %v384 = vunpack.c.l.b16 %v232
      %v385 = vunpack.c.l.b16 %v233
      %v386 = vunpack.c.l.b16 %v234
      %v387 = vunpack.c.l.b16 %v235
      %v388 = vunpack.c.l.b16 %v236
      %v389 = vunpack.c.l.b16 %v237
      %v390 = vunpack.c.l.b16 %v238
      %v391 = vunpack.c.l.b16 %v239
      %v392 = vunpack.c.l.b16 %v240
      %v393 = vunpack.c.l.b16 %v241
      %v394 = vunpack.c.l.b16 %v242
      %v395 = vpack.c.b16 %v380, %v379
      %v396 = vpack.c.b16 %v382, %v381
      %v397 = vpack.c.b16 %v384, %v383
      %v398 = vpack.c.b16 %v386, %v385
      %v399 = vpack.c.b16 %v388, %v387
      %v400 = vpack.c.b16 %v390, %v389
      %v401 = vpack.c.b16 %v392, %v391
      %v402 = vpack.c.b16 %v394, %v393
      %411 = vmatprep.subr.bf16.mxu0 0
      %412 = vmatpush1.bf16.msra.mxu0 %v402
      %413 = vmatprep.subr.bf16.mxu0 0
      %414 = vmatpush1.bf16.msra.mxu0 %v401
      %415 = vmatprep.subr.bf16.mxu0 0
      %416 = vmatpush1.bf16.msra.mxu0 %v400
      %417 = vmatprep.subr.bf16.mxu0 0
      %418 = vmatpush1.bf16.msra.mxu0 %v399
      %419 = vmatprep.subr.bf16.mxu0 0
      %420 = vmatpush1.bf16.msra.mxu0 %v398
      %421 = vmatprep.subr.bf16.mxu0 0
      %422 = vmatpush1.bf16.msra.mxu0 %v397
      %423 = vmatprep.subr.bf16.mxu0 0
      %424 = vmatpush1.bf16.msra.mxu0 %v396
      %425 = vmatprep.subr.bf16.mxu0 0
      %426 = vmatpush1.bf16.msra.mxu0 %v395
      %427 = vmatprep.subr.bf16.mxu0 0
      %428 = vmatpush2.bf16.msra.mxu0 0
      %429 = vmatprep.subr.bf16.mxu0 0
      %430 = vmatpush2.bf16.msra.mxu0 0
      %431 = vmatprep.subr.bf16.mxu0 0
      %432 = vmatpush2.bf16.msra.mxu0 0
      %433 = vmatprep.subr.bf16.mxu0 0
      %434 = vmatpush2.bf16.msra.mxu0 0
      %435 = vmatprep.subr.bf16.mxu0 0
      %436 = vmatpush2.bf16.msra.mxu0 0
      %437 = vmatprep.subr.bf16.mxu0 0
      %438 = vmatpush2.bf16.msra.mxu0 0
      %439 = vmatprep.subr.bf16.mxu0 0
      %440 = vmatpush2.bf16.msra.mxu0 0
      %441 = vmatprep.subr.bf16.mxu0 0
      %442 = vmatpush2.bf16.msra.mxu0 0
      %443 = vmatprep.mubr.bf16.mxu0 0
      %444 = vmatmul.mubr.bf16.gmra.mxu0 %v222
      %v445 = vpop.f32.mrf.mxu0
      %v446 = vadd.f32 %v358, %v445
      %v447 = vpop.f32.mrf.mxu0
      %v448 = vpop.f32.mrf.mxu0
      %v449 = vpop.f32.mrf.mxu0
      %450 = vdwg.mxu0
      %v451 = vld [vmem:[%s206] sm:$0x6]
      %s452 = sadd.s32 %s223, 2
      %s453 = smul.u32 %s452, 16
      %s454 = smul.addr %s453, 4
      %s455 = scalar_lea.vmem %s1, %s454
      %v456 = vld [vmem:[%s455] sm:$0xf]
      %v457 = vld [vmem:[%s455 + $0x4] sm:$0xf]
      %v458 = vld [vmem:[%s455 + $0x8] sm:$0xf]
      %v459 = vld [vmem:[%s455 + $0xc] sm:$0xf]
      %v460 = vld [vmem:[%s455 + $0x10] sm:$0xf]
      %v461 = vld [vmem:[%s455 + $0x14] sm:$0xf]
      %v462 = vld [vmem:[%s455 + $0x18] sm:$0xf]
      %v463 = vld [vmem:[%s455 + $0x1c] sm:$0xf]
      %v464 = vld [vmem:[%s455 + $0x20] sm:$0xf]
      %v465 = vld [vmem:[%s455 + $0x24] sm:$0xf]
      %v466 = vld [vmem:[%s455 + $0x28] sm:$0xf]
      %v467 = vld [vmem:[%s455 + $0x2c] sm:$0xf]
      %v468 = vld [vmem:[%s455 + $0x30] sm:$0xf]
      %v469 = vld [vmem:[%s455 + $0x34] sm:$0xf]
      %v470 = vld [vmem:[%s455 + $0x38] sm:$0xf]
      %v471 = vld [vmem:[%s455 + $0x3c] sm:$0xf]
      %v473 = vunpack.c.l.b16 %v451
      %v474 = vpack.c.b16 %v473, %v473
      %v475 = vrot.slane %v474, 1
      %v493 = vunpack.c.l.b16 %v456
      %v494 = vunpack.c.l.b16 %v457
      %v495 = vunpack.c.l.b16 %v458
      %v496 = vunpack.c.l.b16 %v459
      %v497 = vunpack.c.l.b16 %v460
      %v498 = vunpack.c.l.b16 %v461
      %v499 = vunpack.c.l.b16 %v462
      %v500 = vunpack.c.l.b16 %v463
      %v501 = vunpack.c.l.b16 %v464
      %v502 = vunpack.c.l.b16 %v465
      %v503 = vunpack.c.l.b16 %v466
      %v504 = vunpack.c.l.b16 %v467
      %v505 = vunpack.c.l.b16 %v468
      %v506 = vunpack.c.l.b16 %v469
      %v507 = vunpack.c.l.b16 %v470
      %v508 = vunpack.c.l.b16 %v471
      %v509 = vpack.c.b16 %v494, %v493
      %v510 = vpack.c.b16 %v496, %v495
      %v511 = vpack.c.b16 %v498, %v497
      %v512 = vpack.c.b16 %v500, %v499
      %v513 = vpack.c.b16 %v502, %v501
      %v514 = vpack.c.b16 %v504, %v503
      %v515 = vpack.c.b16 %v506, %v505
      %v516 = vpack.c.b16 %v508, %v507
      %525 = vmatprep.subr.bf16.mxu0 0
      %526 = vmatpush1.bf16.msra.mxu0 %v516
      %527 = vmatprep.subr.bf16.mxu0 0
      %528 = vmatpush1.bf16.msra.mxu0 %v515
      %529 = vmatprep.subr.bf16.mxu0 0
      %530 = vmatpush1.bf16.msra.mxu0 %v514
      %531 = vmatprep.subr.bf16.mxu0 0
      %532 = vmatpush1.bf16.msra.mxu0 %v513
      %533 = vmatprep.subr.bf16.mxu0 0
      %534 = vmatpush1.bf16.msra.mxu0 %v512
      %535 = vmatprep.subr.bf16.mxu0 0
      %536 = vmatpush1.bf16.msra.mxu0 %v511
      %537 = vmatprep.subr.bf16.mxu0 0
      %538 = vmatpush1.bf16.msra.mxu0 %v510
      %539 = vmatprep.subr.bf16.mxu0 0
      %540 = vmatpush1.bf16.msra.mxu0 %v509
      %541 = vmatprep.subr.bf16.mxu0 0
      %542 = vmatpush2.bf16.msra.mxu0 0
      %543 = vmatprep.subr.bf16.mxu0 0
      %544 = vmatpush2.bf16.msra.mxu0 0
      %545 = vmatprep.subr.bf16.mxu0 0
      %546 = vmatpush2.bf16.msra.mxu0 0
      %547 = vmatprep.subr.bf16.mxu0 0
      %548 = vmatpush2.bf16.msra.mxu0 0
      %549 = vmatprep.subr.bf16.mxu0 0
      %550 = vmatpush2.bf16.msra.mxu0 0
      %551 = vmatprep.subr.bf16.mxu0 0
      %552 = vmatpush2.bf16.msra.mxu0 0
      %553 = vmatprep.subr.bf16.mxu0 0
      %554 = vmatpush2.bf16.msra.mxu0 0
      %555 = vmatprep.subr.bf16.mxu0 0
      %556 = vmatpush2.bf16.msra.mxu0 0
      %557 = vmatprep.mubr.bf16.mxu0 0
      %558 = vmatmul.mubr.bf16.gmra.mxu0 %v475
      %v559 = vpop.f32.mrf.mxu0
      %v560 = vadd.f32 0.0, %v559
      %v561 = vpop.f32.mrf.mxu0
      %v562 = vpop.f32.mrf.mxu0
      %v563 = vpop.f32.mrf.mxu0
      %564 = vdwg.mxu0
      %v565 = vadd.f32 %v446, %v560
      %v566 = vld [vmem:[#allocation2] sm:$0xf]
      %v567 = vadd.f32 %v566, %v565
      %568 = vst [vmem:[#allocation2] sm:$0xf] %v567
      %p569 = scmp.eq.s32.totalorder %s21, 2
      // Predicated region
      $region37: #{head_forward.20} parent=31 // pred_check
        %p570 = pneg %p569
      $region38: #{head_forward.20} parent=31 // pred_check_branch
        %572 = sbr.rel (%p570) target = $region40
      $region39: #{head_forward.20} parent=31 // pred_region
        %v573 = vld [vmem:[#allocation2] sm:$0xf]
        %v574 = vld [vmem:[%s2] sm:$0x1]
        %v576 = vlaneseq
        %v577 = vshrl.u32 %v576, 7
        %v578 = vsub.s32 0, %v577
        %v579 = vrot.slane %v574, %v578
        %v581 = vadd.f32 %v573, %v579
        %v582 = vmax.f32 %v581, 0.0
        %v583 = vpack.c.bf16 %v582, %v582
        %584 = vst [vmem:[%s215] sm:$0x3] %v583
      $region40: #{head_forward.20} parent=31 // pred_fallthru
        _
      %p585 = scmp.lt.s32.totalorder %s19, 1
      %s586 = scalar_select %p585, %s19, 1
      %p587 = scmp.lt.s32.totalorder %s20, 3
      %s588 = scalar_select %p587, %s20, 3
      %s589 = smul.addr %s586, 4
      %s590 = sadd.s32 %s588, %s589
      %s591 = smul.addr %s590, 2
      %s592 = scalar_lea.vmem %s3, %s591
      // Predicated region
      $region41: #{head_forward.20} parent=31 // pred_check
        %p593 = pneg %p125
      $region42: #{head_forward.20} parent=31 // pred_check_branch
        %595 = sbr.rel (%p593) target = $region44
      $region43: #{head_forward.20} parent=31 // pred_region
        _
      $region44: #{head_forward.20} parent=31 // pred_fallthru
        _
    $region32: #{head_forward.20} parent=5 // pred_fallthru
      _
    %p596 = scmp.le.s32.totalorder 2, %s9
    // Predicated region
    $region45: #{head_forward.20} parent=5 // pred_check
      %p597 = pneg %p596
    $region46: #{head_forward.20} parent=5 // pred_check_branch
      %599 = sbr.rel (%p597) target = $region48
    $region47: #{head_forward.20} parent=5 // pred_region
      %s600 = ssub.s32 %s9, 2
      // Predicated region
      $region49: #{head_forward.20} parent=47 // pred_check
        %p601 = pneg %p131
      $region50: #{head_forward.20} parent=47 // pred_check_branch
        %603 = sbr.rel (%p601) target = $region52
      $region51: #{head_forward.20} parent=47 // pred_region
        %p604 = scmp.lt.s32.totalorder %s22, 1
        %s605 = scalar_select %p604, %s22, 1
        %p606 = scmp.lt.s32.totalorder %s23, 3
        %s607 = scalar_select %p606, %s23, 3
        %s608 = smul.addr %s605, 4
        %s609 = sadd.s32 %s607, %s608
        %s610 = smul.addr %s609, 2
        %s611 = scalar_lea.vmem %s3, %s610
      $region52: #{head_forward.20} parent=47 // pred_fallthru
        _
    $region48: #{head_forward.20} parent=5 // pred_fallthru
      _
  $region6: #{head_forward.20} parent=0 // loop_footer
    %s13 = sadd.s32 1, %s9
  $region7: #{head_forward.20} parent=0 // loop_footer_branch
    %8 = sbr.rel target = $region3
  $region8: #{head_forward.20} parent=0 // loop_exit
    _

// kernel: head_forward.24
$region0: #{head_forward.24}
  #allocation0 [shape = 'u32[]', space=smem, size = 0x4, offset = 0x4, fixed_abs, tag = 'smem constant byte address 0x4 - core index']
  #allocation1 [shape = 'u32[144,128]{1,0:T(1,128)}', space=vmem, size = 0x12000, scoped, tag = 'internal scratch']
  %s0 = inlined_call_operand.vmem [shape: bf16[32,128], index: 0, kind: input, shape index: {}]
  %s1 = inlined_call_operand.vmem [shape: bf16[128,128], index: 1, kind: input, shape index: {}]
  %s2 = inlined_call_operand.vmem [shape: f32[1,128], index: 2, kind: input, shape index: {}]
  %s3 = inlined_call_operand.vmem [shape: f32[32,128], index: 3, kind: output, shape index: {}]
  %s4 = sld [smem:[#allocation0]]
  $region22: #{head_forward.24} parent=0
    _
  %s6 = ssub.s32 1, %s4
  %s7 = scalar_select 0, %s6, %s4
  // Predicated region
  $region2: #{head_forward.24} parent=0 // pred_check
    _
  $region3: #{head_forward.24} parent=0 // pred_check_branch
    %9 = sbr.rel (0) target = $region5
  $region4: #{head_forward.24} parent=0 // pred_region
    _
  $region5: #{head_forward.24} parent=0 // pred_fallthru
    _
  // Predicated region
  $region6: #{head_forward.24} parent=0 // pred_check
    _
  $region7: #{head_forward.24} parent=0 // pred_check_branch
    %11 = sbr.rel (0) target = $region9
  $region8: #{head_forward.24} parent=0 // pred_region
    _
  $region9: #{head_forward.24} parent=0 // pred_fallthru
    _
  // Predicated region
  $region10: #{head_forward.24} parent=0 // pred_check
    _
  $region11: #{head_forward.24} parent=0 // pred_check_branch
    %13 = sbr.rel (0) target = $region13
  $region12: #{head_forward.24} parent=0 // pred_region
    _
  $region13: #{head_forward.24} parent=0 // pred_fallthru
    _
  %v15 = vld [vmem:[%s0] sm:$0xf]
  %v16 = vld [vmem:[%s0 + $0x4] sm:$0xf]
  %v17 = vld [vmem:[%s0 + $0x8] sm:$0xf]
  %v18 = vld [vmem:[%s0 + $0xc] sm:$0xf]
  %v19 = vld [vmem:[%s1] sm:$0xf]
  %v20 = vld [vmem:[%s1 + $0x4] sm:$0xf]
  %v21 = vld [vmem:[%s1 + $0x8] sm:$0xf]
  %v22 = vld [vmem:[%s1 + $0xc] sm:$0xf]
  %v23 = vld [vmem:[%s1 + $0x10] sm:$0xf]
  %v24 = vld [vmem:[%s1 + $0x14] sm:$0xf]
  %v25 = vld [vmem:[%s1 + $0x18] sm:$0xf]
  %v26 = vld [vmem:[%s1 + $0x1c] sm:$0xf]
  %v27 = vld [vmem:[%s1 + $0x20] sm:$0xf]
  %v28 = vld [vmem:[%s1 + $0x24] sm:$0xf]
  %v29 = vld [vmem:[%s1 + $0x28] sm:$0xf]
  %v30 = vld [vmem:[%s1 + $0x2c] sm:$0xf]
  %v31 = vld [vmem:[%s1 + $0x30] sm:$0xf]
  %v32 = vld [vmem:[%s1 + $0x34] sm:$0xf]
  %v33 = vld [vmem:[%s1 + $0x38] sm:$0xf]
  %v34 = vld [vmem:[%s1 + $0x3c] sm:$0xf]
  %v35 = vld [vmem:[%s2] sm:$0x1]
  %v37 = vlaneseq
  %v38 = vshrl.u32 %v37, 7
  %v39 = vsub.s32 0, %v38
  %v40 = vrot.slane %v35, %v39
  %v46 = vunpack.c.l.b16 %v15
  %v47 = vunpack.c.l.b16 %v16
  %v48 = vunpack.c.l.b16 %v17
  %v49 = vunpack.c.l.b16 %v18
  %v50 = vpack.c.b16 %v47, %v46
  %v51 = vpack.c.b16 %v49, %v48
  %v70 = vunpack.c.l.b16 %v19
  %v71 = vunpack.c.l.b16 %v20
  %v72 = vunpack.c.l.b16 %v21
  %v73 = vunpack.c.l.b16 %v22
  %v74 = vunpack.c.l.b16 %v23
  %v75 = vunpack.c.l.b16 %v24
  %v76 = vunpack.c.l.b16 %v25
  %v77 = vunpack.c.l.b16 %v26
  %v78 = vunpack.c.l.b16 %v27
  %v79 = vunpack.c.l.b16 %v28
  %v80 = vunpack.c.l.b16 %v29
  %v81 = vunpack.c.l.b16 %v30
  %v82 = vunpack.c.l.b16 %v31
  %v83 = vunpack.c.l.b16 %v32
  %v84 = vunpack.c.l.b16 %v33
  %v85 = vunpack.c.l.b16 %v34
  %v86 = vpack.c.b16 %v71, %v70
  %v87 = vpack.c.b16 %v73, %v72
  %v88 = vpack.c.b16 %v75, %v74
  %v89 = vpack.c.b16 %v77, %v76
  %v90 = vpack.c.b16 %v79, %v78
  %v91 = vpack.c.b16 %v81, %v80
  %v92 = vpack.c.b16 %v83, %v82
  %v93 = vpack.c.b16 %v85, %v84
  %102 = vmatprep.subr.bf16.mxu0 0
  %103 = vmatpush1.bf16.msra.mxu0 %v93
  %104 = vmatprep.subr.bf16.mxu0 0
  %105 = vmatpush1.bf16.msra.mxu0 %v92
  %106 = vmatprep.subr.bf16.mxu0 0
  %107 = vmatpush1.bf16.msra.mxu0 %v91
  %108 = vmatprep.subr.bf16.mxu0 0
  %109 = vmatpush1.bf16.msra.mxu0 %v90
  %110 = vmatprep.subr.bf16.mxu0 0
  %111 = vmatpush1.bf16.msra.mxu0 %v89
  %112 = vmatprep.subr.bf16.mxu0 0
  %113 = vmatpush1.bf16.msra.mxu0 %v88
  %114 = vmatprep.subr.bf16.mxu0 0
  %115 = vmatpush1.bf16.msra.mxu0 %v87
  %116 = vmatprep.subr.bf16.mxu0 0
  %117 = vmatpush1.bf16.msra.mxu0 %v86
  %118 = vmatprep.subr.bf16.mxu0 0
  %119 = vmatpush2.bf16.msra.mxu0 0
  %120 = vmatprep.subr.bf16.mxu0 0
  %121 = vmatpush2.bf16.msra.mxu0 0
  %122 = vmatprep.subr.bf16.mxu0 0
  %123 = vmatpush2.bf16.msra.mxu0 0
  %124 = vmatprep.subr.bf16.mxu0 0
  %125 = vmatpush2.bf16.msra.mxu0 0
  %126 = vmatprep.subr.bf16.mxu0 0
  %127 = vmatpush2.bf16.msra.mxu0 0
  %128 = vmatprep.subr.bf16.mxu0 0
  %129 = vmatpush2.bf16.msra.mxu0 0
  %130 = vmatprep.subr.bf16.mxu0 0
  %131 = vmatpush2.bf16.msra.mxu0 0
  %132 = vmatprep.subr.bf16.mxu0 0
  %133 = vmatpush2.bf16.msra.mxu0 0
  %134 = vmatprep.mubr.bf16.mxu0 0
  %135 = vmatmul.mubr.bf16.gmra.mxu0 %v50
  %v136 = vpop.f32.mrf.mxu0
  %v137 = vadd.f32 %v40, %v136
  %v138 = vpop.f32.mrf.mxu0
  %v139 = vpop.f32.mrf.mxu0
  %v140 = vadd.f32 %v40, %v139
  %v141 = vpop.f32.mrf.mxu0
  %142 = vmatprep.mubr.bf16.mxu0 0
  %143 = vmatmul.mubr.bf16.gmra.mxu0 %v51
  %v144 = vpop.f32.mrf.mxu0
  %v145 = vadd.f32 %v40, %v144
  %v146 = vpop.f32.mrf.mxu0
  %v147 = vpop.f32.mrf.mxu0
  %v148 = vadd.f32 %v40, %v147
  %v149 = vpop.f32.mrf.mxu0
  %150 = vdwg.mxu0
  %151 = vst [vmem:[%s3] sm:$0xff] %v137
  %152 = vst [vmem:[%s3 + $0x8] sm:$0xff] %v140
  %153 = vst [vmem:[%s3 + $0x10] sm:$0xff] %v145
  %154 = vst [vmem:[%s3 + $0x18] sm:$0xff] %v148
  // Predicated region
  $region14: #{head_forward.24} parent=0 // pred_check
    _
  $region15: #{head_forward.24} parent=0 // pred_check_branch
    %156 = sbr.rel (0) target = $region17
  $region16: #{head_forward.24} parent=0 // pred_region
    _
  $region17: #{head_forward.24} parent=0 // pred_fallthru
    _
  // Predicated region
  $region18: #{head_forward.24} parent=0 // pred_check
    _
  $region19: #{head_forward.24} parent=0 // pred_check_branch
    %158 = sbr.rel (0) target = $region21
  $region20: #{head_forward.24} parent=0 // pred_region
    _
  $region21: #{head_forward.24} parent=0 // pred_fallthru
    _

// kernel: head_forward.22
$region0: #{head_forward.22}
  #allocation0 [shape = 'u32[]', space=smem, size = 0x4, offset = 0x4, fixed_abs, tag = 'smem constant byte address 0x4 - core index']
  #allocation1 [shape = 'u32[144,128]{1,0:T(1,128)}', space=vmem, size = 0x12000, scoped, tag = 'internal scratch']
  %s0 = inlined_call_operand.vmem [shape: bf16[512,64], index: 0, kind: input, shape index: {}]
  %s1 = inlined_call_operand.vmem [shape: bf16[64,128], index: 1, kind: input, shape index: {}]
  %s2 = inlined_call_operand.vmem [shape: f32[1,128], index: 2, kind: input, shape index: {}]
  %s3 = inlined_call_operand.vmem [shape: f32[512,128], index: 3, kind: output, shape index: {}]
  %s4 = sld [smem:[#allocation0]]
  $region22: #{head_forward.22} parent=0
    _
  %s6 = ssub.s32 1, %s4
  %s7 = scalar_select 0, %s6, %s4
  // Predicated region
  $region2: #{head_forward.22} parent=0 // pred_check
    _
  $region3: #{head_forward.22} parent=0 // pred_check_branch
    %9 = sbr.rel (0) target = $region5
  $region4: #{head_forward.22} parent=0 // pred_region
    _
  $region5: #{head_forward.22} parent=0 // pred_fallthru
    _
  // Predicated region
  $region6: #{head_forward.22} parent=0 // pred_check
    _
  $region7: #{head_forward.22} parent=0 // pred_check_branch
    %11 = sbr.rel (0) target = $region9
  $region8: #{head_forward.22} parent=0 // pred_region
    _
  $region9: #{head_forward.22} parent=0 // pred_fallthru
    _
  // Predicated region
  $region10: #{head_forward.22} parent=0 // pred_check
    _
  $region11: #{head_forward.22} parent=0 // pred_check_branch
    %13 = sbr.rel (0) target = $region13
  $region12: #{head_forward.22} parent=0 // pred_region
    _
  $region13: #{head_forward.22} parent=0 // pred_fallthru
    _
  %v15 = vld [vmem:[%s0] sm:$0xf]
  %v16 = vld [vmem:[%s0 + $0x4] sm:$0xf]
  %v17 = vld [vmem:[%s0 + $0x8] sm:$0xf]
  %v18 = vld [vmem:[%s0 + $0xc] sm:$0xf]
  %v19 = vld [vmem:[%s0 + $0x10] sm:$0xf]
  %v20 = vld [vmem:[%s0 + $0x14] sm:$0xf]
  %v21 = vld [vmem:[%s0 + $0x18] sm:$0xf]
  %v22 = vld [vmem:[%s0 + $0x1c] sm:$0xf]
  %v23 = vld [vmem:[%s0 + $0x20] sm:$0xf]
  %v24 = vld [vmem:[%s0 + $0x24] sm:$0xf]
  %v25 = vld [vmem:[%s0 + $0x28] sm:$0xf]
  %v26 = vld [vmem:[%s0 + $0x2c] sm:$0xf]
  %v27 = vld [vmem:[%s0 + $0x30] sm:$0xf]
  %v28 = vld [vmem:[%s0 + $0x34] sm:$0xf]
  %v29 = vld [vmem:[%s0 + $0x38] sm:$0xf]
  %v30 = vld [vmem:[%s0 + $0x3c] sm:$0xf]
  %v31 = vld [vmem:[%s0 + $0x40] sm:$0xf]
  %v32 = vld [vmem:[%s0 + $0x44] sm:$0xf]
  %v33 = vld [vmem:[%s0 + $0x48] sm:$0xf]
  %v34 = vld [vmem:[%s0 + $0x4c] sm:$0xf]
  %v35 = vld [vmem:[%s0 + $0x50] sm:$0xf]
  %v36 = vld [vmem:[%s0 + $0x54] sm:$0xf]
  %v37 = vld [vmem:[%s0 + $0x58] sm:$0xf]
  %v38 = vld [vmem:[%s0 + $0x5c] sm:$0xf]
  %v39 = vld [vmem:[%s0 + $0x60] sm:$0xf]
  %v40 = vld [vmem:[%s0 + $0x64] sm:$0xf]
  %v41 = vld [vmem:[%s0 + $0x68] sm:$0xf]
  %v42 = vld [vmem:[%s0 + $0x6c] sm:$0xf]
  %v43 = vld [vmem:[%s0 + $0x70] sm:$0xf]
  %v44 = vld [vmem:[%s0 + $0x74] sm:$0xf]
  %v45 = vld [vmem:[%s0 + $0x78] sm:$0xf]
  %v46 = vld [vmem:[%s0 + $0x7c] sm:$0xf]
  %v47 = vld [vmem:[%s0 + $0x80] sm:$0xf]
  %v48 = vld [vmem:[%s0 + $0x84] sm:$0xf]
  %v49 = vld [vmem:[%s0 + $0x88] sm:$0xf]
  %v50 = vld [vmem:[%s0 + $0x8c] sm:$0xf]
  %v51 = vld [vmem:[%s0 + $0x90] sm:$0xf]
  %v52 = vld [vmem:[%s0 + $0x94] sm:$0xf]
  %v53 = vld [vmem:[%s0 + $0x98] sm:$0xf]
  %v54 = vld [vmem:[%s0 + $0x9c] sm:$0xf]
  %v55 = vld [vmem:[%s0 + $0xa0] sm:$0xf]
  %v56 = vld [vmem:[%s0 + $0xa4] sm:$0xf]
  %v57 = vld [vmem:[%s0 + $0xa8] sm:$0xf]
  %v58 = vld [vmem:[%s0 + $0xac] sm:$0xf]
  %v59 = vld [vmem:[%s0 + $0xb0] sm:$0xf]
  %v60 = vld [vmem:[%s0 + $0xb4] sm:$0xf]
  %v61 = vld [vmem:[%s0 + $0xb8] sm:$0xf]
  %v62 = vld [vmem:[%s0 + $0xbc] sm:$0xf]
  %v63 = vld [vmem:[%s0 + $0xc0] sm:$0xf]
  %v64 = vld [vmem:[%s0 + $0xc4] sm:$0xf]
  %v65 = vld [vmem:[%s0 + $0xc8] sm:$0xf]
  %v66 = vld [vmem:[%s0 + $0xcc] sm:$0xf]
  %v67 = vld [vmem:[%s0 + $0xd0] sm:$0xf]
  %v68 = vld [vmem:[%s0 + $0xd4] sm:$0xf]
  %v69 = vld [vmem:[%s0 + $0xd8] sm:$0xf]
  %v70 = vld [vmem:[%s0 + $0xdc] sm:$0xf]
  %v71 = vld [vmem:[%s0 + $0xe0] sm:$0xf]
  %v72 = vld [vmem:[%s0 + $0xe4] sm:$0xf]
  %v73 = vld [vmem:[%s0 + $0xe8] sm:$0xf]
  %v74 = vld [vmem:[%s0 + $0xec] sm:$0xf]
  %v75 = vld [vmem:[%s0 + $0xf0] sm:$0xf]
  %v76 = vld [vmem:[%s0 + $0xf4] sm:$0xf]
  %v77 = vld [vmem:[%s0 + $0xf8] sm:$0xf]
  %v78 = vld [vmem:[%s0 + $0xfc] sm:$0xf]
  %v79 = vld [vmem:[%s1] sm:$0xf]
  %v80 = vld [vmem:[%s1 + $0x4] sm:$0xf]
  %v81 = vld [vmem:[%s1 + $0x8] sm:$0xf]
  %v82 = vld [vmem:[%s1 + $0xc] sm:$0xf]
  %v83 = vld [vmem:[%s1 + $0x10] sm:$0xf]
  %v84 = vld [vmem:[%s1 + $0x14] sm:$0xf]
  %v85 = vld [vmem:[%s1 + $0x18] sm:$0xf]
  %v86 = vld [vmem:[%s1 + $0x1c] sm:$0xf]
  %v87 = vld [vmem:[%s2] sm:$0x1]
  %v89 = vlaneseq
  %v90 = vshrl.u32 %v89, 7
  %v91 = vsub.s32 0, %v90
  %v92 = vrot.slane %v87, %v91
  %v158 = vunpack.c.l.b16 %v15
  %v159 = vunpack.c.l.b16 %v16
  %v160 = vunpack.c.l.b16 %v17
  %v161 = vunpack.c.l.b16 %v18
  %v162 = vunpack.c.l.b16 %v19
  %v163 = vunpack.c.l.b16 %v20
  %v164 = vunpack.c.l.b16 %v21
  %v165 = vunpack.c.l.b16 %v22
  %v166 = vunpack.c.l.b16 %v23
  %v167 = vunpack.c.l.b16 %v24
  %v168 = vunpack.c.l.b16 %v25
  %v169 = vunpack.c.l.b16 %v26
  %v170 = vunpack.c.l.b16 %v27
  %v171 = vunpack.c.l.b16 %v28
  %v172 = vunpack.c.l.b16 %v29
  %v173 = vunpack.c.l.b16 %v30
  %v174 = vunpack.c.l.b16 %v31
  %v175 = vunpack.c.l.b16 %v32
  %v176 = vunpack.c.l.b16 %v33
  %v177 = vunpack.c.l.b16 %v34
  %v178 = vunpack.c.l.b16 %v35
  %v179 = vunpack.c.l.b16 %v36
  %v180 = vunpack.c.l.b16 %v37
  %v181 = vunpack.c.l.b16 %v38
  %v182 = vunpack.c.l.b16 %v39
  %v183 = vunpack.c.l.b16 %v40
  %v184 = vunpack.c.l.b16 %v41
  %v185 = vunpack.c.l.b16 %v42
  %v186 = vunpack.c.l.b16 %v43
  %v187 = vunpack.c.l.b16 %v44
  %v188 = vunpack.c.l.b16 %v45
  %v189 = vunpack.c.l.b16 %v46
  %v190 = vunpack.c.l.b16 %v47
  %v191 = vunpack.c.l.b16 %v48
  %v192 = vunpack.c.l.b16 %v49
  %v193 = vunpack.c.l.b16 %v50
  %v194 = vunpack.c.l.b16 %v51
  %v195 = vunpack.c.l.b16 %v52
  %v196 = vunpack.c.l.b16 %v53
  %v197 = vunpack.c.l.b16 %v54
  %v198 = vunpack.c.l.b16 %v55
  %v199 = vunpack.c.l.b16 %v56
  %v200 = vunpack.c.l.b16 %v57
  %v201 = vunpack.c.l.b16 %v58
  %v202 = vunpack.c.l.b16 %v59
  %v203 = vunpack.c.l.b16 %v60
  %v204 = vunpack.c.l.b16 %v61
  %v205 = vunpack.c.l.b16 %v62
  %v206 = vunpack.c.l.b16 %v63
  %v207 = vunpack.c.l.b16 %v64
  %v208 = vunpack.c.l.b16 %v65
  %v209 = vunpack.c.l.b16 %v66
  %v210 = vunpack.c.l.b16 %v67
  %v211 = vunpack.c.l.b16 %v68
  %v212 = vunpack.c.l.b16 %v69
  %v213 = vunpack.c.l.b16 %v70
  %v214 = vunpack.c.l.b16 %v71
  %v215 = vunpack.c.l.b16 %v72
  %v216 = vunpack.c.l.b16 %v73
  %v217 = vunpack.c.l.b16 %v74
  %v218 = vunpack.c.l.b16 %v75
  %v219 = vunpack.c.l.b16 %v76
  %v220 = vunpack.c.l.b16 %v77
  %v221 = vunpack.c.l.b16 %v78
  %v222 = vpack.c.b16 %v159, %v158
  %v223 = vpack.c.b16 %v161, %v160
  %v224 = vpack.c.b16 %v163, %v162
  %v225 = vpack.c.b16 %v165, %v164
  %v226 = vpack.c.b16 %v167, %v166
  %v227 = vpack.c.b16 %v169, %v168
  %v228 = vpack.c.b16 %v171, %v170
  %v229 = vpack.c.b16 %v173, %v172
  %v230 = vpack.c.b16 %v175, %v174
  %v231 = vpack.c.b16 %v177, %v176
  %v232 = vpack.c.b16 %v179, %v178
  %v233 = vpack.c.b16 %v181, %v180
  %v234 = vpack.c.b16 %v183, %v182
  %v235 = vpack.c.b16 %v185, %v184
  %v236 = vpack.c.b16 %v187, %v186
  %v237 = vpack.c.b16 %v189, %v188
  %v238 = vpack.c.b16 %v191, %v190
  %v239 = vpack.c.b16 %v193, %v192
  %v240 = vpack.c.b16 %v195, %v194
  %v241 = vpack.c.b16 %v197, %v196
  %v242 = vpack.c.b16 %v199, %v198
  %v243 = vpack.c.b16 %v201, %v200
  %v244 = vpack.c.b16 %v203, %v202
  %v245 = vpack.c.b16 %v205, %v204
  %v246 = vpack.c.b16 %v207, %v206
  %v247 = vpack.c.b16 %v209, %v208
  %v248 = vpack.c.b16 %v211, %v210
  %v249 = vpack.c.b16 %v213, %v212
  %v250 = vpack.c.b16 %v215, %v214
  %v251 = vpack.c.b16 %v217, %v216
  %v252 = vpack.c.b16 %v219, %v218
  %v253 = vpack.c.b16 %v221, %v220
  %v262 = vunpack.c.l.b16 %v79
  %v263 = vunpack.c.l.b16 %v80
  %v264 = vunpack.c.l.b16 %v81
  %v265 = vunpack.c.l.b16 %v82
  %v266 = vunpack.c.l.b16 %v83
  %v267 = vunpack.c.l.b16 %v84
  %v268 = vunpack.c.l.b16 %v85
  %v269 = vunpack.c.l.b16 %v86
  %v270 = vpack.c.b16 %v263, %v262
  %v271 = vpack.c.b16 %v265, %v264
  %v272 = vpack.c.b16 %v267, %v266
  %v273 = vpack.c.b16 %v269, %v268
  %vm278 = vcmask 523264
  %v280 = vsel %vm278, %v222, 0
  %v283 = vsel %vm278, %v223, 0
  %v286 = vsel %vm278, %v224, 0
  %v289 = vsel %vm278, %v225, 0
  %v292 = vsel %vm278, %v226, 0
  %v295 = vsel %vm278, %v227, 0
  %v298 = vsel %vm278, %v228, 0
  %v301 = vsel %vm278, %v229, 0
  %v304 = vsel %vm278, %v230, 0
  %v307 = vsel %vm278, %v231, 0
  %v310 = vsel %vm278, %v232, 0
  %v313 = vsel %vm278, %v233, 0
  %v316 = vsel %vm278, %v234, 0
  %v319 = vsel %vm278, %v235, 0
  %v322 = vsel %vm278, %v236, 0
  %v325 = vsel %vm278, %v237, 0
  %v328 = vsel %vm278, %v238, 0
  %v331 = vsel %vm278, %v239, 0
  %v334 = vsel %vm278, %v240, 0
  %v337 = vsel %vm278, %v241, 0
  %v340 = vsel %vm278, %v242, 0
  %v343 = vsel %vm278, %v243, 0
  %v346 = vsel %vm278, %v244, 0
  %v349 = vsel %vm278, %v245, 0
  %v352 = vsel %vm278, %v246, 0
  %v355 = vsel %vm278, %v247, 0
  %v358 = vsel %vm278, %v248, 0
  %v361 = vsel %vm278, %v249, 0
  %v364 = vsel %vm278, %v250, 0
  %v367 = vsel %vm278, %v251, 0
  %v370 = vsel %vm278, %v252, 0
  %v373 = vsel %vm278, %v253, 0
  %375 = vmatprep.subr.bf16.mxu0 0
  %376 = vmatpush1.bf16.msra.mxu0 0
  %377 = vmatprep.subr.bf16.mxu0 0
  %378 = vmatpush1.bf16.msra.mxu0 0
  %379 = vmatprep.subr.bf16.mxu0 0
  %380 = vmatpush1.bf16.msra.mxu0 0
  %381 = vmatprep.subr.bf16.mxu0 0
  %382 = vmatpush1.bf16.msra.mxu0 0
  %383 = vmatprep.subr.bf16.mxu0 0
  %384 = vmatpush1.bf16.msra.mxu0 %v273
  %385 = vmatprep.subr.bf16.mxu0 0
  %386 = vmatpush1.bf16.msra.mxu0 %v272
  %387 = vmatprep.subr.bf16.mxu0 0
  %388 = vmatpush1.bf16.msra.mxu0 %v271
  %389 = vmatprep.subr.bf16.mxu0 0
  %390 = vmatpush1.bf16.msra.mxu0 %v270
  %391 = vmatprep.subr.bf16.mxu0 0
  %392 = vmatpush2.bf16.msra.mxu0 0
  %393 = vmatprep.subr.bf16.mxu0 0
  %394 = vmatpush2.bf16.msra.mxu0 0
  %395 = vmatprep.subr.bf16.mxu0 0
  %396 = vmatpush2.bf16.msra.mxu0 0
  %397 = vmatprep.subr.bf16.mxu0 0
  %398 = vmatpush2.bf16.msra.mxu0 0
  %399 = vmatprep.subr.bf16.mxu0 0
  %400 = vmatpush2.bf16.msra.mxu0 0
  %401 = vmatprep.subr.bf16.mxu0 0
  %402 = vmatpush2.bf16.msra.mxu0 0
  %403 = vmatprep.subr.bf16.mxu0 0
  %404 = vmatpush2.bf16.msra.mxu0 0
  %405 = vmatprep.subr.bf16.mxu0 0
  %406 = vmatpush2.bf16.msra.mxu0 0
  %407 = vmatprep.mubr.bf16.mxu0 0
  %408 = vmatmul.mubr.bf16.gmra.mxu0 %v280
  %v409 = vpop.f32.mrf.mxu0
  %v410 = vadd.f32 %v92, %v409
  %v411 = vpop.f32.mrf.mxu0
  %v412 = vpop.f32.mrf.mxu0
  %v413 = vadd.f32 %v92, %v412
  %v414 = vpop.f32.mrf.mxu0
  %415 = vmatprep.mubr.bf16.mxu0 0
  %416 = vmatmul.mubr.bf16.gmra.mxu0 %v283
  %v417 = vpop.f32.mrf.mxu0
  %v418 = vadd.f32 %v92, %v417
  %v419 = vpop.f32.mrf.mxu0
  %v420 = vpop.f32.mrf.mxu0
  %v421 = vadd.f32 %v92, %v420
  %v422 = vpop.f32.mrf.mxu0
  %423 = vmatprep.mubr.bf16.mxu0 0
  %424 = vmatmul.mubr.bf16.gmra.mxu0 %v286
  %v425 = vpop.f32.mrf.mxu0
  %v426 = vadd.f32 %v92, %v425
  %v427 = vpop.f32.mrf.mxu0
  %v428 = vpop.f32.mrf.mxu0
  %v429 = vadd.f32 %v92, %v428
  %v430 = vpop.f32.mrf.mxu0
  %431 = vmatprep.mubr.bf16.mxu0 0
  %432 = vmatmul.mubr.bf16.gmra.mxu0 %v289
  %v433 = vpop.f32.mrf.mxu0
  %v434 = vadd.f32 %v92, %v433
  %v435 = vpop.f32.mrf.mxu0
  %v436 = vpop.f32.mrf.mxu0
  %v437 = vadd.f32 %v92, %v436
  %v438 = vpop.f32.mrf.mxu0
  %439 = vmatprep.mubr.bf16.mxu0 0
  %440 = vmatmul.mubr.bf16.gmra.mxu0 %v292
  %v441 = vpop.f32.mrf.mxu0
  %v442 = vadd.f32 %v92, %v441
  %v443 = vpop.f32.mrf.mxu0
  %v444 = vpop.f32.mrf.mxu0
  %v445 = vadd.f32 %v92, %v444
  %v446 = vpop.f32.mrf.mxu0
  %447 = vmatprep.mubr.bf16.mxu0 0
  %448 = vmatmul.mubr.bf16.gmra.mxu0 %v295
  %v449 = vpop.f32.mrf.mxu0
  %v450 = vadd.f32 %v92, %v449
  %v451 = vpop.f32.mrf.mxu0
  %v452 = vpop.f32.mrf.mxu0
  %v453 = vadd.f32 %v92, %v452
  %v454 = vpop.f32.mrf.mxu0
  %455 = vmatprep.mubr.bf16.mxu0 0
  %456 = vmatmul.mubr.bf16.gmra.mxu0 %v298
  %v457 = vpop.f32.mrf.mxu0
  %v458 = vadd.f32 %v92, %v457
  %v459 = vpop.f32.mrf.mxu0
  %v460 = vpop.f32.mrf.mxu0
  %v461 = vadd.f32 %v92, %v460
  %v462 = vpop.f32.mrf.mxu0
  %463 = vmatprep.mubr.bf16.mxu0 0
  %464 = vmatmul.mubr.bf16.gmra.mxu0 %v301
  %v465 = vpop.f32.mrf.mxu0
  %v466 = vadd.f32 %v92, %v465
  %v467 = vpop.f32.mrf.mxu0
  %v468 = vpop.f32.mrf.mxu0
  %v469 = vadd.f32 %v92, %v468
  %v470 = vpop.f32.mrf.mxu0
  %471 = vmatprep.mubr.bf16.mxu0 0
  %472 = vmatmul.mubr.bf16.gmra.mxu0 %v304
  %v473 = vpop.f32.mrf.mxu0
  %v474 = vadd.f32 %v92, %v473
  %v475 = vpop.f32.mrf.mxu0
  %v476 = vpop.f32.mrf.mxu0
  %v477 = vadd.f32 %v92, %v476
  %v478 = vpop.f32.mrf.mxu0
  %479 = vmatprep.mubr.bf16.mxu0 0
  %480 = vmatmul.mubr.bf16.gmra.mxu0 %v307
  %v481 = vpop.f32.mrf.mxu0
  %v482 = vadd.f32 %v92, %v481
  %v483 = vpop.f32.mrf.mxu0
  %v484 = vpop.f32.mrf.mxu0
  %v485 = vadd.f32 %v92, %v484
  %v486 = vpop.f32.mrf.mxu0
  %487 = vmatprep.mubr.bf16.mxu0 0
  %488 = vmatmul.mubr.bf16.gmra.mxu0 %v310
  %v489 = vpop.f32.mrf.mxu0
  %v490 = vadd.f32 %v92, %v489
  %v491 = vpop.f32.mrf.mxu0
  %v492 = vpop.f32.mrf.mxu0
  %v493 = vadd.f32 %v92, %v492
  %v494 = vpop.f32.mrf.mxu0
  %495 = vmatprep.mubr.bf16.mxu0 0
  %496 = vmatmul.mubr.bf16.gmra.mxu0 %v313
  %v497 = vpop.f32.mrf.mxu0
  %v498 = vadd.f32 %v92, %v497
  %v499 = vpop.f32.mrf.mxu0
  %v500 = vpop.f32.mrf.mxu0
  %v501 = vadd.f32 %v92, %v500
  %v502 = vpop.f32.mrf.mxu0
  %503 = vmatprep.mubr.bf16.mxu0 0
  %504 = vmatmul.mubr.bf16.gmra.mxu0 %v316
  %v505 = vpop.f32.mrf.mxu0
  %v506 = vadd.f32 %v92, %v505
  %v507 = vpop.f32.mrf.mxu0
  %v508 = vpop.f32.mrf.mxu0
  %v509 = vadd.f32 %v92, %v508
  %v510 = vpop.f32.mrf.mxu0
  %511 = vmatprep.mubr.bf16.mxu0 0
  %512 = vmatmul.mubr.bf16.gmra.mxu0 %v319
  %v513 = vpop.f32.mrf.mxu0
  %v514 = vadd.f32 %v92, %v513
  %v515 = vpop.f32.mrf.mxu0
  %v516 = vpop.f32.mrf.mxu0
  %v517 = vadd.f32 %v92, %v516
  %v518 = vpop.f32.mrf.mxu0
  %519 = vmatprep.mubr.bf16.mxu0 0
  %520 = vmatmul.mubr.bf16.gmra.mxu0 %v322
  %v521 = vpop.f32.mrf.mxu0
  %v522 = vadd.f32 %v92, %v521
  %v523 = vpop.f32.mrf.mxu0
  %v524 = vpop.f32.mrf.mxu0
  %v525 = vadd.f32 %v92, %v524
  %v526 = vpop.f32.mrf.mxu0
  %527 = vmatprep.mubr.bf16.mxu0 0
  %528 = vmatmul.mubr.bf16.gmra.mxu0 %v325
  %v529 = vpop.f32.mrf.mxu0
  %v530 = vadd.f32 %v92, %v529
  %v531 = vpop.f32.mrf.mxu0
  %v532 = vpop.f32.mrf.mxu0
  %v533 = vadd.f32 %v92, %v532
  %v534 = vpop.f32.mrf.mxu0
  %535 = vmatprep.mubr.bf16.mxu0 0
  %536 = vmatmul.mubr.bf16.gmra.mxu0 %v328
  %v537 = vpop.f32.mrf.mxu0
  %v538 = vadd.f32 %v92, %v537
  %v539 = vpop.f32.mrf.mxu0
  %v540 = vpop.f32.mrf.mxu0
  %v541 = vadd.f32 %v92, %v540
  %v542 = vpop.f32.mrf.mxu0
  %543 = vmatprep.mubr.bf16.mxu0 0
  %544 = vmatmul.mubr.bf16.gmra.mxu0 %v331
  %v545 = vpop.f32.mrf.mxu0
  %v546 = vadd.f32 %v92, %v545
  %v547 = vpop.f32.mrf.mxu0
  %v548 = vpop.f32.mrf.mxu0
  %v549 = vadd.f32 %v92, %v548
  %v550 = vpop.f32.mrf.mxu0
  %551 = vmatprep.mubr.bf16.mxu0 0
  %552 = vmatmul.mubr.bf16.gmra.mxu0 %v334
  %v553 = vpop.f32.mrf.mxu0
  %v554 = vadd.f32 %v92, %v553
  %v555 = vpop.f32.mrf.mxu0
  %v556 = vpop.f32.mrf.mxu0
  %v557 = vadd.f32 %v92, %v556
  %v558 = vpop.f32.mrf.mxu0
  %559 = vmatprep.mubr.bf16.mxu0 0
  %560 = vmatmul.mubr.bf16.gmra.mxu0 %v337
  %v561 = vpop.f32.mrf.mxu0
  %v562 = vadd.f32 %v92, %v561
  %v563 = vpop.f32.mrf.mxu0
  %v564 = vpop.f32.mrf.mxu0
  %v565 = vadd.f32 %v92, %v564
  %v566 = vpop.f32.mrf.mxu0
  %567 = vmatprep.mubr.bf16.mxu0 0
  %568 = vmatmul.mubr.bf16.gmra.mxu0 %v340
  %v569 = vpop.f32.mrf.mxu0
  %v570 = vadd.f32 %v92, %v569
  %v571 = vpop.f32.mrf.mxu0
  %v572 = vpop.f32.mrf.mxu0
  %v573 = vadd.f32 %v92, %v572
  %v574 = vpop.f32.mrf.mxu0
  %575 = vmatprep.mubr.bf16.mxu0 0
  %576 = vmatmul.mubr.bf16.gmra.mxu0 %v343
  %v577 = vpop.f32.mrf.mxu0
  %v578 = vadd.f32 %v92, %v577
  %v579 = vpop.f32.mrf.mxu0
  %v580 = vpop.f32.mrf.mxu0
  %v581 = vadd.f32 %v92, %v580
  %v582 = vpop.f32.mrf.mxu0
  %583 = vmatprep.mubr.bf16.mxu0 0
  %584 = vmatmul.mubr.bf16.gmra.mxu0 %v346
  %v585 = vpop.f32.mrf.mxu0
  %v586 = vadd.f32 %v92, %v585
  %v587 = vpop.f32.mrf.mxu0
  %v588 = vpop.f32.mrf.mxu0
  %v589 = vadd.f32 %v92, %v588
  %v590 = vpop.f32.mrf.mxu0
  %591 = vmatprep.mubr.bf16.mxu0 0
  %592 = vmatmul.mubr.bf16.gmra.mxu0 %v349
  %v593 = vpop.f32.mrf.mxu0
  %v594 = vadd.f32 %v92, %v593
  %v595 = vpop.f32.mrf.mxu0
  %v596 = vpop.f32.mrf.mxu0
  %v597 = vadd.f32 %v92, %v596
  %v598 = vpop.f32.mrf.mxu0
  %599 = vmatprep.mubr.bf16.mxu0 0
  %600 = vmatmul.mubr.bf16.gmra.mxu0 %v352
  %v601 = vpop.f32.mrf.mxu0
  %v602 = vadd.f32 %v92, %v601
  %v603 = vpop.f32.mrf.mxu0
  %v604 = vpop.f32.mrf.mxu0
  %v605 = vadd.f32 %v92, %v604
  %v606 = vpop.f32.mrf.mxu0
  %607 = vmatprep.mubr.bf16.mxu0 0
  %608 = vmatmul.mubr.bf16.gmra.mxu0 %v355
  %v609 = vpop.f32.mrf.mxu0
  %v610 = vadd.f32 %v92, %v609
  %v611 = vpop.f32.mrf.mxu0
  %v612 = vpop.f32.mrf.mxu0
  %v613 = vadd.f32 %v92, %v612
  %v614 = vpop.f32.mrf.mxu0
  %615 = vmatprep.mubr.bf16.mxu0 0
  %616 = vmatmul.mubr.bf16.gmra.mxu0 %v358
  %v617 = vpop.f32.mrf.mxu0
  %v618 = vadd.f32 %v92, %v617
  %v619 = vpop.f32.mrf.mxu0
  %v620 = vpop.f32.mrf.mxu0
  %v621 = vadd.f32 %v92, %v620
  %v622 = vpop.f32.mrf.mxu0
  %623 = vmatprep.mubr.bf16.mxu0 0
  %624 = vmatmul.mubr.bf16.gmra.mxu0 %v361
  %v625 = vpop.f32.mrf.mxu0
  %v626 = vadd.f32 %v92, %v625
  %v627 = vpop.f32.mrf.mxu0
  %v628 = vpop.f32.mrf.mxu0
  %v629 = vadd.f32 %v92, %v628
  %v630 = vpop.f32.mrf.mxu0
  %631 = vmatprep.mubr.bf16.mxu0 0
  %632 = vmatmul.mubr.bf16.gmra.mxu0 %v364
  %v633 = vpop.f32.mrf.mxu0
  %v634 = vadd.f32 %v92, %v633
  %v635 = vpop.f32.mrf.mxu0
  %v636 = vpop.f32.mrf.mxu0
  %v637 = vadd.f32 %v92, %v636
  %v638 = vpop.f32.mrf.mxu0
  %639 = vmatprep.mubr.bf16.mxu0 0
  %640 = vmatmul.mubr.bf16.gmra.mxu0 %v367
  %v641 = vpop.f32.mrf.mxu0
  %v642 = vadd.f32 %v92, %v641
  %v643 = vpop.f32.mrf.mxu0
  %v644 = vpop.f32.mrf.mxu0
  %v645 = vadd.f32 %v92, %v644
  %v646 = vpop.f32.mrf.mxu0
  %647 = vmatprep.mubr.bf16.mxu0 0
  %648 = vmatmul.mubr.bf16.gmra.mxu0 %v370
  %v649 = vpop.f32.mrf.mxu0
  %v650 = vadd.f32 %v92, %v649
  %v651 = vpop.f32.mrf.mxu0
  %v652 = vpop.f32.mrf.mxu0
  %v653 = vadd.f32 %v92, %v652
  %v654 = vpop.f32.mrf.mxu0
  %655 = vmatprep.mubr.bf16.mxu0 0
  %656 = vmatmul.mubr.bf16.gmra.mxu0 %v373
  %v657 = vpop.f32.mrf.mxu0
  %v658 = vadd.f32 %v92, %v657
  %v659 = vpop.f32.mrf.mxu0
  %v660 = vpop.f32.mrf.mxu0
  %v661 = vadd.f32 %v92, %v660
  %v662 = vpop.f32.mrf.mxu0
  %663 = vdwg.mxu0
  %664 = vst [vmem:[%s3] sm:$0xff] %v410
  %665 = vst [vmem:[%s3 + $0x8] sm:$0xff] %v413
  %666 = vst [vmem:[%s3 + $0x10] sm:$0xff] %v418
  %667 = vst [vmem:[%s3 + $0x18] sm:$0xff] %v421
  %668 = vst [vmem:[%s3 + $0x20] sm:$0xff] %v426
  %669 = vst [vmem:[%s3 + $0x28] sm:$0xff] %v429
  %670 = vst [vmem:[%s3 + $0x30] sm:$0xff] %v434
  %671 = vst [vmem:[%s3 + $0x38] sm:$0xff] %v437
  %672 = vst [vmem:[%s3 + $0x40] sm:$0xff] %v442
  %673 = vst [vmem:[%s3 + $0x48] sm:$0xff] %v445
  %674 = vst [vmem:[%s3 + $0x50] sm:$0xff] %v450
  %675 = vst [vmem:[%s3 + $0x58] sm:$0xff] %v453
  %676 = vst [vmem:[%s3 + $0x60] sm:$0xff] %v458
  %677 = vst [vmem:[%s3 + $0x68] sm:$0xff] %v461
  %678 = vst [vmem:[%s3 + $0x70] sm:$0xff] %v466
  %679 = vst [vmem:[%s3 + $0x78] sm:$0xff] %v469
  %680 = vst [vmem:[%s3 + $0x80] sm:$0xff] %v474
  %681 = vst [vmem:[%s3 + $0x88] sm:$0xff] %v477
  %682 = vst [vmem:[%s3 + $0x90] sm:$0xff] %v482
  %683 = vst [vmem:[%s3 + $0x98] sm:$0xff] %v485
  %684 = vst [vmem:[%s3 + $0xa0] sm:$0xff] %v490
  %685 = vst [vmem:[%s3 + $0xa8] sm:$0xff] %v493
  %686 = vst [vmem:[%s3 + $0xb0] sm:$0xff] %v498
  %687 = vst [vmem:[%s3 + $0xb8] sm:$0xff] %v501
  %688 = vst [vmem:[%s3 + $0xc0] sm:$0xff] %v506
  %689 = vst [vmem:[%s3 + $0xc8] sm:$0xff] %v509
  %690 = vst [vmem:[%s3 + $0xd0] sm:$0xff] %v514
  %691 = vst [vmem:[%s3 + $0xd8] sm:$0xff] %v517
  %692 = vst [vmem:[%s3 + $0xe0] sm:$0xff] %v522
  %693 = vst [vmem:[%s3 + $0xe8] sm:$0xff] %v525
  %694 = vst [vmem:[%s3 + $0xf0] sm:$0xff] %v530
  %695 = vst [vmem:[%s3 + $0xf8] sm:$0xff] %v533
  %696 = vst [vmem:[%s3 + $0x100] sm:$0xff] %v538
  %697 = vst [vmem:[%s3 + $0x108] sm:$0xff] %v541
  %698 = vst [vmem:[%s3 + $0x110] sm:$0xff] %v546
  %699 = vst [vmem:[%s3 + $0x118] sm:$0xff] %v549
  %700 = vst [vmem:[%s3 + $0x120] sm:$0xff] %v554
  %701 = vst [vmem:[%s3 + $0x128] sm:$0xff] %v557
  %702 = vst [vmem:[%s3 + $0x130] sm:$0xff] %v562
  %703 = vst [vmem:[%s3 + $0x138] sm:$0xff] %v565
  %704 = vst [vmem:[%s3 + $0x140] sm:$0xff] %v570
  %705 = vst [vmem:[%s3 + $0x148] sm:$0xff] %v573
  %706 = vst [vmem:[%s3 + $0x150] sm:$0xff] %v578
  %707 = vst [vmem:[%s3 + $0x158] sm:$0xff] %v581
  %708 = vst [vmem:[%s3 + $0x160] sm:$0xff] %v586
  %709 = vst [vmem:[%s3 + $0x168] sm:$0xff] %v589
  %710 = vst [vmem:[%s3 + $0x170] sm:$0xff] %v594
  %711 = vst [vmem:[%s3 + $0x178] sm:$0xff] %v597
  %712 = vst [vmem:[%s3 + $0x180] sm:$0xff] %v602
  %713 = vst [vmem:[%s3 + $0x188] sm:$0xff] %v605
  %714 = vst [vmem:[%s3 + $0x190] sm:$0xff] %v610
  %715 = vst [vmem:[%s3 + $0x198] sm:$0xff] %v613
  %716 = vst [vmem:[%s3 + $0x1a0] sm:$0xff] %v618
  %717 = vst [vmem:[%s3 + $0x1a8] sm:$0xff] %v621
  %718 = vst [vmem:[%s3 + $0x1b0] sm:$0xff] %v626
  %719 = vst [vmem:[%s3 + $0x1b8] sm:$0xff] %v629
  %720 = vst [vmem:[%s3 + $0x1c0] sm:$0xff] %v634
  %721 = vst [vmem:[%s3 + $0x1c8] sm:$0xff] %v637
  %722 = vst [vmem:[%s3 + $0x1d0] sm:$0xff] %v642
  %723 = vst [vmem:[%s3 + $0x1d8] sm:$0xff] %v645
  %724 = vst [vmem:[%s3 + $0x1e0] sm:$0xff] %v650
  %725 = vst [vmem:[%s3 + $0x1e8] sm:$0xff] %v653
  %726 = vst [vmem:[%s3 + $0x1f0] sm:$0xff] %v658
  %727 = vst [vmem:[%s3 + $0x1f8] sm:$0xff] %v661
  // Predicated region
  $region14: #{head_forward.22} parent=0 // pred_check
    _
  $region15: #{head_forward.22} parent=0 // pred_check_branch
    %729 = sbr.rel (0) target = $region17
  $region16: #{head_forward.22} parent=0 // pred_region
    _
  $region17: #{head_forward.22} parent=0 // pred_fallthru
    _
  // Predicated region
  $region18: #{head_forward.22} parent=0 // pred_check
    _
  $region19: #{head_forward.22} parent=0 // pred_check_branch
    %731 = sbr.rel (0) target = $region21
  $region20: #{head_forward.22} parent=0 // pred_region
    _
  $region21: #{head_forward.22} parent=0 // pred_fallthru
    _

// kernel: tile.13
$region0: #{tile.13}
  #allocation0 [shape = 's32[1]{0}', space=sflag, size = 0x4, scoped, tag = 'scoped memory for tile.13']
  %s0 = inlined_call_operand.vmem [shape: f32[8], index: 0, kind: input, shape index: {}]
  %s1 = inlined_call_operand.vmem [shape: f32[4,8], index: 1, kind: output, shape index: {}]
  // Predicated region
  $region2: #{tile.13} parent=0 // pred_check
    _
  $region3: #{tile.13} parent=0 // pred_check_branch
    %3 = sbr.rel (0) target = $region5
  $region4: #{tile.13} parent=0 // pred_region
    _
  $region5: #{tile.13} parent=0 // pred_fallthru
    _
  %v4 = vld [vmem:[%s0] ss:$0 sm:$0xff]
  %5 = vst [vmem:[%s1] sm:$0xf] %v4

// kernel: tile.14
$region0: #{tile.14}
  %s0 = inlined_call_operand.vmem [shape: f32[4,8], index: 0, kind: input, shape index: {}]
  %s1 = inlined_call_operand.vmem [shape: f32[32], index: 1, kind: output, shape index: {}]
  $region1: #{tile.14} parent=0
    #allocation0 [shape = 'u8[4096]{0}', space=vmem, size = 0x1000, scoped, tag = 'scoped mem for output reshape']
    #allocation1 [shape = 'u8[4096]{0}', space=vmem, size = 0x1000, scoped, tag = 'scoped mem for input reshape']
    %s3 = sshll.u32 1, 4
    %s4 = ssub.s32 %s3, 1
    %v5 = vld [vmem:[%s0] sm:%s4]
    %6 = vst [vmem:[#allocation1] sm:%s4] %v5
    %v7 = vld [vmem:[#allocation1] sm:$0x1]
    %vm8 = vcmask 64512
    %9 = vst.msk [vmem:[#allocation0] sm:$0x1] %vm8, %v7
    %s10 = scalar_lea.vmem [#allocation1], 3
    %v11 = vld [vmem:[%s10] sm:$0x1]
    %12 = vrot.lane.b32.xlu0 %v11, 24
    %v13 = vpop.permute.xlu0 %12
    %vm14 = vcmask 261312
    %15 = vst.msk [vmem:[#allocation0] sm:$0x1] %vm14, %v13
    %s16 = scalar_lea.vmem [#allocation1], 2
    %v17 = vld [vmem:[%s16] sm:$0x1]
    %18 = vrot.lane.b32.xlu0 %v17, 16
    %v19 = vpop.permute.xlu0 %18
    %vm20 = vcmask 195712
    %21 = vst.msk [vmem:[#allocation0] sm:$0x1] %vm20, %v19
    %s22 = scalar_lea.vmem [#allocation1], 1
    %v23 = vld [vmem:[%s22] sm:$0x1]
    %24 = vrot.lane.b32.xlu0 %v23, 8
    %v25 = vpop.permute.xlu0 %24
    %vm26 = vcmask 130112
    %27 = vst.msk [vmem:[#allocation0] sm:$0x1] %vm26, %v25
    %s29 = sshll.u32 1, 1
    %s30 = ssub.s32 %s29, 1
    %v32 = vld [vmem:[#allocation0] sm:%s30]
    %s33 = sshll.u32 1, 1
    %s34 = ssub.s32 %s33, 1
    %35 = vst [vmem:[%s1] sm:%s34] %v32

// kernel: head_forward.25
$region0: #{head_forward.25}
  #allocation0 [shape = 'u32[]', space=smem, size = 0x4, offset = 0x4, fixed_abs, tag = 'smem constant byte address 0x4 - core index']
  #allocation1 [shape = 'u32[144,128]{1,0:T(1,128)}', space=vmem, size = 0x12000, scoped, tag = 'internal scratch']
  #allocation2 [shape = 'f32[16,128]{1,0:T(8,128)}', space=vmem, size = 0x2000, scoped, tag = 'scratch operand']
  %s0 = inlined_call_operand.vmem [shape: bf16[2,18,18,16], index: 0, kind: input, shape index: {}]
  %s1 = inlined_call_operand.vmem [shape: bf16[9,16,128], index: 1, kind: input, shape index: {}]
  %s2 = inlined_call_operand.vmem [shape: f32[1,128], index: 2, kind: input, shape index: {}]
  %s3 = inlined_call_operand.vmem [shape: f32[1,128], index: 3, kind: input, shape index: {}]
  %s4 = inlined_call_operand.vmem [shape: f32[2,16,16,128], index: 4, kind: output, shape index: {}]
  %s5 = sld [smem:[#allocation0]]
  $region57: #{head_forward.25} parent=0
    _
  %s7 = ssub.s32 1, %s5
  %s8 = scalar_select 0, %s7, %s5
  loop: start=0, step=1, limit=98
  $region2: #{head_forward.25} parent=0 // loop_pre_header
    _
  $region3: #{head_forward.25} parent=0 // loop_header
    %s10 = sphi 0, %s14
    %p11 = scmp.ge.s32.totalorder %s10, 98
    %s17 = sphi 0, %s36
    %s18 = sphi 0, %s32
    %s19 = sphi 0, %s28
    %s20 = sphi 0, %s17
    %s21 = sphi 0, %s18
    %s22 = sphi 0, %s19
    %s23 = sphi 0, %s20
    %s24 = sphi 0, %s21
    %s25 = sphi 0, %s22
    %s43 = sphi 0, %s45
    %s46 = sphi 0, %s43
    %s47 = sphi 0, %s46
    %s63 = sphi 0, %s47
    %s67 = sphi 0, %s67
    %s69 = sphi 0, %s67
    %s70 = sphi 0, %s69
    %s84 = sphi 0, %s70
    %s88 = sphi 0, %s88
    %s90 = sphi 0, %s88
    %s91 = sphi 0, %s90
    %s105 = sphi 0, %s91
    %s109 = sphi 0, %s109
    %s111 = sphi 0, %s109
    %s112 = sphi 0, %s111
    %s126 = sphi 0, %s112
    %s134 = sphi 0, %s136
    %s137 = sphi 0, %s134
    %s138 = sphi 0, %s137
    %s154 = sphi 0, %s138
  $region4: #{head_forward.25} parent=0 // loop_header_branch
    %13 = sbr.rel (%p11) target = $region8
  $region5: #{head_forward.25} parent=0 // loop_body
    %s15 = ssub.s32 %s10, 1
    %s16 = ssub.s32 %s10, 2
    %s26 = sadd.s32 1, %s19
    %p27 = scmp.ge.s32.totalorder %s26, 3
    %s28 = scalar_select %p27, 0, %s26
    %s29 = sadd.s32 1, %s18
    %s30 = scalar_select %p27, %s29, %s18
    %p31 = scmp.ge.s32.totalorder %s30, 16
    %s32 = scalar_select %p31, 0, %s30
    %s33 = sadd.s32 1, %s17
    %s34 = scalar_select %p31, %s33, %s17
    %p35 = scmp.ge.s32.totalorder %s34, 2
    %s36 = scalar_select %p35, 0, %s34
    %s37 = sadd.s32 %s18, %s19
    %s38 = sadd.s32 %s32, %s28
    %s39 = ssub.s32 %s17, %s36
    %s40 = ssub.s32 %s37, %s38
    %s41 = sor.u32 %s39, %s40
    %p42 = scmp.eq.s32.totalorder %s41, 0
    %s44 = sadd.s32 %s43, 1
    %s45 = scalar_select %p42, %s43, %s44
    %p48 = pneg %p42
    %p49 = scmp.eq.s32.totalorder %s10, 95
    %p50 = por %p48, %p49
    %p51 = scmp.ne.s32.totalorder %s43, %s46
    %p52 = scmp.eq.s32.totalorder %s10, 0
    %p53 = por %p51, %p52
    %p54 = scmp.ne.s32.totalorder %s43, %s46
    %p55 = scmp.eq.s32.totalorder %s15, 95
    %p56 = por %p54, %p55
    %p57 = scmp.ne.s32.totalorder %s46, %s47
    %p58 = scmp.eq.s32.totalorder %s15, 0
    %p59 = por %p57, %p58
    %p60 = scmp.ne.s32.totalorder %s46, %s47
    %p61 = scmp.eq.s32.totalorder %s16, 95
    %p62 = por %p60, %p61
    %p64 = scmp.ne.s32.totalorder %s47, %s63
    %p65 = scmp.eq.s32.totalorder %s16, 0
    %p66 = por %p64, %p65
    %s68 = sadd.s32 %s67, 1
    %p71 = scmp.eq.s32.totalorder %s10, 95
    %p72 = scmp.ne.s32.totalorder %s67, %s69
    %p73 = scmp.eq.s32.totalorder %s10, 0
    %p74 = por %p72, %p73
    %p75 = scmp.ne.s32.totalorder %s67, %s69
    %p76 = scmp.eq.s32.totalorder %s15, 95
    %p77 = por %p75, %p76
    %p78 = scmp.ne.s32.totalorder %s69, %s70
    %p79 = scmp.eq.s32.totalorder %s15, 0
    %p80 = por %p78, %p79
    %p81 = scmp.ne.s32.totalorder %s69, %s70
    %p82 = scmp.eq.s32.totalorder %s16, 95
    %p83 = por %p81, %p82
    %p85 = scmp.ne.s32.totalorder %s70, %s84
    %p86 = scmp.eq.s32.totalorder %s16, 0
    %p87 = por %p85, %p86
    %s89 = sadd.s32 %s88, 1
    %p92 = scmp.eq.s32.totalorder %s10, 95
    %p93 = scmp.ne.s32.totalorder %s88, %s90
    %p94 = scmp.eq.s32.totalorder %s10, 0
    %p95 = por %p93, %p94
    %p96 = scmp.ne.s32.totalorder %s88, %s90
    %p97 = scmp.eq.s32.totalorder %s15, 95
    %p98 = por %p96, %p97
    %p99 = scmp.ne.s32.totalorder %s90, %s91
    %p100 = scmp.eq.s32.totalorder %s15, 0
    %p101 = por %p99, %p100
    %p102 = scmp.ne.s32.totalorder %s90, %s91
    %p103 = scmp.eq.s32.totalorder %s16, 95
    %p104 = por %p102, %p103
    %p106 = scmp.ne.s32.totalorder %s91, %s105
    %p107 = scmp.eq.s32.totalorder %s16, 0
    %p108 = por %p106, %p107
    %s110 = sadd.s32 %s109, 1
    %p113 = scmp.eq.s32.totalorder %s10, 95
    %p114 = scmp.ne.s32.totalorder %s109, %s111
    %p115 = scmp.eq.s32.totalorder %s10, 0
    %p116 = por %p114, %p115
    %p117 = scmp.ne.s32.totalorder %s109, %s111
    %p118 = scmp.eq.s32.totalorder %s15, 95
    %p119 = por %p117, %p118
    %p120 = scmp.ne.s32.totalorder %s111, %s112
    %p121 = scmp.eq.s32.totalorder %s15, 0
    %p122 = por %p120, %p121
    %p123 = scmp.ne.s32.totalorder %s111, %s112
    %p124 = scmp.eq.s32.totalorder %s16, 95
    %p125 = por %p123, %p124
    %p127 = scmp.ne.s32.totalorder %s112, %s126
    %p128 = scmp.eq.s32.totalorder %s16, 0
    %p129 = por %p127, %p128
    %s130 = ssub.s32 %s17, %s36
    %s131 = ssub.s32 %s18, %s32
    %s132 = sor.u32 %s130, %s131
    %p133 = scmp.eq.s32.totalorder %s132, 0
    %s135 = sadd.s32 %s134, 1
    %s136 = scalar_select %p133, %s134, %s135
    %p139 = pneg %p133
    %p140 = scmp.eq.s32.totalorder %s10, 95
    %p141 = por %p139, %p140
    %p142 = scmp.ne.s32.totalorder %s134, %s137
    %p143 = scmp.eq.s32.totalorder %s10, 0
    %p144 = por %p142, %p143
    %p145 = scmp.ne.s32.totalorder %s134, %s137
    %p146 = scmp.eq.s32.totalorder %s15, 95
    %p147 = por %p145, %p146
    %p148 = scmp.ne.s32.totalorder %s137, %s138
    %p149 = scmp.eq.s32.totalorder %s15, 0
    %p150 = por %p148, %p149
    %p151 = scmp.ne.s32.totalorder %s137, %s138
    %p152 = scmp.eq.s32.totalorder %s16, 95
    %p153 = por %p151, %p152
    %p155 = scmp.ne.s32.totalorder %s138, %s154
    %p156 = scmp.eq.s32.totalorder %s16, 0
    %p157 = por %p155, %p156
    %p158 = scmp.le.s32.totalorder 1, %s10
    %p159 = scmp.lt.s32.totalorder %s10, 97
    %p160 = pnand %p158, %p159
    %p161 = pneg %p160
    // Predicated region
    $region9: #{head_forward.25} parent=5 // pred_check
      _
    $region10: #{head_forward.25} parent=5 // pred_check_branch
      %163 = sbr.rel (%p160) target = $region12
    $region11: #{head_forward.25} parent=5 // pred_region
      %s164 = ssub.s32 %s10, 1
      // Predicated region
      $region13: #{head_forward.25} parent=11 // pred_check
        %p165 = pneg %p80
      $region14: #{head_forward.25} parent=11 // pred_check_branch
        %167 = sbr.rel (%p165) target = $region16
      $region15: #{head_forward.25} parent=11 // pred_region
        _
      $region16: #{head_forward.25} parent=11 // pred_fallthru
        _
      // Predicated region
      $region17: #{head_forward.25} parent=11 // pred_check
        %p168 = pneg %p101
      $region18: #{head_forward.25} parent=11 // pred_check_branch
        %170 = sbr.rel (%p168) target = $region20
      $region19: #{head_forward.25} parent=11 // pred_region
        _
      $region20: #{head_forward.25} parent=11 // pred_fallthru
        _
      // Predicated region
      $region21: #{head_forward.25} parent=11 // pred_check
        %p171 = pneg %p122
      $region22: #{head_forward.25} parent=11 // pred_check_branch
        %173 = sbr.rel (%p171) target = $region24
      $region23: #{head_forward.25} parent=11 // pred_region
        _
      $region24: #{head_forward.25} parent=11 // pred_fallthru
        _
    $region12: #{head_forward.25} parent=5 // pred_fallthru
      _
    %p174 = scmp.lt.s32.totalorder %s10, 96
    // Predicated region
    $region25: #{head_forward.25} parent=5 // pred_check
      %p175 = pneg %p174
    $region26: #{head_forward.25} parent=5 // pred_check_branch
      %177 = sbr.rel (%p175) target = $region28
    $region27: #{head_forward.25} parent=5 // pred_region
      // Predicated region
      $region29: #{head_forward.25} parent=27 // pred_check
        %p178 = pneg %p53
      $region30: #{head_forward.25} parent=27 // pred_check_branch
        %180 = sbr.rel (%p178) target = $region32
      $region31: #{head_forward.25} parent=27 // pred_region
        %s181 = sadd.s32 %s18, %s19
        %p182 = scmp.lt.s32.totalorder %s17, 1
        %s183 = scalar_select %p182, %s17, 1
        %p184 = scmp.lt.s32.totalorder %s181, 17
        %s185 = scalar_select %p184, %s181, 17
        %s186 = smul.addr %s185, 3
        %s187 = smul.addr %s183, 54
        %s188 = sadd.s32 %s186, %s187
        %s189 = smul.addr %s188, 4
        %s190 = scalar_lea.vmem %s0, %s189
        %s191 = sadd.s32 %s18, %s19
      $region32: #{head_forward.25} parent=27 // pred_fallthru
        _
    $region28: #{head_forward.25} parent=5 // pred_fallthru
      _
    %p192 = scmp.le.s32.totalorder 1, %s10
    %p193 = scmp.lt.s32.totalorder %s10, 97
    %p194 = pnand %p192, %p193
    %p195 = pneg %p194
    // Predicated region
    $region33: #{head_forward.25} parent=5 // pred_check
      _
    $region34: #{head_forward.25} parent=5 // pred_check_branch
      %197 = sbr.rel (%p194) target = $region36
    $region35: #{head_forward.25} parent=5 // pred_region
      %s198 = ssub.s32 %s10, 1
      %s199 = sadd.s32 %s21, %s22
      %p200 = scmp.lt.s32.totalorder %s20, 1
      %s201 = scalar_select %p200, %s20, 1
      %p202 = scmp.lt.s32.totalorder %s199, 17
      %s203 = scalar_select %p202, %s199, 17
      %s204 = smul.addr %s203, 3
      %s205 = smul.addr %s201, 54
      %s206 = sadd.s32 %s204, %s205
      %s207 = smul.addr %s206, 4
      %s208 = scalar_lea.vmem %s0, %s207
      %p209 = pneg %p59
      %p210 = pneg %p56
      %p211 = pneg %p80
      %p212 = pneg %p77
      %p213 = pneg %p101
      %p214 = pneg %p98
      %p215 = pneg %p122
      %p216 = pneg %p119
      %p217 = pneg %p150
      %p218 = pneg %p147
      %p219 = scmp.lt.s32.totalorder %s20, 1
      %s220 = scalar_select %p219, %s20, 1
      %p221 = scmp.lt.s32.totalorder %s21, 15
      %s222 = scalar_select %p221, %s21, 15
      %s223 = smul.addr %s222, 2
      %s224 = smul.addr %s220, 32
      %s225 = sadd.s32 %s223, %s224
      %s226 = smul.addr %s225, 8
      %s227 = scalar_lea.vmem %s4, %s226
      %s228 = sadd.s32 %s21, %s22
      %p229 = scmp.lt.s32.totalorder %s20, 1
      %s230 = scalar_select %p229, %s20, 1
      %p231 = scmp.lt.s32.totalorder %s228, 17
      %s232 = scalar_select %p231, %s228, 17
      %s233 = smul.addr %s232, 3
      %s234 = smul.addr %s230, 54
      %s235 = sadd.s32 %s233, %s234
      %s236 = smul.addr %s235, 4
      %s237 = scalar_lea.vmem %s0, %s236
      %s238 = sadd.s32 %s21, %s22
      %p239 = scmp.lt.s32.totalorder %s20, 1
      %s240 = scalar_select %p239, %s20, 1
      %p241 = scmp.lt.s32.totalorder %s21, 15
      %s242 = scalar_select %p241, %s21, 15
      %s243 = smul.addr %s242, 2
      %s244 = smul.addr %s240, 32
      %s245 = sadd.s32 %s243, %s244
      %s246 = smul.addr %s245, 8
      %s247 = scalar_lea.vmem %s4, %s246
      %p249 = scmp.eq.s32.totalorder %s22, 0
      // Predicated region
      $region37: #{head_forward.25} parent=35 // pred_check
        %p250 = pneg %p249
      $region38: #{head_forward.25} parent=35 // pred_check_branch
        %252 = sbr.rel (%p250) target = $region40
      $region39: #{head_forward.25} parent=35 // pred_region
        %253 = vst [vmem:[#allocation2] sm:$0xff] 0.0
        %254 = vst [vmem:[#allocation2 + $0x8] sm:$0xff] 0.0
      $region40: #{head_forward.25} parent=35 // pred_fallthru
        _
      %v255 = vld [vmem:[%s237] sm:$0xf]
      %v256 = vld [vmem:[%s237 + $0x4] sm:$0xf]
      %s257 = smul.u32 %s22, 3
      %s258 = smul.u32 %s257, 2
      %s259 = smul.addr %s258, 4
      %s260 = scalar_lea.vmem %s1, %s259
      %v261 = vld [vmem:[%s260] sm:$0xf]
      %v262 = vld [vmem:[%s260 + $0x4] sm:$0xf]
      %v263 = vld [vmem:[%s237 + $0x8] sm:$0x1]
      %s264 = sadd.s32 %s257, 1
      %s265 = smul.u32 %s264, 2
      %s266 = smul.addr %s265, 4
      %s267 = scalar_lea.vmem %s1, %s266
      %v268 = vld [vmem:[%s267] sm:$0xf]
      %v269 = vld [vmem:[%s267 + $0x4] sm:$0xf]
      %v273 = vunpack.c.l.b16 %v255
      %v274 = vunpack.c.l.b16 %v256
      %v275 = vunpack.c.l.b16 %v263
      %v276 = vpack.c.b16 %v274, %v273
      %v277 = vpack.c.b16 %v275, %v275
      %vm278 = vsmask.f32 7424
      %v280 = vshrl.u32 %v276, 16
      %v282 = vshll.u32 %v276, 16
      %v284 = vrot.slane %v282, 1
      %v285 = vor.u32 %v280, %v284
      %v287 = vshll.u32 %v277, 16
      %v289 = vrot.slane %v287, 1
      %v290 = vsel %vm278, %v285, %v289
      %v293 = vunpack.c.l.b16 %v268
      %v294 = vunpack.c.l.b16 %v269
      %v295 = vpack.c.b16 %v294, %v293
      %vm297 = vcmask 130048
      %v299 = vsel %vm297, %v290, 0
      %301 = vmatprep.subr.bf16.mxu0 0
      %302 = vmatpush1.bf16.msra.mxu0 0
      %303 = vmatprep.subr.bf16.mxu0 0
      %304 = vmatpush1.bf16.msra.mxu0 0
      %305 = vmatprep.subr.bf16.mxu0 0
      %306 = vmatpush1.bf16.msra.mxu0 0
      %307 = vmatprep.subr.bf16.mxu0 0
      %308 = vmatpush1.bf16.msra.mxu0 0
      %309 = vmatprep.subr.bf16.mxu0 0
      %310 = vmatpush1.bf16.msra.mxu0 0
      %311 = vmatprep.subr.bf16.mxu0 0
      %312 = vmatpush1.bf16.msra.mxu0 0
      %313 = vmatprep.subr.bf16.mxu0 0
      %314 = vmatpush1.bf16.msra.mxu0 0
      %315 = vmatprep.subr.bf16.mxu0 0
      %316 = vmatpush1.bf16.msra.mxu0 %v295
      %317 = vmatprep.subr.bf16.mxu0 0
      %318 = vmatpush2.bf16.msra.mxu0 0
      %319 = vmatprep.subr.bf16.mxu0 0
      %320 = vmatpush2.bf16.msra.mxu0 0
      %321 = vmatprep.subr.bf16.mxu0 0
      %322 = vmatpush2.bf16.msra.mxu0 0
      %323 = vmatprep.subr.bf16.mxu0 0
      %324 = vmatpush2.bf16.msra.mxu0 0
      %325 = vmatprep.subr.bf16.mxu0 0
      %326 = vmatpush2.bf16.msra.mxu0 0
      %327 = vmatprep.subr.bf16.mxu0 0
      %328 = vmatpush2.bf16.msra.mxu0 0
      %329 = vmatprep.subr.bf16.mxu0 0
      %330 = vmatpush2.bf16.msra.mxu0 0
      %331 = vmatprep.subr.bf16.mxu0 0
      %332 = vmatpush2.bf16.msra.mxu0 0
      %333 = vmatprep.mubr.bf16.mxu0 0
      %334 = vmatmul.mubr.bf16.gmra.mxu0 %v299
      %v335 = vpop.f32.mrf.mxu0
      %v336 = vadd.f32 0.0, %v335
      %v337 = vpop.f32.mrf.mxu0
      %v338 = vpop.f32.mrf.mxu0
      %v339 = vadd.f32 0.0, %v338
      %v340 = vpop.f32.mrf.mxu0
      %341 = vdwg.mxu0
      %v344 = vunpack.c.l.b16 %v261
      %v345 = vunpack.c.l.b16 %v262
      %v346 = vpack.c.b16 %v345, %v344
      %v348 = vsel %vm297, %v276, 0
      %350 = vmatprep.subr.bf16.mxu0 0
      %351 = vmatpush1.bf16.msra.mxu0 0
      %352 = vmatprep.subr.bf16.mxu0 0
      %353 = vmatpush1.bf16.msra.mxu0 0
      %354 = vmatprep.subr.bf16.mxu0 0
      %355 = vmatpush1.bf16.msra.mxu0 0
      %356 = vmatprep.subr.bf16.mxu0 0
      %357 = vmatpush1.bf16.msra.mxu0 0
      %358 = vmatprep.subr.bf16.mxu0 0
      %359 = vmatpush1.bf16.msra.mxu0 0
      %360 = vmatprep.subr.bf16.mxu0 0
      %361 = vmatpush1.bf16.msra.mxu0 0
      %362 = vmatprep.subr.bf16.mxu0 0
      %363 = vmatpush1.bf16.msra.mxu0 0
      %364 = vmatprep.subr.bf16.mxu0 0
      %365 = vmatpush1.bf16.msra.mxu0 %v346
      %366 = vmatprep.subr.bf16.mxu0 0
      %367 = vmatpush2.bf16.msra.mxu0 0
      %368 = vmatprep.subr.bf16.mxu0 0
      %369 = vmatpush2.bf16.msra.mxu0 0
      %370 = vmatprep.subr.bf16.mxu0 0
      %371 = vmatpush2.bf16.msra.mxu0 0
      %372 = vmatprep.subr.bf16.mxu0 0
      %373 = vmatpush2.bf16.msra.mxu0 0
      %374 = vmatprep.subr.bf16.mxu0 0
      %375 = vmatpush2.bf16.msra.mxu0 0
      %376 = vmatprep.subr.bf16.mxu0 0
      %377 = vmatpush2.bf16.msra.mxu0 0
      %378 = vmatprep.subr.bf16.mxu0 0
      %379 = vmatpush2.bf16.msra.mxu0 0
      %380 = vmatprep.subr.bf16.mxu0 0
      %381 = vmatpush2.bf16.msra.mxu0 0
      %382 = vmatprep.mubr.bf16.mxu0 0
      %383 = vmatmul.mubr.bf16.gmra.mxu0 %v348
      %v384 = vpop.f32.mrf.mxu0
      %v385 = vadd.f32 %v336, %v384
      %v386 = vpop.f32.mrf.mxu0
      %v387 = vpop.f32.mrf.mxu0
      %v388 = vadd.f32 %v339, %v387
      %v389 = vpop.f32.mrf.mxu0
      %390 = vdwg.mxu0
      %v391 = vld [vmem:[%s237] sm:$0xe]
      %s392 = sadd.s32 %s257, 2
      %s393 = smul.u32 %s392, 2
      %s394 = smul.addr %s393, 4
      %s395 = scalar_lea.vmem %s1, %s394
      %v396 = vld [vmem:[%s395] sm:$0xf]
      %v397 = vld [vmem:[%s395 + $0x4] sm:$0xf]
      %v399 = vunpack.c.l.b16 %v391
      %v400 = vpack.c.b16 %v274, %v399
      %vm401 = vcmask 1046528
      %v402 = vrot.slane %v400, 1
      %v403 = vrot.slane %v277, 1
      %v404 = vsel %vm401, %v402, %v403
      %v407 = vunpack.c.l.b16 %v396
      %v408 = vunpack.c.l.b16 %v397
      %v409 = vpack.c.b16 %v408, %v407
      %v412 = vsel %vm297, %v404, 0
      %414 = vmatprep.subr.bf16.mxu0 0
      %415 = vmatpush1.bf16.msra.mxu0 0
      %416 = vmatprep.subr.bf16.mxu0 0
      %417 = vmatpush1.bf16.msra.mxu0 0
      %418 = vmatprep.subr.bf16.mxu0 0
      %419 = vmatpush1.bf16.msra.mxu0 0
      %420 = vmatprep.subr.bf16.mxu0 0
      %421 = vmatpush1.bf16.msra.mxu0 0
      %422 = vmatprep.subr.bf16.mxu0 0
      %423 = vmatpush1.bf16.msra.mxu0 0
      %424 = vmatprep.subr.bf16.mxu0 0
      %425 = vmatpush1.bf16.msra.mxu0 0
      %426 = vmatprep.subr.bf16.mxu0 0
      %427 = vmatpush1.bf16.msra.mxu0 0
      %428 = vmatprep.subr.bf16.mxu0 0
      %429 = vmatpush1.bf16.msra.mxu0 %v409
      %430 = vmatprep.subr.bf16.mxu0 0
      %431 = vmatpush2.bf16.msra.mxu0 0
      %432 = vmatprep.subr.bf16.mxu0 0
      %433 = vmatpush2.bf16.msra.mxu0 0
      %434 = vmatprep.subr.bf16.mxu0 0
      %435 = vmatpush2.bf16.msra.mxu0 0
      %436 = vmatprep.subr.bf16.mxu0 0
      %437 = vmatpush2.bf16.msra.mxu0 0
      %438 = vmatprep.subr.bf16.mxu0 0
      %439 = vmatpush2.bf16.msra.mxu0 0
      %440 = vmatprep.subr.bf16.mxu0 0
      %441 = vmatpush2.bf16.msra.mxu0 0
      %442 = vmatprep.subr.bf16.mxu0 0
      %443 = vmatpush2.bf16.msra.mxu0 0
      %444 = vmatprep.subr.bf16.mxu0 0
      %445 = vmatpush2.bf16.msra.mxu0 0
      %446 = vmatprep.mubr.bf16.mxu0 0
      %447 = vmatmul.mubr.bf16.gmra.mxu0 %v412
      %v448 = vpop.f32.mrf.mxu0
      %v449 = vadd.f32 0.0, %v448
      %v450 = vpop.f32.mrf.mxu0
      %v451 = vpop.f32.mrf.mxu0
      %v452 = vadd.f32 0.0, %v451
      %v453 = vpop.f32.mrf.mxu0
      %454 = vdwg.mxu0
      %v455 = vadd.f32 %v385, %v449
      %v456 = vadd.f32 %v388, %v452
      %v457 = vld [vmem:[#allocation2] sm:$0xff]
      %v458 = vld [vmem:[#allocation2 + $0x8] sm:$0xff]
      %v459 = vadd.f32 %v457, %v455
      %v460 = vadd.f32 %v458, %v456
      %461 = vst [vmem:[#allocation2] sm:$0xff] %v459
      %462 = vst [vmem:[#allocation2 + $0x8] sm:$0xff] %v460
      %p463 = scmp.eq.s32.totalorder %s22, 2
      // Predicated region
      $region41: #{head_forward.25} parent=35 // pred_check
        %p464 = pneg %p463
      $region42: #{head_forward.25} parent=35 // pred_check_branch
        %466 = sbr.rel (%p464) target = $region44
      $region43: #{head_forward.25} parent=35 // pred_region
        %v467 = vld [vmem:[#allocation2] sm:$0xff]
        %v468 = vld [vmem:[#allocation2 + $0x8] sm:$0xff]
        %v469 = vld [vmem:[%s2] sm:$0x1]
        %v471 = vlaneseq
        %v472 = vshrl.u32 %v471, 7
        %v473 = vsub.s32 0, %v472
        %v474 = vrot.slane %v469, %v473
        %v476 = vadd.f32 %v467, %v474
        %v477 = vadd.f32 %v468, %v474
        %vm478 = vcmp.gt.f32.partialorder %v476, 0.0
        %vm479 = vcmp.gt.f32.partialorder %v477, 0.0
        %v480 = vld [vmem:[%s3] sm:$0x1]
        %v482 = vlaneseq
        %v483 = vshrl.u32 %v482, 7
        %v484 = vsub.s32 0, %v483
        %v485 = vrot.slane %v480, %v484
        %v487 = vmul.f32 %v485, %v476
        %v488 = vmul.f32 %v485, %v477
        %v489 = vsel %vm478, %v476, %v487
        %v490 = vsel %vm479, %v477, %v488
        %491 = vst [vmem:[%s247] sm:$0xff] %v489
        %492 = vst [vmem:[%s247 + $0x8] sm:$0xff] %v490
      $region44: #{head_forward.25} parent=35 // pred_fallthru
        _
      %p493 = scmp.lt.s32.totalorder %s20, 1
      %s494 = scalar_select %p493, %s20, 1
      %p495 = scmp.lt.s32.totalorder %s21, 15
      %s496 = scalar_select %p495, %s21, 15
      %s497 = smul.addr %s496, 2
      %s498 = smul.addr %s494, 32
      %s499 = sadd.s32 %s497, %s498
      %s500 = smul.addr %s499, 8
      %s501 = scalar_lea.vmem %s4, %s500
      // Predicated region
      $region45: #{head_forward.25} parent=35 // pred_check
        %p502 = pneg %p147
      $region46: #{head_forward.25} parent=35 // pred_check_branch
        %504 = sbr.rel (%p502) target = $region48
      $region47: #{head_forward.25} parent=35 // pred_region
        _
      $region48: #{head_forward.25} parent=35 // pred_fallthru
        _
    $region36: #{head_forward.25} parent=5 // pred_fallthru
      _
    %p505 = scmp.le.s32.totalorder 2, %s10
    // Predicated region
    $region49: #{head_forward.25} parent=5 // pred_check
      %p506 = pneg %p505
    $region50: #{head_forward.25} parent=5 // pred_check_branch
      %508 = sbr.rel (%p506) target = $region52
    $region51: #{head_forward.25} parent=5 // pred_region
      %s509 = ssub.s32 %s10, 2
      // Predicated region
      $region53: #{head_forward.25} parent=51 // pred_check
        %p510 = pneg %p153
      $region54: #{head_forward.25} parent=51 // pred_check_branch
        %512 = sbr.rel (%p510) target = $region56
      $region55: #{head_forward.25} parent=51 // pred_region
        %p513 = scmp.lt.s32.totalorder %s23, 1
        %s514 = scalar_select %p513, %s23, 1
        %p515 = scmp.lt.s32.totalorder %s24, 15
        %s516 = scalar_select %p515, %s24, 15
        %s517 = smul.addr %s516, 2
        %s518 = smul.addr %s514, 32
        %s519 = sadd.s32 %s517, %s518
        %s520 = smul.addr %s519, 8
        %s521 = scalar_lea.vmem %s4, %s520
      $region56: #{head_forward.25} parent=51 // pred_fallthru
        _
    $region52: #{head_forward.25} parent=5 // pred_fallthru
      _
  $region6: #{head_forward.25} parent=0 // loop_footer
    %s14 = sadd.s32 1, %s10
  $region7: #{head_forward.25} parent=0 // loop_footer_branch
    %9 = sbr.rel target = $region3
  $region8: #{head_forward.25} parent=0 // loop_exit
    _

</llo_original>
